<compile_context>
chip_gen: v7x
topology: tpu7x:2x2x1
jax: 0.10.0
libtpu: 0.0.40
codegen_flags: <defaults>
</compile_context>

<pallas_src>
import functools

import numpy as np
import jax
import jax.numpy as jnp
from jax.experimental import pallas as pl
from jax.experimental.pallas import tpu as pltpu


def _round_up(x, m):
    return ((x + m - 1) // m) * m


# ----------------------------------------------------------------------------
# Anchor utilities (host-side numpy glue, identical role to the PyTorch code)
# ----------------------------------------------------------------------------
def generate_anchor_base(base_size=16, ratios=(0.5, 1, 2), anchor_scales=(8, 16, 32)):
    anchor_base = np.zeros((len(ratios) * len(anchor_scales), 4), dtype=np.float32)
    for i in range(len(ratios)):
        for j in range(len(anchor_scales)):
            h = base_size * anchor_scales[j] * np.sqrt(ratios[i])
            w = base_size * anchor_scales[j] * np.sqrt(1.0 / ratios[i])
            index = i * len(anchor_scales) + j
            anchor_base[index, 0] = -w / 2.0   # x1
            anchor_base[index, 1] = -h / 2.0   # y1
            anchor_base[index, 2] = w / 2.0    # x2
            anchor_base[index, 3] = h / 2.0    # y2
    return anchor_base


def _enumerate_shifted_anchor(anchor_base, feat_stride, height, width):
    shift_x = np.arange(0, width * feat_stride, feat_stride)
    shift_y = np.arange(0, height * feat_stride, feat_stride)
    shift_x, shift_y = np.meshgrid(shift_x, shift_y)
    shift = np.stack((shift_x.ravel(), shift_y.ravel(),
                      shift_x.ravel(), shift_y.ravel()), axis=1)
    A = anchor_base.shape[0]
    K = shift.shape[0]
    anchor = anchor_base.reshape((1, A, 4)) + shift.reshape((K, 1, 4))
    return anchor.reshape((K * A, 4)).astype(np.float32)


def loc2bbox(src_bbox, loc):
    src_w = src_bbox[:, 2] - src_bbox[:, 0]
    src_h = src_bbox[:, 3] - src_bbox[:, 1]
    src_cx = src_bbox[:, 0] + 0.5 * src_w
    src_cy = src_bbox[:, 1] + 0.5 * src_h
    dx, dy, dw, dh = loc[:, 0], loc[:, 1], loc[:, 2], loc[:, 3]
    cx = dx * src_w + src_cx
    cy = dy * src_h + src_cy
    w = np.exp(dw) * src_w
    h = np.exp(dh) * src_h
    dst = np.zeros_like(loc)
    dst[:, 0] = cx - 0.5 * w
    dst[:, 1] = cy - 0.5 * h
    dst[:, 2] = cx + 0.5 * w
    dst[:, 3] = cy + 0.5 * h
    return dst


def nms_numpy(boxes, scores, iou_threshold):
    order = np.argsort(-scores, kind="stable")
    keep = []
    while order.size > 0:
        i = order[0]
        keep.append(i)
        if order.size == 1:
            break
        rest = order[1:]
        xx1 = np.maximum(boxes[i, 0], boxes[rest, 0])
        yy1 = np.maximum(boxes[i, 1], boxes[rest, 1])
        xx2 = np.minimum(boxes[i, 2], boxes[rest, 2])
        yy2 = np.minimum(boxes[i, 3], boxes[rest, 3])
        inter = np.maximum(0.0, xx2 - xx1) * np.maximum(0.0, yy2 - yy1)
        area_i = (boxes[i, 2] - boxes[i, 0]) * (boxes[i, 3] - boxes[i, 1])
        area_r = (boxes[rest, 2] - boxes[rest, 0]) * (boxes[rest, 3] - boxes[rest, 1])
        iou = inter / (area_i + area_r - inter + 1e-12)
        order = rest[iou <= iou_threshold]
    return np.asarray(keep, dtype=np.int64)


class ProposalCreatorNP:
    """Host-side NumPy port of ProposalCreator.

    # TODO(synk): NMS / argsort / boolean filtering produce data-dependent
    # dynamic shapes and have no clean Pallas TPU equivalent; this stage
    # intentionally runs on the host.
    """

    def __init__(self, mode, nms_iou=0.7, n_train_pre_nms=12000, n_train_post_nms=600,
                 n_test_pre_nms=500, n_test_post_nms=500, min_size=16):
        self.mode = mode
        self.nms_iou = nms_iou
        self.n_train_pre_nms = n_train_pre_nms
        self.n_train_post_nms = n_train_post_nms
        self.n_test_pre_nms = n_test_pre_nms
        self.n_test_post_nms = n_test_post_nms
        self.min_size = min_size

    def __call__(self, loc, score, anchor, img_size, scale=1.0):
        if self.mode == "training":
            n_pre_nms = self.n_train_pre_nms
        else:
            n_pre_nms = self.n_test_pre_nms
        roi = loc2bbox(anchor, loc)
        roi[:, [0, 2]] = np.clip(roi[:, [0, 2]], 0, img_size[1])
        roi[:, [1, 3]] = np.clip(roi[:, [1, 3]], 0, img_size[0])
        min_size = self.min_size * scale
        keep = np.where((roi[:, 2] - roi[:, 0] >= min_size)
                        & (roi[:, 3] - roi[:, 1] >= min_size))[0]
        roi = roi[keep, :]
        score = score[keep]
        order = np.argsort(-score, kind="stable")
        if n_pre_nms > 0:
            order = order[:n_pre_nms]
        roi = roi[order, :]
        score = score[order]
        keep = nms_numpy(roi, score, self.nms_iou)
        # (faithful to the original's quirky post-NMS score>0.2 count)
        new_n_pre_nms = int(np.sum(score[: len(keep)] > 0.2))
        keep = keep[:new_n_pre_nms]
        roi = roi[keep]
        roi_f = np.array([[0.0, 0.0, img_size[1], img_size[0]]], dtype=np.float32)
        return np.concatenate((roi.astype(np.float32), roi_f), axis=0)


# ----------------------------------------------------------------------------
# Pallas kernel: fused (3x3 conv + ReLU + all three 1x1 heads) per halo row-tile
# ----------------------------------------------------------------------------
def _rpn_head_kernel(x_ref, w1_ref, b1_ref, wh_ref, bh_ref, out_ref,
                     *, tile_w_pad, halo, fg_start, fg_end):
    rows = out_ref.shape[0]   # (tile_h+2)*(W+2) rounded up to a multiple of 8

    # 3x3 / pad-1 / stride-1 conv: nine accumulating (rows, Cin) @ (Cin, Cmid)
    # MXU matmuls over row-shifted views of the flattened padded slab.  The
    # taps live only in VMEM; shifted-in garbage rows only ever land in the
    # border pixels that the wrapper discards.
    acc = None
    for dy in range(3):
        for dx in range(3):
            off = halo + (dy - 1) * tile_w_pad + (dx - 1)      # static offset >= 0
            tap = x_ref[off:off + rows, :]
            part = jnp.dot(tap, w1_ref[dy * 3 + dx],
                           preferred_element_type=jnp.float32)
            acc = part if acc is None else acc + part

    # bias + ReLU fused with the bf16 cast: only the bf16 copy stays live.
    hidden = jnp.maximum(acc + b1_ref[...], 0.0).astype(wh_ref.dtype)

    # fused 1x1 heads: [loc | score | fg_diff | zero-pad] -> 128-lane-dense out
    heads = jnp.dot(hidden, wh_ref[...],
                    preferred_element_type=jnp.float32) + bh_ref[...]

    # Numerically-stable sigmoid (softmax over (bg,fg) == sigmoid(fg-bg)).
    # Exact reciprocal: cheap VPU/EUP filler under the MXU, and avoids the
    # approx-rcp error near the post-NMS score>0.2 cutoff.
    neg = heads < 0.0
    e = jnp.exp(jnp.where(neg, heads, -heads))                 # arg always <= 0
    r = 1.0 / (1.0 + e)
    sig = jnp.where(neg, e * r, r)

    col = jax.lax.broadcasted_iota(jnp.int32, heads.shape, 1)
    is_fg = (col >= fg_start) & (col < fg_end)
    out_ref[...] = jnp.where(is_fg, sig, heads)


def rpn_head_pallas(x_nchw, w1, b1, wl, bl, ws, bs, wd, bd,
                    compute_dtype=jnp.bfloat16, target_tile_rows=1024):
    n, cin, h, w = x_nchw.shape
    cmid = w1.shape[2]
    a4, a2, a1 = wl.shape[1], ws.shape[1], wd.shape[1]
    n_head_cols = a4 + a2 + a1
    head_pad = _round_up(n_head_cols, 128)

    # --- layout glue (plain JAX): NHWC in bf16 (cast FIRST), one spatial
    #     zero-pad, then row tiles carrying a duplicated 1-row halo.  No 9x
    #     im2col tensor is ever materialized in HBM.
    x = jnp.transpose(x_nchw, (0, 2, 3, 1)).astype(compute_dtype)     # NHWC bf16

    tile_h = max(1, min(h, target_tile_rows // max(w, 1)))
    if n * pl.cdiv(h, tile_h) < 2 and h >= 2:
        tile_h = pl.cdiv(h, 2)          # guarantee >=2 grid programs (v7x: 2 TCs)
    h_tiles = pl.cdiv(h, tile_h)
    h_pad_to = h_tiles * tile_h

    wp = w + 2
    p_grid = (tile_h + 2) * wp          # pixels of one padded row-tile
    p_rows = _round_up(p_grid, 8)       # sublane-aligned matmul M per tile
    halo = wp + 1                       # max |flattened row shift| of a 3x3 tap
    p_ext = p_rows + 2 * halo

    xp = jnp.pad(x, ((0, 0), (1, 1 + h_pad_to - h), (1, 1), (0, 0)))
    slabs = [xp[:, t * tile_h: t * tile_h + tile_h + 2] for t in range(h_tiles)]
    tiles = jnp.stack(slabs, axis=1)                    # (n, ht, tile_h+2, W+2, C)
    tiles = tiles.reshape(n * h_tiles, p_grid, cin)
    tiles = jnp.pad(tiles, ((0, 0), (halo, p_ext - p_grid - halo), (0, 0)))
    num_tiles = n * h_tiles
    # TODO(synk): a fully manual halo DMA (memory_space=pl.ANY + make_async_copy)
    # would also remove the small host-side slab duplication / copies.

    # weights: bf16 matmul operands, f32 biases; heads fused + lane-padded
    w1b = w1.astype(compute_dtype)                      # (9, Cin, Cmid)
    b1f = b1.astype(jnp.float32)                        # (1, Cmid)
    wh = jnp.concatenate([wl, ws, wd], axis=1)
    bh = jnp.concatenate([bl, bs, bd], axis=1)
    wh = jnp.pad(wh, ((0, 0), (0, head_pad - n_head_cols))).astype(compute_dtype)
    bh = jnp.pad(bh, ((0, 0), (0, head_pad - n_head_cols))).astype(jnp.float32)

    kernel = functools.partial(_rpn_head_kernel, tile_w_pad=wp, halo=halo,
                               fg_start=a4 + a2, fg_end=n_head_cols)

    flops = 2 * num_tiles * p_rows * cmid * (9 * cin + head_pad)
    bytes_accessed = (tiles.size * 2 + w1b.size * 2 + wh.size * 2
                      + (b1f.size + bh.size) * 4
                      + num_tiles * p_rows * head_pad * 4)
    cost = pl.CostEstimate(flops=flops,
                           transcendentals=num_tiles * p_rows * head_pad,
                           bytes_accessed=bytes_accessed)

    def build_call(single_buffer_consts):
        # Grid-invariant operands (index_map constant) can be single-buffered
        # to free VMEM (matters on v7x: 64 MiB/TC, 4.5 MiB conv weights @512ch).
        const_kw = ({"pipeline_mode": pl.Buffered(1)} if single_buffer_consts else {})
        in_specs = [
            pl.BlockSpec((None, p_ext, cin), lambda i: (i, 0, 0)),
            pl.BlockSpec((9, cin, cmid), lambda i: (0, 0, 0), **const_kw),
            pl.BlockSpec((1, cmid), lambda i: (0, 0), **const_kw),
            pl.BlockSpec((cmid, head_pad), lambda i: (0, 0), **const_kw),
            pl.BlockSpec((1, head_pad), lambda i: (0, 0), **const_kw),
        ]
        return pl.pallas_call(
            kernel,
            out_shape=jax.ShapeDtypeStruct((num_tiles, p_rows, head_pad), jnp.float32),
            grid_spec=pltpu.PrefetchScalarGridSpec(
                num_scalar_prefetch=0,
                grid=(num_tiles,),
                in_specs=in_specs,
                out_specs=pl.BlockSpec((None, p_rows, head_pad), lambda i: (i, 0, 0)),
            ),
            compiler_params=pltpu.CompilerParams(
                dimension_semantics=("parallel",),
                vmem_limit_bytes=32 * 1024 * 1024),
            cost_estimate=cost,
        )

    try:
        out = build_call(True)(tiles, w1b, b1f, wh, bh)
        out = jax.block_until_ready(out)
    except Exception:
        # pl.Buffered(1) not supported by this jax/libtpu combo: fall back to
        # the default double-buffered constant operands.
        out = build_call(False)(tiles, w1b, b1f, wh, bh)

    # discard sublane padding + border pixels, un-tile rows, split the heads
    out = out[:, :p_grid].reshape(n, h_tiles, tile_h + 2, wp, head_pad)
    out = out[:, :, 1:tile_h + 1, 1:w + 1, :]
    out = out.reshape(n, h_tiles * tile_h, w, head_pad)[:, :h]
    out = out.reshape(n, h * w, head_pad)
    loc_map = out[..., :a4]                                   # (N, H*W, A*4)
    score_map = out[..., a4:a4 + a2]                          # (N, H*W, A*2)
    fg_map = out[..., a4 + a2:n_head_cols]                    # (N, H*W, A)
    return loc_map, score_map, fg_map


# ----------------------------------------------------------------------------
# Module wrapper
# ----------------------------------------------------------------------------
class RegionProposalNetworkPallas:
    def __init__(self, min_size, in_channels=4, mid_channels=32,
                 ratios=(0.5, 1, 2), anchor_scales=(8, 16, 32),
                 feat_stride=16, mode="training", key=None):
        self.anchor_base = generate_anchor_base(ratios=ratios, anchor_scales=anchor_scales)
        n_anchor = self.anchor_base.shape[0]
        self.n_anchor = n_anchor
        self.feat_stride = feat_stride
        self.proposal_layer = ProposalCreatorNP(mode, min_size=min_size)

        # normal_init(_, 0, 0.01): normal weights (std=0.01), zero biases.
        k1, k2, k3 = jax.random.split(key, 3)
        std = 0.01
        # conv1 weight stored as 9 taps (k = dy*3+dx), each (Cin, Cmid)
        self.w1 = std * jax.random.normal(k1, (9, in_channels, mid_channels), jnp.float32)
        self.b1 = jnp.zeros((1, mid_channels), jnp.float32)
        self.wl = std * jax.random.normal(k2, (mid_channels, n_anchor * 4), jnp.float32)
        self.bl = jnp.zeros((1, n_anchor * 4), jnp.float32)
        self.ws = std * jax.random.normal(k3, (mid_channels, n_anchor * 2), jnp.float32)
        self.bs = jnp.zeros((1, n_anchor * 2), jnp.float32)
        # fg-minus-bg difference head (softmax over 2 classes == sigmoid of diff)
        self.wd = self.ws[:, 1::2] - self.ws[:, 0::2]
        self.bd = self.bs[:, 1::2] - self.bs[:, 0::2]

    def forward(self, x, img_size, scale=1.0):
        n, _, h, w = x.shape
        loc_map, score_map, fg_map = rpn_head_pallas(
            x, self.w1, self.b1, self.wl, self.bl, self.ws, self.bs, self.wd, self.bd)

        rpn_locs = loc_map.reshape(n, -1, 4)        # (n, h*w*A, 4)
        rpn_scores = score_map.reshape(n, -1, 2)    # (n, h*w*A, 2)
        rpn_fg_scores = fg_map.reshape(n, -1)       # (n, h*w*A)

        anchor = _enumerate_shifted_anchor(np.array(self.anchor_base),
                                           self.feat_stride, h, w)

        # Single batched device->host transfer for the NumPy proposal stage.
        # TODO(synk): overlap this host NMS loop with the next batch's kernel.
        locs_np, fg_np = jax.device_get((rpn_locs, rpn_fg_scores))
        locs_np = np.asarray(locs_np)
        fg_np = np.asarray(fg_np)
        rois, roi_indices = [], []
        for i in range(n):
            roi = self.proposal_layer(locs_np[i], fg_np[i], anchor, img_size, scale=scale)
            rois.append(roi)
            roi_indices.append(np.full((len(roi),), float(i), dtype=np.float32))
        rois = np.concatenate(rois, axis=0)
        roi_indices = np.concatenate(roi_indices, axis=0)
        return rpn_locs, rpn_scores, rois, roi_indices, anchor


# ----------------------------------------------------------------------------
# Plain-JAX f32 reference for the kernel hot path (correctness check)
# ----------------------------------------------------------------------------
def _reference_head(x_nchw, rpn):
    n, cin, h, w = x_nchw.shape
    cmid = rpn.b1.shape[1]
    w1_hwio = rpn.w1.reshape(3, 3, cin, cmid)
    hid = jax.lax.conv_general_dilated(
        x_nchw, w1_hwio, window_strides=(1, 1), padding="SAME",
        dimension_numbers=("NCHW", "HWIO", "NCHW"))
    hid = jax.nn.relu(hid + rpn.b1[0][None, :, None, None])
    hn = jnp.transpose(hid, (0, 2, 3, 1))
    loc = hn @ rpn.wl + rpn.bl[0]
    score = hn @ rpn.ws + rpn.bs[0]
    sm = jax.nn.softmax(score.reshape(n, h, w, -1, 2), axis=-1)[..., 1]
    return (loc.reshape(n, h * w, -1),
            score.reshape(n, h * w, -1),
            sm.reshape(n, h * w, -1))


if __name__ == "__main__":
    key = jax.random.PRNGKey(0)
    kx, kp = jax.random.split(key)

    N, CIN, H, W = 2, 4, 16, 16
    CMID = 32
    FEAT_STRIDE = 16
    x = jax.random.normal(kx, (N, CIN, H, W), jnp.float32)

    rpn = RegionProposalNetworkPallas(min_size=16, in_channels=CIN, mid_channels=CMID,
                                      feat_stride=FEAT_STRIDE, mode="training", key=kp)

    img_size = (H * FEAT_STRIDE, W * FEAT_STRIDE)   # (img_h, img_w)
    rpn_locs, rpn_scores, rois, roi_indices, anchor = rpn.forward(x, img_size, scale=1.0)
    jax.block_until_ready((rpn_locs, rpn_scores))

    # correctness check of the Pallas hot path (bf16 matmuls, f32 accumulation)
    # against the exact f32 plain-JAX reference.
    loc_map, score_map, fg_map = rpn_head_pallas(
        x, rpn.w1, rpn.b1, rpn.wl, rpn.bl, rpn.ws, rpn.bs, rpn.wd, rpn.bd)
    jax.block_until_ready((loc_map, score_map, fg_map))
    ref_loc, ref_score, ref_fg = _reference_head(x, rpn)
    np.testing.assert_allclose(np.asarray(loc_map), np.asarray(ref_loc),
                               atol=1e-3, rtol=2e-2)
    np.testing.assert_allclose(np.asarray(score_map), np.asarray(ref_score),
                               atol=1e-3, rtol=2e-2)
    np.testing.assert_allclose(np.asarray(fg_map), np.asarray(ref_fg),
                               atol=1e-3, rtol=2e-2)

    assert rpn_locs.shape == (N, H * W * rpn.n_anchor, 4)
    assert rpn_scores.shape == (N, H * W * rpn.n_anchor, 2)
    assert anchor.shape == (H * W * rpn.n_anchor, 4)
    assert rois.shape[0] == roi_indices.shape[0]

    print("KERNEL_OK")
</pallas_src>

<mosaic_0001>
module attributes {stable_mosaic.version = 11 : i64} {
  func.func @_rpn_head_kernel(%arg0: i32, %arg1: memref<1x366x4xbf16, #tpu.memory_space<vmem>>, %arg2: memref<9x4x32xbf16, #tpu.memory_space<vmem>>, %arg3: memref<1x32xf32, #tpu.memory_space<vmem>>, %arg4: memref<32x128xbf16, #tpu.memory_space<vmem>>, %arg5: memref<1x128xf32, #tpu.memory_space<vmem>>, %arg6: memref<1x328x128xf32, #tpu.memory_space<vmem>>) attributes {dimension_semantics = [#tpu.dimension_semantics<parallel>], iteration_bounds = array<i64: 2>, scalar_prefetch = 0 : i64, scratch_operands = 0 : i64, tpu.core_type = #tpu.core_type<tc>, window_params = [{transform_indices = @transform_0, window_bounds = array<i64: 1, 366, 4>}, {pipeline_mode = #tpu.pipeline_mode<synchronous>, transform_indices = @transform_1, window_bounds = array<i64: 9, 4, 32>}, {pipeline_mode = #tpu.pipeline_mode<synchronous>, transform_indices = @transform_2, window_bounds = array<i64: 1, 32>}, {pipeline_mode = #tpu.pipeline_mode<synchronous>, transform_indices = @transform_3, window_bounds = array<i64: 32, 128>}, {pipeline_mode = #tpu.pipeline_mode<synchronous>, transform_indices = @transform_4, window_bounds = array<i64: 1, 128>}, {transform_indices = @transform_5, window_bounds = array<i64: 1, 328, 128>}]} {
    %c0 = arith.constant 0 : index
    %c0_0 = arith.constant 0 : index
    %c0_1 = arith.constant 0 : index
    %0 = vector.load %arg1[%c0, %c0_0, %c0_1] : memref<1x366x4xbf16, #tpu.memory_space<vmem>>, vector<1x328x4xbf16>
    %1 = vector.shape_cast %0 : vector<1x328x4xbf16> to vector<328x4xbf16>
    %c0_2 = arith.constant 0 : index
    %c0_3 = arith.constant 0 : index
    %c0_4 = arith.constant 0 : index
    %2 = vector.load %arg2[%c0_2, %c0_3, %c0_4] : memref<9x4x32xbf16, #tpu.memory_space<vmem>>, vector<1x4x32xbf16>
    %3 = vector.shape_cast %2 : vector<1x4x32xbf16> to vector<4x32xbf16>
    %cst = arith.constant dense<0.000000e+00> : vector<328x32xf32>
    %4 = tpu.matmul %1, %3, %cst {dimension_numbers = #tpu.dot_dimension_numbers<[1], [0], [0], [1], [0, 0, 1, 1], [], []>} : vector<328x4xbf16>, vector<4x32xbf16>, vector<328x32xf32> -> vector<328x32xf32>
    %c0_5 = arith.constant 0 : index
    %c1 = arith.constant 1 : index
    %c0_6 = arith.constant 0 : index
    %5 = vector.load %arg1[%c0_5, %c1, %c0_6] : memref<1x366x4xbf16, #tpu.memory_space<vmem>>, vector<1x328x4xbf16>
    %6 = vector.shape_cast %5 : vector<1x328x4xbf16> to vector<328x4xbf16>
    %c1_7 = arith.constant 1 : index
    %c0_8 = arith.constant 0 : index
    %c0_9 = arith.constant 0 : index
    %7 = vector.load %arg2[%c1_7, %c0_8, %c0_9] : memref<9x4x32xbf16, #tpu.memory_space<vmem>>, vector<1x4x32xbf16>
    %8 = vector.shape_cast %7 : vector<1x4x32xbf16> to vector<4x32xbf16>
    %cst_10 = arith.constant dense<0.000000e+00> : vector<328x32xf32>
    %9 = tpu.matmul %6, %8, %cst_10 {dimension_numbers = #tpu.dot_dimension_numbers<[1], [0], [0], [1], [0, 0, 1, 1], [], []>} : vector<328x4xbf16>, vector<4x32xbf16>, vector<328x32xf32> -> vector<328x32xf32>
    %10 = arith.addf %4, %9 : vector<328x32xf32>
    %c0_11 = arith.constant 0 : index
    %c2 = arith.constant 2 : index
    %c0_12 = arith.constant 0 : index
    %11 = vector.load %arg1[%c0_11, %c2, %c0_12] : memref<1x366x4xbf16, #tpu.memory_space<vmem>>, vector<1x328x4xbf16>
    %12 = vector.shape_cast %11 : vector<1x328x4xbf16> to vector<328x4xbf16>
    %c2_13 = arith.constant 2 : index
    %c0_14 = arith.constant 0 : index
    %c0_15 = arith.constant 0 : index
    %13 = vector.load %arg2[%c2_13, %c0_14, %c0_15] : memref<9x4x32xbf16, #tpu.memory_space<vmem>>, vector<1x4x32xbf16>
    %14 = vector.shape_cast %13 : vector<1x4x32xbf16> to vector<4x32xbf16>
    %cst_16 = arith.constant dense<0.000000e+00> : vector<328x32xf32>
    %15 = tpu.matmul %12, %14, %cst_16 {dimension_numbers = #tpu.dot_dimension_numbers<[1], [0], [0], [1], [0, 0, 1, 1], [], []>} : vector<328x4xbf16>, vector<4x32xbf16>, vector<328x32xf32> -> vector<328x32xf32>
    %16 = arith.addf %10, %15 : vector<328x32xf32>
    %c0_17 = arith.constant 0 : index
    %c18 = arith.constant 18 : index
    %c0_18 = arith.constant 0 : index
    %17 = vector.load %arg1[%c0_17, %c18, %c0_18] : memref<1x366x4xbf16, #tpu.memory_space<vmem>>, vector<1x328x4xbf16>
    %18 = vector.shape_cast %17 : vector<1x328x4xbf16> to vector<328x4xbf16>
    %c3 = arith.constant 3 : index
    %c0_19 = arith.constant 0 : index
    %c0_20 = arith.constant 0 : index
    %19 = vector.load %arg2[%c3, %c0_19, %c0_20] : memref<9x4x32xbf16, #tpu.memory_space<vmem>>, vector<1x4x32xbf16>
    %20 = vector.shape_cast %19 : vector<1x4x32xbf16> to vector<4x32xbf16>
    %cst_21 = arith.constant dense<0.000000e+00> : vector<328x32xf32>
    %21 = tpu.matmul %18, %20, %cst_21 {dimension_numbers = #tpu.dot_dimension_numbers<[1], [0], [0], [1], [0, 0, 1, 1], [], []>} : vector<328x4xbf16>, vector<4x32xbf16>, vector<328x32xf32> -> vector<328x32xf32>
    %22 = arith.addf %16, %21 : vector<328x32xf32>
    %c0_22 = arith.constant 0 : index
    %c19 = arith.constant 19 : index
    %c0_23 = arith.constant 0 : index
    %23 = vector.load %arg1[%c0_22, %c19, %c0_23] : memref<1x366x4xbf16, #tpu.memory_space<vmem>>, vector<1x328x4xbf16>
    %24 = vector.shape_cast %23 : vector<1x328x4xbf16> to vector<328x4xbf16>
    %c4 = arith.constant 4 : index
    %c0_24 = arith.constant 0 : index
    %c0_25 = arith.constant 0 : index
    %25 = vector.load %arg2[%c4, %c0_24, %c0_25] : memref<9x4x32xbf16, #tpu.memory_space<vmem>>, vector<1x4x32xbf16>
    %26 = vector.shape_cast %25 : vector<1x4x32xbf16> to vector<4x32xbf16>
    %cst_26 = arith.constant dense<0.000000e+00> : vector<328x32xf32>
    %27 = tpu.matmul %24, %26, %cst_26 {dimension_numbers = #tpu.dot_dimension_numbers<[1], [0], [0], [1], [0, 0, 1, 1], [], []>} : vector<328x4xbf16>, vector<4x32xbf16>, vector<328x32xf32> -> vector<328x32xf32>
    %28 = arith.addf %22, %27 : vector<328x32xf32>
    %c0_27 = arith.constant 0 : index
    %c20 = arith.constant 20 : index
    %c0_28 = arith.constant 0 : index
    %29 = vector.load %arg1[%c0_27, %c20, %c0_28] : memref<1x366x4xbf16, #tpu.memory_space<vmem>>, vector<1x328x4xbf16>
    %30 = vector.shape_cast %29 : vector<1x328x4xbf16> to vector<328x4xbf16>
    %c5 = arith.constant 5 : index
    %c0_29 = arith.constant 0 : index
    %c0_30 = arith.constant 0 : index
    %31 = vector.load %arg2[%c5, %c0_29, %c0_30] : memref<9x4x32xbf16, #tpu.memory_space<vmem>>, vector<1x4x32xbf16>
    %32 = vector.shape_cast %31 : vector<1x4x32xbf16> to vector<4x32xbf16>
    %cst_31 = arith.constant dense<0.000000e+00> : vector<328x32xf32>
    %33 = tpu.matmul %30, %32, %cst_31 {dimension_numbers = #tpu.dot_dimension_numbers<[1], [0], [0], [1], [0, 0, 1, 1], [], []>} : vector<328x4xbf16>, vector<4x32xbf16>, vector<328x32xf32> -> vector<328x32xf32>
    %34 = arith.addf %28, %33 : vector<328x32xf32>
    %c0_32 = arith.constant 0 : index
    %c36 = arith.constant 36 : index
    %c0_33 = arith.constant 0 : index
    %35 = vector.load %arg1[%c0_32, %c36, %c0_33] : memref<1x366x4xbf16, #tpu.memory_space<vmem>>, vector<1x328x4xbf16>
    %36 = vector.shape_cast %35 : vector<1x328x4xbf16> to vector<328x4xbf16>
    %c6 = arith.constant 6 : index
    %c0_34 = arith.constant 0 : index
    %c0_35 = arith.constant 0 : index
    %37 = vector.load %arg2[%c6, %c0_34, %c0_35] : memref<9x4x32xbf16, #tpu.memory_space<vmem>>, vector<1x4x32xbf16>
    %38 = vector.shape_cast %37 : vector<1x4x32xbf16> to vector<4x32xbf16>
    %cst_36 = arith.constant dense<0.000000e+00> : vector<328x32xf32>
    %39 = tpu.matmul %36, %38, %cst_36 {dimension_numbers = #tpu.dot_dimension_numbers<[1], [0], [0], [1], [0, 0, 1, 1], [], []>} : vector<328x4xbf16>, vector<4x32xbf16>, vector<328x32xf32> -> vector<328x32xf32>
    %40 = arith.addf %34, %39 : vector<328x32xf32>
    %c0_37 = arith.constant 0 : index
    %c37 = arith.constant 37 : index
    %c0_38 = arith.constant 0 : index
    %41 = vector.load %arg1[%c0_37, %c37, %c0_38] : memref<1x366x4xbf16, #tpu.memory_space<vmem>>, vector<1x328x4xbf16>
    %42 = vector.shape_cast %41 : vector<1x328x4xbf16> to vector<328x4xbf16>
    %c7 = arith.constant 7 : index
    %c0_39 = arith.constant 0 : index
    %c0_40 = arith.constant 0 : index
    %43 = vector.load %arg2[%c7, %c0_39, %c0_40] : memref<9x4x32xbf16, #tpu.memory_space<vmem>>, vector<1x4x32xbf16>
    %44 = vector.shape_cast %43 : vector<1x4x32xbf16> to vector<4x32xbf16>
    %cst_41 = arith.constant dense<0.000000e+00> : vector<328x32xf32>
    %45 = tpu.matmul %42, %44, %cst_41 {dimension_numbers = #tpu.dot_dimension_numbers<[1], [0], [0], [1], [0, 0, 1, 1], [], []>} : vector<328x4xbf16>, vector<4x32xbf16>, vector<328x32xf32> -> vector<328x32xf32>
    %46 = arith.addf %40, %45 : vector<328x32xf32>
    %c0_42 = arith.constant 0 : index
    %c38 = arith.constant 38 : index
    %c0_43 = arith.constant 0 : index
    %47 = vector.load %arg1[%c0_42, %c38, %c0_43] : memref<1x366x4xbf16, #tpu.memory_space<vmem>>, vector<1x328x4xbf16>
    %48 = vector.shape_cast %47 : vector<1x328x4xbf16> to vector<328x4xbf16>
    %c8 = arith.constant 8 : index
    %c0_44 = arith.constant 0 : index
    %c0_45 = arith.constant 0 : index
    %49 = vector.load %arg2[%c8, %c0_44, %c0_45] : memref<9x4x32xbf16, #tpu.memory_space<vmem>>, vector<1x4x32xbf16>
    %50 = vector.shape_cast %49 : vector<1x4x32xbf16> to vector<4x32xbf16>
    %cst_46 = arith.constant dense<0.000000e+00> : vector<328x32xf32>
    %51 = tpu.matmul %48, %50, %cst_46 {dimension_numbers = #tpu.dot_dimension_numbers<[1], [0], [0], [1], [0, 0, 1, 1], [], []>} : vector<328x4xbf16>, vector<4x32xbf16>, vector<328x32xf32> -> vector<328x32xf32>
    %52 = arith.addf %46, %51 : vector<328x32xf32>
    %c0_47 = arith.constant 0 : index
    %c0_48 = arith.constant 0 : index
    %53 = vector.load %arg3[%c0_47, %c0_48] : memref<1x32xf32, #tpu.memory_space<vmem>>, vector<1x32xf32>
    %54 = vector.broadcast %53 : vector<1x32xf32> to vector<328x32xf32>
    %55 = arith.addf %52, %54 : vector<328x32xf32>
    %cst_49 = arith.constant 0.000000e+00 : f32
    %56 = vector.broadcast %cst_49 : f32 to vector<328x32xf32>
    %57 = arith.maximumf %55, %56 : vector<328x32xf32>
    %58 = arith.truncf %57 : vector<328x32xf32> to vector<328x32xbf16>
    %c0_50 = arith.constant 0 : index
    %c0_51 = arith.constant 0 : index
    %59 = vector.load %arg4[%c0_50, %c0_51] : memref<32x128xbf16, #tpu.memory_space<vmem>>, vector<32x128xbf16>
    %cst_52 = arith.constant dense<0.000000e+00> : vector<328x128xf32>
    %60 = tpu.matmul %58, %59, %cst_52 {dimension_numbers = #tpu.dot_dimension_numbers<[1], [0], [0], [1], [0, 0, 1, 1], [], []>} : vector<328x32xbf16>, vector<32x128xbf16>, vector<328x128xf32> -> vector<328x128xf32>
    %c0_53 = arith.constant 0 : index
    %c0_54 = arith.constant 0 : index
    %61 = vector.load %arg5[%c0_53, %c0_54] : memref<1x128xf32, #tpu.memory_space<vmem>>, vector<1x128xf32>
    %62 = vector.broadcast %61 : vector<1x128xf32> to vector<328x128xf32>
    %63 = arith.addf %60, %62 : vector<328x128xf32>
    %cst_55 = arith.constant 0.000000e+00 : f32
    %64 = vector.broadcast %cst_55 : f32 to vector<328x128xf32>
    %65 = arith.cmpf olt, %63, %64 : vector<328x128xf32>
    %cst_56 = arith.constant 0.000000e+00 : f32
    %66 = vector.broadcast %cst_56 : f32 to vector<328x128xf32>
    %67 = arith.subf %66, %63 : vector<328x128xf32>
    %68 = arith.select %65, %63, %67 : vector<328x128xi1>, vector<328x128xf32>
    %69 = math.exp %68 : vector<328x128xf32>
    %cst_57 = arith.constant 1.000000e+00 : f32
    %70 = vector.broadcast %cst_57 : f32 to vector<328x128xf32>
    %71 = arith.addf %70, %69 : vector<328x128xf32>
    %cst_58 = arith.constant 1.000000e+00 : f32
    %72 = vector.broadcast %cst_58 : f32 to vector<328x128xf32>
    %73 = arith.divf %72, %71 : vector<328x128xf32>
    %74 = arith.mulf %69, %73 : vector<328x128xf32>
    %75 = arith.select %65, %74, %73 : vector<328x128xi1>, vector<328x128xf32>
    %76 = tpu.iota {dimensions = array<i32: 1>} : vector<328x128xi32>
    %c54_i32 = arith.constant 54 : i32
    %77 = vector.broadcast %c54_i32 : i32 to vector<328x128xi32>
    %78 = arith.cmpi sge, %76, %77 : vector<328x128xi32>
    %c63_i32 = arith.constant 63 : i32
    %79 = vector.broadcast %c63_i32 : i32 to vector<328x128xi32>
    %80 = arith.cmpi slt, %76, %79 : vector<328x128xi32>
    %81 = arith.andi %78, %80 : vector<328x128xi1>
    %82 = arith.select %81, %75, %63 : vector<328x128xi1>, vector<328x128xf32>
    %c0_59 = arith.constant 0 : index
    %c0_60 = arith.constant 0 : index
    %c0_61 = arith.constant 0 : index
    %83 = vector.load %arg6[%c0_59, %c0_60, %c0_61] : memref<1x328x128xf32, #tpu.memory_space<vmem>>, vector<1x328x128xf32>
    %84 = vector.shape_cast %83 : vector<1x328x128xf32> to vector<328x128xf32>
    %85 = vector.shape_cast %82 : vector<328x128xf32> to vector<1x328x128xf32>
    tpu.vector_store %arg6[%c0_59, %c0_60, %c0_61], %85 {strides = array<i32>} : memref<1x328x128xf32, #tpu.memory_space<vmem>>, vector<1x328x128xf32>,
    return
  }
  func.func @transform_0(%arg0: i32) -> (i32, i32, i32) {
    %c0_i32 = arith.constant 0 : i32
    %c0_i32_0 = arith.constant 0 : i32
    %c0_i32_1 = arith.constant 0 : i32
    return %arg0, %c0_i32, %c0_i32_0 : i32, i32, i32
  }
  func.func @transform_1(%arg0: i32) -> (i32, i32, i32) {
    %c0_i32 = arith.constant 0 : i32
    %c0_i32_0 = arith.constant 0 : i32
    %c0_i32_1 = arith.constant 0 : i32
    %c0_i32_2 = arith.constant 0 : i32
    return %c0_i32, %c0_i32_0, %c0_i32_1 : i32, i32, i32
  }
  func.func @transform_2(%arg0: i32) -> (i32, i32) {
    %c0_i32 = arith.constant 0 : i32
    %c0_i32_0 = arith.constant 0 : i32
    %c0_i32_1 = arith.constant 0 : i32
    return %c0_i32, %c0_i32_0 : i32, i32
  }
  func.func @transform_3(%arg0: i32) -> (i32, i32) {
    %c0_i32 = arith.constant 0 : i32
    %c0_i32_0 = arith.constant 0 : i32
    %c0_i32_1 = arith.constant 0 : i32
    return %c0_i32, %c0_i32_0 : i32, i32
  }
  func.func @transform_4(%arg0: i32) -> (i32, i32) {
    %c0_i32 = arith.constant 0 : i32
    %c0_i32_0 = arith.constant 0 : i32
    %c0_i32_1 = arith.constant 0 : i32
    return %c0_i32, %c0_i32_0 : i32, i32
  }
  func.func @transform_5(%arg0: i32) -> (i32, i32, i32) {
    %c0_i32 = arith.constant 0 : i32
    %c0_i32_0 = arith.constant 0 : i32
    %c0_i32_1 = arith.constant 0 : i32
    return %arg0, %c0_i32, %c0_i32_0 : i32, i32, i32
  }
}

module attributes {stable_mosaic.version = 11 : i64} {
  func.func @_rpn_head_kernel(%arg0: i32, %arg1: memref<1x366x4xbf16, #tpu.memory_space<vmem>>, %arg2: memref<9x4x32xbf16, #tpu.memory_space<vmem>>, %arg3: memref<1x32xf32, #tpu.memory_space<vmem>>, %arg4: memref<32x128xbf16, #tpu.memory_space<vmem>>, %arg5: memref<1x128xf32, #tpu.memory_space<vmem>>, %arg6: memref<1x328x128xf32, #tpu.memory_space<vmem>>) attributes {dimension_semantics = [#tpu.dimension_semantics<parallel>], iteration_bounds = array<i64: 2>, scalar_prefetch = 0 : i64, scratch_operands = 0 : i64, tpu.core_type = #tpu.core_type<tc>, window_params = [{transform_indices = @transform_0, window_bounds = array<i64: 1, 366, 4>}, {pipeline_mode = #tpu.pipeline_mode<synchronous>, transform_indices = @transform_1, window_bounds = array<i64: 9, 4, 32>}, {pipeline_mode = #tpu.pipeline_mode<synchronous>, transform_indices = @transform_2, window_bounds = array<i64: 1, 32>}, {pipeline_mode = #tpu.pipeline_mode<synchronous>, transform_indices = @transform_3, window_bounds = array<i64: 32, 128>}, {pipeline_mode = #tpu.pipeline_mode<synchronous>, transform_indices = @transform_4, window_bounds = array<i64: 1, 128>}, {transform_indices = @transform_5, window_bounds = array<i64: 1, 328, 128>}]} {
    %c0 = arith.constant 0 : index
    %c0_0 = arith.constant 0 : index
    %c0_1 = arith.constant 0 : index
    %0 = vector.load %arg1[%c0, %c0_0, %c0_1] : memref<1x366x4xbf16, #tpu.memory_space<vmem>>, vector<1x328x4xbf16>
    %1 = vector.shape_cast %0 : vector<1x328x4xbf16> to vector<328x4xbf16>
    %c0_2 = arith.constant 0 : index
    %c0_3 = arith.constant 0 : index
    %c0_4 = arith.constant 0 : index
    %2 = vector.load %arg2[%c0_2, %c0_3, %c0_4] : memref<9x4x32xbf16, #tpu.memory_space<vmem>>, vector<1x4x32xbf16>
    %3 = vector.shape_cast %2 : vector<1x4x32xbf16> to vector<4x32xbf16>
    %cst = arith.constant dense<0.000000e+00> : vector<328x32xf32>
    %4 = tpu.matmul %1, %3, %cst {dimension_numbers = #tpu.dot_dimension_numbers<[1], [0], [0], [1], [0, 0, 1, 1], [], []>} : vector<328x4xbf16>, vector<4x32xbf16>, vector<328x32xf32> -> vector<328x32xf32>
    %c0_5 = arith.constant 0 : index
    %c1 = arith.constant 1 : index
    %c0_6 = arith.constant 0 : index
    %5 = vector.load %arg1[%c0_5, %c1, %c0_6] : memref<1x366x4xbf16, #tpu.memory_space<vmem>>, vector<1x328x4xbf16>
    %6 = vector.shape_cast %5 : vector<1x328x4xbf16> to vector<328x4xbf16>
    %c1_7 = arith.constant 1 : index
    %c0_8 = arith.constant 0 : index
    %c0_9 = arith.constant 0 : index
    %7 = vector.load %arg2[%c1_7, %c0_8, %c0_9] : memref<9x4x32xbf16, #tpu.memory_space<vmem>>, vector<1x4x32xbf16>
    %8 = vector.shape_cast %7 : vector<1x4x32xbf16> to vector<4x32xbf16>
    %cst_10 = arith.constant dense<0.000000e+00> : vector<328x32xf32>
    %9 = tpu.matmul %6, %8, %cst_10 {dimension_numbers = #tpu.dot_dimension_numbers<[1], [0], [0], [1], [0, 0, 1, 1], [], []>} : vector<328x4xbf16>, vector<4x32xbf16>, vector<328x32xf32> -> vector<328x32xf32>
    %10 = arith.addf %4, %9 : vector<328x32xf32>
    %c0_11 = arith.constant 0 : index
    %c2 = arith.constant 2 : index
    %c0_12 = arith.constant 0 : index
    %11 = vector.load %arg1[%c0_11, %c2, %c0_12] : memref<1x366x4xbf16, #tpu.memory_space<vmem>>, vector<1x328x4xbf16>
    %12 = vector.shape_cast %11 : vector<1x328x4xbf16> to vector<328x4xbf16>
    %c2_13 = arith.constant 2 : index
    %c0_14 = arith.constant 0 : index
    %c0_15 = arith.constant 0 : index
    %13 = vector.load %arg2[%c2_13, %c0_14, %c0_15] : memref<9x4x32xbf16, #tpu.memory_space<vmem>>, vector<1x4x32xbf16>
    %14 = vector.shape_cast %13 : vector<1x4x32xbf16> to vector<4x32xbf16>
    %cst_16 = arith.constant dense<0.000000e+00> : vector<328x32xf32>
    %15 = tpu.matmul %12, %14, %cst_16 {dimension_numbers = #tpu.dot_dimension_numbers<[1], [0], [0], [1], [0, 0, 1, 1], [], []>} : vector<328x4xbf16>, vector<4x32xbf16>, vector<328x32xf32> -> vector<328x32xf32>
    %16 = arith.addf %10, %15 : vector<328x32xf32>
    %c0_17 = arith.constant 0 : index
    %c18 = arith.constant 18 : index
    %c0_18 = arith.constant 0 : index
    %17 = vector.load %arg1[%c0_17, %c18, %c0_18] : memref<1x366x4xbf16, #tpu.memory_space<vmem>>, vector<1x328x4xbf16>
    %18 = vector.shape_cast %17 : vector<1x328x4xbf16> to vector<328x4xbf16>
    %c3 = arith.constant 3 : index
    %c0_19 = arith.constant 0 : index
    %c0_20 = arith.constant 0 : index
    %19 = vector.load %arg2[%c3, %c0_19, %c0_20] : memref<9x4x32xbf16, #tpu.memory_space<vmem>>, vector<1x4x32xbf16>
    %20 = vector.shape_cast %19 : vector<1x4x32xbf16> to vector<4x32xbf16>
    %cst_21 = arith.constant dense<0.000000e+00> : vector<328x32xf32>
    %21 = tpu.matmul %18, %20, %cst_21 {dimension_numbers = #tpu.dot_dimension_numbers<[1], [0], [0], [1], [0, 0, 1, 1], [], []>} : vector<328x4xbf16>, vector<4x32xbf16>, vector<328x32xf32> -> vector<328x32xf32>
    %22 = arith.addf %16, %21 : vector<328x32xf32>
    %c0_22 = arith.constant 0 : index
    %c19 = arith.constant 19 : index
    %c0_23 = arith.constant 0 : index
    %23 = vector.load %arg1[%c0_22, %c19, %c0_23] : memref<1x366x4xbf16, #tpu.memory_space<vmem>>, vector<1x328x4xbf16>
    %24 = vector.shape_cast %23 : vector<1x328x4xbf16> to vector<328x4xbf16>
    %c4 = arith.constant 4 : index
    %c0_24 = arith.constant 0 : index
    %c0_25 = arith.constant 0 : index
    %25 = vector.load %arg2[%c4, %c0_24, %c0_25] : memref<9x4x32xbf16, #tpu.memory_space<vmem>>, vector<1x4x32xbf16>
    %26 = vector.shape_cast %25 : vector<1x4x32xbf16> to vector<4x32xbf16>
    %cst_26 = arith.constant dense<0.000000e+00> : vector<328x32xf32>
    %27 = tpu.matmul %24, %26, %cst_26 {dimension_numbers = #tpu.dot_dimension_numbers<[1], [0], [0], [1], [0, 0, 1, 1], [], []>} : vector<328x4xbf16>, vector<4x32xbf16>, vector<328x32xf32> -> vector<328x32xf32>
    %28 = arith.addf %22, %27 : vector<328x32xf32>
    %c0_27 = arith.constant 0 : index
    %c20 = arith.constant 20 : index
    %c0_28 = arith.constant 0 : index
    %29 = vector.load %arg1[%c0_27, %c20, %c0_28] : memref<1x366x4xbf16, #tpu.memory_space<vmem>>, vector<1x328x4xbf16>
    %30 = vector.shape_cast %29 : vector<1x328x4xbf16> to vector<328x4xbf16>
    %c5 = arith.constant 5 : index
    %c0_29 = arith.constant 0 : index
    %c0_30 = arith.constant 0 : index
    %31 = vector.load %arg2[%c5, %c0_29, %c0_30] : memref<9x4x32xbf16, #tpu.memory_space<vmem>>, vector<1x4x32xbf16>
    %32 = vector.shape_cast %31 : vector<1x4x32xbf16> to vector<4x32xbf16>
    %cst_31 = arith.constant dense<0.000000e+00> : vector<328x32xf32>
    %33 = tpu.matmul %30, %32, %cst_31 {dimension_numbers = #tpu.dot_dimension_numbers<[1], [0], [0], [1], [0, 0, 1, 1], [], []>} : vector<328x4xbf16>, vector<4x32xbf16>, vector<328x32xf32> -> vector<328x32xf32>
    %34 = arith.addf %28, %33 : vector<328x32xf32>
    %c0_32 = arith.constant 0 : index
    %c36 = arith.constant 36 : index
    %c0_33 = arith.constant 0 : index
    %35 = vector.load %arg1[%c0_32, %c36, %c0_33] : memref<1x366x4xbf16, #tpu.memory_space<vmem>>, vector<1x328x4xbf16>
    %36 = vector.shape_cast %35 : vector<1x328x4xbf16> to vector<328x4xbf16>
    %c6 = arith.constant 6 : index
    %c0_34 = arith.constant 0 : index
    %c0_35 = arith.constant 0 : index
    %37 = vector.load %arg2[%c6, %c0_34, %c0_35] : memref<9x4x32xbf16, #tpu.memory_space<vmem>>, vector<1x4x32xbf16>
    %38 = vector.shape_cast %37 : vector<1x4x32xbf16> to vector<4x32xbf16>
    %cst_36 = arith.constant dense<0.000000e+00> : vector<328x32xf32>
    %39 = tpu.matmul %36, %38, %cst_36 {dimension_numbers = #tpu.dot_dimension_numbers<[1], [0], [0], [1], [0, 0, 1, 1], [], []>} : vector<328x4xbf16>, vector<4x32xbf16>, vector<328x32xf32> -> vector<328x32xf32>
    %40 = arith.addf %34, %39 : vector<328x32xf32>
    %c0_37 = arith.constant 0 : index
    %c37 = arith.constant 37 : index
    %c0_38 = arith.constant 0 : index
    %41 = vector.load %arg1[%c0_37, %c37, %c0_38] : memref<1x366x4xbf16, #tpu.memory_space<vmem>>, vector<1x328x4xbf16>
    %42 = vector.shape_cast %41 : vector<1x328x4xbf16> to vector<328x4xbf16>
    %c7 = arith.constant 7 : index
    %c0_39 = arith.constant 0 : index
    %c0_40 = arith.constant 0 : index
    %43 = vector.load %arg2[%c7, %c0_39, %c0_40] : memref<9x4x32xbf16, #tpu.memory_space<vmem>>, vector<1x4x32xbf16>
    %44 = vector.shape_cast %43 : vector<1x4x32xbf16> to vector<4x32xbf16>
    %cst_41 = arith.constant dense<0.000000e+00> : vector<328x32xf32>
    %45 = tpu.matmul %42, %44, %cst_41 {dimension_numbers = #tpu.dot_dimension_numbers<[1], [0], [0], [1], [0, 0, 1, 1], [], []>} : vector<328x4xbf16>, vector<4x32xbf16>, vector<328x32xf32> -> vector<328x32xf32>
    %46 = arith.addf %40, %45 : vector<328x32xf32>
    %c0_42 = arith.constant 0 : index
    %c38 = arith.constant 38 : index
    %c0_43 = arith.constant 0 : index
    %47 = vector.load %arg1[%c0_42, %c38, %c0_43] : memref<1x366x4xbf16, #tpu.memory_space<vmem>>, vector<1x328x4xbf16>
    %48 = vector.shape_cast %47 : vector<1x328x4xbf16> to vector<328x4xbf16>
    %c8 = arith.constant 8 : index
    %c0_44 = arith.constant 0 : index
    %c0_45 = arith.constant 0 : index
    %49 = vector.load %arg2[%c8, %c0_44, %c0_45] : memref<9x4x32xbf16, #tpu.memory_space<vmem>>, vector<1x4x32xbf16>
    %50 = vector.shape_cast %49 : vector<1x4x32xbf16> to vector<4x32xbf16>
    %cst_46 = arith.constant dense<0.000000e+00> : vector<328x32xf32>
    %51 = tpu.matmul %48, %50, %cst_46 {dimension_numbers = #tpu.dot_dimension_numbers<[1], [0], [0], [1], [0, 0, 1, 1], [], []>} : vector<328x4xbf16>, vector<4x32xbf16>, vector<328x32xf32> -> vector<328x32xf32>
    %52 = arith.addf %46, %51 : vector<328x32xf32>
    %c0_47 = arith.constant 0 : index
    %c0_48 = arith.constant 0 : index
    %53 = vector.load %arg3[%c0_47, %c0_48] : memref<1x32xf32, #tpu.memory_space<vmem>>, vector<1x32xf32>
    %54 = vector.broadcast %53 : vector<1x32xf32> to vector<328x32xf32>
    %55 = arith.addf %52, %54 : vector<328x32xf32>
    %cst_49 = arith.constant 0.000000e+00 : f32
    %56 = vector.broadcast %cst_49 : f32 to vector<328x32xf32>
    %57 = arith.maximumf %55, %56 : vector<328x32xf32>
    %58 = arith.truncf %57 : vector<328x32xf32> to vector<328x32xbf16>
    %c0_50 = arith.constant 0 : index
    %c0_51 = arith.constant 0 : index
    %59 = vector.load %arg4[%c0_50, %c0_51] : memref<32x128xbf16, #tpu.memory_space<vmem>>, vector<32x128xbf16>
    %cst_52 = arith.constant dense<0.000000e+00> : vector<328x128xf32>
    %60 = tpu.matmul %58, %59, %cst_52 {dimension_numbers = #tpu.dot_dimension_numbers<[1], [0], [0], [1], [0, 0, 1, 1], [], []>} : vector<328x32xbf16>, vector<32x128xbf16>, vector<328x128xf32> -> vector<328x128xf32>
    %c0_53 = arith.constant 0 : index
    %c0_54 = arith.constant 0 : index
    %61 = vector.load %arg5[%c0_53, %c0_54] : memref<1x128xf32, #tpu.memory_space<vmem>>, vector<1x128xf32>
    %62 = vector.broadcast %61 : vector<1x128xf32> to vector<328x128xf32>
    %63 = arith.addf %60, %62 : vector<328x128xf32>
    %cst_55 = arith.constant 0.000000e+00 : f32
    %64 = vector.broadcast %cst_55 : f32 to vector<328x128xf32>
    %65 = arith.cmpf olt, %63, %64 : vector<328x128xf32>
    %cst_56 = arith.constant 0.000000e+00 : f32
    %66 = vector.broadcast %cst_56 : f32 to vector<328x128xf32>
    %67 = arith.subf %66, %63 : vector<328x128xf32>
    %68 = arith.select %65, %63, %67 : vector<328x128xi1>, vector<328x128xf32>
    %69 = math.exp %68 : vector<328x128xf32>
    %cst_57 = arith.constant 1.000000e+00 : f32
    %70 = vector.broadcast %cst_57 : f32 to vector<328x128xf32>
    %71 = arith.addf %70, %69 : vector<328x128xf32>
    %cst_58 = arith.constant 1.000000e+00 : f32
    %72 = vector.broadcast %cst_58 : f32 to vector<328x128xf32>
    %73 = arith.divf %72, %71 : vector<328x128xf32>
    %74 = arith.mulf %69, %73 : vector<328x128xf32>
    %75 = arith.select %65, %74, %73 : vector<328x128xi1>, vector<328x128xf32>
    %76 = tpu.iota {dimensions = array<i32: 1>} : vector<328x128xi32>
    %c54_i32 = arith.constant 54 : i32
    %77 = vector.broadcast %c54_i32 : i32 to vector<328x128xi32>
    %78 = arith.cmpi sge, %76, %77 : vector<328x128xi32>
    %c63_i32 = arith.constant 63 : i32
    %79 = vector.broadcast %c63_i32 : i32 to vector<328x128xi32>
    %80 = arith.cmpi slt, %76, %79 : vector<328x128xi32>
    %81 = arith.andi %78, %80 : vector<328x128xi1>
    %82 = arith.select %81, %75, %63 : vector<328x128xi1>, vector<328x128xf32>
    %c0_59 = arith.constant 0 : index
    %c0_60 = arith.constant 0 : index
    %c0_61 = arith.constant 0 : index
    %83 = vector.load %arg6[%c0_59, %c0_60, %c0_61] : memref<1x328x128xf32, #tpu.memory_space<vmem>>, vector<1x328x128xf32>
    %84 = vector.shape_cast %83 : vector<1x328x128xf32> to vector<328x128xf32>
    %85 = vector.shape_cast %82 : vector<328x128xf32> to vector<1x328x128xf32>
    tpu.vector_store %arg6[%c0_59, %c0_60, %c0_61], %85 {strides = array<i32>} : memref<1x328x128xf32, #tpu.memory_space<vmem>>, vector<1x328x128xf32>,
    return
  }
  func.func @transform_0(%arg0: i32) -> (i32, i32, i32) {
    %c0_i32 = arith.constant 0 : i32
    %c0_i32_0 = arith.constant 0 : i32
    %c0_i32_1 = arith.constant 0 : i32
    return %arg0, %c0_i32, %c0_i32_0 : i32, i32, i32
  }
  func.func @transform_1(%arg0: i32) -> (i32, i32, i32) {
    %c0_i32 = arith.constant 0 : i32
    %c0_i32_0 = arith.constant 0 : i32
    %c0_i32_1 = arith.constant 0 : i32
    %c0_i32_2 = arith.constant 0 : i32
    return %c0_i32, %c0_i32_0, %c0_i32_1 : i32, i32, i32
  }
  func.func @transform_2(%arg0: i32) -> (i32, i32) {
    %c0_i32 = arith.constant 0 : i32
    %c0_i32_0 = arith.constant 0 : i32
    %c0_i32_1 = arith.constant 0 : i32
    return %c0_i32, %c0_i32_0 : i32, i32
  }
  func.func @transform_3(%arg0: i32) -> (i32, i32) {
    %c0_i32 = arith.constant 0 : i32
    %c0_i32_0 = arith.constant 0 : i32
    %c0_i32_1 = arith.constant 0 : i32
    return %c0_i32, %c0_i32_0 : i32, i32
  }
  func.func @transform_4(%arg0: i32) -> (i32, i32) {
    %c0_i32 = arith.constant 0 : i32
    %c0_i32_0 = arith.constant 0 : i32
    %c0_i32_1 = arith.constant 0 : i32
    return %c0_i32, %c0_i32_0 : i32, i32
  }
  func.func @transform_5(%arg0: i32) -> (i32, i32, i32) {
    %c0_i32 = arith.constant 0 : i32
    %c0_i32_0 = arith.constant 0 : i32
    %c0_i32_1 = arith.constant 0 : i32
    return %arg0, %c0_i32, %c0_i32_0 : i32, i32, i32
  }
}

</mosaic_0001>

<llo_original>
// kernel: tpu_custom_call.1
$region0: #{tpu_custom_call.1}
  #allocation0 [shape = 'u32[]', space=smem, size = 0x4, offset = 0x4, fixed_abs, tag = 'smem constant byte address 0x4 - core index']
  #allocation1 [shape = 'u32[144,128]{1,0:T(1,128)}', space=vmem, size = 0x12000, scoped, tag = 'internal scratch']
  %s0 = inlined_call_operand.vmem [shape: bf16[2,366,4], index: 0, kind: input, shape index: {}]
  %s1 = inlined_call_operand.vmem [shape: bf16[9,4,32], index: 1, kind: input, shape index: {}]
  %s2 = inlined_call_operand.vmem [shape: f32[1,32], index: 2, kind: input, shape index: {}]
  %s3 = inlined_call_operand.vmem [shape: bf16[32,128], index: 3, kind: input, shape index: {}]
  %s4 = inlined_call_operand.vmem [shape: f32[1,128], index: 4, kind: input, shape index: {}]
  %s5 = inlined_call_operand.hbm [shape: f32[2,328,128], index: 5, kind: output, shape index: {}]
  %s6 = sld [smem:[#allocation0]]
  $region53: #{tpu_custom_call.1} parent=0
    _
  %s8 = ssub.s32 1, %s6
  %s9 = scalar_select 0, %s8, %s6
  $region1: #{tpu_custom_call.1} parent=0
    #allocation2 [shape = 'u8[335872]{0}', space=vmem, size = 0x52000, scoped, tag = 'output window, operand 0']
    #allocation3 [shape = 's32[2]{0}', space=sflag, size = 0x8, scoped, tag = 'scoped memory for tpu_custom_call.1']
    %10 = vsyncpa [#allocation3], 0
    %s11 = scalar_lea.sflag [#allocation3], 1
    %12 = vsyncpa %s11, 0
    loop: start=0, step=1, limit=4
    $region2: #{tpu_custom_call.1} parent=1 // loop_pre_header
      _
    $region3: #{tpu_custom_call.1} parent=1 // loop_header
      %s14 = sphi 0, %s18
      %p15 = scmp.ge.s32.totalorder %s14, 4
      %s24 = sphi 0, %s26
      %s27 = sphi 0, %s24
      %s28 = sphi 0, %s27
      %s44 = sphi 0, %s28
      %s48 = sphi 0, %s48
      %s50 = sphi 0, %s48
      %s51 = sphi 0, %s50
      %s65 = sphi 0, %s51
      %s69 = sphi 0, %s69
      %s71 = sphi 0, %s69
      %s72 = sphi 0, %s71
      %s86 = sphi 0, %s72
      %s90 = sphi 0, %s90
      %s92 = sphi 0, %s90
      %s93 = sphi 0, %s92
      %s107 = sphi 0, %s93
      %s111 = sphi 0, %s111
      %s113 = sphi 0, %s111
      %s114 = sphi 0, %s113
      %s128 = sphi 0, %s114
      %s134 = sphi 0, %s136
      %s137 = sphi 0, %s134
      %s138 = sphi 0, %s137
      %s154 = sphi 0, %s138
    $region4: #{tpu_custom_call.1} parent=1 // loop_header_branch
      %17 = sbr.rel (%p15) target = $region8
    $region5: #{tpu_custom_call.1} parent=1 // loop_body
      %s19 = ssub.s32 %s14, 1
      %s20 = ssub.s32 %s14, 2
      %s21 = sadd.s32 %s14, 1
      %s22 = ssub.s32 %s14, %s21
      %p23 = scmp.eq.s32.totalorder %s22, 0
      %s25 = sadd.s32 %s24, 1
      %s26 = scalar_select %p23, %s24, %s25
      %p29 = pneg %p23
      %p30 = scmp.eq.s32.totalorder %s14, 1
      %p31 = por %p29, %p30
      %p32 = scmp.ne.s32.totalorder %s24, %s27
      %p33 = scmp.eq.s32.totalorder %s14, 0
      %p34 = por %p32, %p33
      %p35 = scmp.ne.s32.totalorder %s24, %s27
      %p36 = scmp.eq.s32.totalorder %s19, 1
      %p37 = por %p35, %p36
      %p38 = scmp.ne.s32.totalorder %s27, %s28
      %p39 = scmp.eq.s32.totalorder %s19, 0
      %p40 = por %p38, %p39
      %p41 = scmp.ne.s32.totalorder %s27, %s28
      %p42 = scmp.eq.s32.totalorder %s20, 1
      %p43 = por %p41, %p42
      %p45 = scmp.ne.s32.totalorder %s28, %s44
      %p46 = scmp.eq.s32.totalorder %s20, 0
      %p47 = por %p45, %p46
      %s49 = sadd.s32 %s48, 1
      %p52 = scmp.eq.s32.totalorder %s14, 1
      %p53 = scmp.ne.s32.totalorder %s48, %s50
      %p54 = scmp.eq.s32.totalorder %s14, 0
      %p55 = por %p53, %p54
      %p56 = scmp.ne.s32.totalorder %s48, %s50
      %p57 = scmp.eq.s32.totalorder %s19, 1
      %p58 = por %p56, %p57
      %p59 = scmp.ne.s32.totalorder %s50, %s51
      %p60 = scmp.eq.s32.totalorder %s19, 0
      %p61 = por %p59, %p60
      %p62 = scmp.ne.s32.totalorder %s50, %s51
      %p63 = scmp.eq.s32.totalorder %s20, 1
      %p64 = por %p62, %p63
      %p66 = scmp.ne.s32.totalorder %s51, %s65
      %p67 = scmp.eq.s32.totalorder %s20, 0
      %p68 = por %p66, %p67
      %s70 = sadd.s32 %s69, 1
      %p73 = scmp.eq.s32.totalorder %s14, 1
      %p74 = scmp.ne.s32.totalorder %s69, %s71
      %p75 = scmp.eq.s32.totalorder %s14, 0
      %p76 = por %p74, %p75
      %p77 = scmp.ne.s32.totalorder %s69, %s71
      %p78 = scmp.eq.s32.totalorder %s19, 1
      %p79 = por %p77, %p78
      %p80 = scmp.ne.s32.totalorder %s71, %s72
      %p81 = scmp.eq.s32.totalorder %s19, 0
      %p82 = por %p80, %p81
      %p83 = scmp.ne.s32.totalorder %s71, %s72
      %p84 = scmp.eq.s32.totalorder %s20, 1
      %p85 = por %p83, %p84
      %p87 = scmp.ne.s32.totalorder %s72, %s86
      %p88 = scmp.eq.s32.totalorder %s20, 0
      %p89 = por %p87, %p88
      %s91 = sadd.s32 %s90, 1
      %p94 = scmp.eq.s32.totalorder %s14, 1
      %p95 = scmp.ne.s32.totalorder %s90, %s92
      %p96 = scmp.eq.s32.totalorder %s14, 0
      %p97 = por %p95, %p96
      %p98 = scmp.ne.s32.totalorder %s90, %s92
      %p99 = scmp.eq.s32.totalorder %s19, 1
      %p100 = por %p98, %p99
      %p101 = scmp.ne.s32.totalorder %s92, %s93
      %p102 = scmp.eq.s32.totalorder %s19, 0
      %p103 = por %p101, %p102
      %p104 = scmp.ne.s32.totalorder %s92, %s93
      %p105 = scmp.eq.s32.totalorder %s20, 1
      %p106 = por %p104, %p105
      %p108 = scmp.ne.s32.totalorder %s93, %s107
      %p109 = scmp.eq.s32.totalorder %s20, 0
      %p110 = por %p108, %p109
      %s112 = sadd.s32 %s111, 1
      %p115 = scmp.eq.s32.totalorder %s14, 1
      %p116 = scmp.ne.s32.totalorder %s111, %s113
      %p117 = scmp.eq.s32.totalorder %s14, 0
      %p118 = por %p116, %p117
      %p119 = scmp.ne.s32.totalorder %s111, %s113
      %p120 = scmp.eq.s32.totalorder %s19, 1
      %p121 = por %p119, %p120
      %p122 = scmp.ne.s32.totalorder %s113, %s114
      %p123 = scmp.eq.s32.totalorder %s19, 0
      %p124 = por %p122, %p123
      %p125 = scmp.ne.s32.totalorder %s113, %s114
      %p126 = scmp.eq.s32.totalorder %s20, 1
      %p127 = por %p125, %p126
      %p129 = scmp.ne.s32.totalorder %s114, %s128
      %p130 = scmp.eq.s32.totalorder %s20, 0
      %p131 = por %p129, %p130
      %s132 = ssub.s32 %s14, %s21
      %p133 = scmp.eq.s32.totalorder %s132, 0
      %s135 = sadd.s32 %s134, 1
      %s136 = scalar_select %p133, %s134, %s135
      %p139 = pneg %p133
      %p140 = scmp.eq.s32.totalorder %s14, 1
      %p141 = por %p139, %p140
      %p142 = scmp.ne.s32.totalorder %s134, %s137
      %p143 = scmp.eq.s32.totalorder %s14, 0
      %p144 = por %p142, %p143
      %p145 = scmp.ne.s32.totalorder %s134, %s137
      %p146 = scmp.eq.s32.totalorder %s19, 1
      %p147 = por %p145, %p146
      %p148 = scmp.ne.s32.totalorder %s137, %s138
      %p149 = scmp.eq.s32.totalorder %s19, 0
      %p150 = por %p148, %p149
      %p151 = scmp.ne.s32.totalorder %s137, %s138
      %p152 = scmp.eq.s32.totalorder %s20, 1
      %p153 = por %p151, %p152
      %p155 = scmp.ne.s32.totalorder %s138, %s154
      %p156 = scmp.eq.s32.totalorder %s20, 0
      %p157 = por %p155, %p156
      %p158 = scmp.le.s32.totalorder 1, %s14
      %p159 = scmp.lt.s32.totalorder %s14, 3
      %p160 = pnand %p158, %p159
      %p161 = pneg %p160
      // Predicated region
      $region9: #{tpu_custom_call.1} parent=5 // pred_check
        _
      $region10: #{tpu_custom_call.1} parent=5 // pred_check_branch
        %163 = sbr.rel (%p160) target = $region12
      $region11: #{tpu_custom_call.1} parent=5 // pred_region
        %s164 = ssub.s32 %s14, 1
        // Predicated region
        $region13: #{tpu_custom_call.1} parent=11 // pred_check
          %p165 = pneg %p61
        $region14: #{tpu_custom_call.1} parent=11 // pred_check_branch
          %167 = sbr.rel (%p165) target = $region16
        $region15: #{tpu_custom_call.1} parent=11 // pred_region
          _
        $region16: #{tpu_custom_call.1} parent=11 // pred_fallthru
          _
        // Predicated region
        $region17: #{tpu_custom_call.1} parent=11 // pred_check
          %p168 = pneg %p82
        $region18: #{tpu_custom_call.1} parent=11 // pred_check_branch
          %170 = sbr.rel (%p168) target = $region20
        $region19: #{tpu_custom_call.1} parent=11 // pred_region
          _
        $region20: #{tpu_custom_call.1} parent=11 // pred_fallthru
          _
        // Predicated region
        $region21: #{tpu_custom_call.1} parent=11 // pred_check
          %p171 = pneg %p103
        $region22: #{tpu_custom_call.1} parent=11 // pred_check_branch
          %173 = sbr.rel (%p171) target = $region24
        $region23: #{tpu_custom_call.1} parent=11 // pred_region
          _
        $region24: #{tpu_custom_call.1} parent=11 // pred_fallthru
          _
        // Predicated region
        $region25: #{tpu_custom_call.1} parent=11 // pred_check
          %p174 = pneg %p124
        $region26: #{tpu_custom_call.1} parent=11 // pred_check_branch
          %176 = sbr.rel (%p174) target = $region28
        $region27: #{tpu_custom_call.1} parent=11 // pred_region
          _
        $region28: #{tpu_custom_call.1} parent=11 // pred_fallthru
          _
      $region12: #{tpu_custom_call.1} parent=5 // pred_fallthru
        _
      %p177 = scmp.lt.s32.totalorder %s14, 2
      // Predicated region
      $region29: #{tpu_custom_call.1} parent=5 // pred_check
        %p178 = pneg %p177
      $region30: #{tpu_custom_call.1} parent=5 // pred_check_branch
        %180 = sbr.rel (%p178) target = $region32
      $region31: #{tpu_custom_call.1} parent=5 // pred_region
        // Predicated region
        $region33: #{tpu_custom_call.1} parent=31 // pred_check
          %p181 = pneg %p34
        $region34: #{tpu_custom_call.1} parent=31 // pred_check_branch
          %183 = sbr.rel (%p181) target = $region36
        $region35: #{tpu_custom_call.1} parent=31 // pred_region
          %p184 = scmp.lt.s32.totalorder %s14, 1
          %s185 = scalar_select %p184, %s14, 1
          %s186 = smul.addr %s185, 46
          %s187 = smul.addr %s186, 4
          %s188 = scalar_lea.vmem %s0, %s187
        $region36: #{tpu_custom_call.1} parent=31 // pred_fallthru
          _
      $region32: #{tpu_custom_call.1} parent=5 // pred_fallthru
        _
      %p189 = scmp.le.s32.totalorder 1, %s14
      %p190 = scmp.lt.s32.totalorder %s14, 3
      %p191 = pnand %p189, %p190
      %p192 = pneg %p191
      // Predicated region
      $region37: #{tpu_custom_call.1} parent=5 // pred_check
        _
      $region38: #{tpu_custom_call.1} parent=5 // pred_check_branch
        %194 = sbr.rel (%p191) target = $region40
      $region39: #{tpu_custom_call.1} parent=5 // pred_region
        %s195 = ssub.s32 %s14, 1
        %p196 = scmp.lt.s32.totalorder %s19, 1
        %s197 = scalar_select %p196, %s19, 1
        %s198 = smul.addr %s197, 46
        %s199 = smul.addr %s198, 4
        %s200 = scalar_lea.vmem %s0, %s199
        %p201 = pneg %p40
        %p202 = pneg %p37
        %p203 = pneg %p61
        %p204 = pneg %p58
        %p205 = pneg %p82
        %p206 = pneg %p79
        %p207 = pneg %p103
        %p208 = pneg %p100
        %p209 = pneg %p124
        %p210 = pneg %p121
        %p211 = pneg %p150
        %p212 = pneg %p147
        %s213 = sand.u32 %s137, 1
        %s214 = scalar_lea.sflag [#allocation3], %s213
        %s215 = sand.u32 %s137, 1
        %s216 = smul.addr %s215, 328
        %s217 = scalar_lea.vmem [#allocation2], %s216
        %p218 = scmp.lt.s32.totalorder %s19, 1
        %s219 = scalar_select %p218, %s19, 1
        %s220 = smul.addr %s219, 46
        %s221 = smul.addr %s220, 4
        %s222 = scalar_lea.vmem %s0, %s221
        %v224 = vld [vmem:[%s222] sm:$0xf]
        %v225 = vld [vmem:[%s222 + $0x4] sm:$0xf]
        %v226 = vld [vmem:[%s222 + $0x8] sm:$0xf]
        %v227 = vld [vmem:[%s222 + $0xc] sm:$0xf]
        %v228 = vld [vmem:[%s222 + $0x10] sm:$0xf]
        %v229 = vld [vmem:[%s222 + $0x14] sm:$0xf]
        %v230 = vld [vmem:[%s222 + $0x18] sm:$0xf]
        %v231 = vld [vmem:[%s222 + $0x1c] sm:$0xf]
        %v232 = vld [vmem:[%s222 + $0x20] sm:$0xf]
        %v233 = vld [vmem:[%s222 + $0x24] sm:$0xf]
        %v234 = vld [vmem:[%s222 + $0x28] sm:$0xf]
        %v235 = vld [vmem:[%s222 + $0x2c] sm:$0xf]
        %v236 = vld [vmem:[%s222 + $0x30] sm:$0xf]
        %v237 = vld [vmem:[%s222 + $0x34] sm:$0xf]
        %v238 = vld [vmem:[%s222 + $0x38] sm:$0xf]
        %v239 = vld [vmem:[%s222 + $0x3c] sm:$0xf]
        %v240 = vld [vmem:[%s222 + $0x40] sm:$0xf]
        %v241 = vld [vmem:[%s222 + $0x44] sm:$0xf]
        %v242 = vld [vmem:[%s222 + $0x48] sm:$0xf]
        %v243 = vld [vmem:[%s222 + $0x4c] sm:$0xf]
        %v244 = vld [vmem:[%s222 + $0x50] sm:$0xf]
        %v245 = vld [vmem:[%s222 + $0x54] sm:$0xf]
        %v246 = vld [vmem:[%s222 + $0x58] sm:$0xf]
        %v247 = vld [vmem:[%s222 + $0x5c] sm:$0xf]
        %v248 = vld [vmem:[%s222 + $0x60] sm:$0xf]
        %v249 = vld [vmem:[%s222 + $0x64] sm:$0xf]
        %v250 = vld [vmem:[%s222 + $0x68] sm:$0xf]
        %v251 = vld [vmem:[%s222 + $0x6c] sm:$0xf]
        %v252 = vld [vmem:[%s222 + $0x70] sm:$0xf]
        %v253 = vld [vmem:[%s222 + $0x74] sm:$0xf]
        %v254 = vld [vmem:[%s222 + $0x78] sm:$0xf]
        %v255 = vld [vmem:[%s222 + $0x7c] sm:$0xf]
        %v256 = vld [vmem:[%s222 + $0x80] sm:$0xf]
        %v257 = vld [vmem:[%s222 + $0x84] sm:$0xf]
        %v258 = vld [vmem:[%s222 + $0x88] sm:$0xf]
        %v259 = vld [vmem:[%s222 + $0x8c] sm:$0xf]
        %v260 = vld [vmem:[%s222 + $0x90] sm:$0xf]
        %v261 = vld [vmem:[%s222 + $0x94] sm:$0xf]
        %v262 = vld [vmem:[%s222 + $0x98] sm:$0xf]
        %v263 = vld [vmem:[%s222 + $0x9c] sm:$0xf]
        %v264 = vld [vmem:[%s222 + $0xa0] sm:$0xf]
        %v265 = vld [vmem:[%s1] sm:$0x3]
        %v266 = vld [vmem:[%s222 + $0xa4] sm:$0x1]
        %s267 = scalar_lea.vmem %s1, 2
        %v268 = vld [vmem:[%s267] sm:$0x3]
        %v311 = vunpack.c.l.b16 %v224
        %v312 = vunpack.c.l.b16 %v225
        %v313 = vunpack.c.l.b16 %v226
        %v314 = vunpack.c.l.b16 %v227
        %v315 = vunpack.c.l.b16 %v228
        %v316 = vunpack.c.l.b16 %v229
        %v317 = vunpack.c.l.b16 %v230
        %v318 = vunpack.c.l.b16 %v231
        %v319 = vunpack.c.l.b16 %v232
        %v320 = vunpack.c.l.b16 %v233
        %v321 = vunpack.c.l.b16 %v234
        %v322 = vunpack.c.l.b16 %v235
        %v323 = vunpack.c.l.b16 %v236
        %v324 = vunpack.c.l.b16 %v237
        %v325 = vunpack.c.l.b16 %v238
        %v326 = vunpack.c.l.b16 %v239
        %v327 = vunpack.c.l.b16 %v240
        %v328 = vunpack.c.l.b16 %v241
        %v329 = vunpack.c.l.b16 %v242
        %v330 = vunpack.c.l.b16 %v243
        %v331 = vunpack.c.l.b16 %v244
        %v332 = vunpack.c.l.b16 %v245
        %v333 = vunpack.c.l.b16 %v246
        %v334 = vunpack.c.l.b16 %v247
        %v335 = vunpack.c.l.b16 %v248
        %v336 = vunpack.c.l.b16 %v249
        %v337 = vunpack.c.l.b16 %v250
        %v338 = vunpack.c.l.b16 %v251
        %v339 = vunpack.c.l.b16 %v252
        %v340 = vunpack.c.l.b16 %v253
        %v341 = vunpack.c.l.b16 %v254
        %v342 = vunpack.c.l.b16 %v255
        %v343 = vunpack.c.l.b16 %v256
        %v344 = vunpack.c.l.b16 %v257
        %v345 = vunpack.c.l.b16 %v258
        %v346 = vunpack.c.l.b16 %v259
        %v347 = vunpack.c.l.b16 %v260
        %v348 = vunpack.c.l.b16 %v261
        %v349 = vunpack.c.l.b16 %v262
        %v350 = vunpack.c.l.b16 %v263
        %v351 = vunpack.c.l.b16 %v264
        %v352 = vunpack.c.l.b16 %v266
        %v353 = vpack.c.b16 %v312, %v311
        %v354 = vpack.c.b16 %v314, %v313
        %v355 = vpack.c.b16 %v316, %v315
        %v356 = vpack.c.b16 %v318, %v317
        %v357 = vpack.c.b16 %v320, %v319
        %v358 = vpack.c.b16 %v322, %v321
        %v359 = vpack.c.b16 %v324, %v323
        %v360 = vpack.c.b16 %v326, %v325
        %v361 = vpack.c.b16 %v328, %v327
        %v362 = vpack.c.b16 %v330, %v329
        %v363 = vpack.c.b16 %v332, %v331
        %v364 = vpack.c.b16 %v334, %v333
        %v365 = vpack.c.b16 %v336, %v335
        %v366 = vpack.c.b16 %v338, %v337
        %v367 = vpack.c.b16 %v340, %v339
        %v368 = vpack.c.b16 %v342, %v341
        %v369 = vpack.c.b16 %v344, %v343
        %v370 = vpack.c.b16 %v346, %v345
        %v371 = vpack.c.b16 %v348, %v347
        %v372 = vpack.c.b16 %v350, %v349
        %v373 = vpack.c.b16 %v352, %v351
        %vm374 = vsmask.f32 7424
        %v376 = vshrl.u32 %v353, 16
        %v378 = vshll.u32 %v353, 16
        %v380 = vrot.slane %v378, 1
        %v381 = vor.u32 %v376, %v380
        %v383 = vshll.u32 %v354, 16
        %v385 = vrot.slane %v383, 1
        %v386 = vsel %vm374, %v381, %v385
        %v387 = vshrl.u32 %v354, 16
        %v389 = vor.u32 %v387, %v385
        %v391 = vshll.u32 %v355, 16
        %v393 = vrot.slane %v391, 1
        %v394 = vsel %vm374, %v389, %v393
        %v395 = vshrl.u32 %v355, 16
        %v397 = vor.u32 %v395, %v393
        %v399 = vshll.u32 %v356, 16
        %v401 = vrot.slane %v399, 1
        %v402 = vsel %vm374, %v397, %v401
        %v403 = vshrl.u32 %v356, 16
        %v405 = vor.u32 %v403, %v401
        %v407 = vshll.u32 %v357, 16
        %v409 = vrot.slane %v407, 1
        %v410 = vsel %vm374, %v405, %v409
        %v411 = vshrl.u32 %v357, 16
        %v413 = vor.u32 %v411, %v409
        %v415 = vshll.u32 %v358, 16
        %v417 = vrot.slane %v415, 1
        %v418 = vsel %vm374, %v413, %v417
        %v419 = vshrl.u32 %v358, 16
        %v421 = vor.u32 %v419, %v417
        %v423 = vshll.u32 %v359, 16
        %v425 = vrot.slane %v423, 1
        %v426 = vsel %vm374, %v421, %v425
        %v427 = vshrl.u32 %v359, 16
        %v429 = vor.u32 %v427, %v425
        %v431 = vshll.u32 %v360, 16
        %v433 = vrot.slane %v431, 1
        %v434 = vsel %vm374, %v429, %v433
        %v435 = vshrl.u32 %v360, 16
        %v437 = vor.u32 %v435, %v433
        %v439 = vshll.u32 %v361, 16
        %v441 = vrot.slane %v439, 1
        %v442 = vsel %vm374, %v437, %v441
        %v443 = vshrl.u32 %v361, 16
        %v445 = vor.u32 %v443, %v441
        %v447 = vshll.u32 %v362, 16
        %v449 = vrot.slane %v447, 1
        %v450 = vsel %vm374, %v445, %v449
        %v451 = vshrl.u32 %v362, 16
        %v453 = vor.u32 %v451, %v449
        %v455 = vshll.u32 %v363, 16
        %v457 = vrot.slane %v455, 1
        %v458 = vsel %vm374, %v453, %v457
        %v459 = vshrl.u32 %v363, 16
        %v461 = vor.u32 %v459, %v457
        %v463 = vshll.u32 %v364, 16
        %v465 = vrot.slane %v463, 1
        %v466 = vsel %vm374, %v461, %v465
        %v467 = vshrl.u32 %v364, 16
        %v469 = vor.u32 %v467, %v465
        %v471 = vshll.u32 %v365, 16
        %v473 = vrot.slane %v471, 1
        %v474 = vsel %vm374, %v469, %v473
        %v475 = vshrl.u32 %v365, 16
        %v477 = vor.u32 %v475, %v473
        %v479 = vshll.u32 %v366, 16
        %v481 = vrot.slane %v479, 1
        %v482 = vsel %vm374, %v477, %v481
        %v483 = vshrl.u32 %v366, 16
        %v485 = vor.u32 %v483, %v481
        %v487 = vshll.u32 %v367, 16
        %v489 = vrot.slane %v487, 1
        %v490 = vsel %vm374, %v485, %v489
        %v491 = vshrl.u32 %v367, 16
        %v493 = vor.u32 %v491, %v489
        %v495 = vshll.u32 %v368, 16
        %v497 = vrot.slane %v495, 1
        %v498 = vsel %vm374, %v493, %v497
        %v499 = vshrl.u32 %v368, 16
        %v501 = vor.u32 %v499, %v497
        %v503 = vshll.u32 %v369, 16
        %v505 = vrot.slane %v503, 1
        %v506 = vsel %vm374, %v501, %v505
        %v507 = vshrl.u32 %v369, 16
        %v509 = vor.u32 %v507, %v505
        %v511 = vshll.u32 %v370, 16
        %v513 = vrot.slane %v511, 1
        %v514 = vsel %vm374, %v509, %v513
        %v515 = vshrl.u32 %v370, 16
        %v517 = vor.u32 %v515, %v513
        %v519 = vshll.u32 %v371, 16
        %v521 = vrot.slane %v519, 1
        %v522 = vsel %vm374, %v517, %v521
        %v523 = vshrl.u32 %v371, 16
        %v525 = vor.u32 %v523, %v521
        %v527 = vshll.u32 %v372, 16
        %v529 = vrot.slane %v527, 1
        %v530 = vsel %vm374, %v525, %v529
        %v531 = vshrl.u32 %v372, 16
        %v533 = vor.u32 %v531, %v529
        %v535 = vshll.u32 %v373, 16
        %v537 = vrot.slane %v535, 1
        %v538 = vsel %vm374, %v533, %v537
        %v539 = vshrl.u32 %v373, 16
        %v541 = vor.u32 %v539, %v537
        %vm542 = vcmask 31744
        %v544 = vsel %vm542, %v386, 0
        %v547 = vsel %vm542, %v394, 0
        %v550 = vsel %vm542, %v402, 0
        %v553 = vsel %vm542, %v410, 0
        %v556 = vsel %vm542, %v418, 0
        %v559 = vsel %vm542, %v426, 0
        %v562 = vsel %vm542, %v434, 0
        %v565 = vsel %vm542, %v442, 0
        %v568 = vsel %vm542, %v450, 0
        %v571 = vsel %vm542, %v458, 0
        %v574 = vsel %vm542, %v466, 0
        %v577 = vsel %vm542, %v474, 0
        %v580 = vsel %vm542, %v482, 0
        %v583 = vsel %vm542, %v490, 0
        %v586 = vsel %vm542, %v498, 0
        %v589 = vsel %vm542, %v506, 0
        %v592 = vsel %vm542, %v514, 0
        %v595 = vsel %vm542, %v522, 0
        %v598 = vsel %vm542, %v530, 0
        %v601 = vsel %vm542, %v538, 0
        %v604 = vsel %vm542, %v541, 0
        %vm606 = vcmask 1041408
        %v608 = vsel %vm606, %v268, 0
        %610 = vmatprep.subr.bf16.mxu0 0
        %611 = vmatpush1.bf16.msra.mxu0 %v608
        %612 = vmatprep.subr.bf16.mxu0 0
        %613 = vmatpush1.bf16.msra.mxu0 0
        %614 = vmatprep.subr.bf16.mxu0 0
        %615 = vmatpush1.bf16.msra.mxu0 0
        %616 = vmatprep.subr.bf16.mxu0 0
        %617 = vmatpush1.bf16.msra.mxu0 0
        %618 = vmatprep.subr.bf16.mxu0 0
        %619 = vmatpush1.bf16.msra.mxu0 0
        %620 = vmatprep.subr.bf16.mxu0 0
        %621 = vmatpush1.bf16.msra.mxu0 0
        %622 = vmatprep.subr.bf16.mxu0 0
        %623 = vmatpush1.bf16.msra.mxu0 0
        %624 = vmatprep.subr.bf16.mxu0 0
        %625 = vmatpush1.bf16.msra.mxu0 0
        %626 = vmatprep.subr.bf16.mxu0 0
        %627 = vmatpush1.bf16.msra.mxu0 0
        %628 = vmatprep.subr.bf16.mxu0 0
        %629 = vmatpush1.bf16.msra.mxu0 0
        %630 = vmatprep.subr.bf16.mxu0 0
        %631 = vmatpush1.bf16.msra.mxu0 0
        %632 = vmatprep.subr.bf16.mxu0 0
        %633 = vmatpush1.bf16.msra.mxu0 0
        %634 = vmatprep.subr.bf16.mxu0 0
        %635 = vmatpush1.bf16.msra.mxu0 0
        %636 = vmatprep.subr.bf16.mxu0 0
        %637 = vmatpush1.bf16.msra.mxu0 0
        %638 = vmatprep.subr.bf16.mxu0 0
        %639 = vmatpush1.bf16.msra.mxu0 0
        %640 = vmatprep.subr.bf16.mxu0 0
        %641 = vmatpush1.bf16.msra.mxu0 0
        %642 = vmatprep.mubr.bf16.mxu0 0
        %643 = vmatmul.mubr.bf16.gmra.mrb[0].mxu0 %v544
        %v644 = vpop.f32.mrb[0].mxu0
        %v645 = vadd.f32 0.0, %v644
        %v646 = vpop.f32.mrb[0].mxu0
        %v647 = vpop.f32.mrb[0].mxu0
        %v648 = vadd.f32 0.0, %v647
        %v649 = vpop.f32.mrb[0].mxu0
        %650 = vmatprep.mubr.bf16.mxu0 0
        %651 = vmatmul.mubr.bf16.gmra.mrb[0].mxu0 %v547
        %v652 = vpop.f32.mrb[0].mxu0
        %v653 = vadd.f32 0.0, %v652
        %v654 = vpop.f32.mrb[0].mxu0
        %v655 = vpop.f32.mrb[0].mxu0
        %v656 = vadd.f32 0.0, %v655
        %v657 = vpop.f32.mrb[0].mxu0
        %658 = vmatprep.mubr.bf16.mxu0 0
        %659 = vmatmul.mubr.bf16.gmra.mrb[0].mxu0 %v550
        %v660 = vpop.f32.mrb[0].mxu0
        %v661 = vadd.f32 0.0, %v660
        %v662 = vpop.f32.mrb[0].mxu0
        %v663 = vpop.f32.mrb[0].mxu0
        %v664 = vadd.f32 0.0, %v663
        %v665 = vpop.f32.mrb[0].mxu0
        %666 = vmatprep.mubr.bf16.mxu0 0
        %667 = vmatmul.mubr.bf16.gmra.mrb[0].mxu0 %v553
        %v668 = vpop.f32.mrb[0].mxu0
        %v669 = vadd.f32 0.0, %v668
        %v670 = vpop.f32.mrb[0].mxu0
        %v671 = vpop.f32.mrb[0].mxu0
        %v672 = vadd.f32 0.0, %v671
        %v673 = vpop.f32.mrb[0].mxu0
        %674 = vmatprep.mubr.bf16.mxu0 0
        %675 = vmatmul.mubr.bf16.gmra.mrb[0].mxu0 %v556
        %v676 = vpop.f32.mrb[0].mxu0
        %v677 = vadd.f32 0.0, %v676
        %v678 = vpop.f32.mrb[0].mxu0
        %v679 = vpop.f32.mrb[0].mxu0
        %v680 = vadd.f32 0.0, %v679
        %v681 = vpop.f32.mrb[0].mxu0
        %682 = vmatprep.mubr.bf16.mxu0 0
        %683 = vmatmul.mubr.bf16.gmra.mrb[0].mxu0 %v559
        %v684 = vpop.f32.mrb[0].mxu0
        %v685 = vadd.f32 0.0, %v684
        %v686 = vpop.f32.mrb[0].mxu0
        %v687 = vpop.f32.mrb[0].mxu0
        %v688 = vadd.f32 0.0, %v687
        %v689 = vpop.f32.mrb[0].mxu0
        %690 = vmatprep.mubr.bf16.mxu0 0
        %691 = vmatmul.mubr.bf16.gmra.mrb[0].mxu0 %v562
        %v692 = vpop.f32.mrb[0].mxu0
        %v693 = vadd.f32 0.0, %v692
        %v694 = vpop.f32.mrb[0].mxu0
        %v695 = vpop.f32.mrb[0].mxu0
        %v696 = vadd.f32 0.0, %v695
        %v697 = vpop.f32.mrb[0].mxu0
        %698 = vmatprep.mubr.bf16.mxu0 0
        %699 = vmatmul.mubr.bf16.gmra.mrb[0].mxu0 %v565
        %v700 = vpop.f32.mrb[0].mxu0
        %v701 = vadd.f32 0.0, %v700
        %v702 = vpop.f32.mrb[0].mxu0
        %v703 = vpop.f32.mrb[0].mxu0
        %v704 = vadd.f32 0.0, %v703
        %v705 = vpop.f32.mrb[0].mxu0
        %706 = vmatprep.mubr.bf16.mxu0 0
        %707 = vmatmul.mubr.bf16.gmra.mrb[0].mxu0 %v568
        %v708 = vpop.f32.mrb[0].mxu0
        %v709 = vadd.f32 0.0, %v708
        %v710 = vpop.f32.mrb[0].mxu0
        %v711 = vpop.f32.mrb[0].mxu0
        %v712 = vadd.f32 0.0, %v711
        %v713 = vpop.f32.mrb[0].mxu0
        %714 = vmatprep.mubr.bf16.mxu0 0
        %715 = vmatmul.mubr.bf16.gmra.mrb[0].mxu0 %v571
        %v716 = vpop.f32.mrb[0].mxu0
        %v717 = vadd.f32 0.0, %v716
        %v718 = vpop.f32.mrb[0].mxu0
        %v719 = vpop.f32.mrb[0].mxu0
        %v720 = vadd.f32 0.0, %v719
        %v721 = vpop.f32.mrb[0].mxu0
        %722 = vmatprep.mubr.bf16.mxu0 0
        %723 = vmatmul.mubr.bf16.gmra.mrb[0].mxu0 %v574
        %v724 = vpop.f32.mrb[0].mxu0
        %v725 = vadd.f32 0.0, %v724
        %v726 = vpop.f32.mrb[0].mxu0
        %v727 = vpop.f32.mrb[0].mxu0
        %v728 = vadd.f32 0.0, %v727
        %v729 = vpop.f32.mrb[0].mxu0
        %730 = vmatprep.mubr.bf16.mxu0 0
        %731 = vmatmul.mubr.bf16.gmra.mrb[0].mxu0 %v577
        %v732 = vpop.f32.mrb[0].mxu0
        %v733 = vadd.f32 0.0, %v732
        %v734 = vpop.f32.mrb[0].mxu0
        %v735 = vpop.f32.mrb[0].mxu0
        %v736 = vadd.f32 0.0, %v735
        %v737 = vpop.f32.mrb[0].mxu0
        %738 = vmatprep.mubr.bf16.mxu0 0
        %739 = vmatmul.mubr.bf16.gmra.mrb[0].mxu0 %v580
        %v740 = vpop.f32.mrb[0].mxu0
        %v741 = vadd.f32 0.0, %v740
        %v742 = vpop.f32.mrb[0].mxu0
        %v743 = vpop.f32.mrb[0].mxu0
        %v744 = vadd.f32 0.0, %v743
        %v745 = vpop.f32.mrb[0].mxu0
        %746 = vmatprep.mubr.bf16.mxu0 0
        %747 = vmatmul.mubr.bf16.gmra.mrb[0].mxu0 %v583
        %v748 = vpop.f32.mrb[0].mxu0
        %v749 = vadd.f32 0.0, %v748
        %v750 = vpop.f32.mrb[0].mxu0
        %v751 = vpop.f32.mrb[0].mxu0
        %v752 = vadd.f32 0.0, %v751
        %v753 = vpop.f32.mrb[0].mxu0
        %754 = vmatprep.mubr.bf16.mxu0 0
        %755 = vmatmul.mubr.bf16.gmra.mrb[0].mxu0 %v586
        %v756 = vpop.f32.mrb[0].mxu0
        %v757 = vadd.f32 0.0, %v756
        %v758 = vpop.f32.mrb[0].mxu0
        %v759 = vpop.f32.mrb[0].mxu0
        %v760 = vadd.f32 0.0, %v759
        %v761 = vpop.f32.mrb[0].mxu0
        %762 = vmatprep.mubr.bf16.mxu0 0
        %763 = vmatmul.mubr.bf16.gmra.mrb[0].mxu0 %v589
        %v764 = vpop.f32.mrb[0].mxu0
        %v765 = vadd.f32 0.0, %v764
        %v766 = vpop.f32.mrb[0].mxu0
        %v767 = vpop.f32.mrb[0].mxu0
        %v768 = vadd.f32 0.0, %v767
        %v769 = vpop.f32.mrb[0].mxu0
        %770 = vmatprep.mubr.bf16.mxu0 0
        %771 = vmatmul.mubr.bf16.gmra.mrb[0].mxu0 %v592
        %v772 = vpop.f32.mrb[0].mxu0
        %v773 = vadd.f32 0.0, %v772
        %v774 = vpop.f32.mrb[0].mxu0
        %v775 = vpop.f32.mrb[0].mxu0
        %v776 = vadd.f32 0.0, %v775
        %v777 = vpop.f32.mrb[0].mxu0
        %778 = vmatprep.mubr.bf16.mxu0 0
        %779 = vmatmul.mubr.bf16.gmra.mrb[0].mxu0 %v595
        %v780 = vpop.f32.mrb[0].mxu0
        %v781 = vadd.f32 0.0, %v780
        %v782 = vpop.f32.mrb[0].mxu0
        %v783 = vpop.f32.mrb[0].mxu0
        %v784 = vadd.f32 0.0, %v783
        %v785 = vpop.f32.mrb[0].mxu0
        %786 = vmatprep.mubr.bf16.mxu0 0
        %787 = vmatmul.mubr.bf16.gmra.mrb[0].mxu0 %v598
        %v788 = vpop.f32.mrb[0].mxu0
        %v789 = vadd.f32 0.0, %v788
        %v790 = vpop.f32.mrb[0].mxu0
        %v791 = vpop.f32.mrb[0].mxu0
        %v792 = vadd.f32 0.0, %v791
        %v793 = vpop.f32.mrb[0].mxu0
        %794 = vmatprep.mubr.bf16.mxu0 0
        %795 = vmatmul.mubr.bf16.gmra.mrb[0].mxu0 %v601
        %v796 = vpop.f32.mrb[0].mxu0
        %v797 = vadd.f32 0.0, %v796
        %v798 = vpop.f32.mrb[0].mxu0
        %v799 = vpop.f32.mrb[0].mxu0
        %v800 = vadd.f32 0.0, %v799
        %v801 = vpop.f32.mrb[0].mxu0
        %802 = vmatprep.mubr.bf16.mxu0 0
        %803 = vmatmul.mubr.bf16.gmra.mrb[0].mxu0 %v604
        %v804 = vpop.f32.mrb[0].mxu0
        %v805 = vadd.f32 0.0, %v804
        %v806 = vpop.f32.mrb[0].mxu0
        %v807 = vpop.f32.mrb[0].mxu0
        %v808 = vpop.f32.mrb[0].mxu0
        %809 = vdwg.mxu0
        %v810 = vpack.c.b16 %v351, %v351
        %v811 = vsel %vm542, %v353, 0
        %v813 = vsel %vm542, %v354, 0
        %v815 = vsel %vm542, %v355, 0
        %v817 = vsel %vm542, %v356, 0
        %v819 = vsel %vm542, %v357, 0
        %v821 = vsel %vm542, %v358, 0
        %v823 = vsel %vm542, %v359, 0
        %v825 = vsel %vm542, %v360, 0
        %v827 = vsel %vm542, %v361, 0
        %v829 = vsel %vm542, %v362, 0
        %v831 = vsel %vm542, %v363, 0
        %v833 = vsel %vm542, %v364, 0
        %v835 = vsel %vm542, %v365, 0
        %v837 = vsel %vm542, %v366, 0
        %v839 = vsel %vm542, %v367, 0
        %v841 = vsel %vm542, %v368, 0
        %v843 = vsel %vm542, %v369, 0
        %v845 = vsel %vm542, %v370, 0
        %v847 = vsel %vm542, %v371, 0
        %v849 = vsel %vm542, %v372, 0
        %v852 = vsel %vm542, %v810, 0
        %v855 = vsel %vm606, %v265, 0
        %857 = vmatprep.subr.bf16.mxu0 0
        %858 = vmatpush1.bf16.msra.mxu0 %v855
        %859 = vmatprep.subr.bf16.mxu0 0
        %860 = vmatpush1.bf16.msra.mxu0 0
        %861 = vmatprep.subr.bf16.mxu0 0
        %862 = vmatpush1.bf16.msra.mxu0 0
        %863 = vmatprep.subr.bf16.mxu0 0
        %864 = vmatpush1.bf16.msra.mxu0 0
        %865 = vmatprep.subr.bf16.mxu0 0
        %866 = vmatpush1.bf16.msra.mxu0 0
        %867 = vmatprep.subr.bf16.mxu0 0
        %868 = vmatpush1.bf16.msra.mxu0 0
        %869 = vmatprep.subr.bf16.mxu0 0
        %870 = vmatpush1.bf16.msra.mxu0 0
        %871 = vmatprep.subr.bf16.mxu0 0
        %872 = vmatpush1.bf16.msra.mxu0 0
        %873 = vmatprep.subr.bf16.mxu0 0
        %874 = vmatpush1.bf16.msra.mxu0 0
        %875 = vmatprep.subr.bf16.mxu0 0
        %876 = vmatpush1.bf16.msra.mxu0 0
        %877 = vmatprep.subr.bf16.mxu0 0
        %878 = vmatpush1.bf16.msra.mxu0 0
        %879 = vmatprep.subr.bf16.mxu0 0
        %880 = vmatpush1.bf16.msra.mxu0 0
        %881 = vmatprep.subr.bf16.mxu0 0
        %882 = vmatpush1.bf16.msra.mxu0 0
        %883 = vmatprep.subr.bf16.mxu0 0
        %884 = vmatpush1.bf16.msra.mxu0 0
        %885 = vmatprep.subr.bf16.mxu0 0
        %886 = vmatpush1.bf16.msra.mxu0 0
        %887 = vmatprep.subr.bf16.mxu0 0
        %888 = vmatpush1.bf16.msra.mxu0 0
        %889 = vmatprep.mubr.bf16.mxu0 0
        %890 = vmatmul.mubr.bf16.gmra.mrb[0].mxu0 %v811
        %v891 = vpop.f32.mrb[0].mxu0
        %v892 = vadd.f32 %v645, %v891
        %v893 = vpop.f32.mrb[0].mxu0
        %v894 = vpop.f32.mrb[0].mxu0
        %v895 = vadd.f32 %v648, %v894
        %v896 = vpop.f32.mrb[0].mxu0
        %897 = vmatprep.mubr.bf16.mxu0 0
        %898 = vmatmul.mubr.bf16.gmra.mrb[0].mxu0 %v813
        %v899 = vpop.f32.mrb[0].mxu0
        %v900 = vadd.f32 %v653, %v899
        %v901 = vpop.f32.mrb[0].mxu0
        %v902 = vpop.f32.mrb[0].mxu0
        %v903 = vadd.f32 %v656, %v902
        %v904 = vpop.f32.mrb[0].mxu0
        %905 = vmatprep.mubr.bf16.mxu0 0
        %906 = vmatmul.mubr.bf16.gmra.mrb[0].mxu0 %v815
        %v907 = vpop.f32.mrb[0].mxu0
        %v908 = vadd.f32 %v661, %v907
        %v909 = vpop.f32.mrb[0].mxu0
        %v910 = vpop.f32.mrb[0].mxu0
        %v911 = vadd.f32 %v664, %v910
        %v912 = vpop.f32.mrb[0].mxu0
        %913 = vmatprep.mubr.bf16.mxu0 0
        %914 = vmatmul.mubr.bf16.gmra.mrb[0].mxu0 %v817
        %v915 = vpop.f32.mrb[0].mxu0
        %v916 = vadd.f32 %v669, %v915
        %v917 = vpop.f32.mrb[0].mxu0
        %v918 = vpop.f32.mrb[0].mxu0
        %v919 = vadd.f32 %v672, %v918
        %v920 = vpop.f32.mrb[0].mxu0
        %921 = vmatprep.mubr.bf16.mxu0 0
        %922 = vmatmul.mubr.bf16.gmra.mrb[0].mxu0 %v819
        %v923 = vpop.f32.mrb[0].mxu0
        %v924 = vadd.f32 %v677, %v923
        %v925 = vpop.f32.mrb[0].mxu0
        %v926 = vpop.f32.mrb[0].mxu0
        %v927 = vadd.f32 %v680, %v926
        %v928 = vpop.f32.mrb[0].mxu0
        %929 = vmatprep.mubr.bf16.mxu0 0
        %930 = vmatmul.mubr.bf16.gmra.mrb[0].mxu0 %v821
        %v931 = vpop.f32.mrb[0].mxu0
        %v932 = vadd.f32 %v685, %v931
        %v933 = vpop.f32.mrb[0].mxu0
        %v934 = vpop.f32.mrb[0].mxu0
        %v935 = vadd.f32 %v688, %v934
        %v936 = vpop.f32.mrb[0].mxu0
        %937 = vmatprep.mubr.bf16.mxu0 0
        %938 = vmatmul.mubr.bf16.gmra.mrb[0].mxu0 %v823
        %v939 = vpop.f32.mrb[0].mxu0
        %v940 = vadd.f32 %v693, %v939
        %v941 = vpop.f32.mrb[0].mxu0
        %v942 = vpop.f32.mrb[0].mxu0
        %v943 = vadd.f32 %v696, %v942
        %v944 = vpop.f32.mrb[0].mxu0
        %945 = vmatprep.mubr.bf16.mxu0 0
        %946 = vmatmul.mubr.bf16.gmra.mrb[0].mxu0 %v825
        %v947 = vpop.f32.mrb[0].mxu0
        %v948 = vadd.f32 %v701, %v947
        %v949 = vpop.f32.mrb[0].mxu0
        %v950 = vpop.f32.mrb[0].mxu0
        %v951 = vadd.f32 %v704, %v950
        %v952 = vpop.f32.mrb[0].mxu0
        %953 = vmatprep.mubr.bf16.mxu0 0
        %954 = vmatmul.mubr.bf16.gmra.mrb[0].mxu0 %v827
        %v955 = vpop.f32.mrb[0].mxu0
        %v956 = vadd.f32 %v709, %v955
        %v957 = vpop.f32.mrb[0].mxu0
        %v958 = vpop.f32.mrb[0].mxu0
        %v959 = vadd.f32 %v712, %v958
        %v960 = vpop.f32.mrb[0].mxu0
        %961 = vmatprep.mubr.bf16.mxu0 0
        %962 = vmatmul.mubr.bf16.gmra.mrb[0].mxu0 %v829
        %v963 = vpop.f32.mrb[0].mxu0
        %v964 = vadd.f32 %v717, %v963
        %v965 = vpop.f32.mrb[0].mxu0
        %v966 = vpop.f32.mrb[0].mxu0
        %v967 = vadd.f32 %v720, %v966
        %v968 = vpop.f32.mrb[0].mxu0
        %969 = vmatprep.mubr.bf16.mxu0 0
        %970 = vmatmul.mubr.bf16.gmra.mrb[0].mxu0 %v831
        %v971 = vpop.f32.mrb[0].mxu0
        %v972 = vadd.f32 %v725, %v971
        %v973 = vpop.f32.mrb[0].mxu0
        %v974 = vpop.f32.mrb[0].mxu0
        %v975 = vadd.f32 %v728, %v974
        %v976 = vpop.f32.mrb[0].mxu0
        %977 = vmatprep.mubr.bf16.mxu0 0
        %978 = vmatmul.mubr.bf16.gmra.mrb[0].mxu0 %v833
        %v979 = vpop.f32.mrb[0].mxu0
        %v980 = vadd.f32 %v733, %v979
        %v981 = vpop.f32.mrb[0].mxu0
        %v982 = vpop.f32.mrb[0].mxu0
        %v983 = vadd.f32 %v736, %v982
        %v984 = vpop.f32.mrb[0].mxu0
        %985 = vmatprep.mubr.bf16.mxu0 0
        %986 = vmatmul.mubr.bf16.gmra.mrb[0].mxu0 %v835
        %v987 = vpop.f32.mrb[0].mxu0
        %v988 = vadd.f32 %v741, %v987
        %v989 = vpop.f32.mrb[0].mxu0
        %v990 = vpop.f32.mrb[0].mxu0
        %v991 = vadd.f32 %v744, %v990
        %v992 = vpop.f32.mrb[0].mxu0
        %993 = vmatprep.mubr.bf16.mxu0 0
        %994 = vmatmul.mubr.bf16.gmra.mrb[0].mxu0 %v837
        %v995 = vpop.f32.mrb[0].mxu0
        %v996 = vadd.f32 %v749, %v995
        %v997 = vpop.f32.mrb[0].mxu0
        %v998 = vpop.f32.mrb[0].mxu0
        %v999 = vadd.f32 %v752, %v998
        %v1000 = vpop.f32.mrb[0].mxu0
        %1001 = vmatprep.mubr.bf16.mxu0 0
        %1002 = vmatmul.mubr.bf16.gmra.mrb[0].mxu0 %v839
        %v1003 = vpop.f32.mrb[0].mxu0
        %v1004 = vadd.f32 %v757, %v1003
        %v1005 = vpop.f32.mrb[0].mxu0
        %v1006 = vpop.f32.mrb[0].mxu0
        %v1007 = vadd.f32 %v760, %v1006
        %v1008 = vpop.f32.mrb[0].mxu0
        %1009 = vmatprep.mubr.bf16.mxu0 0
        %1010 = vmatmul.mubr.bf16.gmra.mrb[0].mxu0 %v841
        %v1011 = vpop.f32.mrb[0].mxu0
        %v1012 = vadd.f32 %v765, %v1011
        %v1013 = vpop.f32.mrb[0].mxu0
        %v1014 = vpop.f32.mrb[0].mxu0
        %v1015 = vadd.f32 %v768, %v1014
        %v1016 = vpop.f32.mrb[0].mxu0
        %1017 = vmatprep.mubr.bf16.mxu0 0
        %1018 = vmatmul.mubr.bf16.gmra.mrb[0].mxu0 %v843
        %v1019 = vpop.f32.mrb[0].mxu0
        %v1020 = vadd.f32 %v773, %v1019
        %v1021 = vpop.f32.mrb[0].mxu0
        %v1022 = vpop.f32.mrb[0].mxu0
        %v1023 = vadd.f32 %v776, %v1022
        %v1024 = vpop.f32.mrb[0].mxu0
        %1025 = vmatprep.mubr.bf16.mxu0 0
        %1026 = vmatmul.mubr.bf16.gmra.mrb[0].mxu0 %v845
        %v1027 = vpop.f32.mrb[0].mxu0
        %v1028 = vadd.f32 %v781, %v1027
        %v1029 = vpop.f32.mrb[0].mxu0
        %v1030 = vpop.f32.mrb[0].mxu0
        %v1031 = vadd.f32 %v784, %v1030
        %v1032 = vpop.f32.mrb[0].mxu0
        %1033 = vmatprep.mubr.bf16.mxu0 0
        %1034 = vmatmul.mubr.bf16.gmra.mrb[0].mxu0 %v847
        %v1035 = vpop.f32.mrb[0].mxu0
        %v1036 = vadd.f32 %v789, %v1035
        %v1037 = vpop.f32.mrb[0].mxu0
        %v1038 = vpop.f32.mrb[0].mxu0
        %v1039 = vadd.f32 %v792, %v1038
        %v1040 = vpop.f32.mrb[0].mxu0
        %1041 = vmatprep.mubr.bf16.mxu0 0
        %1042 = vmatmul.mubr.bf16.gmra.mrb[0].mxu0 %v849
        %v1043 = vpop.f32.mrb[0].mxu0
        %v1044 = vadd.f32 %v797, %v1043
        %v1045 = vpop.f32.mrb[0].mxu0
        %v1046 = vpop.f32.mrb[0].mxu0
        %v1047 = vadd.f32 %v800, %v1046
        %v1048 = vpop.f32.mrb[0].mxu0
        %1049 = vmatprep.mubr.bf16.mxu0 0
        %1050 = vmatmul.mubr.bf16.gmra.mrb[0].mxu0 %v852
        %v1051 = vpop.f32.mrb[0].mxu0
        %v1052 = vadd.f32 %v805, %v1051
        %v1053 = vpop.f32.mrb[0].mxu0
        %v1054 = vpop.f32.mrb[0].mxu0
        %v1055 = vpop.f32.mrb[0].mxu0
        %1056 = vdwg.mxu0
        %v1057 = vld [vmem:[%s222] sm:$0xe]
        %s1058 = scalar_lea.vmem %s1, 4
        %v1059 = vld [vmem:[%s1058] sm:$0x3]
        %v1061 = vunpack.c.l.b16 %v1057
        %v1062 = vpack.c.b16 %v312, %v1061
        %vm1063 = vcmask 1046528
        %v1064 = vrot.slane %v1062, 1
        %v1065 = vrot.slane %v354, 1
        %v1066 = vsel %vm1063, %v1064, %v1065
        %v1067 = vrot.slane %v355, 1
        %v1068 = vsel %vm1063, %v1065, %v1067
        %v1069 = vrot.slane %v356, 1
        %v1070 = vsel %vm1063, %v1067, %v1069
        %v1071 = vrot.slane %v357, 1
        %v1072 = vsel %vm1063, %v1069, %v1071
        %v1073 = vrot.slane %v358, 1
        %v1074 = vsel %vm1063, %v1071, %v1073
        %v1075 = vrot.slane %v359, 1
        %v1076 = vsel %vm1063, %v1073, %v1075
        %v1077 = vrot.slane %v360, 1
        %v1078 = vsel %vm1063, %v1075, %v1077
        %v1079 = vrot.slane %v361, 1
        %v1080 = vsel %vm1063, %v1077, %v1079
        %v1081 = vrot.slane %v362, 1
        %v1082 = vsel %vm1063, %v1079, %v1081
        %v1083 = vrot.slane %v363, 1
        %v1084 = vsel %vm1063, %v1081, %v1083
        %v1085 = vrot.slane %v364, 1
        %v1086 = vsel %vm1063, %v1083, %v1085
        %v1087 = vrot.slane %v365, 1
        %v1088 = vsel %vm1063, %v1085, %v1087
        %v1089 = vrot.slane %v366, 1
        %v1090 = vsel %vm1063, %v1087, %v1089
        %v1091 = vrot.slane %v367, 1
        %v1092 = vsel %vm1063, %v1089, %v1091
        %v1093 = vrot.slane %v368, 1
        %v1094 = vsel %vm1063, %v1091, %v1093
        %v1095 = vrot.slane %v369, 1
        %v1096 = vsel %vm1063, %v1093, %v1095
        %v1097 = vrot.slane %v370, 1
        %v1098 = vsel %vm1063, %v1095, %v1097
        %v1099 = vrot.slane %v371, 1
        %v1100 = vsel %vm1063, %v1097, %v1099
        %v1101 = vrot.slane %v372, 1
        %v1102 = vsel %vm1063, %v1099, %v1101
        %v1103 = vrot.slane %v373, 1
        %v1104 = vsel %vm1063, %v1101, %v1103
        %v1106 = vsel %vm542, %v1066, 0
        %v1109 = vsel %vm542, %v1068, 0
        %v1112 = vsel %vm542, %v1070, 0
        %v1115 = vsel %vm542, %v1072, 0
        %v1118 = vsel %vm542, %v1074, 0
        %v1121 = vsel %vm542, %v1076, 0
        %v1124 = vsel %vm542, %v1078, 0
        %v1127 = vsel %vm542, %v1080, 0
        %v1130 = vsel %vm542, %v1082, 0
        %v1133 = vsel %vm542, %v1084, 0
        %v1136 = vsel %vm542, %v1086, 0
        %v1139 = vsel %vm542, %v1088, 0
        %v1142 = vsel %vm542, %v1090, 0
        %v1145 = vsel %vm542, %v1092, 0
        %v1148 = vsel %vm542, %v1094, 0
        %v1151 = vsel %vm542, %v1096, 0
        %v1154 = vsel %vm542, %v1098, 0
        %v1157 = vsel %vm542, %v1100, 0
        %v1160 = vsel %vm542, %v1102, 0
        %v1163 = vsel %vm542, %v1104, 0
        %v1166 = vsel %vm542, %v1103, 0
        %v1169 = vsel %vm606, %v1059, 0
        %1171 = vmatprep.subr.bf16.mxu0 0
        %1172 = vmatpush1.bf16.msra.mxu0 %v1169
        %1173 = vmatprep.subr.bf16.mxu0 0
        %1174 = vmatpush1.bf16.msra.mxu0 0
        %1175 = vmatprep.subr.bf16.mxu0 0
        %1176 = vmatpush1.bf16.msra.mxu0 0
        %1177 = vmatprep.subr.bf16.mxu0 0
        %1178 = vmatpush1.bf16.msra.mxu0 0
        %1179 = vmatprep.subr.bf16.mxu0 0
        %1180 = vmatpush1.bf16.msra.mxu0 0
        %1181 = vmatprep.subr.bf16.mxu0 0
        %1182 = vmatpush1.bf16.msra.mxu0 0
        %1183 = vmatprep.subr.bf16.mxu0 0
        %1184 = vmatpush1.bf16.msra.mxu0 0
        %1185 = vmatprep.subr.bf16.mxu0 0
        %1186 = vmatpush1.bf16.msra.mxu0 0
        %1187 = vmatprep.subr.bf16.mxu0 0
        %1188 = vmatpush1.bf16.msra.mxu0 0
        %1189 = vmatprep.subr.bf16.mxu0 0
        %1190 = vmatpush1.bf16.msra.mxu0 0
        %1191 = vmatprep.subr.bf16.mxu0 0
        %1192 = vmatpush1.bf16.msra.mxu0 0
        %1193 = vmatprep.subr.bf16.mxu0 0
        %1194 = vmatpush1.bf16.msra.mxu0 0
        %1195 = vmatprep.subr.bf16.mxu0 0
        %1196 = vmatpush1.bf16.msra.mxu0 0
        %1197 = vmatprep.subr.bf16.mxu0 0
        %1198 = vmatpush1.bf16.msra.mxu0 0
        %1199 = vmatprep.subr.bf16.mxu0 0
        %1200 = vmatpush1.bf16.msra.mxu0 0
        %1201 = vmatprep.subr.bf16.mxu0 0
        %1202 = vmatpush1.bf16.msra.mxu0 0
        %1203 = vmatprep.mubr.bf16.mxu0 0
        %1204 = vmatmul.mubr.bf16.gmra.mrb[0].mxu0 %v1106
        %v1205 = vpop.f32.mrb[0].mxu0
        %v1206 = vadd.f32 0.0, %v1205
        %v1207 = vpop.f32.mrb[0].mxu0
        %v1208 = vpop.f32.mrb[0].mxu0
        %v1209 = vadd.f32 0.0, %v1208
        %v1210 = vpop.f32.mrb[0].mxu0
        %1211 = vmatprep.mubr.bf16.mxu0 0
        %1212 = vmatmul.mubr.bf16.gmra.mrb[0].mxu0 %v1109
        %v1213 = vpop.f32.mrb[0].mxu0
        %v1214 = vadd.f32 0.0, %v1213
        %v1215 = vpop.f32.mrb[0].mxu0
        %v1216 = vpop.f32.mrb[0].mxu0
        %v1217 = vadd.f32 0.0, %v1216
        %v1218 = vpop.f32.mrb[0].mxu0
        %1219 = vmatprep.mubr.bf16.mxu0 0
        %1220 = vmatmul.mubr.bf16.gmra.mrb[0].mxu0 %v1112
        %v1221 = vpop.f32.mrb[0].mxu0
        %v1222 = vadd.f32 0.0, %v1221
        %v1223 = vpop.f32.mrb[0].mxu0
        %v1224 = vpop.f32.mrb[0].mxu0
        %v1225 = vadd.f32 0.0, %v1224
        %v1226 = vpop.f32.mrb[0].mxu0
        %1227 = vmatprep.mubr.bf16.mxu0 0
        %1228 = vmatmul.mubr.bf16.gmra.mrb[0].mxu0 %v1115
        %v1229 = vpop.f32.mrb[0].mxu0
        %v1230 = vadd.f32 0.0, %v1229
        %v1231 = vpop.f32.mrb[0].mxu0
        %v1232 = vpop.f32.mrb[0].mxu0
        %v1233 = vadd.f32 0.0, %v1232
        %v1234 = vpop.f32.mrb[0].mxu0
        %1235 = vmatprep.mubr.bf16.mxu0 0
        %1236 = vmatmul.mubr.bf16.gmra.mrb[0].mxu0 %v1118
        %v1237 = vpop.f32.mrb[0].mxu0
        %v1238 = vadd.f32 0.0, %v1237
        %v1239 = vpop.f32.mrb[0].mxu0
        %v1240 = vpop.f32.mrb[0].mxu0
        %v1241 = vadd.f32 0.0, %v1240
        %v1242 = vpop.f32.mrb[0].mxu0
        %1243 = vmatprep.mubr.bf16.mxu0 0
        %1244 = vmatmul.mubr.bf16.gmra.mrb[0].mxu0 %v1121
        %v1245 = vpop.f32.mrb[0].mxu0
        %v1246 = vadd.f32 0.0, %v1245
        %v1247 = vpop.f32.mrb[0].mxu0
        %v1248 = vpop.f32.mrb[0].mxu0
        %v1249 = vadd.f32 0.0, %v1248
        %v1250 = vpop.f32.mrb[0].mxu0
        %1251 = vmatprep.mubr.bf16.mxu0 0
        %1252 = vmatmul.mubr.bf16.gmra.mrb[0].mxu0 %v1124
        %v1253 = vpop.f32.mrb[0].mxu0
        %v1254 = vadd.f32 0.0, %v1253
        %v1255 = vpop.f32.mrb[0].mxu0
        %v1256 = vpop.f32.mrb[0].mxu0
        %v1257 = vadd.f32 0.0, %v1256
        %v1258 = vpop.f32.mrb[0].mxu0
        %1259 = vmatprep.mubr.bf16.mxu0 0
        %1260 = vmatmul.mubr.bf16.gmra.mrb[0].mxu0 %v1127
        %v1261 = vpop.f32.mrb[0].mxu0
        %v1262 = vadd.f32 0.0, %v1261
        %v1263 = vpop.f32.mrb[0].mxu0
        %v1264 = vpop.f32.mrb[0].mxu0
        %v1265 = vadd.f32 0.0, %v1264
        %v1266 = vpop.f32.mrb[0].mxu0
        %1267 = vmatprep.mubr.bf16.mxu0 0
        %1268 = vmatmul.mubr.bf16.gmra.mrb[0].mxu0 %v1130
        %v1269 = vpop.f32.mrb[0].mxu0
        %v1270 = vadd.f32 0.0, %v1269
        %v1271 = vpop.f32.mrb[0].mxu0
        %v1272 = vpop.f32.mrb[0].mxu0
        %v1273 = vadd.f32 0.0, %v1272
        %v1274 = vpop.f32.mrb[0].mxu0
        %1275 = vmatprep.mubr.bf16.mxu0 0
        %1276 = vmatmul.mubr.bf16.gmra.mrb[0].mxu0 %v1133
        %v1277 = vpop.f32.mrb[0].mxu0
        %v1278 = vadd.f32 0.0, %v1277
        %v1279 = vpop.f32.mrb[0].mxu0
        %v1280 = vpop.f32.mrb[0].mxu0
        %v1281 = vadd.f32 0.0, %v1280
        %v1282 = vpop.f32.mrb[0].mxu0
        %1283 = vmatprep.mubr.bf16.mxu0 0
        %1284 = vmatmul.mubr.bf16.gmra.mrb[0].mxu0 %v1136
        %v1285 = vpop.f32.mrb[0].mxu0
        %v1286 = vadd.f32 0.0, %v1285
        %v1287 = vpop.f32.mrb[0].mxu0
        %v1288 = vpop.f32.mrb[0].mxu0
        %v1289 = vadd.f32 0.0, %v1288
        %v1290 = vpop.f32.mrb[0].mxu0
        %1291 = vmatprep.mubr.bf16.mxu0 0
        %1292 = vmatmul.mubr.bf16.gmra.mrb[0].mxu0 %v1139
        %v1293 = vpop.f32.mrb[0].mxu0
        %v1294 = vadd.f32 0.0, %v1293
        %v1295 = vpop.f32.mrb[0].mxu0
        %v1296 = vpop.f32.mrb[0].mxu0
        %v1297 = vadd.f32 0.0, %v1296
        %v1298 = vpop.f32.mrb[0].mxu0
        %1299 = vmatprep.mubr.bf16.mxu0 0
        %1300 = vmatmul.mubr.bf16.gmra.mrb[0].mxu0 %v1142
        %v1301 = vpop.f32.mrb[0].mxu0
        %v1302 = vadd.f32 0.0, %v1301
        %v1303 = vpop.f32.mrb[0].mxu0
        %v1304 = vpop.f32.mrb[0].mxu0
        %v1305 = vadd.f32 0.0, %v1304
        %v1306 = vpop.f32.mrb[0].mxu0
        %1307 = vmatprep.mubr.bf16.mxu0 0
        %1308 = vmatmul.mubr.bf16.gmra.mrb[0].mxu0 %v1145
        %v1309 = vpop.f32.mrb[0].mxu0
        %v1310 = vadd.f32 0.0, %v1309
        %v1311 = vpop.f32.mrb[0].mxu0
        %v1312 = vpop.f32.mrb[0].mxu0
        %v1313 = vadd.f32 0.0, %v1312
        %v1314 = vpop.f32.mrb[0].mxu0
        %1315 = vmatprep.mubr.bf16.mxu0 0
        %1316 = vmatmul.mubr.bf16.gmra.mrb[0].mxu0 %v1148
        %v1317 = vpop.f32.mrb[0].mxu0
        %v1318 = vadd.f32 0.0, %v1317
        %v1319 = vpop.f32.mrb[0].mxu0
        %v1320 = vpop.f32.mrb[0].mxu0
        %v1321 = vadd.f32 0.0, %v1320
        %v1322 = vpop.f32.mrb[0].mxu0
        %1323 = vmatprep.mubr.bf16.mxu0 0
        %1324 = vmatmul.mubr.bf16.gmra.mrb[0].mxu0 %v1151
        %v1325 = vpop.f32.mrb[0].mxu0
        %v1326 = vadd.f32 0.0, %v1325
        %v1327 = vpop.f32.mrb[0].mxu0
        %v1328 = vpop.f32.mrb[0].mxu0
        %v1329 = vadd.f32 0.0, %v1328
        %v1330 = vpop.f32.mrb[0].mxu0
        %1331 = vmatprep.mubr.bf16.mxu0 0
        %1332 = vmatmul.mubr.bf16.gmra.mrb[0].mxu0 %v1154
        %v1333 = vpop.f32.mrb[0].mxu0
        %v1334 = vadd.f32 0.0, %v1333
        %v1335 = vpop.f32.mrb[0].mxu0
        %v1336 = vpop.f32.mrb[0].mxu0
        %v1337 = vadd.f32 0.0, %v1336
        %v1338 = vpop.f32.mrb[0].mxu0
        %1339 = vmatprep.mubr.bf16.mxu0 0
        %1340 = vmatmul.mubr.bf16.gmra.mrb[0].mxu0 %v1157
        %v1341 = vpop.f32.mrb[0].mxu0
        %v1342 = vadd.f32 0.0, %v1341
        %v1343 = vpop.f32.mrb[0].mxu0
        %v1344 = vpop.f32.mrb[0].mxu0
        %v1345 = vadd.f32 0.0, %v1344
        %v1346 = vpop.f32.mrb[0].mxu0
        %1347 = vmatprep.mubr.bf16.mxu0 0
        %1348 = vmatmul.mubr.bf16.gmra.mrb[0].mxu0 %v1160
        %v1349 = vpop.f32.mrb[0].mxu0
        %v1350 = vadd.f32 0.0, %v1349
        %v1351 = vpop.f32.mrb[0].mxu0
        %v1352 = vpop.f32.mrb[0].mxu0
        %v1353 = vadd.f32 0.0, %v1352
        %v1354 = vpop.f32.mrb[0].mxu0
        %1355 = vmatprep.mubr.bf16.mxu0 0
        %1356 = vmatmul.mubr.bf16.gmra.mrb[0].mxu0 %v1163
        %v1357 = vpop.f32.mrb[0].mxu0
        %v1358 = vadd.f32 0.0, %v1357
        %v1359 = vpop.f32.mrb[0].mxu0
        %v1360 = vpop.f32.mrb[0].mxu0
        %v1361 = vadd.f32 0.0, %v1360
        %v1362 = vpop.f32.mrb[0].mxu0
        %1363 = vmatprep.mubr.bf16.mxu0 0
        %1364 = vmatmul.mubr.bf16.gmra.mrb[0].mxu0 %v1166
        %v1365 = vpop.f32.mrb[0].mxu0
        %v1366 = vadd.f32 0.0, %v1365
        %v1367 = vpop.f32.mrb[0].mxu0
        %v1368 = vpop.f32.mrb[0].mxu0
        %v1369 = vpop.f32.mrb[0].mxu0
        %1370 = vdwg.mxu0
        %v1371 = vadd.f32 %v892, %v1206
        %v1372 = vadd.f32 %v895, %v1209
        %v1373 = vadd.f32 %v900, %v1214
        %v1374 = vadd.f32 %v903, %v1217
        %v1375 = vadd.f32 %v908, %v1222
        %v1376 = vadd.f32 %v911, %v1225
        %v1377 = vadd.f32 %v916, %v1230
        %v1378 = vadd.f32 %v919, %v1233
        %v1379 = vadd.f32 %v924, %v1238
        %v1380 = vadd.f32 %v927, %v1241
        %v1381 = vadd.f32 %v932, %v1246
        %v1382 = vadd.f32 %v935, %v1249
        %v1383 = vadd.f32 %v940, %v1254
        %v1384 = vadd.f32 %v943, %v1257
        %v1385 = vadd.f32 %v948, %v1262
        %v1386 = vadd.f32 %v951, %v1265
        %v1387 = vadd.f32 %v956, %v1270
        %v1388 = vadd.f32 %v959, %v1273
        %v1389 = vadd.f32 %v964, %v1278
        %v1390 = vadd.f32 %v967, %v1281
        %v1391 = vadd.f32 %v972, %v1286
        %v1392 = vadd.f32 %v975, %v1289
        %v1393 = vadd.f32 %v980, %v1294
        %v1394 = vadd.f32 %v983, %v1297
        %v1395 = vadd.f32 %v988, %v1302
        %v1396 = vadd.f32 %v991, %v1305
        %v1397 = vadd.f32 %v996, %v1310
        %v1398 = vadd.f32 %v999, %v1313
        %v1399 = vadd.f32 %v1004, %v1318
        %v1400 = vadd.f32 %v1007, %v1321
        %v1401 = vadd.f32 %v1012, %v1326
        %v1402 = vadd.f32 %v1015, %v1329
        %v1403 = vadd.f32 %v1020, %v1334
        %v1404 = vadd.f32 %v1023, %v1337
        %v1405 = vadd.f32 %v1028, %v1342
        %v1406 = vadd.f32 %v1031, %v1345
        %v1407 = vadd.f32 %v1036, %v1350
        %v1408 = vadd.f32 %v1039, %v1353
        %v1409 = vadd.f32 %v1044, %v1358
        %v1410 = vadd.f32 %v1047, %v1361
        %v1411 = vadd.f32 %v1052, %v1366
        %v1412 = vld [vmem:[%s222 + $0x8] sm:$0xe]
        %v1413 = vld [vmem:[%s222 + $0xc] sm:$0xf]
        %v1414 = vld [vmem:[%s222 + $0x10] sm:$0xf]
        %v1415 = vld [vmem:[%s222 + $0x14] sm:$0xf]
        %v1416 = vld [vmem:[%s222 + $0x18] sm:$0xf]
        %v1417 = vld [vmem:[%s222 + $0x1c] sm:$0xf]
        %v1418 = vld [vmem:[%s222 + $0x20] sm:$0xf]
        %v1419 = vld [vmem:[%s222 + $0x24] sm:$0xf]
        %v1420 = vld [vmem:[%s222 + $0x28] sm:$0xf]
        %v1421 = vld [vmem:[%s222 + $0x2c] sm:$0xf]
        %v1422 = vld [vmem:[%s222 + $0x30] sm:$0xf]
        %v1423 = vld [vmem:[%s222 + $0x34] sm:$0xf]
        %v1424 = vld [vmem:[%s222 + $0x38] sm:$0xf]
        %v1425 = vld [vmem:[%s222 + $0x3c] sm:$0xf]
        %v1426 = vld [vmem:[%s222 + $0x40] sm:$0xf]
        %v1427 = vld [vmem:[%s222 + $0x44] sm:$0xf]
        %v1428 = vld [vmem:[%s222 + $0x48] sm:$0xf]
        %v1429 = vld [vmem:[%s222 + $0x4c] sm:$0xf]
        %v1430 = vld [vmem:[%s222 + $0x50] sm:$0xf]
        %v1431 = vld [vmem:[%s222 + $0x54] sm:$0xf]
        %v1432 = vld [vmem:[%s222 + $0x58] sm:$0xf]
        %v1433 = vld [vmem:[%s222 + $0x5c] sm:$0xf]
        %v1434 = vld [vmem:[%s222 + $0x60] sm:$0xf]
        %v1435 = vld [vmem:[%s222 + $0x64] sm:$0xf]
        %v1436 = vld [vmem:[%s222 + $0x68] sm:$0xf]
        %v1437 = vld [vmem:[%s222 + $0x6c] sm:$0xf]
        %v1438 = vld [vmem:[%s222 + $0x70] sm:$0xf]
        %v1439 = vld [vmem:[%s222 + $0x74] sm:$0xf]
        %v1440 = vld [vmem:[%s222 + $0x78] sm:$0xf]
        %v1441 = vld [vmem:[%s222 + $0x7c] sm:$0xf]
        %v1442 = vld [vmem:[%s222 + $0x80] sm:$0xf]
        %v1443 = vld [vmem:[%s222 + $0x84] sm:$0xf]
        %v1444 = vld [vmem:[%s222 + $0x88] sm:$0xf]
        %v1445 = vld [vmem:[%s222 + $0x8c] sm:$0xf]
        %v1446 = vld [vmem:[%s222 + $0x90] sm:$0xf]
        %v1447 = vld [vmem:[%s222 + $0x94] sm:$0xf]
        %v1448 = vld [vmem:[%s222 + $0x98] sm:$0xf]
        %v1449 = vld [vmem:[%s222 + $0x9c] sm:$0xf]
        %v1450 = vld [vmem:[%s222 + $0xa0] sm:$0xf]
        %v1451 = vld [vmem:[%s222 + $0xa4] sm:$0xf]
        %v1452 = vld [vmem:[%s222 + $0xa8] sm:$0xf]
        %v1453 = vld [vmem:[%s222 + $0xac] sm:$0x1]
        %s1454 = scalar_lea.vmem %s1, 6
        %v1455 = vld [vmem:[%s1454] sm:$0x3]
        %v1498 = vunpack.c.l.b16 %v1412
        %v1499 = vunpack.c.l.b16 %v1413
        %v1500 = vunpack.c.l.b16 %v1414
        %v1501 = vunpack.c.l.b16 %v1415
        %v1502 = vunpack.c.l.b16 %v1416
        %v1503 = vunpack.c.l.b16 %v1417
        %v1504 = vunpack.c.l.b16 %v1418
        %v1505 = vunpack.c.l.b16 %v1419
        %v1506 = vunpack.c.l.b16 %v1420
        %v1507 = vunpack.c.l.b16 %v1421
        %v1508 = vunpack.c.l.b16 %v1422
        %v1509 = vunpack.c.l.b16 %v1423
        %v1510 = vunpack.c.l.b16 %v1424
        %v1511 = vunpack.c.l.b16 %v1425
        %v1512 = vunpack.c.l.b16 %v1426
        %v1513 = vunpack.c.l.b16 %v1427
        %v1514 = vunpack.c.l.b16 %v1428
        %v1515 = vunpack.c.l.b16 %v1429
        %v1516 = vunpack.c.l.b16 %v1430
        %v1517 = vunpack.c.l.b16 %v1431
        %v1518 = vunpack.c.l.b16 %v1432
        %v1519 = vunpack.c.l.b16 %v1433
        %v1520 = vunpack.c.l.b16 %v1434
        %v1521 = vunpack.c.l.b16 %v1435
        %v1522 = vunpack.c.l.b16 %v1436
        %v1523 = vunpack.c.l.b16 %v1437
        %v1524 = vunpack.c.l.b16 %v1438
        %v1525 = vunpack.c.l.b16 %v1439
        %v1526 = vunpack.c.l.b16 %v1440
        %v1527 = vunpack.c.l.b16 %v1441
        %v1528 = vunpack.c.l.b16 %v1442
        %v1529 = vunpack.c.l.b16 %v1443
        %v1530 = vunpack.c.l.b16 %v1444
        %v1531 = vunpack.c.l.b16 %v1445
        %v1532 = vunpack.c.l.b16 %v1446
        %v1533 = vunpack.c.l.b16 %v1447
        %v1534 = vunpack.c.l.b16 %v1448
        %v1535 = vunpack.c.l.b16 %v1449
        %v1536 = vunpack.c.l.b16 %v1450
        %v1537 = vunpack.c.l.b16 %v1451
        %v1538 = vunpack.c.l.b16 %v1452
        %v1539 = vunpack.c.l.b16 %v1453
        %v1540 = vpack.c.b16 %v1499, %v1498
        %v1541 = vpack.c.b16 %v1501, %v1500
        %v1542 = vpack.c.b16 %v1503, %v1502
        %v1543 = vpack.c.b16 %v1505, %v1504
        %v1544 = vpack.c.b16 %v1507, %v1506
        %v1545 = vpack.c.b16 %v1509, %v1508
        %v1546 = vpack.c.b16 %v1511, %v1510
        %v1547 = vpack.c.b16 %v1513, %v1512
        %v1548 = vpack.c.b16 %v1515, %v1514
        %v1549 = vpack.c.b16 %v1517, %v1516
        %v1550 = vpack.c.b16 %v1519, %v1518
        %v1551 = vpack.c.b16 %v1521, %v1520
        %v1552 = vpack.c.b16 %v1523, %v1522
        %v1553 = vpack.c.b16 %v1525, %v1524
        %v1554 = vpack.c.b16 %v1527, %v1526
        %v1555 = vpack.c.b16 %v1529, %v1528
        %v1556 = vpack.c.b16 %v1531, %v1530
        %v1557 = vpack.c.b16 %v1533, %v1532
        %v1558 = vpack.c.b16 %v1535, %v1534
        %v1559 = vpack.c.b16 %v1537, %v1536
        %v1560 = vpack.c.b16 %v1539, %v1538
        %v1561 = vrot.slane %v1540, 1
        %v1562 = vrot.slane %v1541, 1
        %v1563 = vsel %vm1063, %v1561, %v1562
        %v1564 = vrot.slane %v1542, 1
        %v1565 = vsel %vm1063, %v1562, %v1564
        %v1566 = vrot.slane %v1543, 1
        %v1567 = vsel %vm1063, %v1564, %v1566
        %v1568 = vrot.slane %v1544, 1
        %v1569 = vsel %vm1063, %v1566, %v1568
        %v1570 = vrot.slane %v1545, 1
        %v1571 = vsel %vm1063, %v1568, %v1570
        %v1572 = vrot.slane %v1546, 1
        %v1573 = vsel %vm1063, %v1570, %v1572
        %v1574 = vrot.slane %v1547, 1
        %v1575 = vsel %vm1063, %v1572, %v1574
        %v1576 = vrot.slane %v1548, 1
        %v1577 = vsel %vm1063, %v1574, %v1576
        %v1578 = vrot.slane %v1549, 1
        %v1579 = vsel %vm1063, %v1576, %v1578
        %v1580 = vrot.slane %v1550, 1
        %v1581 = vsel %vm1063, %v1578, %v1580
        %v1582 = vrot.slane %v1551, 1
        %v1583 = vsel %vm1063, %v1580, %v1582
        %v1584 = vrot.slane %v1552, 1
        %v1585 = vsel %vm1063, %v1582, %v1584
        %v1586 = vrot.slane %v1553, 1
        %v1587 = vsel %vm1063, %v1584, %v1586
        %v1588 = vrot.slane %v1554, 1
        %v1589 = vsel %vm1063, %v1586, %v1588
        %v1590 = vrot.slane %v1555, 1
        %v1591 = vsel %vm1063, %v1588, %v1590
        %v1592 = vrot.slane %v1556, 1
        %v1593 = vsel %vm1063, %v1590, %v1592
        %v1594 = vrot.slane %v1557, 1
        %v1595 = vsel %vm1063, %v1592, %v1594
        %v1596 = vrot.slane %v1558, 1
        %v1597 = vsel %vm1063, %v1594, %v1596
        %v1598 = vrot.slane %v1559, 1
        %v1599 = vsel %vm1063, %v1596, %v1598
        %v1600 = vrot.slane %v1560, 1
        %v1601 = vsel %vm1063, %v1598, %v1600
        %v1603 = vsel %vm542, %v1563, 0
        %v1606 = vsel %vm542, %v1565, 0
        %v1609 = vsel %vm542, %v1567, 0
        %v1612 = vsel %vm542, %v1569, 0
        %v1615 = vsel %vm542, %v1571, 0
        %v1618 = vsel %vm542, %v1573, 0
        %v1621 = vsel %vm542, %v1575, 0
        %v1624 = vsel %vm542, %v1577, 0
        %v1627 = vsel %vm542, %v1579, 0
        %v1630 = vsel %vm542, %v1581, 0
        %v1633 = vsel %vm542, %v1583, 0
        %v1636 = vsel %vm542, %v1585, 0
        %v1639 = vsel %vm542, %v1587, 0
        %v1642 = vsel %vm542, %v1589, 0
        %v1645 = vsel %vm542, %v1591, 0
        %v1648 = vsel %vm542, %v1593, 0
        %v1651 = vsel %vm542, %v1595, 0
        %v1654 = vsel %vm542, %v1597, 0
        %v1657 = vsel %vm542, %v1599, 0
        %v1660 = vsel %vm542, %v1601, 0
        %v1663 = vsel %vm542, %v1600, 0
        %v1666 = vsel %vm606, %v1455, 0
        %1668 = vmatprep.subr.bf16.mxu0 0
        %1669 = vmatpush1.bf16.msra.mxu0 %v1666
        %1670 = vmatprep.subr.bf16.mxu0 0
        %1671 = vmatpush1.bf16.msra.mxu0 0
        %1672 = vmatprep.subr.bf16.mxu0 0
        %1673 = vmatpush1.bf16.msra.mxu0 0
        %1674 = vmatprep.subr.bf16.mxu0 0
        %1675 = vmatpush1.bf16.msra.mxu0 0
        %1676 = vmatprep.subr.bf16.mxu0 0
        %1677 = vmatpush1.bf16.msra.mxu0 0
        %1678 = vmatprep.subr.bf16.mxu0 0
        %1679 = vmatpush1.bf16.msra.mxu0 0
        %1680 = vmatprep.subr.bf16.mxu0 0
        %1681 = vmatpush1.bf16.msra.mxu0 0
        %1682 = vmatprep.subr.bf16.mxu0 0
        %1683 = vmatpush1.bf16.msra.mxu0 0
        %1684 = vmatprep.subr.bf16.mxu0 0
        %1685 = vmatpush1.bf16.msra.mxu0 0
        %1686 = vmatprep.subr.bf16.mxu0 0
        %1687 = vmatpush1.bf16.msra.mxu0 0
        %1688 = vmatprep.subr.bf16.mxu0 0
        %1689 = vmatpush1.bf16.msra.mxu0 0
        %1690 = vmatprep.subr.bf16.mxu0 0
        %1691 = vmatpush1.bf16.msra.mxu0 0
        %1692 = vmatprep.subr.bf16.mxu0 0
        %1693 = vmatpush1.bf16.msra.mxu0 0
        %1694 = vmatprep.subr.bf16.mxu0 0
        %1695 = vmatpush1.bf16.msra.mxu0 0
        %1696 = vmatprep.subr.bf16.mxu0 0
        %1697 = vmatpush1.bf16.msra.mxu0 0
        %1698 = vmatprep.subr.bf16.mxu0 0
        %1699 = vmatpush1.bf16.msra.mxu0 0
        %1700 = vmatprep.mubr.bf16.mxu0 0
        %1701 = vmatmul.mubr.bf16.gmra.mrb[0].mxu0 %v1603
        %v1702 = vpop.f32.mrb[0].mxu0
        %v1703 = vadd.f32 0.0, %v1702
        %v1704 = vpop.f32.mrb[0].mxu0
        %v1705 = vpop.f32.mrb[0].mxu0
        %v1706 = vadd.f32 0.0, %v1705
        %v1707 = vpop.f32.mrb[0].mxu0
        %1708 = vmatprep.mubr.bf16.mxu0 0
        %1709 = vmatmul.mubr.bf16.gmra.mrb[0].mxu0 %v1606
        %v1710 = vpop.f32.mrb[0].mxu0
        %v1711 = vadd.f32 0.0, %v1710
        %v1712 = vpop.f32.mrb[0].mxu0
        %v1713 = vpop.f32.mrb[0].mxu0
        %v1714 = vadd.f32 0.0, %v1713
        %v1715 = vpop.f32.mrb[0].mxu0
        %1716 = vmatprep.mubr.bf16.mxu0 0
        %1717 = vmatmul.mubr.bf16.gmra.mrb[0].mxu0 %v1609
        %v1718 = vpop.f32.mrb[0].mxu0
        %v1719 = vadd.f32 0.0, %v1718
        %v1720 = vpop.f32.mrb[0].mxu0
        %v1721 = vpop.f32.mrb[0].mxu0
        %v1722 = vadd.f32 0.0, %v1721
        %v1723 = vpop.f32.mrb[0].mxu0
        %1724 = vmatprep.mubr.bf16.mxu0 0
        %1725 = vmatmul.mubr.bf16.gmra.mrb[0].mxu0 %v1612
        %v1726 = vpop.f32.mrb[0].mxu0
        %v1727 = vadd.f32 0.0, %v1726
        %v1728 = vpop.f32.mrb[0].mxu0
        %v1729 = vpop.f32.mrb[0].mxu0
        %v1730 = vadd.f32 0.0, %v1729
        %v1731 = vpop.f32.mrb[0].mxu0
        %1732 = vmatprep.mubr.bf16.mxu0 0
        %1733 = vmatmul.mubr.bf16.gmra.mrb[0].mxu0 %v1615
        %v1734 = vpop.f32.mrb[0].mxu0
        %v1735 = vadd.f32 0.0, %v1734
        %v1736 = vpop.f32.mrb[0].mxu0
        %v1737 = vpop.f32.mrb[0].mxu0
        %v1738 = vadd.f32 0.0, %v1737
        %v1739 = vpop.f32.mrb[0].mxu0
        %1740 = vmatprep.mubr.bf16.mxu0 0
        %1741 = vmatmul.mubr.bf16.gmra.mrb[0].mxu0 %v1618
        %v1742 = vpop.f32.mrb[0].mxu0
        %v1743 = vadd.f32 0.0, %v1742
        %v1744 = vpop.f32.mrb[0].mxu0
        %v1745 = vpop.f32.mrb[0].mxu0
        %v1746 = vadd.f32 0.0, %v1745
        %v1747 = vpop.f32.mrb[0].mxu0
        %1748 = vmatprep.mubr.bf16.mxu0 0
        %1749 = vmatmul.mubr.bf16.gmra.mrb[0].mxu0 %v1621
        %v1750 = vpop.f32.mrb[0].mxu0
        %v1751 = vadd.f32 0.0, %v1750
        %v1752 = vpop.f32.mrb[0].mxu0
        %v1753 = vpop.f32.mrb[0].mxu0
        %v1754 = vadd.f32 0.0, %v1753
        %v1755 = vpop.f32.mrb[0].mxu0
        %1756 = vmatprep.mubr.bf16.mxu0 0
        %1757 = vmatmul.mubr.bf16.gmra.mrb[0].mxu0 %v1624
        %v1758 = vpop.f32.mrb[0].mxu0
        %v1759 = vadd.f32 0.0, %v1758
        %v1760 = vpop.f32.mrb[0].mxu0
        %v1761 = vpop.f32.mrb[0].mxu0
        %v1762 = vadd.f32 0.0, %v1761
        %v1763 = vpop.f32.mrb[0].mxu0
        %1764 = vmatprep.mubr.bf16.mxu0 0
        %1765 = vmatmul.mubr.bf16.gmra.mrb[0].mxu0 %v1627
        %v1766 = vpop.f32.mrb[0].mxu0
        %v1767 = vadd.f32 0.0, %v1766
        %v1768 = vpop.f32.mrb[0].mxu0
        %v1769 = vpop.f32.mrb[0].mxu0
        %v1770 = vadd.f32 0.0, %v1769
        %v1771 = vpop.f32.mrb[0].mxu0
        %1772 = vmatprep.mubr.bf16.mxu0 0
        %1773 = vmatmul.mubr.bf16.gmra.mrb[0].mxu0 %v1630
        %v1774 = vpop.f32.mrb[0].mxu0
        %v1775 = vadd.f32 0.0, %v1774
        %v1776 = vpop.f32.mrb[0].mxu0
        %v1777 = vpop.f32.mrb[0].mxu0
        %v1778 = vadd.f32 0.0, %v1777
        %v1779 = vpop.f32.mrb[0].mxu0
        %1780 = vmatprep.mubr.bf16.mxu0 0
        %1781 = vmatmul.mubr.bf16.gmra.mrb[0].mxu0 %v1633
        %v1782 = vpop.f32.mrb[0].mxu0
        %v1783 = vadd.f32 0.0, %v1782
        %v1784 = vpop.f32.mrb[0].mxu0
        %v1785 = vpop.f32.mrb[0].mxu0
        %v1786 = vadd.f32 0.0, %v1785
        %v1787 = vpop.f32.mrb[0].mxu0
        %1788 = vmatprep.mubr.bf16.mxu0 0
        %1789 = vmatmul.mubr.bf16.gmra.mrb[0].mxu0 %v1636
        %v1790 = vpop.f32.mrb[0].mxu0
        %v1791 = vadd.f32 0.0, %v1790
        %v1792 = vpop.f32.mrb[0].mxu0
        %v1793 = vpop.f32.mrb[0].mxu0
        %v1794 = vadd.f32 0.0, %v1793
        %v1795 = vpop.f32.mrb[0].mxu0
        %1796 = vmatprep.mubr.bf16.mxu0 0
        %1797 = vmatmul.mubr.bf16.gmra.mrb[0].mxu0 %v1639
        %v1798 = vpop.f32.mrb[0].mxu0
        %v1799 = vadd.f32 0.0, %v1798
        %v1800 = vpop.f32.mrb[0].mxu0
        %v1801 = vpop.f32.mrb[0].mxu0
        %v1802 = vadd.f32 0.0, %v1801
        %v1803 = vpop.f32.mrb[0].mxu0
        %1804 = vmatprep.mubr.bf16.mxu0 0
        %1805 = vmatmul.mubr.bf16.gmra.mrb[0].mxu0 %v1642
        %v1806 = vpop.f32.mrb[0].mxu0
        %v1807 = vadd.f32 0.0, %v1806
        %v1808 = vpop.f32.mrb[0].mxu0
        %v1809 = vpop.f32.mrb[0].mxu0
        %v1810 = vadd.f32 0.0, %v1809
        %v1811 = vpop.f32.mrb[0].mxu0
        %1812 = vmatprep.mubr.bf16.mxu0 0
        %1813 = vmatmul.mubr.bf16.gmra.mrb[0].mxu0 %v1645
        %v1814 = vpop.f32.mrb[0].mxu0
        %v1815 = vadd.f32 0.0, %v1814
        %v1816 = vpop.f32.mrb[0].mxu0
        %v1817 = vpop.f32.mrb[0].mxu0
        %v1818 = vadd.f32 0.0, %v1817
        %v1819 = vpop.f32.mrb[0].mxu0
        %1820 = vmatprep.mubr.bf16.mxu0 0
        %1821 = vmatmul.mubr.bf16.gmra.mrb[0].mxu0 %v1648
        %v1822 = vpop.f32.mrb[0].mxu0
        %v1823 = vadd.f32 0.0, %v1822
        %v1824 = vpop.f32.mrb[0].mxu0
        %v1825 = vpop.f32.mrb[0].mxu0
        %v1826 = vadd.f32 0.0, %v1825
        %v1827 = vpop.f32.mrb[0].mxu0
        %1828 = vmatprep.mubr.bf16.mxu0 0
        %1829 = vmatmul.mubr.bf16.gmra.mrb[0].mxu0 %v1651
        %v1830 = vpop.f32.mrb[0].mxu0
        %v1831 = vadd.f32 0.0, %v1830
        %v1832 = vpop.f32.mrb[0].mxu0
        %v1833 = vpop.f32.mrb[0].mxu0
        %v1834 = vadd.f32 0.0, %v1833
        %v1835 = vpop.f32.mrb[0].mxu0
        %1836 = vmatprep.mubr.bf16.mxu0 0
        %1837 = vmatmul.mubr.bf16.gmra.mrb[0].mxu0 %v1654
        %v1838 = vpop.f32.mrb[0].mxu0
        %v1839 = vadd.f32 0.0, %v1838
        %v1840 = vpop.f32.mrb[0].mxu0
        %v1841 = vpop.f32.mrb[0].mxu0
        %v1842 = vadd.f32 0.0, %v1841
        %v1843 = vpop.f32.mrb[0].mxu0
        %1844 = vmatprep.mubr.bf16.mxu0 0
        %1845 = vmatmul.mubr.bf16.gmra.mrb[0].mxu0 %v1657
        %v1846 = vpop.f32.mrb[0].mxu0
        %v1847 = vadd.f32 0.0, %v1846
        %v1848 = vpop.f32.mrb[0].mxu0
        %v1849 = vpop.f32.mrb[0].mxu0
        %v1850 = vadd.f32 0.0, %v1849
        %v1851 = vpop.f32.mrb[0].mxu0
        %1852 = vmatprep.mubr.bf16.mxu0 0
        %1853 = vmatmul.mubr.bf16.gmra.mrb[0].mxu0 %v1660
        %v1854 = vpop.f32.mrb[0].mxu0
        %v1855 = vadd.f32 0.0, %v1854
        %v1856 = vpop.f32.mrb[0].mxu0
        %v1857 = vpop.f32.mrb[0].mxu0
        %v1858 = vadd.f32 0.0, %v1857
        %v1859 = vpop.f32.mrb[0].mxu0
        %1860 = vmatprep.mubr.bf16.mxu0 0
        %1861 = vmatmul.mubr.bf16.gmra.mrb[0].mxu0 %v1663
        %v1862 = vpop.f32.mrb[0].mxu0
        %v1863 = vadd.f32 0.0, %v1862
        %v1864 = vpop.f32.mrb[0].mxu0
        %v1865 = vpop.f32.mrb[0].mxu0
        %v1866 = vpop.f32.mrb[0].mxu0
        %1867 = vdwg.mxu0
        %v1868 = vadd.f32 %v1371, %v1703
        %v1869 = vadd.f32 %v1372, %v1706
        %v1870 = vadd.f32 %v1373, %v1711
        %v1871 = vadd.f32 %v1374, %v1714
        %v1872 = vadd.f32 %v1375, %v1719
        %v1873 = vadd.f32 %v1376, %v1722
        %v1874 = vadd.f32 %v1377, %v1727
        %v1875 = vadd.f32 %v1378, %v1730
        %v1876 = vadd.f32 %v1379, %v1735
        %v1877 = vadd.f32 %v1380, %v1738
        %v1878 = vadd.f32 %v1381, %v1743
        %v1879 = vadd.f32 %v1382, %v1746
        %v1880 = vadd.f32 %v1383, %v1751
        %v1881 = vadd.f32 %v1384, %v1754
        %v1882 = vadd.f32 %v1385, %v1759
        %v1883 = vadd.f32 %v1386, %v1762
        %v1884 = vadd.f32 %v1387, %v1767
        %v1885 = vadd.f32 %v1388, %v1770
        %v1886 = vadd.f32 %v1389, %v1775
        %v1887 = vadd.f32 %v1390, %v1778
        %v1888 = vadd.f32 %v1391, %v1783
        %v1889 = vadd.f32 %v1392, %v1786
        %v1890 = vadd.f32 %v1393, %v1791
        %v1891 = vadd.f32 %v1394, %v1794
        %v1892 = vadd.f32 %v1395, %v1799
        %v1893 = vadd.f32 %v1396, %v1802
        %v1894 = vadd.f32 %v1397, %v1807
        %v1895 = vadd.f32 %v1398, %v1810
        %v1896 = vadd.f32 %v1399, %v1815
        %v1897 = vadd.f32 %v1400, %v1818
        %v1898 = vadd.f32 %v1401, %v1823
        %v1899 = vadd.f32 %v1402, %v1826
        %v1900 = vadd.f32 %v1403, %v1831
        %v1901 = vadd.f32 %v1404, %v1834
        %v1902 = vadd.f32 %v1405, %v1839
        %v1903 = vadd.f32 %v1406, %v1842
        %v1904 = vadd.f32 %v1407, %v1847
        %v1905 = vadd.f32 %v1408, %v1850
        %v1906 = vadd.f32 %v1409, %v1855
        %v1907 = vadd.f32 %v1410, %v1858
        %v1908 = vadd.f32 %v1411, %v1863
        %v1909 = vld [vmem:[%s222 + $0xac] sm:$0x3]
        %s1910 = scalar_lea.vmem %s1, 8
        %v1911 = vld [vmem:[%s1910] sm:$0x3]
        %v1913 = vunpack.c.l.b16 %v1909
        %v1914 = vpack.c.b16 %v1913, %v1538
        %vm1915 = vsmask.f32 6400
        %v1917 = vshrl.u32 %v1540, 16
        %v1919 = vrot.slane %v1917, 1
        %v1920 = vshll.u32 %v1540, 16
        %v1922 = vrot.slane %v1920, 2
        %v1923 = vor.u32 %v1919, %v1922
        %v1925 = vshrl.u32 %v1541, 16
        %v1927 = vrot.slane %v1925, 1
        %v1928 = vshll.u32 %v1541, 16
        %v1930 = vrot.slane %v1928, 2
        %v1931 = vor.u32 %v1927, %v1930
        %v1932 = vsel %vm1915, %v1923, %v1931
        %v1934 = vshrl.u32 %v1542, 16
        %v1936 = vrot.slane %v1934, 1
        %v1937 = vshll.u32 %v1542, 16
        %v1939 = vrot.slane %v1937, 2
        %v1940 = vor.u32 %v1936, %v1939
        %v1941 = vsel %vm1915, %v1931, %v1940
        %v1943 = vshrl.u32 %v1543, 16
        %v1945 = vrot.slane %v1943, 1
        %v1946 = vshll.u32 %v1543, 16
        %v1948 = vrot.slane %v1946, 2
        %v1949 = vor.u32 %v1945, %v1948
        %v1950 = vsel %vm1915, %v1940, %v1949
        %v1952 = vshrl.u32 %v1544, 16
        %v1954 = vrot.slane %v1952, 1
        %v1955 = vshll.u32 %v1544, 16
        %v1957 = vrot.slane %v1955, 2
        %v1958 = vor.u32 %v1954, %v1957
        %v1959 = vsel %vm1915, %v1949, %v1958
        %v1961 = vshrl.u32 %v1545, 16
        %v1963 = vrot.slane %v1961, 1
        %v1964 = vshll.u32 %v1545, 16
        %v1966 = vrot.slane %v1964, 2
        %v1967 = vor.u32 %v1963, %v1966
        %v1968 = vsel %vm1915, %v1958, %v1967
        %v1970 = vshrl.u32 %v1546, 16
        %v1972 = vrot.slane %v1970, 1
        %v1973 = vshll.u32 %v1546, 16
        %v1975 = vrot.slane %v1973, 2
        %v1976 = vor.u32 %v1972, %v1975
        %v1977 = vsel %vm1915, %v1967, %v1976
        %v1979 = vshrl.u32 %v1547, 16
        %v1981 = vrot.slane %v1979, 1
        %v1982 = vshll.u32 %v1547, 16
        %v1984 = vrot.slane %v1982, 2
        %v1985 = vor.u32 %v1981, %v1984
        %v1986 = vsel %vm1915, %v1976, %v1985
        %v1988 = vshrl.u32 %v1548, 16
        %v1990 = vrot.slane %v1988, 1
        %v1991 = vshll.u32 %v1548, 16
        %v1993 = vrot.slane %v1991, 2
        %v1994 = vor.u32 %v1990, %v1993
        %v1995 = vsel %vm1915, %v1985, %v1994
        %v1997 = vshrl.u32 %v1549, 16
        %v1999 = vrot.slane %v1997, 1
        %v2000 = vshll.u32 %v1549, 16
        %v2002 = vrot.slane %v2000, 2
        %v2003 = vor.u32 %v1999, %v2002
        %v2004 = vsel %vm1915, %v1994, %v2003
        %v2006 = vshrl.u32 %v1550, 16
        %v2008 = vrot.slane %v2006, 1
        %v2009 = vshll.u32 %v1550, 16
        %v2011 = vrot.slane %v2009, 2
        %v2012 = vor.u32 %v2008, %v2011
        %v2013 = vsel %vm1915, %v2003, %v2012
        %v2015 = vshrl.u32 %v1551, 16
        %v2017 = vrot.slane %v2015, 1
        %v2018 = vshll.u32 %v1551, 16
        %v2020 = vrot.slane %v2018, 2
        %v2021 = vor.u32 %v2017, %v2020
        %v2022 = vsel %vm1915, %v2012, %v2021
        %v2024 = vshrl.u32 %v1552, 16
        %v2026 = vrot.slane %v2024, 1
        %v2027 = vshll.u32 %v1552, 16
        %v2029 = vrot.slane %v2027, 2
        %v2030 = vor.u32 %v2026, %v2029
        %v2031 = vsel %vm1915, %v2021, %v2030
        %v2033 = vshrl.u32 %v1553, 16
        %v2035 = vrot.slane %v2033, 1
        %v2036 = vshll.u32 %v1553, 16
        %v2038 = vrot.slane %v2036, 2
        %v2039 = vor.u32 %v2035, %v2038
        %v2040 = vsel %vm1915, %v2030, %v2039
        %v2042 = vshrl.u32 %v1554, 16
        %v2044 = vrot.slane %v2042, 1
        %v2045 = vshll.u32 %v1554, 16
        %v2047 = vrot.slane %v2045, 2
        %v2048 = vor.u32 %v2044, %v2047
        %v2049 = vsel %vm1915, %v2039, %v2048
        %v2051 = vshrl.u32 %v1555, 16
        %v2053 = vrot.slane %v2051, 1
        %v2054 = vshll.u32 %v1555, 16
        %v2056 = vrot.slane %v2054, 2
        %v2057 = vor.u32 %v2053, %v2056
        %v2058 = vsel %vm1915, %v2048, %v2057
        %v2060 = vshrl.u32 %v1556, 16
        %v2062 = vrot.slane %v2060, 1
        %v2063 = vshll.u32 %v1556, 16
        %v2065 = vrot.slane %v2063, 2
        %v2066 = vor.u32 %v2062, %v2065
        %v2067 = vsel %vm1915, %v2057, %v2066
        %v2069 = vshrl.u32 %v1557, 16
        %v2071 = vrot.slane %v2069, 1
        %v2072 = vshll.u32 %v1557, 16
        %v2074 = vrot.slane %v2072, 2
        %v2075 = vor.u32 %v2071, %v2074
        %v2076 = vsel %vm1915, %v2066, %v2075
        %v2078 = vshrl.u32 %v1558, 16
        %v2080 = vrot.slane %v2078, 1
        %v2081 = vshll.u32 %v1558, 16
        %v2083 = vrot.slane %v2081, 2
        %v2084 = vor.u32 %v2080, %v2083
        %v2085 = vsel %vm1915, %v2075, %v2084
        %v2087 = vshrl.u32 %v1559, 16
        %v2089 = vrot.slane %v2087, 1
        %v2090 = vshll.u32 %v1559, 16
        %v2092 = vrot.slane %v2090, 2
        %v2093 = vor.u32 %v2089, %v2092
        %v2094 = vsel %vm1915, %v2084, %v2093
        %v2096 = vshrl.u32 %v1914, 16
        %v2098 = vrot.slane %v2096, 1
        %v2099 = vshll.u32 %v1914, 16
        %v2101 = vrot.slane %v2099, 2
        %v2102 = vor.u32 %v2098, %v2101
        %v2103 = vsel %vm1915, %v2093, %v2102
        %v2105 = vsel %vm542, %v1932, 0
        %v2108 = vsel %vm542, %v1941, 0
        %v2111 = vsel %vm542, %v1950, 0
        %v2114 = vsel %vm542, %v1959, 0
        %v2117 = vsel %vm542, %v1968, 0
        %v2120 = vsel %vm542, %v1977, 0
        %v2123 = vsel %vm542, %v1986, 0
        %v2126 = vsel %vm542, %v1995, 0
        %v2129 = vsel %vm542, %v2004, 0
        %v2132 = vsel %vm542, %v2013, 0
        %v2135 = vsel %vm542, %v2022, 0
        %v2138 = vsel %vm542, %v2031, 0
        %v2141 = vsel %vm542, %v2040, 0
        %v2144 = vsel %vm542, %v2049, 0
        %v2147 = vsel %vm542, %v2058, 0
        %v2150 = vsel %vm542, %v2067, 0
        %v2153 = vsel %vm542, %v2076, 0
        %v2156 = vsel %vm542, %v2085, 0
        %v2159 = vsel %vm542, %v2094, 0
        %v2162 = vsel %vm542, %v2103, 0
        %v2165 = vsel %vm542, %v2102, 0
        %v2168 = vsel %vm606, %v1911, 0
        %2170 = vmatprep.subr.bf16.mxu0 0
        %2171 = vmatpush1.bf16.msra.mxu0 %v2168
        %2172 = vmatprep.subr.bf16.mxu0 0
        %2173 = vmatpush1.bf16.msra.mxu0 0
        %2174 = vmatprep.subr.bf16.mxu0 0
        %2175 = vmatpush1.bf16.msra.mxu0 0
        %2176 = vmatprep.subr.bf16.mxu0 0
        %2177 = vmatpush1.bf16.msra.mxu0 0
        %2178 = vmatprep.subr.bf16.mxu0 0
        %2179 = vmatpush1.bf16.msra.mxu0 0
        %2180 = vmatprep.subr.bf16.mxu0 0
        %2181 = vmatpush1.bf16.msra.mxu0 0
        %2182 = vmatprep.subr.bf16.mxu0 0
        %2183 = vmatpush1.bf16.msra.mxu0 0
        %2184 = vmatprep.subr.bf16.mxu0 0
        %2185 = vmatpush1.bf16.msra.mxu0 0
        %2186 = vmatprep.subr.bf16.mxu0 0
        %2187 = vmatpush1.bf16.msra.mxu0 0
        %2188 = vmatprep.subr.bf16.mxu0 0
        %2189 = vmatpush1.bf16.msra.mxu0 0
        %2190 = vmatprep.subr.bf16.mxu0 0
        %2191 = vmatpush1.bf16.msra.mxu0 0
        %2192 = vmatprep.subr.bf16.mxu0 0
        %2193 = vmatpush1.bf16.msra.mxu0 0
        %2194 = vmatprep.subr.bf16.mxu0 0
        %2195 = vmatpush1.bf16.msra.mxu0 0
        %2196 = vmatprep.subr.bf16.mxu0 0
        %2197 = vmatpush1.bf16.msra.mxu0 0
        %2198 = vmatprep.subr.bf16.mxu0 0
        %2199 = vmatpush1.bf16.msra.mxu0 0
        %2200 = vmatprep.subr.bf16.mxu0 0
        %2201 = vmatpush1.bf16.msra.mxu0 0
        %2202 = vmatprep.mubr.bf16.mxu0 0
        %2203 = vmatmul.mubr.bf16.gmra.mrb[0].mxu0 %v2105
        %v2204 = vpop.f32.mrb[0].mxu0
        %v2205 = vadd.f32 0.0, %v2204
        %v2206 = vpop.f32.mrb[0].mxu0
        %v2207 = vpop.f32.mrb[0].mxu0
        %v2208 = vadd.f32 0.0, %v2207
        %v2209 = vpop.f32.mrb[0].mxu0
        %2210 = vmatprep.mubr.bf16.mxu0 0
        %2211 = vmatmul.mubr.bf16.gmra.mrb[0].mxu0 %v2108
        %v2212 = vpop.f32.mrb[0].mxu0
        %v2213 = vadd.f32 0.0, %v2212
        %v2214 = vpop.f32.mrb[0].mxu0
        %v2215 = vpop.f32.mrb[0].mxu0
        %v2216 = vadd.f32 0.0, %v2215
        %v2217 = vpop.f32.mrb[0].mxu0
        %2218 = vmatprep.mubr.bf16.mxu0 0
        %2219 = vmatmul.mubr.bf16.gmra.mrb[0].mxu0 %v2111
        %v2220 = vpop.f32.mrb[0].mxu0
        %v2221 = vadd.f32 0.0, %v2220
        %v2222 = vpop.f32.mrb[0].mxu0
        %v2223 = vpop.f32.mrb[0].mxu0
        %v2224 = vadd.f32 0.0, %v2223
        %v2225 = vpop.f32.mrb[0].mxu0
        %2226 = vmatprep.mubr.bf16.mxu0 0
        %2227 = vmatmul.mubr.bf16.gmra.mrb[0].mxu0 %v2114
        %v2228 = vpop.f32.mrb[0].mxu0
        %v2229 = vadd.f32 0.0, %v2228
        %v2230 = vpop.f32.mrb[0].mxu0
        %v2231 = vpop.f32.mrb[0].mxu0
        %v2232 = vadd.f32 0.0, %v2231
        %v2233 = vpop.f32.mrb[0].mxu0
        %2234 = vmatprep.mubr.bf16.mxu0 0
        %2235 = vmatmul.mubr.bf16.gmra.mrb[0].mxu0 %v2117
        %v2236 = vpop.f32.mrb[0].mxu0
        %v2237 = vadd.f32 0.0, %v2236
        %v2238 = vpop.f32.mrb[0].mxu0
        %v2239 = vpop.f32.mrb[0].mxu0
        %v2240 = vadd.f32 0.0, %v2239
        %v2241 = vpop.f32.mrb[0].mxu0
        %2242 = vmatprep.mubr.bf16.mxu0 0
        %2243 = vmatmul.mubr.bf16.gmra.mrb[0].mxu0 %v2120
        %v2244 = vpop.f32.mrb[0].mxu0
        %v2245 = vadd.f32 0.0, %v2244
        %v2246 = vpop.f32.mrb[0].mxu0
        %v2247 = vpop.f32.mrb[0].mxu0
        %v2248 = vadd.f32 0.0, %v2247
        %v2249 = vpop.f32.mrb[0].mxu0
        %2250 = vmatprep.mubr.bf16.mxu0 0
        %2251 = vmatmul.mubr.bf16.gmra.mrb[0].mxu0 %v2123
        %v2252 = vpop.f32.mrb[0].mxu0
        %v2253 = vadd.f32 0.0, %v2252
        %v2254 = vpop.f32.mrb[0].mxu0
        %v2255 = vpop.f32.mrb[0].mxu0
        %v2256 = vadd.f32 0.0, %v2255
        %v2257 = vpop.f32.mrb[0].mxu0
        %2258 = vmatprep.mubr.bf16.mxu0 0
        %2259 = vmatmul.mubr.bf16.gmra.mrb[0].mxu0 %v2126
        %v2260 = vpop.f32.mrb[0].mxu0
        %v2261 = vadd.f32 0.0, %v2260
        %v2262 = vpop.f32.mrb[0].mxu0
        %v2263 = vpop.f32.mrb[0].mxu0
        %v2264 = vadd.f32 0.0, %v2263
        %v2265 = vpop.f32.mrb[0].mxu0
        %2266 = vmatprep.mubr.bf16.mxu0 0
        %2267 = vmatmul.mubr.bf16.gmra.mrb[0].mxu0 %v2129
        %v2268 = vpop.f32.mrb[0].mxu0
        %v2269 = vadd.f32 0.0, %v2268
        %v2270 = vpop.f32.mrb[0].mxu0
        %v2271 = vpop.f32.mrb[0].mxu0
        %v2272 = vadd.f32 0.0, %v2271
        %v2273 = vpop.f32.mrb[0].mxu0
        %2274 = vmatprep.mubr.bf16.mxu0 0
        %2275 = vmatmul.mubr.bf16.gmra.mrb[0].mxu0 %v2132
        %v2276 = vpop.f32.mrb[0].mxu0
        %v2277 = vadd.f32 0.0, %v2276
        %v2278 = vpop.f32.mrb[0].mxu0
        %v2279 = vpop.f32.mrb[0].mxu0
        %v2280 = vadd.f32 0.0, %v2279
        %v2281 = vpop.f32.mrb[0].mxu0
        %2282 = vmatprep.mubr.bf16.mxu0 0
        %2283 = vmatmul.mubr.bf16.gmra.mrb[0].mxu0 %v2135
        %v2284 = vpop.f32.mrb[0].mxu0
        %v2285 = vadd.f32 0.0, %v2284
        %v2286 = vpop.f32.mrb[0].mxu0
        %v2287 = vpop.f32.mrb[0].mxu0
        %v2288 = vadd.f32 0.0, %v2287
        %v2289 = vpop.f32.mrb[0].mxu0
        %2290 = vmatprep.mubr.bf16.mxu0 0
        %2291 = vmatmul.mubr.bf16.gmra.mrb[0].mxu0 %v2138
        %v2292 = vpop.f32.mrb[0].mxu0
        %v2293 = vadd.f32 0.0, %v2292
        %v2294 = vpop.f32.mrb[0].mxu0
        %v2295 = vpop.f32.mrb[0].mxu0
        %v2296 = vadd.f32 0.0, %v2295
        %v2297 = vpop.f32.mrb[0].mxu0
        %2298 = vmatprep.mubr.bf16.mxu0 0
        %2299 = vmatmul.mubr.bf16.gmra.mrb[0].mxu0 %v2141
        %v2300 = vpop.f32.mrb[0].mxu0
        %v2301 = vadd.f32 0.0, %v2300
        %v2302 = vpop.f32.mrb[0].mxu0
        %v2303 = vpop.f32.mrb[0].mxu0
        %v2304 = vadd.f32 0.0, %v2303
        %v2305 = vpop.f32.mrb[0].mxu0
        %2306 = vmatprep.mubr.bf16.mxu0 0
        %2307 = vmatmul.mubr.bf16.gmra.mrb[0].mxu0 %v2144
        %v2308 = vpop.f32.mrb[0].mxu0
        %v2309 = vadd.f32 0.0, %v2308
        %v2310 = vpop.f32.mrb[0].mxu0
        %v2311 = vpop.f32.mrb[0].mxu0
        %v2312 = vadd.f32 0.0, %v2311
        %v2313 = vpop.f32.mrb[0].mxu0
        %2314 = vmatprep.mubr.bf16.mxu0 0
        %2315 = vmatmul.mubr.bf16.gmra.mrb[0].mxu0 %v2147
        %v2316 = vpop.f32.mrb[0].mxu0
        %v2317 = vadd.f32 0.0, %v2316
        %v2318 = vpop.f32.mrb[0].mxu0
        %v2319 = vpop.f32.mrb[0].mxu0
        %v2320 = vadd.f32 0.0, %v2319
        %v2321 = vpop.f32.mrb[0].mxu0
        %2322 = vmatprep.mubr.bf16.mxu0 0
        %2323 = vmatmul.mubr.bf16.gmra.mrb[0].mxu0 %v2150
        %v2324 = vpop.f32.mrb[0].mxu0
        %v2325 = vadd.f32 0.0, %v2324
        %v2326 = vpop.f32.mrb[0].mxu0
        %v2327 = vpop.f32.mrb[0].mxu0
        %v2328 = vadd.f32 0.0, %v2327
        %v2329 = vpop.f32.mrb[0].mxu0
        %2330 = vmatprep.mubr.bf16.mxu0 0
        %2331 = vmatmul.mubr.bf16.gmra.mrb[0].mxu0 %v2153
        %v2332 = vpop.f32.mrb[0].mxu0
        %v2333 = vadd.f32 0.0, %v2332
        %v2334 = vpop.f32.mrb[0].mxu0
        %v2335 = vpop.f32.mrb[0].mxu0
        %v2336 = vadd.f32 0.0, %v2335
        %v2337 = vpop.f32.mrb[0].mxu0
        %2338 = vmatprep.mubr.bf16.mxu0 0
        %2339 = vmatmul.mubr.bf16.gmra.mrb[0].mxu0 %v2156
        %v2340 = vpop.f32.mrb[0].mxu0
        %v2341 = vadd.f32 0.0, %v2340
        %v2342 = vpop.f32.mrb[0].mxu0
        %v2343 = vpop.f32.mrb[0].mxu0
        %v2344 = vadd.f32 0.0, %v2343
        %v2345 = vpop.f32.mrb[0].mxu0
        %2346 = vmatprep.mubr.bf16.mxu0 0
        %2347 = vmatmul.mubr.bf16.gmra.mrb[0].mxu0 %v2159
        %v2348 = vpop.f32.mrb[0].mxu0
        %v2349 = vadd.f32 0.0, %v2348
        %v2350 = vpop.f32.mrb[0].mxu0
        %v2351 = vpop.f32.mrb[0].mxu0
        %v2352 = vadd.f32 0.0, %v2351
        %v2353 = vpop.f32.mrb[0].mxu0
        %2354 = vmatprep.mubr.bf16.mxu0 0
        %2355 = vmatmul.mubr.bf16.gmra.mrb[0].mxu0 %v2162
        %v2356 = vpop.f32.mrb[0].mxu0
        %v2357 = vadd.f32 0.0, %v2356
        %v2358 = vpop.f32.mrb[0].mxu0
        %v2359 = vpop.f32.mrb[0].mxu0
        %v2360 = vadd.f32 0.0, %v2359
        %v2361 = vpop.f32.mrb[0].mxu0
        %2362 = vmatprep.mubr.bf16.mxu0 0
        %2363 = vmatmul.mubr.bf16.gmra.mrb[0].mxu0 %v2165
        %v2364 = vpop.f32.mrb[0].mxu0
        %v2365 = vadd.f32 0.0, %v2364
        %v2366 = vpop.f32.mrb[0].mxu0
        %v2367 = vpop.f32.mrb[0].mxu0
        %v2368 = vpop.f32.mrb[0].mxu0
        %2369 = vdwg.mxu0
        %v2370 = vadd.f32 %v1868, %v2205
        %v2371 = vadd.f32 %v1869, %v2208
        %v2372 = vadd.f32 %v1870, %v2213
        %v2373 = vadd.f32 %v1871, %v2216
        %v2374 = vadd.f32 %v1872, %v2221
        %v2375 = vadd.f32 %v1873, %v2224
        %v2376 = vadd.f32 %v1874, %v2229
        %v2377 = vadd.f32 %v1875, %v2232
        %v2378 = vadd.f32 %v1876, %v2237
        %v2379 = vadd.f32 %v1877, %v2240
        %v2380 = vadd.f32 %v1878, %v2245
        %v2381 = vadd.f32 %v1879, %v2248
        %v2382 = vadd.f32 %v1880, %v2253
        %v2383 = vadd.f32 %v1881, %v2256
        %v2384 = vadd.f32 %v1882, %v2261
        %v2385 = vadd.f32 %v1883, %v2264
        %v2386 = vadd.f32 %v1884, %v2269
        %v2387 = vadd.f32 %v1885, %v2272
        %v2388 = vadd.f32 %v1886, %v2277
        %v2389 = vadd.f32 %v1887, %v2280
        %v2390 = vadd.f32 %v1888, %v2285
        %v2391 = vadd.f32 %v1889, %v2288
        %v2392 = vadd.f32 %v1890, %v2293
        %v2393 = vadd.f32 %v1891, %v2296
        %v2394 = vadd.f32 %v1892, %v2301
        %v2395 = vadd.f32 %v1893, %v2304
        %v2396 = vadd.f32 %v1894, %v2309
        %v2397 = vadd.f32 %v1895, %v2312
        %v2398 = vadd.f32 %v1896, %v2317
        %v2399 = vadd.f32 %v1897, %v2320
        %v2400 = vadd.f32 %v1898, %v2325
        %v2401 = vadd.f32 %v1899, %v2328
        %v2402 = vadd.f32 %v1900, %v2333
        %v2403 = vadd.f32 %v1901, %v2336
        %v2404 = vadd.f32 %v1902, %v2341
        %v2405 = vadd.f32 %v1903, %v2344
        %v2406 = vadd.f32 %v1904, %v2349
        %v2407 = vadd.f32 %v1905, %v2352
        %v2408 = vadd.f32 %v1906, %v2357
        %v2409 = vadd.f32 %v1907, %v2360
        %v2410 = vadd.f32 %v1908, %v2365
        %v2411 = vld [vmem:[%s222 + $0x8] sm:$0xc]
        %s2412 = scalar_lea.vmem %s1, 10
        %v2413 = vld [vmem:[%s2412] sm:$0x3]
        %v2415 = vunpack.c.l.b16 %v2411
        %v2416 = vpack.c.b16 %v1499, %v2415
        %vm2417 = vcmask 1045504
        %v2418 = vrot.slane %v2416, 2
        %v2419 = vrot.slane %v1541, 2
        %v2420 = vsel %vm2417, %v2418, %v2419
        %v2421 = vrot.slane %v1542, 2
        %v2422 = vsel %vm2417, %v2419, %v2421
        %v2423 = vrot.slane %v1543, 2
        %v2424 = vsel %vm2417, %v2421, %v2423
        %v2425 = vrot.slane %v1544, 2
        %v2426 = vsel %vm2417, %v2423, %v2425
        %v2427 = vrot.slane %v1545, 2
        %v2428 = vsel %vm2417, %v2425, %v2427
        %v2429 = vrot.slane %v1546, 2
        %v2430 = vsel %vm2417, %v2427, %v2429
        %v2431 = vrot.slane %v1547, 2
        %v2432 = vsel %vm2417, %v2429, %v2431
        %v2433 = vrot.slane %v1548, 2
        %v2434 = vsel %vm2417, %v2431, %v2433
        %v2435 = vrot.slane %v1549, 2
        %v2436 = vsel %vm2417, %v2433, %v2435
        %v2437 = vrot.slane %v1550, 2
        %v2438 = vsel %vm2417, %v2435, %v2437
        %v2439 = vrot.slane %v1551, 2
        %v2440 = vsel %vm2417, %v2437, %v2439
        %v2441 = vrot.slane %v1552, 2
        %v2442 = vsel %vm2417, %v2439, %v2441
        %v2443 = vrot.slane %v1553, 2
        %v2444 = vsel %vm2417, %v2441, %v2443
        %v2445 = vrot.slane %v1554, 2
        %v2446 = vsel %vm2417, %v2443, %v2445
        %v2447 = vrot.slane %v1555, 2
        %v2448 = vsel %vm2417, %v2445, %v2447
        %v2449 = vrot.slane %v1556, 2
        %v2450 = vsel %vm2417, %v2447, %v2449
        %v2451 = vrot.slane %v1557, 2
        %v2452 = vsel %vm2417, %v2449, %v2451
        %v2453 = vrot.slane %v1558, 2
        %v2454 = vsel %vm2417, %v2451, %v2453
        %v2455 = vrot.slane %v1559, 2
        %v2456 = vsel %vm2417, %v2453, %v2455
        %v2457 = vrot.slane %v1914, 2
        %v2458 = vsel %vm2417, %v2455, %v2457
        %v2460 = vsel %vm542, %v2420, 0
        %v2463 = vsel %vm542, %v2422, 0
        %v2466 = vsel %vm542, %v2424, 0
        %v2469 = vsel %vm542, %v2426, 0
        %v2472 = vsel %vm542, %v2428, 0
        %v2475 = vsel %vm542, %v2430, 0
        %v2478 = vsel %vm542, %v2432, 0
        %v2481 = vsel %vm542, %v2434, 0
        %v2484 = vsel %vm542, %v2436, 0
        %v2487 = vsel %vm542, %v2438, 0
        %v2490 = vsel %vm542, %v2440, 0
        %v2493 = vsel %vm542, %v2442, 0
        %v2496 = vsel %vm542, %v2444, 0
        %v2499 = vsel %vm542, %v2446, 0
        %v2502 = vsel %vm542, %v2448, 0
        %v2505 = vsel %vm542, %v2450, 0
        %v2508 = vsel %vm542, %v2452, 0
        %v2511 = vsel %vm542, %v2454, 0
        %v2514 = vsel %vm542, %v2456, 0
        %v2517 = vsel %vm542, %v2458, 0
        %v2520 = vsel %vm542, %v2457, 0
        %v2523 = vsel %vm606, %v2413, 0
        %2525 = vmatprep.subr.bf16.mxu0 0
        %2526 = vmatpush1.bf16.msra.mxu0 %v2523
        %2527 = vmatprep.subr.bf16.mxu0 0
        %2528 = vmatpush1.bf16.msra.mxu0 0
        %2529 = vmatprep.subr.bf16.mxu0 0
        %2530 = vmatpush1.bf16.msra.mxu0 0
        %2531 = vmatprep.subr.bf16.mxu0 0
        %2532 = vmatpush1.bf16.msra.mxu0 0
        %2533 = vmatprep.subr.bf16.mxu0 0
        %2534 = vmatpush1.bf16.msra.mxu0 0
        %2535 = vmatprep.subr.bf16.mxu0 0
        %2536 = vmatpush1.bf16.msra.mxu0 0
        %2537 = vmatprep.subr.bf16.mxu0 0
        %2538 = vmatpush1.bf16.msra.mxu0 0
        %2539 = vmatprep.subr.bf16.mxu0 0
        %2540 = vmatpush1.bf16.msra.mxu0 0
        %2541 = vmatprep.subr.bf16.mxu0 0
        %2542 = vmatpush1.bf16.msra.mxu0 0
        %2543 = vmatprep.subr.bf16.mxu0 0
        %2544 = vmatpush1.bf16.msra.mxu0 0
        %2545 = vmatprep.subr.bf16.mxu0 0
        %2546 = vmatpush1.bf16.msra.mxu0 0
        %2547 = vmatprep.subr.bf16.mxu0 0
        %2548 = vmatpush1.bf16.msra.mxu0 0
        %2549 = vmatprep.subr.bf16.mxu0 0
        %2550 = vmatpush1.bf16.msra.mxu0 0
        %2551 = vmatprep.subr.bf16.mxu0 0
        %2552 = vmatpush1.bf16.msra.mxu0 0
        %2553 = vmatprep.subr.bf16.mxu0 0
        %2554 = vmatpush1.bf16.msra.mxu0 0
        %2555 = vmatprep.subr.bf16.mxu0 0
        %2556 = vmatpush1.bf16.msra.mxu0 0
        %2557 = vmatprep.mubr.bf16.mxu0 0
        %2558 = vmatmul.mubr.bf16.gmra.mrb[0].mxu0 %v2460
        %v2559 = vpop.f32.mrb[0].mxu0
        %v2560 = vadd.f32 0.0, %v2559
        %v2561 = vpop.f32.mrb[0].mxu0
        %v2562 = vpop.f32.mrb[0].mxu0
        %v2563 = vadd.f32 0.0, %v2562
        %v2564 = vpop.f32.mrb[0].mxu0
        %2565 = vmatprep.mubr.bf16.mxu0 0
        %2566 = vmatmul.mubr.bf16.gmra.mrb[0].mxu0 %v2463
        %v2567 = vpop.f32.mrb[0].mxu0
        %v2568 = vadd.f32 0.0, %v2567
        %v2569 = vpop.f32.mrb[0].mxu0
        %v2570 = vpop.f32.mrb[0].mxu0
        %v2571 = vadd.f32 0.0, %v2570
        %v2572 = vpop.f32.mrb[0].mxu0
        %2573 = vmatprep.mubr.bf16.mxu0 0
        %2574 = vmatmul.mubr.bf16.gmra.mrb[0].mxu0 %v2466
        %v2575 = vpop.f32.mrb[0].mxu0
        %v2576 = vadd.f32 0.0, %v2575
        %v2577 = vpop.f32.mrb[0].mxu0
        %v2578 = vpop.f32.mrb[0].mxu0
        %v2579 = vadd.f32 0.0, %v2578
        %v2580 = vpop.f32.mrb[0].mxu0
        %2581 = vmatprep.mubr.bf16.mxu0 0
        %2582 = vmatmul.mubr.bf16.gmra.mrb[0].mxu0 %v2469
        %v2583 = vpop.f32.mrb[0].mxu0
        %v2584 = vadd.f32 0.0, %v2583
        %v2585 = vpop.f32.mrb[0].mxu0
        %v2586 = vpop.f32.mrb[0].mxu0
        %v2587 = vadd.f32 0.0, %v2586
        %v2588 = vpop.f32.mrb[0].mxu0
        %2589 = vmatprep.mubr.bf16.mxu0 0
        %2590 = vmatmul.mubr.bf16.gmra.mrb[0].mxu0 %v2472
        %v2591 = vpop.f32.mrb[0].mxu0
        %v2592 = vadd.f32 0.0, %v2591
        %v2593 = vpop.f32.mrb[0].mxu0
        %v2594 = vpop.f32.mrb[0].mxu0
        %v2595 = vadd.f32 0.0, %v2594
        %v2596 = vpop.f32.mrb[0].mxu0
        %2597 = vmatprep.mubr.bf16.mxu0 0
        %2598 = vmatmul.mubr.bf16.gmra.mrb[0].mxu0 %v2475
        %v2599 = vpop.f32.mrb[0].mxu0
        %v2600 = vadd.f32 0.0, %v2599
        %v2601 = vpop.f32.mrb[0].mxu0
        %v2602 = vpop.f32.mrb[0].mxu0
        %v2603 = vadd.f32 0.0, %v2602
        %v2604 = vpop.f32.mrb[0].mxu0
        %2605 = vmatprep.mubr.bf16.mxu0 0
        %2606 = vmatmul.mubr.bf16.gmra.mrb[0].mxu0 %v2478
        %v2607 = vpop.f32.mrb[0].mxu0
        %v2608 = vadd.f32 0.0, %v2607
        %v2609 = vpop.f32.mrb[0].mxu0
        %v2610 = vpop.f32.mrb[0].mxu0
        %v2611 = vadd.f32 0.0, %v2610
        %v2612 = vpop.f32.mrb[0].mxu0
        %2613 = vmatprep.mubr.bf16.mxu0 0
        %2614 = vmatmul.mubr.bf16.gmra.mrb[0].mxu0 %v2481
        %v2615 = vpop.f32.mrb[0].mxu0
        %v2616 = vadd.f32 0.0, %v2615
        %v2617 = vpop.f32.mrb[0].mxu0
        %v2618 = vpop.f32.mrb[0].mxu0
        %v2619 = vadd.f32 0.0, %v2618
        %v2620 = vpop.f32.mrb[0].mxu0
        %2621 = vmatprep.mubr.bf16.mxu0 0
        %2622 = vmatmul.mubr.bf16.gmra.mrb[0].mxu0 %v2484
        %v2623 = vpop.f32.mrb[0].mxu0
        %v2624 = vadd.f32 0.0, %v2623
        %v2625 = vpop.f32.mrb[0].mxu0
        %v2626 = vpop.f32.mrb[0].mxu0
        %v2627 = vadd.f32 0.0, %v2626
        %v2628 = vpop.f32.mrb[0].mxu0
        %2629 = vmatprep.mubr.bf16.mxu0 0
        %2630 = vmatmul.mubr.bf16.gmra.mrb[0].mxu0 %v2487
        %v2631 = vpop.f32.mrb[0].mxu0
        %v2632 = vadd.f32 0.0, %v2631
        %v2633 = vpop.f32.mrb[0].mxu0
        %v2634 = vpop.f32.mrb[0].mxu0
        %v2635 = vadd.f32 0.0, %v2634
        %v2636 = vpop.f32.mrb[0].mxu0
        %2637 = vmatprep.mubr.bf16.mxu0 0
        %2638 = vmatmul.mubr.bf16.gmra.mrb[0].mxu0 %v2490
        %v2639 = vpop.f32.mrb[0].mxu0
        %v2640 = vadd.f32 0.0, %v2639
        %v2641 = vpop.f32.mrb[0].mxu0
        %v2642 = vpop.f32.mrb[0].mxu0
        %v2643 = vadd.f32 0.0, %v2642
        %v2644 = vpop.f32.mrb[0].mxu0
        %2645 = vmatprep.mubr.bf16.mxu0 0
        %2646 = vmatmul.mubr.bf16.gmra.mrb[0].mxu0 %v2493
        %v2647 = vpop.f32.mrb[0].mxu0
        %v2648 = vadd.f32 0.0, %v2647
        %v2649 = vpop.f32.mrb[0].mxu0
        %v2650 = vpop.f32.mrb[0].mxu0
        %v2651 = vadd.f32 0.0, %v2650
        %v2652 = vpop.f32.mrb[0].mxu0
        %2653 = vmatprep.mubr.bf16.mxu0 0
        %2654 = vmatmul.mubr.bf16.gmra.mrb[0].mxu0 %v2496
        %v2655 = vpop.f32.mrb[0].mxu0
        %v2656 = vadd.f32 0.0, %v2655
        %v2657 = vpop.f32.mrb[0].mxu0
        %v2658 = vpop.f32.mrb[0].mxu0
        %v2659 = vadd.f32 0.0, %v2658
        %v2660 = vpop.f32.mrb[0].mxu0
        %2661 = vmatprep.mubr.bf16.mxu0 0
        %2662 = vmatmul.mubr.bf16.gmra.mrb[0].mxu0 %v2499
        %v2663 = vpop.f32.mrb[0].mxu0
        %v2664 = vadd.f32 0.0, %v2663
        %v2665 = vpop.f32.mrb[0].mxu0
        %v2666 = vpop.f32.mrb[0].mxu0
        %v2667 = vadd.f32 0.0, %v2666
        %v2668 = vpop.f32.mrb[0].mxu0
        %2669 = vmatprep.mubr.bf16.mxu0 0
        %2670 = vmatmul.mubr.bf16.gmra.mrb[0].mxu0 %v2502
        %v2671 = vpop.f32.mrb[0].mxu0
        %v2672 = vadd.f32 0.0, %v2671
        %v2673 = vpop.f32.mrb[0].mxu0
        %v2674 = vpop.f32.mrb[0].mxu0
        %v2675 = vadd.f32 0.0, %v2674
        %v2676 = vpop.f32.mrb[0].mxu0
        %2677 = vmatprep.mubr.bf16.mxu0 0
        %2678 = vmatmul.mubr.bf16.gmra.mrb[0].mxu0 %v2505
        %v2679 = vpop.f32.mrb[0].mxu0
        %v2680 = vadd.f32 0.0, %v2679
        %v2681 = vpop.f32.mrb[0].mxu0
        %v2682 = vpop.f32.mrb[0].mxu0
        %v2683 = vadd.f32 0.0, %v2682
        %v2684 = vpop.f32.mrb[0].mxu0
        %2685 = vmatprep.mubr.bf16.mxu0 0
        %2686 = vmatmul.mubr.bf16.gmra.mrb[0].mxu0 %v2508
        %v2687 = vpop.f32.mrb[0].mxu0
        %v2688 = vadd.f32 0.0, %v2687
        %v2689 = vpop.f32.mrb[0].mxu0
        %v2690 = vpop.f32.mrb[0].mxu0
        %v2691 = vadd.f32 0.0, %v2690
        %v2692 = vpop.f32.mrb[0].mxu0
        %2693 = vmatprep.mubr.bf16.mxu0 0
        %2694 = vmatmul.mubr.bf16.gmra.mrb[0].mxu0 %v2511
        %v2695 = vpop.f32.mrb[0].mxu0
        %v2696 = vadd.f32 0.0, %v2695
        %v2697 = vpop.f32.mrb[0].mxu0
        %v2698 = vpop.f32.mrb[0].mxu0
        %v2699 = vadd.f32 0.0, %v2698
        %v2700 = vpop.f32.mrb[0].mxu0
        %2701 = vmatprep.mubr.bf16.mxu0 0
        %2702 = vmatmul.mubr.bf16.gmra.mrb[0].mxu0 %v2514
        %v2703 = vpop.f32.mrb[0].mxu0
        %v2704 = vadd.f32 0.0, %v2703
        %v2705 = vpop.f32.mrb[0].mxu0
        %v2706 = vpop.f32.mrb[0].mxu0
        %v2707 = vadd.f32 0.0, %v2706
        %v2708 = vpop.f32.mrb[0].mxu0
        %2709 = vmatprep.mubr.bf16.mxu0 0
        %2710 = vmatmul.mubr.bf16.gmra.mrb[0].mxu0 %v2517
        %v2711 = vpop.f32.mrb[0].mxu0
        %v2712 = vadd.f32 0.0, %v2711
        %v2713 = vpop.f32.mrb[0].mxu0
        %v2714 = vpop.f32.mrb[0].mxu0
        %v2715 = vadd.f32 0.0, %v2714
        %v2716 = vpop.f32.mrb[0].mxu0
        %2717 = vmatprep.mubr.bf16.mxu0 0
        %2718 = vmatmul.mubr.bf16.gmra.mrb[0].mxu0 %v2520
        %v2719 = vpop.f32.mrb[0].mxu0
        %v2720 = vadd.f32 0.0, %v2719
        %v2721 = vpop.f32.mrb[0].mxu0
        %v2722 = vpop.f32.mrb[0].mxu0
        %v2723 = vpop.f32.mrb[0].mxu0
        %2724 = vdwg.mxu0
        %v2725 = vadd.f32 %v2370, %v2560
        %v2726 = vadd.f32 %v2371, %v2563
        %v2727 = vadd.f32 %v2372, %v2568
        %v2728 = vadd.f32 %v2373, %v2571
        %v2729 = vadd.f32 %v2374, %v2576
        %v2730 = vadd.f32 %v2375, %v2579
        %v2731 = vadd.f32 %v2376, %v2584
        %v2732 = vadd.f32 %v2377, %v2587
        %v2733 = vadd.f32 %v2378, %v2592
        %v2734 = vadd.f32 %v2379, %v2595
        %v2735 = vadd.f32 %v2380, %v2600
        %v2736 = vadd.f32 %v2381, %v2603
        %v2737 = vadd.f32 %v2382, %v2608
        %v2738 = vadd.f32 %v2383, %v2611
        %v2739 = vadd.f32 %v2384, %v2616
        %v2740 = vadd.f32 %v2385, %v2619
        %v2741 = vadd.f32 %v2386, %v2624
        %v2742 = vadd.f32 %v2387, %v2627
        %v2743 = vadd.f32 %v2388, %v2632
        %v2744 = vadd.f32 %v2389, %v2635
        %v2745 = vadd.f32 %v2390, %v2640
        %v2746 = vadd.f32 %v2391, %v2643
        %v2747 = vadd.f32 %v2392, %v2648
        %v2748 = vadd.f32 %v2393, %v2651
        %v2749 = vadd.f32 %v2394, %v2656
        %v2750 = vadd.f32 %v2395, %v2659
        %v2751 = vadd.f32 %v2396, %v2664
        %v2752 = vadd.f32 %v2397, %v2667
        %v2753 = vadd.f32 %v2398, %v2672
        %v2754 = vadd.f32 %v2399, %v2675
        %v2755 = vadd.f32 %v2400, %v2680
        %v2756 = vadd.f32 %v2401, %v2683
        %v2757 = vadd.f32 %v2402, %v2688
        %v2758 = vadd.f32 %v2403, %v2691
        %v2759 = vadd.f32 %v2404, %v2696
        %v2760 = vadd.f32 %v2405, %v2699
        %v2761 = vadd.f32 %v2406, %v2704
        %v2762 = vadd.f32 %v2407, %v2707
        %v2763 = vadd.f32 %v2408, %v2712
        %v2764 = vadd.f32 %v2409, %v2715
        %v2765 = vadd.f32 %v2410, %v2720
        %v2766 = vld [vmem:[%s222 + $0x10] sm:$0xc]
        %v2767 = vld [vmem:[%s222 + $0x14] sm:$0xf]
        %v2768 = vld [vmem:[%s222 + $0x18] sm:$0xf]
        %v2769 = vld [vmem:[%s222 + $0x1c] sm:$0xf]
        %v2770 = vld [vmem:[%s222 + $0x20] sm:$0xf]
        %v2771 = vld [vmem:[%s222 + $0x24] sm:$0xf]
        %v2772 = vld [vmem:[%s222 + $0x28] sm:$0xf]
        %v2773 = vld [vmem:[%s222 + $0x2c] sm:$0xf]
        %v2774 = vld [vmem:[%s222 + $0x30] sm:$0xf]
        %v2775 = vld [vmem:[%s222 + $0x34] sm:$0xf]
        %v2776 = vld [vmem:[%s222 + $0x38] sm:$0xf]
        %v2777 = vld [vmem:[%s222 + $0x3c] sm:$0xf]
        %v2778 = vld [vmem:[%s222 + $0x40] sm:$0xf]
        %v2779 = vld [vmem:[%s222 + $0x44] sm:$0xf]
        %v2780 = vld [vmem:[%s222 + $0x48] sm:$0xf]
        %v2781 = vld [vmem:[%s222 + $0x4c] sm:$0xf]
        %v2782 = vld [vmem:[%s222 + $0x50] sm:$0xf]
        %v2783 = vld [vmem:[%s222 + $0x54] sm:$0xf]
        %v2784 = vld [vmem:[%s222 + $0x58] sm:$0xf]
        %v2785 = vld [vmem:[%s222 + $0x5c] sm:$0xf]
        %v2786 = vld [vmem:[%s222 + $0x60] sm:$0xf]
        %v2787 = vld [vmem:[%s222 + $0x64] sm:$0xf]
        %v2788 = vld [vmem:[%s222 + $0x68] sm:$0xf]
        %v2789 = vld [vmem:[%s222 + $0x6c] sm:$0xf]
        %v2790 = vld [vmem:[%s222 + $0x70] sm:$0xf]
        %v2791 = vld [vmem:[%s222 + $0x74] sm:$0xf]
        %v2792 = vld [vmem:[%s222 + $0x78] sm:$0xf]
        %v2793 = vld [vmem:[%s222 + $0x7c] sm:$0xf]
        %v2794 = vld [vmem:[%s222 + $0x80] sm:$0xf]
        %v2795 = vld [vmem:[%s222 + $0x84] sm:$0xf]
        %v2796 = vld [vmem:[%s222 + $0x88] sm:$0xf]
        %v2797 = vld [vmem:[%s222 + $0x8c] sm:$0xf]
        %v2798 = vld [vmem:[%s222 + $0x90] sm:$0xf]
        %v2799 = vld [vmem:[%s222 + $0x94] sm:$0xf]
        %v2800 = vld [vmem:[%s222 + $0x98] sm:$0xf]
        %v2801 = vld [vmem:[%s222 + $0x9c] sm:$0xf]
        %v2802 = vld [vmem:[%s222 + $0xa0] sm:$0xf]
        %v2803 = vld [vmem:[%s222 + $0xa4] sm:$0xf]
        %v2804 = vld [vmem:[%s222 + $0xa8] sm:$0xf]
        %v2805 = vld [vmem:[%s222 + $0xac] sm:$0xf]
        %v2806 = vld [vmem:[%s222 + $0xb0] sm:$0xf]
        %v2807 = vld [vmem:[%s222 + $0xb4] sm:$0x3]
        %s2808 = scalar_lea.vmem %s1, 12
        %v2809 = vld [vmem:[%s2808] sm:$0x3]
        %v2852 = vunpack.c.l.b16 %v2766
        %v2853 = vunpack.c.l.b16 %v2767
        %v2854 = vunpack.c.l.b16 %v2768
        %v2855 = vunpack.c.l.b16 %v2769
        %v2856 = vunpack.c.l.b16 %v2770
        %v2857 = vunpack.c.l.b16 %v2771
        %v2858 = vunpack.c.l.b16 %v2772
        %v2859 = vunpack.c.l.b16 %v2773
        %v2860 = vunpack.c.l.b16 %v2774
        %v2861 = vunpack.c.l.b16 %v2775
        %v2862 = vunpack.c.l.b16 %v2776
        %v2863 = vunpack.c.l.b16 %v2777
        %v2864 = vunpack.c.l.b16 %v2778
        %v2865 = vunpack.c.l.b16 %v2779
        %v2866 = vunpack.c.l.b16 %v2780
        %v2867 = vunpack.c.l.b16 %v2781
        %v2868 = vunpack.c.l.b16 %v2782
        %v2869 = vunpack.c.l.b16 %v2783
        %v2870 = vunpack.c.l.b16 %v2784
        %v2871 = vunpack.c.l.b16 %v2785
        %v2872 = vunpack.c.l.b16 %v2786
        %v2873 = vunpack.c.l.b16 %v2787
        %v2874 = vunpack.c.l.b16 %v2788
        %v2875 = vunpack.c.l.b16 %v2789
        %v2876 = vunpack.c.l.b16 %v2790
        %v2877 = vunpack.c.l.b16 %v2791
        %v2878 = vunpack.c.l.b16 %v2792
        %v2879 = vunpack.c.l.b16 %v2793
        %v2880 = vunpack.c.l.b16 %v2794
        %v2881 = vunpack.c.l.b16 %v2795
        %v2882 = vunpack.c.l.b16 %v2796
        %v2883 = vunpack.c.l.b16 %v2797
        %v2884 = vunpack.c.l.b16 %v2798
        %v2885 = vunpack.c.l.b16 %v2799
        %v2886 = vunpack.c.l.b16 %v2800
        %v2887 = vunpack.c.l.b16 %v2801
        %v2888 = vunpack.c.l.b16 %v2802
        %v2889 = vunpack.c.l.b16 %v2803
        %v2890 = vunpack.c.l.b16 %v2804
        %v2891 = vunpack.c.l.b16 %v2805
        %v2892 = vunpack.c.l.b16 %v2806
        %v2893 = vunpack.c.l.b16 %v2807
        %v2894 = vpack.c.b16 %v2853, %v2852
        %v2895 = vpack.c.b16 %v2855, %v2854
        %v2896 = vpack.c.b16 %v2857, %v2856
        %v2897 = vpack.c.b16 %v2859, %v2858
        %v2898 = vpack.c.b16 %v2861, %v2860
        %v2899 = vpack.c.b16 %v2863, %v2862
        %v2900 = vpack.c.b16 %v2865, %v2864
        %v2901 = vpack.c.b16 %v2867, %v2866
        %v2902 = vpack.c.b16 %v2869, %v2868
        %v2903 = vpack.c.b16 %v2871, %v2870
        %v2904 = vpack.c.b16 %v2873, %v2872
        %v2905 = vpack.c.b16 %v2875, %v2874
        %v2906 = vpack.c.b16 %v2877, %v2876
        %v2907 = vpack.c.b16 %v2879, %v2878
        %v2908 = vpack.c.b16 %v2881, %v2880
        %v2909 = vpack.c.b16 %v2883, %v2882
        %v2910 = vpack.c.b16 %v2885, %v2884
        %v2911 = vpack.c.b16 %v2887, %v2886
        %v2912 = vpack.c.b16 %v2889, %v2888
        %v2913 = vpack.c.b16 %v2891, %v2890
        %v2914 = vpack.c.b16 %v2893, %v2892
        %v2915 = vrot.slane %v2894, 2
        %v2916 = vrot.slane %v2895, 2
        %v2917 = vsel %vm2417, %v2915, %v2916
        %v2918 = vrot.slane %v2896, 2
        %v2919 = vsel %vm2417, %v2916, %v2918
        %v2920 = vrot.slane %v2897, 2
        %v2921 = vsel %vm2417, %v2918, %v2920
        %v2922 = vrot.slane %v2898, 2
        %v2923 = vsel %vm2417, %v2920, %v2922
        %v2924 = vrot.slane %v2899, 2
        %v2925 = vsel %vm2417, %v2922, %v2924
        %v2926 = vrot.slane %v2900, 2
        %v2927 = vsel %vm2417, %v2924, %v2926
        %v2928 = vrot.slane %v2901, 2
        %v2929 = vsel %vm2417, %v2926, %v2928
        %v2930 = vrot.slane %v2902, 2
        %v2931 = vsel %vm2417, %v2928, %v2930
        %v2932 = vrot.slane %v2903, 2
        %v2933 = vsel %vm2417, %v2930, %v2932
        %v2934 = vrot.slane %v2904, 2
        %v2935 = vsel %vm2417, %v2932, %v2934
        %v2936 = vrot.slane %v2905, 2
        %v2937 = vsel %vm2417, %v2934, %v2936
        %v2938 = vrot.slane %v2906, 2
        %v2939 = vsel %vm2417, %v2936, %v2938
        %v2940 = vrot.slane %v2907, 2
        %v2941 = vsel %vm2417, %v2938, %v2940
        %v2942 = vrot.slane %v2908, 2
        %v2943 = vsel %vm2417, %v2940, %v2942
        %v2944 = vrot.slane %v2909, 2
        %v2945 = vsel %vm2417, %v2942, %v2944
        %v2946 = vrot.slane %v2910, 2
        %v2947 = vsel %vm2417, %v2944, %v2946
        %v2948 = vrot.slane %v2911, 2
        %v2949 = vsel %vm2417, %v2946, %v2948
        %v2950 = vrot.slane %v2912, 2
        %v2951 = vsel %vm2417, %v2948, %v2950
        %v2952 = vrot.slane %v2913, 2
        %v2953 = vsel %vm2417, %v2950, %v2952
        %v2954 = vrot.slane %v2914, 2
        %v2955 = vsel %vm2417, %v2952, %v2954
        %v2957 = vsel %vm542, %v2917, 0
        %v2960 = vsel %vm542, %v2919, 0
        %v2963 = vsel %vm542, %v2921, 0
        %v2966 = vsel %vm542, %v2923, 0
        %v2969 = vsel %vm542, %v2925, 0
        %v2972 = vsel %vm542, %v2927, 0
        %v2975 = vsel %vm542, %v2929, 0
        %v2978 = vsel %vm542, %v2931, 0
        %v2981 = vsel %vm542, %v2933, 0
        %v2984 = vsel %vm542, %v2935, 0
        %v2987 = vsel %vm542, %v2937, 0
        %v2990 = vsel %vm542, %v2939, 0
        %v2993 = vsel %vm542, %v2941, 0
        %v2996 = vsel %vm542, %v2943, 0
        %v2999 = vsel %vm542, %v2945, 0
        %v3002 = vsel %vm542, %v2947, 0
        %v3005 = vsel %vm542, %v2949, 0
        %v3008 = vsel %vm542, %v2951, 0
        %v3011 = vsel %vm542, %v2953, 0
        %v3014 = vsel %vm542, %v2955, 0
        %v3017 = vsel %vm542, %v2954, 0
        %v3020 = vsel %vm606, %v2809, 0
        %3022 = vmatprep.subr.bf16.mxu0 0
        %3023 = vmatpush1.bf16.msra.mxu0 %v3020
        %3024 = vmatprep.subr.bf16.mxu0 0
        %3025 = vmatpush1.bf16.msra.mxu0 0
        %3026 = vmatprep.subr.bf16.mxu0 0
        %3027 = vmatpush1.bf16.msra.mxu0 0
        %3028 = vmatprep.subr.bf16.mxu0 0
        %3029 = vmatpush1.bf16.msra.mxu0 0
        %3030 = vmatprep.subr.bf16.mxu0 0
        %3031 = vmatpush1.bf16.msra.mxu0 0
        %3032 = vmatprep.subr.bf16.mxu0 0
        %3033 = vmatpush1.bf16.msra.mxu0 0
        %3034 = vmatprep.subr.bf16.mxu0 0
        %3035 = vmatpush1.bf16.msra.mxu0 0
        %3036 = vmatprep.subr.bf16.mxu0 0
        %3037 = vmatpush1.bf16.msra.mxu0 0
        %3038 = vmatprep.subr.bf16.mxu0 0
        %3039 = vmatpush1.bf16.msra.mxu0 0
        %3040 = vmatprep.subr.bf16.mxu0 0
        %3041 = vmatpush1.bf16.msra.mxu0 0
        %3042 = vmatprep.subr.bf16.mxu0 0
        %3043 = vmatpush1.bf16.msra.mxu0 0
        %3044 = vmatprep.subr.bf16.mxu0 0
        %3045 = vmatpush1.bf16.msra.mxu0 0
        %3046 = vmatprep.subr.bf16.mxu0 0
        %3047 = vmatpush1.bf16.msra.mxu0 0
        %3048 = vmatprep.subr.bf16.mxu0 0
        %3049 = vmatpush1.bf16.msra.mxu0 0
        %3050 = vmatprep.subr.bf16.mxu0 0
        %3051 = vmatpush1.bf16.msra.mxu0 0
        %3052 = vmatprep.subr.bf16.mxu0 0
        %3053 = vmatpush1.bf16.msra.mxu0 0
        %3054 = vmatprep.mubr.bf16.mxu0 0
        %3055 = vmatmul.mubr.bf16.gmra.mrb[0].mxu0 %v2957
        %v3056 = vpop.f32.mrb[0].mxu0
        %v3057 = vadd.f32 0.0, %v3056
        %v3058 = vpop.f32.mrb[0].mxu0
        %v3059 = vpop.f32.mrb[0].mxu0
        %v3060 = vadd.f32 0.0, %v3059
        %v3061 = vpop.f32.mrb[0].mxu0
        %3062 = vmatprep.mubr.bf16.mxu0 0
        %3063 = vmatmul.mubr.bf16.gmra.mrb[0].mxu0 %v2960
        %v3064 = vpop.f32.mrb[0].mxu0
        %v3065 = vadd.f32 0.0, %v3064
        %v3066 = vpop.f32.mrb[0].mxu0
        %v3067 = vpop.f32.mrb[0].mxu0
        %v3068 = vadd.f32 0.0, %v3067
        %v3069 = vpop.f32.mrb[0].mxu0
        %3070 = vmatprep.mubr.bf16.mxu0 0
        %3071 = vmatmul.mubr.bf16.gmra.mrb[0].mxu0 %v2963
        %v3072 = vpop.f32.mrb[0].mxu0
        %v3073 = vadd.f32 0.0, %v3072
        %v3074 = vpop.f32.mrb[0].mxu0
        %v3075 = vpop.f32.mrb[0].mxu0
        %v3076 = vadd.f32 0.0, %v3075
        %v3077 = vpop.f32.mrb[0].mxu0
        %3078 = vmatprep.mubr.bf16.mxu0 0
        %3079 = vmatmul.mubr.bf16.gmra.mrb[0].mxu0 %v2966
        %v3080 = vpop.f32.mrb[0].mxu0
        %v3081 = vadd.f32 0.0, %v3080
        %v3082 = vpop.f32.mrb[0].mxu0
        %v3083 = vpop.f32.mrb[0].mxu0
        %v3084 = vadd.f32 0.0, %v3083
        %v3085 = vpop.f32.mrb[0].mxu0
        %3086 = vmatprep.mubr.bf16.mxu0 0
        %3087 = vmatmul.mubr.bf16.gmra.mrb[0].mxu0 %v2969
        %v3088 = vpop.f32.mrb[0].mxu0
        %v3089 = vadd.f32 0.0, %v3088
        %v3090 = vpop.f32.mrb[0].mxu0
        %v3091 = vpop.f32.mrb[0].mxu0
        %v3092 = vadd.f32 0.0, %v3091
        %v3093 = vpop.f32.mrb[0].mxu0
        %3094 = vmatprep.mubr.bf16.mxu0 0
        %3095 = vmatmul.mubr.bf16.gmra.mrb[0].mxu0 %v2972
        %v3096 = vpop.f32.mrb[0].mxu0
        %v3097 = vadd.f32 0.0, %v3096
        %v3098 = vpop.f32.mrb[0].mxu0
        %v3099 = vpop.f32.mrb[0].mxu0
        %v3100 = vadd.f32 0.0, %v3099
        %v3101 = vpop.f32.mrb[0].mxu0
        %3102 = vmatprep.mubr.bf16.mxu0 0
        %3103 = vmatmul.mubr.bf16.gmra.mrb[0].mxu0 %v2975
        %v3104 = vpop.f32.mrb[0].mxu0
        %v3105 = vadd.f32 0.0, %v3104
        %v3106 = vpop.f32.mrb[0].mxu0
        %v3107 = vpop.f32.mrb[0].mxu0
        %v3108 = vadd.f32 0.0, %v3107
        %v3109 = vpop.f32.mrb[0].mxu0
        %3110 = vmatprep.mubr.bf16.mxu0 0
        %3111 = vmatmul.mubr.bf16.gmra.mrb[0].mxu0 %v2978
        %v3112 = vpop.f32.mrb[0].mxu0
        %v3113 = vadd.f32 0.0, %v3112
        %v3114 = vpop.f32.mrb[0].mxu0
        %v3115 = vpop.f32.mrb[0].mxu0
        %v3116 = vadd.f32 0.0, %v3115
        %v3117 = vpop.f32.mrb[0].mxu0
        %3118 = vmatprep.mubr.bf16.mxu0 0
        %3119 = vmatmul.mubr.bf16.gmra.mrb[0].mxu0 %v2981
        %v3120 = vpop.f32.mrb[0].mxu0
        %v3121 = vadd.f32 0.0, %v3120
        %v3122 = vpop.f32.mrb[0].mxu0
        %v3123 = vpop.f32.mrb[0].mxu0
        %v3124 = vadd.f32 0.0, %v3123
        %v3125 = vpop.f32.mrb[0].mxu0
        %3126 = vmatprep.mubr.bf16.mxu0 0
        %3127 = vmatmul.mubr.bf16.gmra.mrb[0].mxu0 %v2984
        %v3128 = vpop.f32.mrb[0].mxu0
        %v3129 = vadd.f32 0.0, %v3128
        %v3130 = vpop.f32.mrb[0].mxu0
        %v3131 = vpop.f32.mrb[0].mxu0
        %v3132 = vadd.f32 0.0, %v3131
        %v3133 = vpop.f32.mrb[0].mxu0
        %3134 = vmatprep.mubr.bf16.mxu0 0
        %3135 = vmatmul.mubr.bf16.gmra.mrb[0].mxu0 %v2987
        %v3136 = vpop.f32.mrb[0].mxu0
        %v3137 = vadd.f32 0.0, %v3136
        %v3138 = vpop.f32.mrb[0].mxu0
        %v3139 = vpop.f32.mrb[0].mxu0
        %v3140 = vadd.f32 0.0, %v3139
        %v3141 = vpop.f32.mrb[0].mxu0
        %3142 = vmatprep.mubr.bf16.mxu0 0
        %3143 = vmatmul.mubr.bf16.gmra.mrb[0].mxu0 %v2990
        %v3144 = vpop.f32.mrb[0].mxu0
        %v3145 = vadd.f32 0.0, %v3144
        %v3146 = vpop.f32.mrb[0].mxu0
        %v3147 = vpop.f32.mrb[0].mxu0
        %v3148 = vadd.f32 0.0, %v3147
        %v3149 = vpop.f32.mrb[0].mxu0
        %3150 = vmatprep.mubr.bf16.mxu0 0
        %3151 = vmatmul.mubr.bf16.gmra.mrb[0].mxu0 %v2993
        %v3152 = vpop.f32.mrb[0].mxu0
        %v3153 = vadd.f32 0.0, %v3152
        %v3154 = vpop.f32.mrb[0].mxu0
        %v3155 = vpop.f32.mrb[0].mxu0
        %v3156 = vadd.f32 0.0, %v3155
        %v3157 = vpop.f32.mrb[0].mxu0
        %3158 = vmatprep.mubr.bf16.mxu0 0
        %3159 = vmatmul.mubr.bf16.gmra.mrb[0].mxu0 %v2996
        %v3160 = vpop.f32.mrb[0].mxu0
        %v3161 = vadd.f32 0.0, %v3160
        %v3162 = vpop.f32.mrb[0].mxu0
        %v3163 = vpop.f32.mrb[0].mxu0
        %v3164 = vadd.f32 0.0, %v3163
        %v3165 = vpop.f32.mrb[0].mxu0
        %3166 = vmatprep.mubr.bf16.mxu0 0
        %3167 = vmatmul.mubr.bf16.gmra.mrb[0].mxu0 %v2999
        %v3168 = vpop.f32.mrb[0].mxu0
        %v3169 = vadd.f32 0.0, %v3168
        %v3170 = vpop.f32.mrb[0].mxu0
        %v3171 = vpop.f32.mrb[0].mxu0
        %v3172 = vadd.f32 0.0, %v3171
        %v3173 = vpop.f32.mrb[0].mxu0
        %3174 = vmatprep.mubr.bf16.mxu0 0
        %3175 = vmatmul.mubr.bf16.gmra.mrb[0].mxu0 %v3002
        %v3176 = vpop.f32.mrb[0].mxu0
        %v3177 = vadd.f32 0.0, %v3176
        %v3178 = vpop.f32.mrb[0].mxu0
        %v3179 = vpop.f32.mrb[0].mxu0
        %v3180 = vadd.f32 0.0, %v3179
        %v3181 = vpop.f32.mrb[0].mxu0
        %3182 = vmatprep.mubr.bf16.mxu0 0
        %3183 = vmatmul.mubr.bf16.gmra.mrb[0].mxu0 %v3005
        %v3184 = vpop.f32.mrb[0].mxu0
        %v3185 = vadd.f32 0.0, %v3184
        %v3186 = vpop.f32.mrb[0].mxu0
        %v3187 = vpop.f32.mrb[0].mxu0
        %v3188 = vadd.f32 0.0, %v3187
        %v3189 = vpop.f32.mrb[0].mxu0
        %3190 = vmatprep.mubr.bf16.mxu0 0
        %3191 = vmatmul.mubr.bf16.gmra.mrb[0].mxu0 %v3008
        %v3192 = vpop.f32.mrb[0].mxu0
        %v3193 = vadd.f32 0.0, %v3192
        %v3194 = vpop.f32.mrb[0].mxu0
        %v3195 = vpop.f32.mrb[0].mxu0
        %v3196 = vadd.f32 0.0, %v3195
        %v3197 = vpop.f32.mrb[0].mxu0
        %3198 = vmatprep.mubr.bf16.mxu0 0
        %3199 = vmatmul.mubr.bf16.gmra.mrb[0].mxu0 %v3011
        %v3200 = vpop.f32.mrb[0].mxu0
        %v3201 = vadd.f32 0.0, %v3200
        %v3202 = vpop.f32.mrb[0].mxu0
        %v3203 = vpop.f32.mrb[0].mxu0
        %v3204 = vadd.f32 0.0, %v3203
        %v3205 = vpop.f32.mrb[0].mxu0
        %3206 = vmatprep.mubr.bf16.mxu0 0
        %3207 = vmatmul.mubr.bf16.gmra.mrb[0].mxu0 %v3014
        %v3208 = vpop.f32.mrb[0].mxu0
        %v3209 = vadd.f32 0.0, %v3208
        %v3210 = vpop.f32.mrb[0].mxu0
        %v3211 = vpop.f32.mrb[0].mxu0
        %v3212 = vadd.f32 0.0, %v3211
        %v3213 = vpop.f32.mrb[0].mxu0
        %3214 = vmatprep.mubr.bf16.mxu0 0
        %3215 = vmatmul.mubr.bf16.gmra.mrb[0].mxu0 %v3017
        %v3216 = vpop.f32.mrb[0].mxu0
        %v3217 = vadd.f32 0.0, %v3216
        %v3218 = vpop.f32.mrb[0].mxu0
        %v3219 = vpop.f32.mrb[0].mxu0
        %v3220 = vpop.f32.mrb[0].mxu0
        %3221 = vdwg.mxu0
        %v3222 = vadd.f32 %v2725, %v3057
        %v3223 = vadd.f32 %v2726, %v3060
        %v3224 = vadd.f32 %v2727, %v3065
        %v3225 = vadd.f32 %v2728, %v3068
        %v3226 = vadd.f32 %v2729, %v3073
        %v3227 = vadd.f32 %v2730, %v3076
        %v3228 = vadd.f32 %v2731, %v3081
        %v3229 = vadd.f32 %v2732, %v3084
        %v3230 = vadd.f32 %v2733, %v3089
        %v3231 = vadd.f32 %v2734, %v3092
        %v3232 = vadd.f32 %v2735, %v3097
        %v3233 = vadd.f32 %v2736, %v3100
        %v3234 = vadd.f32 %v2737, %v3105
        %v3235 = vadd.f32 %v2738, %v3108
        %v3236 = vadd.f32 %v2739, %v3113
        %v3237 = vadd.f32 %v2740, %v3116
        %v3238 = vadd.f32 %v2741, %v3121
        %v3239 = vadd.f32 %v2742, %v3124
        %v3240 = vadd.f32 %v2743, %v3129
        %v3241 = vadd.f32 %v2744, %v3132
        %v3242 = vadd.f32 %v2745, %v3137
        %v3243 = vadd.f32 %v2746, %v3140
        %v3244 = vadd.f32 %v2747, %v3145
        %v3245 = vadd.f32 %v2748, %v3148
        %v3246 = vadd.f32 %v2749, %v3153
        %v3247 = vadd.f32 %v2750, %v3156
        %v3248 = vadd.f32 %v2751, %v3161
        %v3249 = vadd.f32 %v2752, %v3164
        %v3250 = vadd.f32 %v2753, %v3169
        %v3251 = vadd.f32 %v2754, %v3172
        %v3252 = vadd.f32 %v2755, %v3177
        %v3253 = vadd.f32 %v2756, %v3180
        %v3254 = vadd.f32 %v2757, %v3185
        %v3255 = vadd.f32 %v2758, %v3188
        %v3256 = vadd.f32 %v2759, %v3193
        %v3257 = vadd.f32 %v2760, %v3196
        %v3258 = vadd.f32 %v2761, %v3201
        %v3259 = vadd.f32 %v2762, %v3204
        %v3260 = vadd.f32 %v2763, %v3209
        %v3261 = vadd.f32 %v2764, %v3212
        %v3262 = vadd.f32 %v2765, %v3217
        %v3263 = vld [vmem:[%s222 + $0xb4] sm:$0x7]
        %s3264 = scalar_lea.vmem %s1, 14
        %v3265 = vld [vmem:[%s3264] sm:$0x3]
        %v3267 = vunpack.c.l.b16 %v3263
        %v3268 = vpack.c.b16 %v3267, %v2892
        %vm3269 = vsmask.f32 5376
        %v3271 = vshrl.u32 %v2894, 16
        %v3273 = vrot.slane %v3271, 2
        %v3274 = vshll.u32 %v2894, 16
        %v3276 = vrot.slane %v3274, 3
        %v3277 = vor.u32 %v3273, %v3276
        %v3279 = vshrl.u32 %v2895, 16
        %v3281 = vrot.slane %v3279, 2
        %v3282 = vshll.u32 %v2895, 16
        %v3284 = vrot.slane %v3282, 3
        %v3285 = vor.u32 %v3281, %v3284
        %v3286 = vsel %vm3269, %v3277, %v3285
        %v3288 = vshrl.u32 %v2896, 16
        %v3290 = vrot.slane %v3288, 2
        %v3291 = vshll.u32 %v2896, 16
        %v3293 = vrot.slane %v3291, 3
        %v3294 = vor.u32 %v3290, %v3293
        %v3295 = vsel %vm3269, %v3285, %v3294
        %v3297 = vshrl.u32 %v2897, 16
        %v3299 = vrot.slane %v3297, 2
        %v3300 = vshll.u32 %v2897, 16
        %v3302 = vrot.slane %v3300, 3
        %v3303 = vor.u32 %v3299, %v3302
        %v3304 = vsel %vm3269, %v3294, %v3303
        %v3306 = vshrl.u32 %v2898, 16
        %v3308 = vrot.slane %v3306, 2
        %v3309 = vshll.u32 %v2898, 16
        %v3311 = vrot.slane %v3309, 3
        %v3312 = vor.u32 %v3308, %v3311
        %v3313 = vsel %vm3269, %v3303, %v3312
        %v3315 = vshrl.u32 %v2899, 16
        %v3317 = vrot.slane %v3315, 2
        %v3318 = vshll.u32 %v2899, 16
        %v3320 = vrot.slane %v3318, 3
        %v3321 = vor.u32 %v3317, %v3320
        %v3322 = vsel %vm3269, %v3312, %v3321
        %v3324 = vshrl.u32 %v2900, 16
        %v3326 = vrot.slane %v3324, 2
        %v3327 = vshll.u32 %v2900, 16
        %v3329 = vrot.slane %v3327, 3
        %v3330 = vor.u32 %v3326, %v3329
        %v3331 = vsel %vm3269, %v3321, %v3330
        %v3333 = vshrl.u32 %v2901, 16
        %v3335 = vrot.slane %v3333, 2
        %v3336 = vshll.u32 %v2901, 16
        %v3338 = vrot.slane %v3336, 3
        %v3339 = vor.u32 %v3335, %v3338
        %v3340 = vsel %vm3269, %v3330, %v3339
        %v3342 = vshrl.u32 %v2902, 16
        %v3344 = vrot.slane %v3342, 2
        %v3345 = vshll.u32 %v2902, 16
        %v3347 = vrot.slane %v3345, 3
        %v3348 = vor.u32 %v3344, %v3347
        %v3349 = vsel %vm3269, %v3339, %v3348
        %v3351 = vshrl.u32 %v2903, 16
        %v3353 = vrot.slane %v3351, 2
        %v3354 = vshll.u32 %v2903, 16
        %v3356 = vrot.slane %v3354, 3
        %v3357 = vor.u32 %v3353, %v3356
        %v3358 = vsel %vm3269, %v3348, %v3357
        %v3360 = vshrl.u32 %v2904, 16
        %v3362 = vrot.slane %v3360, 2
        %v3363 = vshll.u32 %v2904, 16
        %v3365 = vrot.slane %v3363, 3
        %v3366 = vor.u32 %v3362, %v3365
        %v3367 = vsel %vm3269, %v3357, %v3366
        %v3369 = vshrl.u32 %v2905, 16
        %v3371 = vrot.slane %v3369, 2
        %v3372 = vshll.u32 %v2905, 16
        %v3374 = vrot.slane %v3372, 3
        %v3375 = vor.u32 %v3371, %v3374
        %v3376 = vsel %vm3269, %v3366, %v3375
        %v3378 = vshrl.u32 %v2906, 16
        %v3380 = vrot.slane %v3378, 2
        %v3381 = vshll.u32 %v2906, 16
        %v3383 = vrot.slane %v3381, 3
        %v3384 = vor.u32 %v3380, %v3383
        %v3385 = vsel %vm3269, %v3375, %v3384
        %v3387 = vshrl.u32 %v2907, 16
        %v3389 = vrot.slane %v3387, 2
        %v3390 = vshll.u32 %v2907, 16
        %v3392 = vrot.slane %v3390, 3
        %v3393 = vor.u32 %v3389, %v3392
        %v3394 = vsel %vm3269, %v3384, %v3393
        %v3396 = vshrl.u32 %v2908, 16
        %v3398 = vrot.slane %v3396, 2
        %v3399 = vshll.u32 %v2908, 16
        %v3401 = vrot.slane %v3399, 3
        %v3402 = vor.u32 %v3398, %v3401
        %v3403 = vsel %vm3269, %v3393, %v3402
        %v3405 = vshrl.u32 %v2909, 16
        %v3407 = vrot.slane %v3405, 2
        %v3408 = vshll.u32 %v2909, 16
        %v3410 = vrot.slane %v3408, 3
        %v3411 = vor.u32 %v3407, %v3410
        %v3412 = vsel %vm3269, %v3402, %v3411
        %v3414 = vshrl.u32 %v2910, 16
        %v3416 = vrot.slane %v3414, 2
        %v3417 = vshll.u32 %v2910, 16
        %v3419 = vrot.slane %v3417, 3
        %v3420 = vor.u32 %v3416, %v3419
        %v3421 = vsel %vm3269, %v3411, %v3420
        %v3423 = vshrl.u32 %v2911, 16
        %v3425 = vrot.slane %v3423, 2
        %v3426 = vshll.u32 %v2911, 16
        %v3428 = vrot.slane %v3426, 3
        %v3429 = vor.u32 %v3425, %v3428
        %v3430 = vsel %vm3269, %v3420, %v3429
        %v3432 = vshrl.u32 %v2912, 16
        %v3434 = vrot.slane %v3432, 2
        %v3435 = vshll.u32 %v2912, 16
        %v3437 = vrot.slane %v3435, 3
        %v3438 = vor.u32 %v3434, %v3437
        %v3439 = vsel %vm3269, %v3429, %v3438
        %v3441 = vshrl.u32 %v2913, 16
        %v3443 = vrot.slane %v3441, 2
        %v3444 = vshll.u32 %v2913, 16
        %v3446 = vrot.slane %v3444, 3
        %v3447 = vor.u32 %v3443, %v3446
        %v3448 = vsel %vm3269, %v3438, %v3447
        %v3450 = vshrl.u32 %v3268, 16
        %v3452 = vrot.slane %v3450, 2
        %v3453 = vshll.u32 %v3268, 16
        %v3455 = vrot.slane %v3453, 3
        %v3456 = vor.u32 %v3452, %v3455
        %v3457 = vsel %vm3269, %v3447, %v3456
        %v3459 = vsel %vm542, %v3286, 0
        %v3462 = vsel %vm542, %v3295, 0
        %v3465 = vsel %vm542, %v3304, 0
        %v3468 = vsel %vm542, %v3313, 0
        %v3471 = vsel %vm542, %v3322, 0
        %v3474 = vsel %vm542, %v3331, 0
        %v3477 = vsel %vm542, %v3340, 0
        %v3480 = vsel %vm542, %v3349, 0
        %v3483 = vsel %vm542, %v3358, 0
        %v3486 = vsel %vm542, %v3367, 0
        %v3489 = vsel %vm542, %v3376, 0
        %v3492 = vsel %vm542, %v3385, 0
        %v3495 = vsel %vm542, %v3394, 0
        %v3498 = vsel %vm542, %v3403, 0
        %v3501 = vsel %vm542, %v3412, 0
        %v3504 = vsel %vm542, %v3421, 0
        %v3507 = vsel %vm542, %v3430, 0
        %v3510 = vsel %vm542, %v3439, 0
        %v3513 = vsel %vm542, %v3448, 0
        %v3516 = vsel %vm542, %v3457, 0
        %v3519 = vsel %vm542, %v3456, 0
        %v3522 = vsel %vm606, %v3265, 0
        %3524 = vmatprep.subr.bf16.mxu0 0
        %3525 = vmatpush1.bf16.msra.mxu0 %v3522
        %3526 = vmatprep.subr.bf16.mxu0 0
        %3527 = vmatpush1.bf16.msra.mxu0 0
        %3528 = vmatprep.subr.bf16.mxu0 0
        %3529 = vmatpush1.bf16.msra.mxu0 0
        %3530 = vmatprep.subr.bf16.mxu0 0
        %3531 = vmatpush1.bf16.msra.mxu0 0
        %3532 = vmatprep.subr.bf16.mxu0 0
        %3533 = vmatpush1.bf16.msra.mxu0 0
        %3534 = vmatprep.subr.bf16.mxu0 0
        %3535 = vmatpush1.bf16.msra.mxu0 0
        %3536 = vmatprep.subr.bf16.mxu0 0
        %3537 = vmatpush1.bf16.msra.mxu0 0
        %3538 = vmatprep.subr.bf16.mxu0 0
        %3539 = vmatpush1.bf16.msra.mxu0 0
        %3540 = vmatprep.subr.bf16.mxu0 0
        %3541 = vmatpush1.bf16.msra.mxu0 0
        %3542 = vmatprep.subr.bf16.mxu0 0
        %3543 = vmatpush1.bf16.msra.mxu0 0
        %3544 = vmatprep.subr.bf16.mxu0 0
        %3545 = vmatpush1.bf16.msra.mxu0 0
        %3546 = vmatprep.subr.bf16.mxu0 0
        %3547 = vmatpush1.bf16.msra.mxu0 0
        %3548 = vmatprep.subr.bf16.mxu0 0
        %3549 = vmatpush1.bf16.msra.mxu0 0
        %3550 = vmatprep.subr.bf16.mxu0 0
        %3551 = vmatpush1.bf16.msra.mxu0 0
        %3552 = vmatprep.subr.bf16.mxu0 0
        %3553 = vmatpush1.bf16.msra.mxu0 0
        %3554 = vmatprep.subr.bf16.mxu0 0
        %3555 = vmatpush1.bf16.msra.mxu0 0
        %3556 = vmatprep.mubr.bf16.mxu0 0
        %3557 = vmatmul.mubr.bf16.gmra.mrb[0].mxu0 %v3459
        %v3558 = vpop.f32.mrb[0].mxu0
        %v3559 = vadd.f32 0.0, %v3558
        %v3560 = vpop.f32.mrb[0].mxu0
        %v3561 = vpop.f32.mrb[0].mxu0
        %v3562 = vadd.f32 0.0, %v3561
        %v3563 = vpop.f32.mrb[0].mxu0
        %3564 = vmatprep.mubr.bf16.mxu0 0
        %3565 = vmatmul.mubr.bf16.gmra.mrb[0].mxu0 %v3462
        %v3566 = vpop.f32.mrb[0].mxu0
        %v3567 = vadd.f32 0.0, %v3566
        %v3568 = vpop.f32.mrb[0].mxu0
        %v3569 = vpop.f32.mrb[0].mxu0
        %v3570 = vadd.f32 0.0, %v3569
        %v3571 = vpop.f32.mrb[0].mxu0
        %3572 = vmatprep.mubr.bf16.mxu0 0
        %3573 = vmatmul.mubr.bf16.gmra.mrb[0].mxu0 %v3465
        %v3574 = vpop.f32.mrb[0].mxu0
        %v3575 = vadd.f32 0.0, %v3574
        %v3576 = vpop.f32.mrb[0].mxu0
        %v3577 = vpop.f32.mrb[0].mxu0
        %v3578 = vadd.f32 0.0, %v3577
        %v3579 = vpop.f32.mrb[0].mxu0
        %3580 = vmatprep.mubr.bf16.mxu0 0
        %3581 = vmatmul.mubr.bf16.gmra.mrb[0].mxu0 %v3468
        %v3582 = vpop.f32.mrb[0].mxu0
        %v3583 = vadd.f32 0.0, %v3582
        %v3584 = vpop.f32.mrb[0].mxu0
        %v3585 = vpop.f32.mrb[0].mxu0
        %v3586 = vadd.f32 0.0, %v3585
        %v3587 = vpop.f32.mrb[0].mxu0
        %3588 = vmatprep.mubr.bf16.mxu0 0
        %3589 = vmatmul.mubr.bf16.gmra.mrb[0].mxu0 %v3471
        %v3590 = vpop.f32.mrb[0].mxu0
        %v3591 = vadd.f32 0.0, %v3590
        %v3592 = vpop.f32.mrb[0].mxu0
        %v3593 = vpop.f32.mrb[0].mxu0
        %v3594 = vadd.f32 0.0, %v3593
        %v3595 = vpop.f32.mrb[0].mxu0
        %3596 = vmatprep.mubr.bf16.mxu0 0
        %3597 = vmatmul.mubr.bf16.gmra.mrb[0].mxu0 %v3474
        %v3598 = vpop.f32.mrb[0].mxu0
        %v3599 = vadd.f32 0.0, %v3598
        %v3600 = vpop.f32.mrb[0].mxu0
        %v3601 = vpop.f32.mrb[0].mxu0
        %v3602 = vadd.f32 0.0, %v3601
        %v3603 = vpop.f32.mrb[0].mxu0
        %3604 = vmatprep.mubr.bf16.mxu0 0
        %3605 = vmatmul.mubr.bf16.gmra.mrb[0].mxu0 %v3477
        %v3606 = vpop.f32.mrb[0].mxu0
        %v3607 = vadd.f32 0.0, %v3606
        %v3608 = vpop.f32.mrb[0].mxu0
        %v3609 = vpop.f32.mrb[0].mxu0
        %v3610 = vadd.f32 0.0, %v3609
        %v3611 = vpop.f32.mrb[0].mxu0
        %3612 = vmatprep.mubr.bf16.mxu0 0
        %3613 = vmatmul.mubr.bf16.gmra.mrb[0].mxu0 %v3480
        %v3614 = vpop.f32.mrb[0].mxu0
        %v3615 = vadd.f32 0.0, %v3614
        %v3616 = vpop.f32.mrb[0].mxu0
        %v3617 = vpop.f32.mrb[0].mxu0
        %v3618 = vadd.f32 0.0, %v3617
        %v3619 = vpop.f32.mrb[0].mxu0
        %3620 = vmatprep.mubr.bf16.mxu0 0
        %3621 = vmatmul.mubr.bf16.gmra.mrb[0].mxu0 %v3483
        %v3622 = vpop.f32.mrb[0].mxu0
        %v3623 = vadd.f32 0.0, %v3622
        %v3624 = vpop.f32.mrb[0].mxu0
        %v3625 = vpop.f32.mrb[0].mxu0
        %v3626 = vadd.f32 0.0, %v3625
        %v3627 = vpop.f32.mrb[0].mxu0
        %3628 = vmatprep.mubr.bf16.mxu0 0
        %3629 = vmatmul.mubr.bf16.gmra.mrb[0].mxu0 %v3486
        %v3630 = vpop.f32.mrb[0].mxu0
        %v3631 = vadd.f32 0.0, %v3630
        %v3632 = vpop.f32.mrb[0].mxu0
        %v3633 = vpop.f32.mrb[0].mxu0
        %v3634 = vadd.f32 0.0, %v3633
        %v3635 = vpop.f32.mrb[0].mxu0
        %3636 = vmatprep.mubr.bf16.mxu0 0
        %3637 = vmatmul.mubr.bf16.gmra.mrb[0].mxu0 %v3489
        %v3638 = vpop.f32.mrb[0].mxu0
        %v3639 = vadd.f32 0.0, %v3638
        %v3640 = vpop.f32.mrb[0].mxu0
        %v3641 = vpop.f32.mrb[0].mxu0
        %v3642 = vadd.f32 0.0, %v3641
        %v3643 = vpop.f32.mrb[0].mxu0
        %3644 = vmatprep.mubr.bf16.mxu0 0
        %3645 = vmatmul.mubr.bf16.gmra.mrb[0].mxu0 %v3492
        %v3646 = vpop.f32.mrb[0].mxu0
        %v3647 = vadd.f32 0.0, %v3646
        %v3648 = vpop.f32.mrb[0].mxu0
        %v3649 = vpop.f32.mrb[0].mxu0
        %v3650 = vadd.f32 0.0, %v3649
        %v3651 = vpop.f32.mrb[0].mxu0
        %3652 = vmatprep.mubr.bf16.mxu0 0
        %3653 = vmatmul.mubr.bf16.gmra.mrb[0].mxu0 %v3495
        %v3654 = vpop.f32.mrb[0].mxu0
        %v3655 = vadd.f32 0.0, %v3654
        %v3656 = vpop.f32.mrb[0].mxu0
        %v3657 = vpop.f32.mrb[0].mxu0
        %v3658 = vadd.f32 0.0, %v3657
        %v3659 = vpop.f32.mrb[0].mxu0
        %3660 = vmatprep.mubr.bf16.mxu0 0
        %3661 = vmatmul.mubr.bf16.gmra.mrb[0].mxu0 %v3498
        %v3662 = vpop.f32.mrb[0].mxu0
        %v3663 = vadd.f32 0.0, %v3662
        %v3664 = vpop.f32.mrb[0].mxu0
        %v3665 = vpop.f32.mrb[0].mxu0
        %v3666 = vadd.f32 0.0, %v3665
        %v3667 = vpop.f32.mrb[0].mxu0
        %3668 = vmatprep.mubr.bf16.mxu0 0
        %3669 = vmatmul.mubr.bf16.gmra.mrb[0].mxu0 %v3501
        %v3670 = vpop.f32.mrb[0].mxu0
        %v3671 = vadd.f32 0.0, %v3670
        %v3672 = vpop.f32.mrb[0].mxu0
        %v3673 = vpop.f32.mrb[0].mxu0
        %v3674 = vadd.f32 0.0, %v3673
        %v3675 = vpop.f32.mrb[0].mxu0
        %3676 = vmatprep.mubr.bf16.mxu0 0
        %3677 = vmatmul.mubr.bf16.gmra.mrb[0].mxu0 %v3504
        %v3678 = vpop.f32.mrb[0].mxu0
        %v3679 = vadd.f32 0.0, %v3678
        %v3680 = vpop.f32.mrb[0].mxu0
        %v3681 = vpop.f32.mrb[0].mxu0
        %v3682 = vadd.f32 0.0, %v3681
        %v3683 = vpop.f32.mrb[0].mxu0
        %3684 = vmatprep.mubr.bf16.mxu0 0
        %3685 = vmatmul.mubr.bf16.gmra.mrb[0].mxu0 %v3507
        %v3686 = vpop.f32.mrb[0].mxu0
        %v3687 = vadd.f32 0.0, %v3686
        %v3688 = vpop.f32.mrb[0].mxu0
        %v3689 = vpop.f32.mrb[0].mxu0
        %v3690 = vadd.f32 0.0, %v3689
        %v3691 = vpop.f32.mrb[0].mxu0
        %3692 = vmatprep.mubr.bf16.mxu0 0
        %3693 = vmatmul.mubr.bf16.gmra.mrb[0].mxu0 %v3510
        %v3694 = vpop.f32.mrb[0].mxu0
        %v3695 = vadd.f32 0.0, %v3694
        %v3696 = vpop.f32.mrb[0].mxu0
        %v3697 = vpop.f32.mrb[0].mxu0
        %v3698 = vadd.f32 0.0, %v3697
        %v3699 = vpop.f32.mrb[0].mxu0
        %3700 = vmatprep.mubr.bf16.mxu0 0
        %3701 = vmatmul.mubr.bf16.gmra.mrb[0].mxu0 %v3513
        %v3702 = vpop.f32.mrb[0].mxu0
        %v3703 = vadd.f32 0.0, %v3702
        %v3704 = vpop.f32.mrb[0].mxu0
        %v3705 = vpop.f32.mrb[0].mxu0
        %v3706 = vadd.f32 0.0, %v3705
        %v3707 = vpop.f32.mrb[0].mxu0
        %3708 = vmatprep.mubr.bf16.mxu0 0
        %3709 = vmatmul.mubr.bf16.gmra.mrb[0].mxu0 %v3516
        %v3710 = vpop.f32.mrb[0].mxu0
        %v3711 = vadd.f32 0.0, %v3710
        %v3712 = vpop.f32.mrb[0].mxu0
        %v3713 = vpop.f32.mrb[0].mxu0
        %v3714 = vadd.f32 0.0, %v3713
        %v3715 = vpop.f32.mrb[0].mxu0
        %3716 = vmatprep.mubr.bf16.mxu0 0
        %3717 = vmatmul.mubr.bf16.gmra.mrb[0].mxu0 %v3519
        %v3718 = vpop.f32.mrb[0].mxu0
        %v3719 = vadd.f32 0.0, %v3718
        %v3720 = vpop.f32.mrb[0].mxu0
        %v3721 = vpop.f32.mrb[0].mxu0
        %v3722 = vpop.f32.mrb[0].mxu0
        %3723 = vdwg.mxu0
        %v3724 = vadd.f32 %v3222, %v3559
        %v3725 = vadd.f32 %v3223, %v3562
        %v3726 = vadd.f32 %v3224, %v3567
        %v3727 = vadd.f32 %v3225, %v3570
        %v3728 = vadd.f32 %v3226, %v3575
        %v3729 = vadd.f32 %v3227, %v3578
        %v3730 = vadd.f32 %v3228, %v3583
        %v3731 = vadd.f32 %v3229, %v3586
        %v3732 = vadd.f32 %v3230, %v3591
        %v3733 = vadd.f32 %v3231, %v3594
        %v3734 = vadd.f32 %v3232, %v3599
        %v3735 = vadd.f32 %v3233, %v3602
        %v3736 = vadd.f32 %v3234, %v3607
        %v3737 = vadd.f32 %v3235, %v3610
        %v3738 = vadd.f32 %v3236, %v3615
        %v3739 = vadd.f32 %v3237, %v3618
        %v3740 = vadd.f32 %v3238, %v3623
        %v3741 = vadd.f32 %v3239, %v3626
        %v3742 = vadd.f32 %v3240, %v3631
        %v3743 = vadd.f32 %v3241, %v3634
        %v3744 = vadd.f32 %v3242, %v3639
        %v3745 = vadd.f32 %v3243, %v3642
        %v3746 = vadd.f32 %v3244, %v3647
        %v3747 = vadd.f32 %v3245, %v3650
        %v3748 = vadd.f32 %v3246, %v3655
        %v3749 = vadd.f32 %v3247, %v3658
        %v3750 = vadd.f32 %v3248, %v3663
        %v3751 = vadd.f32 %v3249, %v3666
        %v3752 = vadd.f32 %v3250, %v3671
        %v3753 = vadd.f32 %v3251, %v3674
        %v3754 = vadd.f32 %v3252, %v3679
        %v3755 = vadd.f32 %v3253, %v3682
        %v3756 = vadd.f32 %v3254, %v3687
        %v3757 = vadd.f32 %v3255, %v3690
        %v3758 = vadd.f32 %v3256, %v3695
        %v3759 = vadd.f32 %v3257, %v3698
        %v3760 = vadd.f32 %v3258, %v3703
        %v3761 = vadd.f32 %v3259, %v3706
        %v3762 = vadd.f32 %v3260, %v3711
        %v3763 = vadd.f32 %v3261, %v3714
        %v3764 = vadd.f32 %v3262, %v3719
        %v3765 = vld [vmem:[%s222 + $0x10] sm:$0x8]
        %s3766 = scalar_lea.vmem %s1, 16
        %v3767 = vld [vmem:[%s3766] sm:$0x3]
        %v3769 = vunpack.c.l.b16 %v3765
        %v3770 = vpack.c.b16 %v2853, %v3769
        %vm3771 = vcmask 1044480
        %v3772 = vrot.slane %v3770, 3
        %v3773 = vrot.slane %v2895, 3
        %v3774 = vsel %vm3771, %v3772, %v3773
        %v3775 = vrot.slane %v2896, 3
        %v3776 = vsel %vm3771, %v3773, %v3775
        %v3777 = vrot.slane %v2897, 3
        %v3778 = vsel %vm3771, %v3775, %v3777
        %v3779 = vrot.slane %v2898, 3
        %v3780 = vsel %vm3771, %v3777, %v3779
        %v3781 = vrot.slane %v2899, 3
        %v3782 = vsel %vm3771, %v3779, %v3781
        %v3783 = vrot.slane %v2900, 3
        %v3784 = vsel %vm3771, %v3781, %v3783
        %v3785 = vrot.slane %v2901, 3
        %v3786 = vsel %vm3771, %v3783, %v3785
        %v3787 = vrot.slane %v2902, 3
        %v3788 = vsel %vm3771, %v3785, %v3787
        %v3789 = vrot.slane %v2903, 3
        %v3790 = vsel %vm3771, %v3787, %v3789
        %v3791 = vrot.slane %v2904, 3
        %v3792 = vsel %vm3771, %v3789, %v3791
        %v3793 = vrot.slane %v2905, 3
        %v3794 = vsel %vm3771, %v3791, %v3793
        %v3795 = vrot.slane %v2906, 3
        %v3796 = vsel %vm3771, %v3793, %v3795
        %v3797 = vrot.slane %v2907, 3
        %v3798 = vsel %vm3771, %v3795, %v3797
        %v3799 = vrot.slane %v2908, 3
        %v3800 = vsel %vm3771, %v3797, %v3799
        %v3801 = vrot.slane %v2909, 3
        %v3802 = vsel %vm3771, %v3799, %v3801
        %v3803 = vrot.slane %v2910, 3
        %v3804 = vsel %vm3771, %v3801, %v3803
        %v3805 = vrot.slane %v2911, 3
        %v3806 = vsel %vm3771, %v3803, %v3805
        %v3807 = vrot.slane %v2912, 3
        %v3808 = vsel %vm3771, %v3805, %v3807
        %v3809 = vrot.slane %v2913, 3
        %v3810 = vsel %vm3771, %v3807, %v3809
        %v3811 = vrot.slane %v3268, 3
        %v3812 = vsel %vm3771, %v3809, %v3811
        %v3814 = vsel %vm542, %v3774, 0
        %v3817 = vsel %vm542, %v3776, 0
        %v3820 = vsel %vm542, %v3778, 0
        %v3823 = vsel %vm542, %v3780, 0
        %v3826 = vsel %vm542, %v3782, 0
        %v3829 = vsel %vm542, %v3784, 0
        %v3832 = vsel %vm542, %v3786, 0
        %v3835 = vsel %vm542, %v3788, 0
        %v3838 = vsel %vm542, %v3790, 0
        %v3841 = vsel %vm542, %v3792, 0
        %v3844 = vsel %vm542, %v3794, 0
        %v3847 = vsel %vm542, %v3796, 0
        %v3850 = vsel %vm542, %v3798, 0
        %v3853 = vsel %vm542, %v3800, 0
        %v3856 = vsel %vm542, %v3802, 0
        %v3859 = vsel %vm542, %v3804, 0
        %v3862 = vsel %vm542, %v3806, 0
        %v3865 = vsel %vm542, %v3808, 0
        %v3868 = vsel %vm542, %v3810, 0
        %v3871 = vsel %vm542, %v3812, 0
        %v3874 = vsel %vm542, %v3811, 0
        %v3877 = vsel %vm606, %v3767, 0
        %3879 = vmatprep.subr.bf16.mxu0 0
        %3880 = vmatpush1.bf16.msra.mxu0 %v3877
        %3881 = vmatprep.subr.bf16.mxu0 0
        %3882 = vmatpush1.bf16.msra.mxu0 0
        %3883 = vmatprep.subr.bf16.mxu0 0
        %3884 = vmatpush1.bf16.msra.mxu0 0
        %3885 = vmatprep.subr.bf16.mxu0 0
        %3886 = vmatpush1.bf16.msra.mxu0 0
        %3887 = vmatprep.subr.bf16.mxu0 0
        %3888 = vmatpush1.bf16.msra.mxu0 0
        %3889 = vmatprep.subr.bf16.mxu0 0
        %3890 = vmatpush1.bf16.msra.mxu0 0
        %3891 = vmatprep.subr.bf16.mxu0 0
        %3892 = vmatpush1.bf16.msra.mxu0 0
        %3893 = vmatprep.subr.bf16.mxu0 0
        %3894 = vmatpush1.bf16.msra.mxu0 0
        %3895 = vmatprep.subr.bf16.mxu0 0
        %3896 = vmatpush1.bf16.msra.mxu0 0
        %3897 = vmatprep.subr.bf16.mxu0 0
        %3898 = vmatpush1.bf16.msra.mxu0 0
        %3899 = vmatprep.subr.bf16.mxu0 0
        %3900 = vmatpush1.bf16.msra.mxu0 0
        %3901 = vmatprep.subr.bf16.mxu0 0
        %3902 = vmatpush1.bf16.msra.mxu0 0
        %3903 = vmatprep.subr.bf16.mxu0 0
        %3904 = vmatpush1.bf16.msra.mxu0 0
        %3905 = vmatprep.subr.bf16.mxu0 0
        %3906 = vmatpush1.bf16.msra.mxu0 0
        %3907 = vmatprep.subr.bf16.mxu0 0
        %3908 = vmatpush1.bf16.msra.mxu0 0
        %3909 = vmatprep.subr.bf16.mxu0 0
        %3910 = vmatpush1.bf16.msra.mxu0 0
        %3911 = vmatprep.mubr.bf16.mxu0 0
        %3912 = vmatmul.mubr.bf16.gmra.mrb[0].mxu0 %v3814
        %v3913 = vpop.f32.mrb[0].mxu0
        %v3914 = vadd.f32 0.0, %v3913
        %v3915 = vpop.f32.mrb[0].mxu0
        %v3916 = vpop.f32.mrb[0].mxu0
        %v3917 = vadd.f32 0.0, %v3916
        %v3918 = vpop.f32.mrb[0].mxu0
        %3919 = vmatprep.mubr.bf16.mxu0 0
        %3920 = vmatmul.mubr.bf16.gmra.mrb[0].mxu0 %v3817
        %v3921 = vpop.f32.mrb[0].mxu0
        %v3922 = vadd.f32 0.0, %v3921
        %v3923 = vpop.f32.mrb[0].mxu0
        %v3924 = vpop.f32.mrb[0].mxu0
        %v3925 = vadd.f32 0.0, %v3924
        %v3926 = vpop.f32.mrb[0].mxu0
        %3927 = vmatprep.mubr.bf16.mxu0 0
        %3928 = vmatmul.mubr.bf16.gmra.mrb[0].mxu0 %v3820
        %v3929 = vpop.f32.mrb[0].mxu0
        %v3930 = vadd.f32 0.0, %v3929
        %v3931 = vpop.f32.mrb[0].mxu0
        %v3932 = vpop.f32.mrb[0].mxu0
        %v3933 = vadd.f32 0.0, %v3932
        %v3934 = vpop.f32.mrb[0].mxu0
        %3935 = vmatprep.mubr.bf16.mxu0 0
        %3936 = vmatmul.mubr.bf16.gmra.mrb[0].mxu0 %v3823
        %v3937 = vpop.f32.mrb[0].mxu0
        %v3938 = vadd.f32 0.0, %v3937
        %v3939 = vpop.f32.mrb[0].mxu0
        %v3940 = vpop.f32.mrb[0].mxu0
        %v3941 = vadd.f32 0.0, %v3940
        %v3942 = vpop.f32.mrb[0].mxu0
        %3943 = vmatprep.mubr.bf16.mxu0 0
        %3944 = vmatmul.mubr.bf16.gmra.mrb[0].mxu0 %v3826
        %v3945 = vpop.f32.mrb[0].mxu0
        %v3946 = vadd.f32 0.0, %v3945
        %v3947 = vpop.f32.mrb[0].mxu0
        %v3948 = vpop.f32.mrb[0].mxu0
        %v3949 = vadd.f32 0.0, %v3948
        %v3950 = vpop.f32.mrb[0].mxu0
        %3951 = vmatprep.mubr.bf16.mxu0 0
        %3952 = vmatmul.mubr.bf16.gmra.mrb[0].mxu0 %v3829
        %v3953 = vpop.f32.mrb[0].mxu0
        %v3954 = vadd.f32 0.0, %v3953
        %v3955 = vpop.f32.mrb[0].mxu0
        %v3956 = vpop.f32.mrb[0].mxu0
        %v3957 = vadd.f32 0.0, %v3956
        %v3958 = vpop.f32.mrb[0].mxu0
        %3959 = vmatprep.mubr.bf16.mxu0 0
        %3960 = vmatmul.mubr.bf16.gmra.mrb[0].mxu0 %v3832
        %v3961 = vpop.f32.mrb[0].mxu0
        %v3962 = vadd.f32 0.0, %v3961
        %v3963 = vpop.f32.mrb[0].mxu0
        %v3964 = vpop.f32.mrb[0].mxu0
        %v3965 = vadd.f32 0.0, %v3964
        %v3966 = vpop.f32.mrb[0].mxu0
        %3967 = vmatprep.mubr.bf16.mxu0 0
        %3968 = vmatmul.mubr.bf16.gmra.mrb[0].mxu0 %v3835
        %v3969 = vpop.f32.mrb[0].mxu0
        %v3970 = vadd.f32 0.0, %v3969
        %v3971 = vpop.f32.mrb[0].mxu0
        %v3972 = vpop.f32.mrb[0].mxu0
        %v3973 = vadd.f32 0.0, %v3972
        %v3974 = vpop.f32.mrb[0].mxu0
        %3975 = vmatprep.mubr.bf16.mxu0 0
        %3976 = vmatmul.mubr.bf16.gmra.mrb[0].mxu0 %v3838
        %v3977 = vpop.f32.mrb[0].mxu0
        %v3978 = vadd.f32 0.0, %v3977
        %v3979 = vpop.f32.mrb[0].mxu0
        %v3980 = vpop.f32.mrb[0].mxu0
        %v3981 = vadd.f32 0.0, %v3980
        %v3982 = vpop.f32.mrb[0].mxu0
        %3983 = vmatprep.mubr.bf16.mxu0 0
        %3984 = vmatmul.mubr.bf16.gmra.mrb[0].mxu0 %v3841
        %v3985 = vpop.f32.mrb[0].mxu0
        %v3986 = vadd.f32 0.0, %v3985
        %v3987 = vpop.f32.mrb[0].mxu0
        %v3988 = vpop.f32.mrb[0].mxu0
        %v3989 = vadd.f32 0.0, %v3988
        %v3990 = vpop.f32.mrb[0].mxu0
        %3991 = vmatprep.mubr.bf16.mxu0 0
        %3992 = vmatmul.mubr.bf16.gmra.mrb[0].mxu0 %v3844
        %v3993 = vpop.f32.mrb[0].mxu0
        %v3994 = vadd.f32 0.0, %v3993
        %v3995 = vpop.f32.mrb[0].mxu0
        %v3996 = vpop.f32.mrb[0].mxu0
        %v3997 = vadd.f32 0.0, %v3996
        %v3998 = vpop.f32.mrb[0].mxu0
        %3999 = vmatprep.mubr.bf16.mxu0 0
        %4000 = vmatmul.mubr.bf16.gmra.mrb[0].mxu0 %v3847
        %v4001 = vpop.f32.mrb[0].mxu0
        %v4002 = vadd.f32 0.0, %v4001
        %v4003 = vpop.f32.mrb[0].mxu0
        %v4004 = vpop.f32.mrb[0].mxu0
        %v4005 = vadd.f32 0.0, %v4004
        %v4006 = vpop.f32.mrb[0].mxu0
        %4007 = vmatprep.mubr.bf16.mxu0 0
        %4008 = vmatmul.mubr.bf16.gmra.mrb[0].mxu0 %v3850
        %v4009 = vpop.f32.mrb[0].mxu0
        %v4010 = vadd.f32 0.0, %v4009
        %v4011 = vpop.f32.mrb[0].mxu0
        %v4012 = vpop.f32.mrb[0].mxu0
        %v4013 = vadd.f32 0.0, %v4012
        %v4014 = vpop.f32.mrb[0].mxu0
        %4015 = vmatprep.mubr.bf16.mxu0 0
        %4016 = vmatmul.mubr.bf16.gmra.mrb[0].mxu0 %v3853
        %v4017 = vpop.f32.mrb[0].mxu0
        %v4018 = vadd.f32 0.0, %v4017
        %v4019 = vpop.f32.mrb[0].mxu0
        %v4020 = vpop.f32.mrb[0].mxu0
        %v4021 = vadd.f32 0.0, %v4020
        %v4022 = vpop.f32.mrb[0].mxu0
        %4023 = vmatprep.mubr.bf16.mxu0 0
        %4024 = vmatmul.mubr.bf16.gmra.mrb[0].mxu0 %v3856
        %v4025 = vpop.f32.mrb[0].mxu0
        %v4026 = vadd.f32 0.0, %v4025
        %v4027 = vpop.f32.mrb[0].mxu0
        %v4028 = vpop.f32.mrb[0].mxu0
        %v4029 = vadd.f32 0.0, %v4028
        %v4030 = vpop.f32.mrb[0].mxu0
        %4031 = vmatprep.mubr.bf16.mxu0 0
        %4032 = vmatmul.mubr.bf16.gmra.mrb[0].mxu0 %v3859
        %v4033 = vpop.f32.mrb[0].mxu0
        %v4034 = vadd.f32 0.0, %v4033
        %v4035 = vpop.f32.mrb[0].mxu0
        %v4036 = vpop.f32.mrb[0].mxu0
        %v4037 = vadd.f32 0.0, %v4036
        %v4038 = vpop.f32.mrb[0].mxu0
        %4039 = vmatprep.mubr.bf16.mxu0 0
        %4040 = vmatmul.mubr.bf16.gmra.mrb[0].mxu0 %v3862
        %v4041 = vpop.f32.mrb[0].mxu0
        %v4042 = vadd.f32 0.0, %v4041
        %v4043 = vpop.f32.mrb[0].mxu0
        %v4044 = vpop.f32.mrb[0].mxu0
        %v4045 = vadd.f32 0.0, %v4044
        %v4046 = vpop.f32.mrb[0].mxu0
        %4047 = vmatprep.mubr.bf16.mxu0 0
        %4048 = vmatmul.mubr.bf16.gmra.mrb[0].mxu0 %v3865
        %v4049 = vpop.f32.mrb[0].mxu0
        %v4050 = vadd.f32 0.0, %v4049
        %v4051 = vpop.f32.mrb[0].mxu0
        %v4052 = vpop.f32.mrb[0].mxu0
        %v4053 = vadd.f32 0.0, %v4052
        %v4054 = vpop.f32.mrb[0].mxu0
        %4055 = vmatprep.mubr.bf16.mxu0 0
        %4056 = vmatmul.mubr.bf16.gmra.mrb[0].mxu0 %v3868
        %v4057 = vpop.f32.mrb[0].mxu0
        %v4058 = vadd.f32 0.0, %v4057
        %v4059 = vpop.f32.mrb[0].mxu0
        %v4060 = vpop.f32.mrb[0].mxu0
        %v4061 = vadd.f32 0.0, %v4060
        %v4062 = vpop.f32.mrb[0].mxu0
        %4063 = vmatprep.mubr.bf16.mxu0 0
        %4064 = vmatmul.mubr.bf16.gmra.mrb[0].mxu0 %v3871
        %v4065 = vpop.f32.mrb[0].mxu0
        %v4066 = vadd.f32 0.0, %v4065
        %v4067 = vpop.f32.mrb[0].mxu0
        %v4068 = vpop.f32.mrb[0].mxu0
        %v4069 = vadd.f32 0.0, %v4068
        %v4070 = vpop.f32.mrb[0].mxu0
        %4071 = vmatprep.mubr.bf16.mxu0 0
        %4072 = vmatmul.mubr.bf16.gmra.mrb[0].mxu0 %v3874
        %v4073 = vpop.f32.mrb[0].mxu0
        %v4074 = vadd.f32 0.0, %v4073
        %v4075 = vpop.f32.mrb[0].mxu0
        %v4076 = vpop.f32.mrb[0].mxu0
        %v4077 = vpop.f32.mrb[0].mxu0
        %4078 = vdwg.mxu0
        %v4079 = vadd.f32 %v3724, %v3914
        %v4080 = vadd.f32 %v3725, %v3917
        %v4081 = vadd.f32 %v3726, %v3922
        %v4082 = vadd.f32 %v3727, %v3925
        %v4083 = vadd.f32 %v3728, %v3930
        %v4084 = vadd.f32 %v3729, %v3933
        %v4085 = vadd.f32 %v3730, %v3938
        %v4086 = vadd.f32 %v3731, %v3941
        %v4087 = vadd.f32 %v3732, %v3946
        %v4088 = vadd.f32 %v3733, %v3949
        %v4089 = vadd.f32 %v3734, %v3954
        %v4090 = vadd.f32 %v3735, %v3957
        %v4091 = vadd.f32 %v3736, %v3962
        %v4092 = vadd.f32 %v3737, %v3965
        %v4093 = vadd.f32 %v3738, %v3970
        %v4094 = vadd.f32 %v3739, %v3973
        %v4095 = vadd.f32 %v3740, %v3978
        %v4096 = vadd.f32 %v3741, %v3981
        %v4097 = vadd.f32 %v3742, %v3986
        %v4098 = vadd.f32 %v3743, %v3989
        %v4099 = vadd.f32 %v3744, %v3994
        %v4100 = vadd.f32 %v3745, %v3997
        %v4101 = vadd.f32 %v3746, %v4002
        %v4102 = vadd.f32 %v3747, %v4005
        %v4103 = vadd.f32 %v3748, %v4010
        %v4104 = vadd.f32 %v3749, %v4013
        %v4105 = vadd.f32 %v3750, %v4018
        %v4106 = vadd.f32 %v3751, %v4021
        %v4107 = vadd.f32 %v3752, %v4026
        %v4108 = vadd.f32 %v3753, %v4029
        %v4109 = vadd.f32 %v3754, %v4034
        %v4110 = vadd.f32 %v3755, %v4037
        %v4111 = vadd.f32 %v3756, %v4042
        %v4112 = vadd.f32 %v3757, %v4045
        %v4113 = vadd.f32 %v3758, %v4050
        %v4114 = vadd.f32 %v3759, %v4053
        %v4115 = vadd.f32 %v3760, %v4058
        %v4116 = vadd.f32 %v3761, %v4061
        %v4117 = vadd.f32 %v3762, %v4066
        %v4118 = vadd.f32 %v3763, %v4069
        %v4119 = vadd.f32 %v3764, %v4074
        %v4120 = vld [vmem:[%s2] sm:$0x1]
        %v4122 = vlaneseq
        %v4123 = vshrl.u32 %v4122, 7
        %v4124 = vsub.s32 0, %v4123
        %v4125 = vrot.slane %v4120, %v4124
        %v4127 = vadd.f32 %v4079, %v4125
        %v4128 = vadd.f32 %v4080, %v4125
        %v4129 = vadd.f32 %v4081, %v4125
        %v4130 = vadd.f32 %v4082, %v4125
        %v4131 = vadd.f32 %v4083, %v4125
        %v4132 = vadd.f32 %v4084, %v4125
        %v4133 = vadd.f32 %v4085, %v4125
        %v4134 = vadd.f32 %v4086, %v4125
        %v4135 = vadd.f32 %v4087, %v4125
        %v4136 = vadd.f32 %v4088, %v4125
        %v4137 = vadd.f32 %v4089, %v4125
        %v4138 = vadd.f32 %v4090, %v4125
        %v4139 = vadd.f32 %v4091, %v4125
        %v4140 = vadd.f32 %v4092, %v4125
        %v4141 = vadd.f32 %v4093, %v4125
        %v4142 = vadd.f32 %v4094, %v4125
        %v4143 = vadd.f32 %v4095, %v4125
        %v4144 = vadd.f32 %v4096, %v4125
        %v4145 = vadd.f32 %v4097, %v4125
        %v4146 = vadd.f32 %v4098, %v4125
        %v4147 = vadd.f32 %v4099, %v4125
        %v4148 = vadd.f32 %v4100, %v4125
        %v4149 = vadd.f32 %v4101, %v4125
        %v4150 = vadd.f32 %v4102, %v4125
        %v4151 = vadd.f32 %v4103, %v4125
        %v4152 = vadd.f32 %v4104, %v4125
        %v4153 = vadd.f32 %v4105, %v4125
        %v4154 = vadd.f32 %v4106, %v4125
        %v4155 = vadd.f32 %v4107, %v4125
        %v4156 = vadd.f32 %v4108, %v4125
        %v4157 = vadd.f32 %v4109, %v4125
        %v4158 = vadd.f32 %v4110, %v4125
        %v4159 = vadd.f32 %v4111, %v4125
        %v4160 = vadd.f32 %v4112, %v4125
        %v4161 = vadd.f32 %v4113, %v4125
        %v4162 = vadd.f32 %v4114, %v4125
        %v4163 = vadd.f32 %v4115, %v4125
        %v4164 = vadd.f32 %v4116, %v4125
        %v4165 = vadd.f32 %v4117, %v4125
        %v4166 = vadd.f32 %v4118, %v4125
        %v4167 = vadd.f32 %v4119, %v4125
        %v4168 = vmax.f32 %v4127, 0.0
        %v4169 = vmax.f32 %v4128, 0.0
        %v4170 = vmax.f32 %v4129, 0.0
        %v4171 = vmax.f32 %v4130, 0.0
        %v4172 = vmax.f32 %v4131, 0.0
        %v4173 = vmax.f32 %v4132, 0.0
        %v4174 = vmax.f32 %v4133, 0.0
        %v4175 = vmax.f32 %v4134, 0.0
        %v4176 = vmax.f32 %v4135, 0.0
        %v4177 = vmax.f32 %v4136, 0.0
        %v4178 = vmax.f32 %v4137, 0.0
        %v4179 = vmax.f32 %v4138, 0.0
        %v4180 = vmax.f32 %v4139, 0.0
        %v4181 = vmax.f32 %v4140, 0.0
        %v4182 = vmax.f32 %v4141, 0.0
        %v4183 = vmax.f32 %v4142, 0.0
        %v4184 = vmax.f32 %v4143, 0.0
        %v4185 = vmax.f32 %v4144, 0.0
        %v4186 = vmax.f32 %v4145, 0.0
        %v4187 = vmax.f32 %v4146, 0.0
        %v4188 = vmax.f32 %v4147, 0.0
        %v4189 = vmax.f32 %v4148, 0.0
        %v4190 = vmax.f32 %v4149, 0.0
        %v4191 = vmax.f32 %v4150, 0.0
        %v4192 = vmax.f32 %v4151, 0.0
        %v4193 = vmax.f32 %v4152, 0.0
        %v4194 = vmax.f32 %v4153, 0.0
        %v4195 = vmax.f32 %v4154, 0.0
        %v4196 = vmax.f32 %v4155, 0.0
        %v4197 = vmax.f32 %v4156, 0.0
        %v4198 = vmax.f32 %v4157, 0.0
        %v4199 = vmax.f32 %v4158, 0.0
        %v4200 = vmax.f32 %v4159, 0.0
        %v4201 = vmax.f32 %v4160, 0.0
        %v4202 = vmax.f32 %v4161, 0.0
        %v4203 = vmax.f32 %v4162, 0.0
        %v4204 = vmax.f32 %v4163, 0.0
        %v4205 = vmax.f32 %v4164, 0.0
        %v4206 = vmax.f32 %v4165, 0.0
        %v4207 = vmax.f32 %v4166, 0.0
        %v4208 = vmax.f32 %v4167, 0.0
        %v4209 = vpack.c.bf16 %v4169, %v4168
        %v4210 = vpack.c.bf16 %v4171, %v4170
        %v4211 = vpack.c.bf16 %v4173, %v4172
        %v4212 = vpack.c.bf16 %v4175, %v4174
        %v4213 = vpack.c.bf16 %v4177, %v4176
        %v4214 = vpack.c.bf16 %v4179, %v4178
        %v4215 = vpack.c.bf16 %v4181, %v4180
        %v4216 = vpack.c.bf16 %v4183, %v4182
        %v4217 = vpack.c.bf16 %v4185, %v4184
        %v4218 = vpack.c.bf16 %v4187, %v4186
        %v4219 = vpack.c.bf16 %v4189, %v4188
        %v4220 = vpack.c.bf16 %v4191, %v4190
        %v4221 = vpack.c.bf16 %v4193, %v4192
        %v4222 = vpack.c.bf16 %v4195, %v4194
        %v4223 = vpack.c.bf16 %v4197, %v4196
        %v4224 = vpack.c.bf16 %v4199, %v4198
        %v4225 = vpack.c.bf16 %v4201, %v4200
        %v4226 = vpack.c.bf16 %v4203, %v4202
        %v4227 = vpack.c.bf16 %v4205, %v4204
        %v4228 = vpack.c.bf16 %v4207, %v4206
        %v4229 = vpack.c.bf16 %v4208, %v4208
        %v4230 = vld [vmem:[%s3] sm:$0xf]
        %v4231 = vld [vmem:[%s3 + $0x4] sm:$0xf]
        %v4232 = vld [vmem:[%s3 + $0x8] sm:$0xf]
        %v4233 = vld [vmem:[%s3 + $0xc] sm:$0xf]
        %v4234 = vld [vmem:[%s4] sm:$0x1]
        %v4236 = vlaneseq
        %v4237 = vshrl.u32 %v4236, 7
        %v4238 = vsub.s32 0, %v4237
        %v4239 = vrot.slane %v4234, %v4238
        %v4245 = vunpack.c.l.b16 %v4230
        %v4246 = vunpack.c.l.b16 %v4231
        %v4247 = vunpack.c.l.b16 %v4232
        %v4248 = vunpack.c.l.b16 %v4233
        %v4249 = vpack.c.b16 %v4246, %v4245
        %v4250 = vpack.c.b16 %v4248, %v4247
        %vm4253 = vcmask 261120
        %v4255 = vsel %vm4253, %v4209, 0
        %v4258 = vsel %vm4253, %v4210, 0
        %v4261 = vsel %vm4253, %v4211, 0
        %v4264 = vsel %vm4253, %v4212, 0
        %v4267 = vsel %vm4253, %v4213, 0
        %v4270 = vsel %vm4253, %v4214, 0
        %v4273 = vsel %vm4253, %v4215, 0
        %v4276 = vsel %vm4253, %v4216, 0
        %v4279 = vsel %vm4253, %v4217, 0
        %v4282 = vsel %vm4253, %v4218, 0
        %v4285 = vsel %vm4253, %v4219, 0
        %v4288 = vsel %vm4253, %v4220, 0
        %v4291 = vsel %vm4253, %v4221, 0
        %v4294 = vsel %vm4253, %v4222, 0
        %v4297 = vsel %vm4253, %v4223, 0
        %v4300 = vsel %vm4253, %v4224, 0
        %v4303 = vsel %vm4253, %v4225, 0
        %v4306 = vsel %vm4253, %v4226, 0
        %v4309 = vsel %vm4253, %v4227, 0
        %v4312 = vsel %vm4253, %v4228, 0
        %v4315 = vsel %vm4253, %v4229, 0
        %4317 = vmatprep.subr.bf16.mxu0 0
        %4318 = vmatpush1.bf16.msra.mxu0 %v4249
        %4319 = vmatprep.subr.bf16.mxu0 0
        %4320 = vmatpush1.bf16.msra.mxu0 %v4250
        %4321 = vmatprep.subr.bf16.mxu0 0
        %4322 = vmatpush1.bf16.msra.mxu0 0
        %4323 = vmatprep.subr.bf16.mxu0 0
        %4324 = vmatpush1.bf16.msra.mxu0 0
        %4325 = vmatprep.subr.bf16.mxu0 0
        %4326 = vmatpush1.bf16.msra.mxu0 0
        %4327 = vmatprep.subr.bf16.mxu0 0
        %4328 = vmatpush1.bf16.msra.mxu0 0
        %4329 = vmatprep.subr.bf16.mxu0 0
        %4330 = vmatpush1.bf16.msra.mxu0 0
        %4331 = vmatprep.subr.bf16.mxu0 0
        %4332 = vmatpush1.bf16.msra.mxu0 0
        %4333 = vmatprep.subr.bf16.mxu0 0
        %4334 = vmatpush1.bf16.msra.mxu0 0
        %4335 = vmatprep.subr.bf16.mxu0 0
        %4336 = vmatpush1.bf16.msra.mxu0 0
        %4337 = vmatprep.subr.bf16.mxu0 0
        %4338 = vmatpush1.bf16.msra.mxu0 0
        %4339 = vmatprep.subr.bf16.mxu0 0
        %4340 = vmatpush1.bf16.msra.mxu0 0
        %4341 = vmatprep.subr.bf16.mxu0 0
        %4342 = vmatpush1.bf16.msra.mxu0 0
        %4343 = vmatprep.subr.bf16.mxu0 0
        %4344 = vmatpush1.bf16.msra.mxu0 0
        %4345 = vmatprep.subr.bf16.mxu0 0
        %4346 = vmatpush1.bf16.msra.mxu0 0
        %4347 = vmatprep.subr.bf16.mxu0 0
        %4348 = vmatpush1.bf16.msra.mxu0 0
        %4349 = vmatprep.mubr.bf16.mxu0 0
        %4350 = vmatmul.mubr.bf16.gmra.mrb[0].mxu0 %v4255
        %v4351 = vpop.f32.mrb[0].mxu0
        %v4352 = vadd.f32 %v4239, %v4351
        %v4353 = vpop.f32.mrb[0].mxu0
        %v4354 = vpop.f32.mrb[0].mxu0
        %v4355 = vadd.f32 %v4239, %v4354
        %v4356 = vpop.f32.mrb[0].mxu0
        %4357 = vmatprep.mubr.bf16.mxu0 0
        %4358 = vmatmul.mubr.bf16.gmra.mrb[0].mxu0 %v4258
        %v4359 = vpop.f32.mrb[0].mxu0
        %v4360 = vadd.f32 %v4239, %v4359
        %v4361 = vpop.f32.mrb[0].mxu0
        %v4362 = vpop.f32.mrb[0].mxu0
        %v4363 = vadd.f32 %v4239, %v4362
        %v4364 = vpop.f32.mrb[0].mxu0
        %4365 = vmatprep.mubr.bf16.mxu0 0
        %4366 = vmatmul.mubr.bf16.gmra.mrb[0].mxu0 %v4261
        %v4367 = vpop.f32.mrb[0].mxu0
        %v4368 = vadd.f32 %v4239, %v4367
        %v4369 = vpop.f32.mrb[0].mxu0
        %v4370 = vpop.f32.mrb[0].mxu0
        %v4371 = vadd.f32 %v4239, %v4370
        %v4372 = vpop.f32.mrb[0].mxu0
        %4373 = vmatprep.mubr.bf16.mxu0 0
        %4374 = vmatmul.mubr.bf16.gmra.mrb[0].mxu0 %v4264
        %v4375 = vpop.f32.mrb[0].mxu0
        %v4376 = vadd.f32 %v4239, %v4375
        %v4377 = vpop.f32.mrb[0].mxu0
        %v4378 = vpop.f32.mrb[0].mxu0
        %v4379 = vadd.f32 %v4239, %v4378
        %v4380 = vpop.f32.mrb[0].mxu0
        %4381 = vmatprep.mubr.bf16.mxu0 0
        %4382 = vmatmul.mubr.bf16.gmra.mrb[0].mxu0 %v4267
        %v4383 = vpop.f32.mrb[0].mxu0
        %v4384 = vadd.f32 %v4239, %v4383
        %v4385 = vpop.f32.mrb[0].mxu0
        %v4386 = vpop.f32.mrb[0].mxu0
        %v4387 = vadd.f32 %v4239, %v4386
        %v4388 = vpop.f32.mrb[0].mxu0
        %4389 = vmatprep.mubr.bf16.mxu0 0
        %4390 = vmatmul.mubr.bf16.gmra.mrb[0].mxu0 %v4270
        %v4391 = vpop.f32.mrb[0].mxu0
        %v4392 = vadd.f32 %v4239, %v4391
        %v4393 = vpop.f32.mrb[0].mxu0
        %v4394 = vpop.f32.mrb[0].mxu0
        %v4395 = vadd.f32 %v4239, %v4394
        %v4396 = vpop.f32.mrb[0].mxu0
        %4397 = vmatprep.mubr.bf16.mxu0 0
        %4398 = vmatmul.mubr.bf16.gmra.mrb[0].mxu0 %v4273
        %v4399 = vpop.f32.mrb[0].mxu0
        %v4400 = vadd.f32 %v4239, %v4399
        %v4401 = vpop.f32.mrb[0].mxu0
        %v4402 = vpop.f32.mrb[0].mxu0
        %v4403 = vadd.f32 %v4239, %v4402
        %v4404 = vpop.f32.mrb[0].mxu0
        %4405 = vmatprep.mubr.bf16.mxu0 0
        %4406 = vmatmul.mubr.bf16.gmra.mrb[0].mxu0 %v4276
        %v4407 = vpop.f32.mrb[0].mxu0
        %v4408 = vadd.f32 %v4239, %v4407
        %v4409 = vpop.f32.mrb[0].mxu0
        %v4410 = vpop.f32.mrb[0].mxu0
        %v4411 = vadd.f32 %v4239, %v4410
        %v4412 = vpop.f32.mrb[0].mxu0
        %4413 = vmatprep.mubr.bf16.mxu0 0
        %4414 = vmatmul.mubr.bf16.gmra.mrb[0].mxu0 %v4279
        %v4415 = vpop.f32.mrb[0].mxu0
        %v4416 = vadd.f32 %v4239, %v4415
        %v4417 = vpop.f32.mrb[0].mxu0
        %v4418 = vpop.f32.mrb[0].mxu0
        %v4419 = vadd.f32 %v4239, %v4418
        %v4420 = vpop.f32.mrb[0].mxu0
        %4421 = vmatprep.mubr.bf16.mxu0 0
        %4422 = vmatmul.mubr.bf16.gmra.mrb[0].mxu0 %v4282
        %v4423 = vpop.f32.mrb[0].mxu0
        %v4424 = vadd.f32 %v4239, %v4423
        %v4425 = vpop.f32.mrb[0].mxu0
        %v4426 = vpop.f32.mrb[0].mxu0
        %v4427 = vadd.f32 %v4239, %v4426
        %v4428 = vpop.f32.mrb[0].mxu0
        %4429 = vmatprep.mubr.bf16.mxu0 0
        %4430 = vmatmul.mubr.bf16.gmra.mrb[0].mxu0 %v4285
        %v4431 = vpop.f32.mrb[0].mxu0
        %v4432 = vadd.f32 %v4239, %v4431
        %v4433 = vpop.f32.mrb[0].mxu0
        %v4434 = vpop.f32.mrb[0].mxu0
        %v4435 = vadd.f32 %v4239, %v4434
        %v4436 = vpop.f32.mrb[0].mxu0
        %4437 = vmatprep.mubr.bf16.mxu0 0
        %4438 = vmatmul.mubr.bf16.gmra.mrb[0].mxu0 %v4288
        %v4439 = vpop.f32.mrb[0].mxu0
        %v4440 = vadd.f32 %v4239, %v4439
        %v4441 = vpop.f32.mrb[0].mxu0
        %v4442 = vpop.f32.mrb[0].mxu0
        %v4443 = vadd.f32 %v4239, %v4442
        %v4444 = vpop.f32.mrb[0].mxu0
        %4445 = vmatprep.mubr.bf16.mxu0 0
        %4446 = vmatmul.mubr.bf16.gmra.mrb[0].mxu0 %v4291
        %v4447 = vpop.f32.mrb[0].mxu0
        %v4448 = vadd.f32 %v4239, %v4447
        %v4449 = vpop.f32.mrb[0].mxu0
        %v4450 = vpop.f32.mrb[0].mxu0
        %v4451 = vadd.f32 %v4239, %v4450
        %v4452 = vpop.f32.mrb[0].mxu0
        %4453 = vmatprep.mubr.bf16.mxu0 0
        %4454 = vmatmul.mubr.bf16.gmra.mrb[0].mxu0 %v4294
        %v4455 = vpop.f32.mrb[0].mxu0
        %v4456 = vadd.f32 %v4239, %v4455
        %v4457 = vpop.f32.mrb[0].mxu0
        %v4458 = vpop.f32.mrb[0].mxu0
        %v4459 = vadd.f32 %v4239, %v4458
        %v4460 = vpop.f32.mrb[0].mxu0
        %4461 = vmatprep.mubr.bf16.mxu0 0
        %4462 = vmatmul.mubr.bf16.gmra.mrb[0].mxu0 %v4297
        %v4463 = vpop.f32.mrb[0].mxu0
        %v4464 = vadd.f32 %v4239, %v4463
        %v4465 = vpop.f32.mrb[0].mxu0
        %v4466 = vpop.f32.mrb[0].mxu0
        %v4467 = vadd.f32 %v4239, %v4466
        %v4468 = vpop.f32.mrb[0].mxu0
        %4469 = vmatprep.mubr.bf16.mxu0 0
        %4470 = vmatmul.mubr.bf16.gmra.mrb[0].mxu0 %v4300
        %v4471 = vpop.f32.mrb[0].mxu0
        %v4472 = vadd.f32 %v4239, %v4471
        %v4473 = vpop.f32.mrb[0].mxu0
        %v4474 = vpop.f32.mrb[0].mxu0
        %v4475 = vadd.f32 %v4239, %v4474
        %v4476 = vpop.f32.mrb[0].mxu0
        %4477 = vmatprep.mubr.bf16.mxu0 0
        %4478 = vmatmul.mubr.bf16.gmra.mrb[0].mxu0 %v4303
        %v4479 = vpop.f32.mrb[0].mxu0
        %v4480 = vadd.f32 %v4239, %v4479
        %v4481 = vpop.f32.mrb[0].mxu0
        %v4482 = vpop.f32.mrb[0].mxu0
        %v4483 = vadd.f32 %v4239, %v4482
        %v4484 = vpop.f32.mrb[0].mxu0
        %4485 = vmatprep.mubr.bf16.mxu0 0
        %4486 = vmatmul.mubr.bf16.gmra.mrb[0].mxu0 %v4306
        %v4487 = vpop.f32.mrb[0].mxu0
        %v4488 = vadd.f32 %v4239, %v4487
        %v4489 = vpop.f32.mrb[0].mxu0
        %v4490 = vpop.f32.mrb[0].mxu0
        %v4491 = vadd.f32 %v4239, %v4490
        %v4492 = vpop.f32.mrb[0].mxu0
        %4493 = vmatprep.mubr.bf16.mxu0 0
        %4494 = vmatmul.mubr.bf16.gmra.mrb[0].mxu0 %v4309
        %v4495 = vpop.f32.mrb[0].mxu0
        %v4496 = vadd.f32 %v4239, %v4495
        %v4497 = vpop.f32.mrb[0].mxu0
        %v4498 = vpop.f32.mrb[0].mxu0
        %v4499 = vadd.f32 %v4239, %v4498
        %v4500 = vpop.f32.mrb[0].mxu0
        %4501 = vmatprep.mubr.bf16.mxu0 0
        %4502 = vmatmul.mubr.bf16.gmra.mrb[0].mxu0 %v4312
        %v4503 = vpop.f32.mrb[0].mxu0
        %v4504 = vadd.f32 %v4239, %v4503
        %v4505 = vpop.f32.mrb[0].mxu0
        %v4506 = vpop.f32.mrb[0].mxu0
        %v4507 = vadd.f32 %v4239, %v4506
        %v4508 = vpop.f32.mrb[0].mxu0
        %4509 = vmatprep.mubr.bf16.mxu0 0
        %4510 = vmatmul.mubr.bf16.gmra.mrb[0].mxu0 %v4315
        %v4511 = vpop.f32.mrb[0].mxu0
        %v4512 = vadd.f32 %v4239, %v4511
        %v4513 = vpop.f32.mrb[0].mxu0
        %v4514 = vpop.f32.mrb[0].mxu0
        %v4515 = vpop.f32.mrb[0].mxu0
        %4516 = vdwg.mxu0
        %vm4517 = vcmp.lt.f32.partialorder %v4352, 0.0
        %vm4518 = vcmp.lt.f32.partialorder %v4355, 0.0
        %vm4519 = vcmp.lt.f32.partialorder %v4360, 0.0
        %vm4520 = vcmp.lt.f32.partialorder %v4363, 0.0
        %vm4521 = vcmp.lt.f32.partialorder %v4368, 0.0
        %vm4522 = vcmp.lt.f32.partialorder %v4371, 0.0
        %vm4523 = vcmp.lt.f32.partialorder %v4376, 0.0
        %vm4524 = vcmp.lt.f32.partialorder %v4379, 0.0
        %vm4525 = vcmp.lt.f32.partialorder %v4384, 0.0
        %vm4526 = vcmp.lt.f32.partialorder %v4387, 0.0
        %vm4527 = vcmp.lt.f32.partialorder %v4392, 0.0
        %vm4528 = vcmp.lt.f32.partialorder %v4395, 0.0
        %vm4529 = vcmp.lt.f32.partialorder %v4400, 0.0
        %vm4530 = vcmp.lt.f32.partialorder %v4403, 0.0
        %vm4531 = vcmp.lt.f32.partialorder %v4408, 0.0
        %vm4532 = vcmp.lt.f32.partialorder %v4411, 0.0
        %vm4533 = vcmp.lt.f32.partialorder %v4416, 0.0
        %vm4534 = vcmp.lt.f32.partialorder %v4419, 0.0
        %vm4535 = vcmp.lt.f32.partialorder %v4424, 0.0
        %vm4536 = vcmp.lt.f32.partialorder %v4427, 0.0
        %vm4537 = vcmp.lt.f32.partialorder %v4432, 0.0
        %vm4538 = vcmp.lt.f32.partialorder %v4435, 0.0
        %vm4539 = vcmp.lt.f32.partialorder %v4440, 0.0
        %vm4540 = vcmp.lt.f32.partialorder %v4443, 0.0
        %vm4541 = vcmp.lt.f32.partialorder %v4448, 0.0
        %vm4542 = vcmp.lt.f32.partialorder %v4451, 0.0
        %vm4543 = vcmp.lt.f32.partialorder %v4456, 0.0
        %vm4544 = vcmp.lt.f32.partialorder %v4459, 0.0
        %vm4545 = vcmp.lt.f32.partialorder %v4464, 0.0
        %vm4546 = vcmp.lt.f32.partialorder %v4467, 0.0
        %vm4547 = vcmp.lt.f32.partialorder %v4472, 0.0
        %vm4548 = vcmp.lt.f32.partialorder %v4475, 0.0
        %vm4549 = vcmp.lt.f32.partialorder %v4480, 0.0
        %vm4550 = vcmp.lt.f32.partialorder %v4483, 0.0
        %vm4551 = vcmp.lt.f32.partialorder %v4488, 0.0
        %vm4552 = vcmp.lt.f32.partialorder %v4491, 0.0
        %vm4553 = vcmp.lt.f32.partialorder %v4496, 0.0
        %vm4554 = vcmp.lt.f32.partialorder %v4499, 0.0
        %vm4555 = vcmp.lt.f32.partialorder %v4504, 0.0
        %vm4556 = vcmp.lt.f32.partialorder %v4507, 0.0
        %vm4557 = vcmp.lt.f32.partialorder %v4512, 0.0
        %v4558 = vsub.f32 0.0, %v4352
        %v4559 = vsub.f32 0.0, %v4355
        %v4560 = vsub.f32 0.0, %v4360
        %v4561 = vsub.f32 0.0, %v4363
        %v4562 = vsub.f32 0.0, %v4368
        %v4563 = vsub.f32 0.0, %v4371
        %v4564 = vsub.f32 0.0, %v4376
        %v4565 = vsub.f32 0.0, %v4379
        %v4566 = vsub.f32 0.0, %v4384
        %v4567 = vsub.f32 0.0, %v4387
        %v4568 = vsub.f32 0.0, %v4392
        %v4569 = vsub.f32 0.0, %v4395
        %v4570 = vsub.f32 0.0, %v4400
        %v4571 = vsub.f32 0.0, %v4403
        %v4572 = vsub.f32 0.0, %v4408
        %v4573 = vsub.f32 0.0, %v4411
        %v4574 = vsub.f32 0.0, %v4416
        %v4575 = vsub.f32 0.0, %v4419
        %v4576 = vsub.f32 0.0, %v4424
        %v4577 = vsub.f32 0.0, %v4427
        %v4578 = vsub.f32 0.0, %v4432
        %v4579 = vsub.f32 0.0, %v4435
        %v4580 = vsub.f32 0.0, %v4440
        %v4581 = vsub.f32 0.0, %v4443
        %v4582 = vsub.f32 0.0, %v4448
        %v4583 = vsub.f32 0.0, %v4451
        %v4584 = vsub.f32 0.0, %v4456
        %v4585 = vsub.f32 0.0, %v4459
        %v4586 = vsub.f32 0.0, %v4464
        %v4587 = vsub.f32 0.0, %v4467
        %v4588 = vsub.f32 0.0, %v4472
        %v4589 = vsub.f32 0.0, %v4475
        %v4590 = vsub.f32 0.0, %v4480
        %v4591 = vsub.f32 0.0, %v4483
        %v4592 = vsub.f32 0.0, %v4488
        %v4593 = vsub.f32 0.0, %v4491
        %v4594 = vsub.f32 0.0, %v4496
        %v4595 = vsub.f32 0.0, %v4499
        %v4596 = vsub.f32 0.0, %v4504
        %v4597 = vsub.f32 0.0, %v4507
        %v4598 = vsub.f32 0.0, %v4512
        %v4599 = vsel %vm4517, %v4352, %v4558
        %v4600 = vsel %vm4518, %v4355, %v4559
        %v4601 = vsel %vm4519, %v4360, %v4560
        %v4602 = vsel %vm4520, %v4363, %v4561
        %v4603 = vsel %vm4521, %v4368, %v4562
        %v4604 = vsel %vm4522, %v4371, %v4563
        %v4605 = vsel %vm4523, %v4376, %v4564
        %v4606 = vsel %vm4524, %v4379, %v4565
        %v4607 = vsel %vm4525, %v4384, %v4566
        %v4608 = vsel %vm4526, %v4387, %v4567
        %v4609 = vsel %vm4527, %v4392, %v4568
        %v4610 = vsel %vm4528, %v4395, %v4569
        %v4611 = vsel %vm4529, %v4400, %v4570
        %v4612 = vsel %vm4530, %v4403, %v4571
        %v4613 = vsel %vm4531, %v4408, %v4572
        %v4614 = vsel %vm4532, %v4411, %v4573
        %v4615 = vsel %vm4533, %v4416, %v4574
        %v4616 = vsel %vm4534, %v4419, %v4575
        %v4617 = vsel %vm4535, %v4424, %v4576
        %v4618 = vsel %vm4536, %v4427, %v4577
        %v4619 = vsel %vm4537, %v4432, %v4578
        %v4620 = vsel %vm4538, %v4435, %v4579
        %v4621 = vsel %vm4539, %v4440, %v4580
        %v4622 = vsel %vm4540, %v4443, %v4581
        %v4623 = vsel %vm4541, %v4448, %v4582
        %v4624 = vsel %vm4542, %v4451, %v4583
        %v4625 = vsel %vm4543, %v4456, %v4584
        %v4626 = vsel %vm4544, %v4459, %v4585
        %v4627 = vsel %vm4545, %v4464, %v4586
        %v4628 = vsel %vm4546, %v4467, %v4587
        %v4629 = vsel %vm4547, %v4472, %v4588
        %v4630 = vsel %vm4548, %v4475, %v4589
        %v4631 = vsel %vm4549, %v4480, %v4590
        %v4632 = vsel %vm4550, %v4483, %v4591
        %v4633 = vsel %vm4551, %v4488, %v4592
        %v4634 = vsel %vm4552, %v4491, %v4593
        %v4635 = vsel %vm4553, %v4496, %v4594
        %v4636 = vsel %vm4554, %v4499, %v4595
        %v4637 = vsel %vm4555, %v4504, %v4596
        %v4638 = vsel %vm4556, %v4507, %v4597
        %v4639 = vsel %vm4557, %v4512, %v4598
        %v4640 = vmul.f32 %v4599, 1.442695
        %v4641 = vpow.pop %v4640
        %v4642 = vmul.f32 %v4600, 1.442695
        %v4643 = vpow.pop %v4642
        %v4644 = vmul.f32 %v4601, 1.442695
        %v4645 = vpow.pop %v4644
        %v4646 = vmul.f32 %v4602, 1.442695
        %v4647 = vpow.pop %v4646
        %v4648 = vmul.f32 %v4603, 1.442695
        %v4649 = vpow.pop %v4648
        %v4650 = vmul.f32 %v4604, 1.442695
        %v4651 = vpow.pop %v4650
        %v4652 = vmul.f32 %v4605, 1.442695
        %v4653 = vpow.pop %v4652
        %v4654 = vmul.f32 %v4606, 1.442695
        %v4655 = vpow.pop %v4654
        %v4656 = vmul.f32 %v4607, 1.442695
        %v4657 = vpow.pop %v4656
        %v4658 = vmul.f32 %v4608, 1.442695
        %v4659 = vpow.pop %v4658
        %v4660 = vmul.f32 %v4609, 1.442695
        %v4661 = vpow.pop %v4660
        %v4662 = vmul.f32 %v4610, 1.442695
        %v4663 = vpow.pop %v4662
        %v4664 = vmul.f32 %v4611, 1.442695
        %v4665 = vpow.pop %v4664
        %v4666 = vmul.f32 %v4612, 1.442695
        %v4667 = vpow.pop %v4666
        %v4668 = vmul.f32 %v4613, 1.442695
        %v4669 = vpow.pop %v4668
        %v4670 = vmul.f32 %v4614, 1.442695
        %v4671 = vpow.pop %v4670
        %v4672 = vmul.f32 %v4615, 1.442695
        %v4673 = vpow.pop %v4672
        %v4674 = vmul.f32 %v4616, 1.442695
        %v4675 = vpow.pop %v4674
        %v4676 = vmul.f32 %v4617, 1.442695
        %v4677 = vpow.pop %v4676
        %v4678 = vmul.f32 %v4618, 1.442695
        %v4679 = vpow.pop %v4678
        %v4680 = vmul.f32 %v4619, 1.442695
        %v4681 = vpow.pop %v4680
        %v4682 = vmul.f32 %v4620, 1.442695
        %v4683 = vpow.pop %v4682
        %v4684 = vmul.f32 %v4621, 1.442695
        %v4685 = vpow.pop %v4684
        %v4686 = vmul.f32 %v4622, 1.442695
        %v4687 = vpow.pop %v4686
        %v4688 = vmul.f32 %v4623, 1.442695
        %v4689 = vpow.pop %v4688
        %v4690 = vmul.f32 %v4624, 1.442695
        %v4691 = vpow.pop %v4690
        %v4692 = vmul.f32 %v4625, 1.442695
        %v4693 = vpow.pop %v4692
        %v4694 = vmul.f32 %v4626, 1.442695
        %v4695 = vpow.pop %v4694
        %v4696 = vmul.f32 %v4627, 1.442695
        %v4697 = vpow.pop %v4696
        %v4698 = vmul.f32 %v4628, 1.442695
        %v4699 = vpow.pop %v4698
        %v4700 = vmul.f32 %v4629, 1.442695
        %v4701 = vpow.pop %v4700
        %v4702 = vmul.f32 %v4630, 1.442695
        %v4703 = vpow.pop %v4702
        %v4704 = vmul.f32 %v4631, 1.442695
        %v4705 = vpow.pop %v4704
        %v4706 = vmul.f32 %v4632, 1.442695
        %v4707 = vpow.pop %v4706
        %v4708 = vmul.f32 %v4633, 1.442695
        %v4709 = vpow.pop %v4708
        %v4710 = vmul.f32 %v4634, 1.442695
        %v4711 = vpow.pop %v4710
        %v4712 = vmul.f32 %v4635, 1.442695
        %v4713 = vpow.pop %v4712
        %v4714 = vmul.f32 %v4636, 1.442695
        %v4715 = vpow.pop %v4714
        %v4716 = vmul.f32 %v4637, 1.442695
        %v4717 = vpow.pop %v4716
        %v4718 = vmul.f32 %v4638, 1.442695
        %v4719 = vpow.pop %v4718
        %v4720 = vmul.f32 %v4639, 1.442695
        %v4721 = vpow.pop %v4720
        %v4722 = vadd.f32 %v4641, 1.0
        %v4723 = vadd.f32 %v4643, 1.0
        %v4724 = vadd.f32 %v4645, 1.0
        %v4725 = vadd.f32 %v4647, 1.0
        %v4726 = vadd.f32 %v4649, 1.0
        %v4727 = vadd.f32 %v4651, 1.0
        %v4728 = vadd.f32 %v4653, 1.0
        %v4729 = vadd.f32 %v4655, 1.0
        %v4730 = vadd.f32 %v4657, 1.0
        %v4731 = vadd.f32 %v4659, 1.0
        %v4732 = vadd.f32 %v4661, 1.0
        %v4733 = vadd.f32 %v4663, 1.0
        %v4734 = vadd.f32 %v4665, 1.0
        %v4735 = vadd.f32 %v4667, 1.0
        %v4736 = vadd.f32 %v4669, 1.0
        %v4737 = vadd.f32 %v4671, 1.0
        %v4738 = vadd.f32 %v4673, 1.0
        %v4739 = vadd.f32 %v4675, 1.0
        %v4740 = vadd.f32 %v4677, 1.0
        %v4741 = vadd.f32 %v4679, 1.0
        %v4742 = vadd.f32 %v4681, 1.0
        %v4743 = vadd.f32 %v4683, 1.0
        %v4744 = vadd.f32 %v4685, 1.0
        %v4745 = vadd.f32 %v4687, 1.0
        %v4746 = vadd.f32 %v4689, 1.0
        %v4747 = vadd.f32 %v4691, 1.0
        %v4748 = vadd.f32 %v4693, 1.0
        %v4749 = vadd.f32 %v4695, 1.0
        %v4750 = vadd.f32 %v4697, 1.0
        %v4751 = vadd.f32 %v4699, 1.0
        %v4752 = vadd.f32 %v4701, 1.0
        %v4753 = vadd.f32 %v4703, 1.0
        %v4754 = vadd.f32 %v4705, 1.0
        %v4755 = vadd.f32 %v4707, 1.0
        %v4756 = vadd.f32 %v4709, 1.0
        %v4757 = vadd.f32 %v4711, 1.0
        %v4758 = vadd.f32 %v4713, 1.0
        %v4759 = vadd.f32 %v4715, 1.0
        %v4760 = vadd.f32 %v4717, 1.0
        %v4761 = vadd.f32 %v4719, 1.0
        %v4762 = vadd.f32 %v4721, 1.0
        %v4763 = vrcp.pop %v4722
        %v4764 = vmul.f32 1.0, %v4763
        %v4765 = vrcp.pop %v4723
        %v4766 = vmul.f32 1.0, %v4765
        %v4767 = vrcp.pop %v4724
        %v4768 = vmul.f32 1.0, %v4767
        %v4769 = vrcp.pop %v4725
        %v4770 = vmul.f32 1.0, %v4769
        %v4771 = vrcp.pop %v4726
        %v4772 = vmul.f32 1.0, %v4771
        %v4773 = vrcp.pop %v4727
        %v4774 = vmul.f32 1.0, %v4773
        %v4775 = vrcp.pop %v4728
        %v4776 = vmul.f32 1.0, %v4775
        %v4777 = vrcp.pop %v4729
        %v4778 = vmul.f32 1.0, %v4777
        %v4779 = vrcp.pop %v4730
        %v4780 = vmul.f32 1.0, %v4779
        %v4781 = vrcp.pop %v4731
        %v4782 = vmul.f32 1.0, %v4781
        %v4783 = vrcp.pop %v4732
        %v4784 = vmul.f32 1.0, %v4783
        %v4785 = vrcp.pop %v4733
        %v4786 = vmul.f32 1.0, %v4785
        %v4787 = vrcp.pop %v4734
        %v4788 = vmul.f32 1.0, %v4787
        %v4789 = vrcp.pop %v4735
        %v4790 = vmul.f32 1.0, %v4789
        %v4791 = vrcp.pop %v4736
        %v4792 = vmul.f32 1.0, %v4791
        %v4793 = vrcp.pop %v4737
        %v4794 = vmul.f32 1.0, %v4793
        %v4795 = vrcp.pop %v4738
        %v4796 = vmul.f32 1.0, %v4795
        %v4797 = vrcp.pop %v4739
        %v4798 = vmul.f32 1.0, %v4797
        %v4799 = vrcp.pop %v4740
        %v4800 = vmul.f32 1.0, %v4799
        %v4801 = vrcp.pop %v4741
        %v4802 = vmul.f32 1.0, %v4801
        %v4803 = vrcp.pop %v4742
        %v4804 = vmul.f32 1.0, %v4803
        %v4805 = vrcp.pop %v4743
        %v4806 = vmul.f32 1.0, %v4805
        %v4807 = vrcp.pop %v4744
        %v4808 = vmul.f32 1.0, %v4807
        %v4809 = vrcp.pop %v4745
        %v4810 = vmul.f32 1.0, %v4809
        %v4811 = vrcp.pop %v4746
        %v4812 = vmul.f32 1.0, %v4811
        %v4813 = vrcp.pop %v4747
        %v4814 = vmul.f32 1.0, %v4813
        %v4815 = vrcp.pop %v4748
        %v4816 = vmul.f32 1.0, %v4815
        %v4817 = vrcp.pop %v4749
        %v4818 = vmul.f32 1.0, %v4817
        %v4819 = vrcp.pop %v4750
        %v4820 = vmul.f32 1.0, %v4819
        %v4821 = vrcp.pop %v4751
        %v4822 = vmul.f32 1.0, %v4821
        %v4823 = vrcp.pop %v4752
        %v4824 = vmul.f32 1.0, %v4823
        %v4825 = vrcp.pop %v4753
        %v4826 = vmul.f32 1.0, %v4825
        %v4827 = vrcp.pop %v4754
        %v4828 = vmul.f32 1.0, %v4827
        %v4829 = vrcp.pop %v4755
        %v4830 = vmul.f32 1.0, %v4829
        %v4831 = vrcp.pop %v4756
        %v4832 = vmul.f32 1.0, %v4831
        %v4833 = vrcp.pop %v4757
        %v4834 = vmul.f32 1.0, %v4833
        %v4835 = vrcp.pop %v4758
        %v4836 = vmul.f32 1.0, %v4835
        %v4837 = vrcp.pop %v4759
        %v4838 = vmul.f32 1.0, %v4837
        %v4839 = vrcp.pop %v4760
        %v4840 = vmul.f32 1.0, %v4839
        %v4841 = vrcp.pop %v4761
        %v4842 = vmul.f32 1.0, %v4841
        %v4843 = vrcp.pop %v4762
        %v4844 = vmul.f32 1.0, %v4843
        %v4845 = vmul.f32 %v4641, %v4764
        %v4846 = vmul.f32 %v4643, %v4766
        %v4847 = vmul.f32 %v4645, %v4768
        %v4848 = vmul.f32 %v4647, %v4770
        %v4849 = vmul.f32 %v4649, %v4772
        %v4850 = vmul.f32 %v4651, %v4774
        %v4851 = vmul.f32 %v4653, %v4776
        %v4852 = vmul.f32 %v4655, %v4778
        %v4853 = vmul.f32 %v4657, %v4780
        %v4854 = vmul.f32 %v4659, %v4782
        %v4855 = vmul.f32 %v4661, %v4784
        %v4856 = vmul.f32 %v4663, %v4786
        %v4857 = vmul.f32 %v4665, %v4788
        %v4858 = vmul.f32 %v4667, %v4790
        %v4859 = vmul.f32 %v4669, %v4792
        %v4860 = vmul.f32 %v4671, %v4794
        %v4861 = vmul.f32 %v4673, %v4796
        %v4862 = vmul.f32 %v4675, %v4798
        %v4863 = vmul.f32 %v4677, %v4800
        %v4864 = vmul.f32 %v4679, %v4802
        %v4865 = vmul.f32 %v4681, %v4804
        %v4866 = vmul.f32 %v4683, %v4806
        %v4867 = vmul.f32 %v4685, %v4808
        %v4868 = vmul.f32 %v4687, %v4810
        %v4869 = vmul.f32 %v4689, %v4812
        %v4870 = vmul.f32 %v4691, %v4814
        %v4871 = vmul.f32 %v4693, %v4816
        %v4872 = vmul.f32 %v4695, %v4818
        %v4873 = vmul.f32 %v4697, %v4820
        %v4874 = vmul.f32 %v4699, %v4822
        %v4875 = vmul.f32 %v4701, %v4824
        %v4876 = vmul.f32 %v4703, %v4826
        %v4877 = vmul.f32 %v4705, %v4828
        %v4878 = vmul.f32 %v4707, %v4830
        %v4879 = vmul.f32 %v4709, %v4832
        %v4880 = vmul.f32 %v4711, %v4834
        %v4881 = vmul.f32 %v4713, %v4836
        %v4882 = vmul.f32 %v4715, %v4838
        %v4883 = vmul.f32 %v4717, %v4840
        %v4884 = vmul.f32 %v4719, %v4842
        %v4885 = vmul.f32 %v4721, %v4844
        %v4886 = vsel %vm4517, %v4845, %v4764
        %v4887 = vsel %vm4518, %v4846, %v4766
        %v4888 = vsel %vm4519, %v4847, %v4768
        %v4889 = vsel %vm4520, %v4848, %v4770
        %v4890 = vsel %vm4521, %v4849, %v4772
        %v4891 = vsel %vm4522, %v4850, %v4774
        %v4892 = vsel %vm4523, %v4851, %v4776
        %v4893 = vsel %vm4524, %v4852, %v4778
        %v4894 = vsel %vm4525, %v4853, %v4780
        %v4895 = vsel %vm4526, %v4854, %v4782
        %v4896 = vsel %vm4527, %v4855, %v4784
        %v4897 = vsel %vm4528, %v4856, %v4786
        %v4898 = vsel %vm4529, %v4857, %v4788
        %v4899 = vsel %vm4530, %v4858, %v4790
        %v4900 = vsel %vm4531, %v4859, %v4792
        %v4901 = vsel %vm4532, %v4860, %v4794
        %v4902 = vsel %vm4533, %v4861, %v4796
        %v4903 = vsel %vm4534, %v4862, %v4798
        %v4904 = vsel %vm4535, %v4863, %v4800
        %v4905 = vsel %vm4536, %v4864, %v4802
        %v4906 = vsel %vm4537, %v4865, %v4804
        %v4907 = vsel %vm4538, %v4866, %v4806
        %v4908 = vsel %vm4539, %v4867, %v4808
        %v4909 = vsel %vm4540, %v4868, %v4810
        %v4910 = vsel %vm4541, %v4869, %v4812
        %v4911 = vsel %vm4542, %v4870, %v4814
        %v4912 = vsel %vm4543, %v4871, %v4816
        %v4913 = vsel %vm4544, %v4872, %v4818
        %v4914 = vsel %vm4545, %v4873, %v4820
        %v4915 = vsel %vm4546, %v4874, %v4822
        %v4916 = vsel %vm4547, %v4875, %v4824
        %v4917 = vsel %vm4548, %v4876, %v4826
        %v4918 = vsel %vm4549, %v4877, %v4828
        %v4919 = vsel %vm4550, %v4878, %v4830
        %v4920 = vsel %vm4551, %v4879, %v4832
        %v4921 = vsel %vm4552, %v4880, %v4834
        %v4922 = vsel %vm4553, %v4881, %v4836
        %v4923 = vsel %vm4554, %v4882, %v4838
        %v4924 = vsel %vm4555, %v4883, %v4840
        %v4925 = vsel %vm4556, %v4884, %v4842
        %v4926 = vsel %vm4557, %v4885, %v4844
        %v4927 = vlaneseq
        %v4928 = vand.u32 %v4927, 127
        %vm4929 = vcmp.ge.s32.totalorder %v4928, 54
        %vm4930 = vcmp.lt.s32.totalorder %v4928, 63
        %vm4931 = vmand %vm4929, %vm4930
        %v4932 = vsel %vm4931, %v4886, %v4352
        %v4933 = vsel %vm4931, %v4887, %v4355
        %v4934 = vsel %vm4931, %v4888, %v4360
        %v4935 = vsel %vm4931, %v4889, %v4363
        %v4936 = vsel %vm4931, %v4890, %v4368
        %v4937 = vsel %vm4931, %v4891, %v4371
        %v4938 = vsel %vm4931, %v4892, %v4376
        %v4939 = vsel %vm4931, %v4893, %v4379
        %v4940 = vsel %vm4931, %v4894, %v4384
        %v4941 = vsel %vm4931, %v4895, %v4387
        %v4942 = vsel %vm4931, %v4896, %v4392
        %v4943 = vsel %vm4931, %v4897, %v4395
        %v4944 = vsel %vm4931, %v4898, %v4400
        %v4945 = vsel %vm4931, %v4899, %v4403
        %v4946 = vsel %vm4931, %v4900, %v4408
        %v4947 = vsel %vm4931, %v4901, %v4411
        %v4948 = vsel %vm4931, %v4902, %v4416
        %v4949 = vsel %vm4931, %v4903, %v4419
        %v4950 = vsel %vm4931, %v4904, %v4424
        %v4951 = vsel %vm4931, %v4905, %v4427
        %v4952 = vsel %vm4931, %v4906, %v4432
        %v4953 = vsel %vm4931, %v4907, %v4435
        %v4954 = vsel %vm4931, %v4908, %v4440
        %v4955 = vsel %vm4931, %v4909, %v4443
        %v4956 = vsel %vm4931, %v4910, %v4448
        %v4957 = vsel %vm4931, %v4911, %v4451
        %v4958 = vsel %vm4931, %v4912, %v4456
        %v4959 = vsel %vm4931, %v4913, %v4459
        %v4960 = vsel %vm4931, %v4914, %v4464
        %v4961 = vsel %vm4931, %v4915, %v4467
        %v4962 = vsel %vm4931, %v4916, %v4472
        %v4963 = vsel %vm4931, %v4917, %v4475
        %v4964 = vsel %vm4931, %v4918, %v4480
        %v4965 = vsel %vm4931, %v4919, %v4483
        %v4966 = vsel %vm4931, %v4920, %v4488
        %v4967 = vsel %vm4931, %v4921, %v4491
        %v4968 = vsel %vm4931, %v4922, %v4496
        %v4969 = vsel %vm4931, %v4923, %v4499
        %v4970 = vsel %vm4931, %v4924, %v4504
        %v4971 = vsel %vm4931, %v4925, %v4507
        %v4972 = vsel %vm4931, %v4926, %v4512
        %4973 = vst [vmem:[%s217] sm:$0xff] %v4932
        %4974 = vst [vmem:[%s217 + $0x8] sm:$0xff] %v4933
        %4975 = vst [vmem:[%s217 + $0x10] sm:$0xff] %v4934
        %4976 = vst [vmem:[%s217 + $0x18] sm:$0xff] %v4935
        %4977 = vst [vmem:[%s217 + $0x20] sm:$0xff] %v4936
        %4978 = vst [vmem:[%s217 + $0x28] sm:$0xff] %v4937
        %4979 = vst [vmem:[%s217 + $0x30] sm:$0xff] %v4938
        %4980 = vst [vmem:[%s217 + $0x38] sm:$0xff] %v4939
        %4981 = vst [vmem:[%s217 + $0x40] sm:$0xff] %v4940
        %4982 = vst [vmem:[%s217 + $0x48] sm:$0xff] %v4941
        %4983 = vst [vmem:[%s217 + $0x50] sm:$0xff] %v4942
        %4984 = vst [vmem:[%s217 + $0x58] sm:$0xff] %v4943
        %4985 = vst [vmem:[%s217 + $0x60] sm:$0xff] %v4944
        %4986 = vst [vmem:[%s217 + $0x68] sm:$0xff] %v4945
        %4987 = vst [vmem:[%s217 + $0x70] sm:$0xff] %v4946
        %4988 = vst [vmem:[%s217 + $0x78] sm:$0xff] %v4947
        %4989 = vst [vmem:[%s217 + $0x80] sm:$0xff] %v4948
        %4990 = vst [vmem:[%s217 + $0x88] sm:$0xff] %v4949
        %4991 = vst [vmem:[%s217 + $0x90] sm:$0xff] %v4950
        %4992 = vst [vmem:[%s217 + $0x98] sm:$0xff] %v4951
        %4993 = vst [vmem:[%s217 + $0xa0] sm:$0xff] %v4952
        %4994 = vst [vmem:[%s217 + $0xa8] sm:$0xff] %v4953
        %4995 = vst [vmem:[%s217 + $0xb0] sm:$0xff] %v4954
        %4996 = vst [vmem:[%s217 + $0xb8] sm:$0xff] %v4955
        %4997 = vst [vmem:[%s217 + $0xc0] sm:$0xff] %v4956
        %4998 = vst [vmem:[%s217 + $0xc8] sm:$0xff] %v4957
        %4999 = vst [vmem:[%s217 + $0xd0] sm:$0xff] %v4958
        %5000 = vst [vmem:[%s217 + $0xd8] sm:$0xff] %v4959
        %5001 = vst [vmem:[%s217 + $0xe0] sm:$0xff] %v4960
        %5002 = vst [vmem:[%s217 + $0xe8] sm:$0xff] %v4961
        %5003 = vst [vmem:[%s217 + $0xf0] sm:$0xff] %v4962
        %5004 = vst [vmem:[%s217 + $0xf8] sm:$0xff] %v4963
        %5005 = vst [vmem:[%s217 + $0x100] sm:$0xff] %v4964
        %5006 = vst [vmem:[%s217 + $0x108] sm:$0xff] %v4965
        %5007 = vst [vmem:[%s217 + $0x110] sm:$0xff] %v4966
        %5008 = vst [vmem:[%s217 + $0x118] sm:$0xff] %v4967
        %5009 = vst [vmem:[%s217 + $0x120] sm:$0xff] %v4968
        %5010 = vst [vmem:[%s217 + $0x128] sm:$0xff] %v4969
        %5011 = vst [vmem:[%s217 + $0x130] sm:$0xff] %v4970
        %5012 = vst [vmem:[%s217 + $0x138] sm:$0xff] %v4971
        %5013 = vst [vmem:[%s217 + $0x140] sm:$0xff] %v4972
        %s5014 = sand.u32 %s137, 1
        %s5015 = scalar_lea.sflag [#allocation3], %s5014
        %s5016 = sand.u32 %s137, 1
        %s5017 = smul.addr %s5016, 328
        %s5018 = scalar_lea.vmem [#allocation2], %s5017
        // Predicated region
        $region41: #{tpu_custom_call.1} parent=39 // pred_check
          %p5019 = pneg %p147
        $region42: #{tpu_custom_call.1} parent=39 // pred_check_branch
          %5021 = sbr.rel (%p5019) target = $region44
        $region43: #{tpu_custom_call.1} parent=39 // pred_region
          %s5023 = ssub.s32 5248, 5248
          %5024 = vsyncadd %s5015, %s5023
          %s5025 = smul.addr %s19, 41
          %s5026 = smul.addr %s5025, 128
          %s5027 = scalar_lea.hbm %s5, %s5026
          %s5028 = sshll.u32 %s5018, 4
          %s5029 = int_to_ptr.vmem [resolvable:$true] %s5028
          %5034 = dma.vmem_to_hbm [thread:$0]  %s5029, 5248, %s5027, %s5015, 128, 128, 8
        $region44: #{tpu_custom_call.1} parent=39 // pred_fallthru
          _
      $region40: #{tpu_custom_call.1} parent=5 // pred_fallthru
        _
      %p5035 = scmp.le.s32.totalorder 2, %s14
      // Predicated region
      $region45: #{tpu_custom_call.1} parent=5 // pred_check
        %p5036 = pneg %p5035
      $region46: #{tpu_custom_call.1} parent=5 // pred_check_branch
        %5038 = sbr.rel (%p5036) target = $region48
      $region47: #{tpu_custom_call.1} parent=5 // pred_region
        %s5039 = ssub.s32 %s14, 2
        // Predicated region
        $region49: #{tpu_custom_call.1} parent=47 // pred_check
          %p5040 = pneg %p153
        $region50: #{tpu_custom_call.1} parent=47 // pred_check_branch
          %5042 = sbr.rel (%p5040) target = $region52
        $region51: #{tpu_custom_call.1} parent=47 // pred_region
          %s5043 = sand.u32 %s138, 1
          %s5044 = scalar_lea.sflag [#allocation3], %s5043
          %s5045 = sand.u32 %s138, 1
          %s5046 = smul.addr %s5045, 328
          %s5047 = scalar_lea.vmem [#allocation2], %s5046
          %5048 = dma.done %s5044, 5248
        $region52: #{tpu_custom_call.1} parent=47 // pred_fallthru
          _
      $region48: #{tpu_custom_call.1} parent=5 // pred_fallthru
        _
    $region6: #{tpu_custom_call.1} parent=1 // loop_footer
      %s18 = sadd.s32 1, %s14
    $region7: #{tpu_custom_call.1} parent=1 // loop_footer_branch
      %13 = sbr.rel target = $region3
    $region8: #{tpu_custom_call.1} parent=1 // loop_exit
      _
    %5049 = vsyncpa [#allocation3], 1
    %s5050 = scalar_lea.sflag [#allocation3], 1
    %5051 = vsyncpa %s5050, 1

// kernel: tpu_custom_call.1
$region0: #{tpu_custom_call.1}
  #allocation0 [shape = 'u32[]', space=smem, size = 0x4, offset = 0x4, fixed_abs, tag = 'smem constant byte address 0x4 - core index']
  #allocation1 [shape = 'u32[144,128]{1,0:T(1,128)}', space=vmem, size = 0x12000, scoped, tag = 'internal scratch']
  %s0 = inlined_call_operand.vmem [shape: bf16[2,366,4], index: 0, kind: input, shape index: {}]
  %s1 = inlined_call_operand.vmem [shape: bf16[9,4,32], index: 1, kind: input, shape index: {}]
  %s2 = inlined_call_operand.vmem [shape: f32[1,32], index: 2, kind: input, shape index: {}]
  %s3 = inlined_call_operand.vmem [shape: bf16[32,128], index: 3, kind: input, shape index: {}]
  %s4 = inlined_call_operand.vmem [shape: f32[1,128], index: 4, kind: input, shape index: {}]
  %s5 = inlined_call_operand.hbm [shape: f32[2,328,128], index: 5, kind: output, shape index: {}]
  %s6 = sld [smem:[#allocation0]]
  $region53: #{tpu_custom_call.1} parent=0
    _
  %s8 = ssub.s32 1, %s6
  %s9 = scalar_select 0, %s8, %s6
  $region1: #{tpu_custom_call.1} parent=0
    #allocation2 [shape = 'u8[335872]{0}', space=vmem, size = 0x52000, scoped, tag = 'output window, operand 0']
    #allocation3 [shape = 's32[2]{0}', space=sflag, size = 0x8, scoped, tag = 'scoped memory for tpu_custom_call.1']
    %10 = vsyncpa [#allocation3], 0
    %s11 = scalar_lea.sflag [#allocation3], 1
    %12 = vsyncpa %s11, 0
    loop: start=0, step=1, limit=4
    $region2: #{tpu_custom_call.1} parent=1 // loop_pre_header
      _
    $region3: #{tpu_custom_call.1} parent=1 // loop_header
      %s14 = sphi 0, %s18
      %p15 = scmp.ge.s32.totalorder %s14, 4
      %s24 = sphi 0, %s26
      %s27 = sphi 0, %s24
      %s28 = sphi 0, %s27
      %s44 = sphi 0, %s28
      %s48 = sphi 0, %s48
      %s50 = sphi 0, %s48
      %s51 = sphi 0, %s50
      %s65 = sphi 0, %s51
      %s69 = sphi 0, %s69
      %s71 = sphi 0, %s69
      %s72 = sphi 0, %s71
      %s86 = sphi 0, %s72
      %s90 = sphi 0, %s90
      %s92 = sphi 0, %s90
      %s93 = sphi 0, %s92
      %s107 = sphi 0, %s93
      %s111 = sphi 0, %s111
      %s113 = sphi 0, %s111
      %s114 = sphi 0, %s113
      %s128 = sphi 0, %s114
      %s134 = sphi 0, %s136
      %s137 = sphi 0, %s134
      %s138 = sphi 0, %s137
      %s154 = sphi 0, %s138
    $region4: #{tpu_custom_call.1} parent=1 // loop_header_branch
      %17 = sbr.rel (%p15) target = $region8
    $region5: #{tpu_custom_call.1} parent=1 // loop_body
      %s19 = ssub.s32 %s14, 1
      %s20 = ssub.s32 %s14, 2
      %s21 = sadd.s32 %s14, 1
      %s22 = ssub.s32 %s14, %s21
      %p23 = scmp.eq.s32.totalorder %s22, 0
      %s25 = sadd.s32 %s24, 1
      %s26 = scalar_select %p23, %s24, %s25
      %p29 = pneg %p23
      %p30 = scmp.eq.s32.totalorder %s14, 1
      %p31 = por %p29, %p30
      %p32 = scmp.ne.s32.totalorder %s24, %s27
      %p33 = scmp.eq.s32.totalorder %s14, 0
      %p34 = por %p32, %p33
      %p35 = scmp.ne.s32.totalorder %s24, %s27
      %p36 = scmp.eq.s32.totalorder %s19, 1
      %p37 = por %p35, %p36
      %p38 = scmp.ne.s32.totalorder %s27, %s28
      %p39 = scmp.eq.s32.totalorder %s19, 0
      %p40 = por %p38, %p39
      %p41 = scmp.ne.s32.totalorder %s27, %s28
      %p42 = scmp.eq.s32.totalorder %s20, 1
      %p43 = por %p41, %p42
      %p45 = scmp.ne.s32.totalorder %s28, %s44
      %p46 = scmp.eq.s32.totalorder %s20, 0
      %p47 = por %p45, %p46
      %s49 = sadd.s32 %s48, 1
      %p52 = scmp.eq.s32.totalorder %s14, 1
      %p53 = scmp.ne.s32.totalorder %s48, %s50
      %p54 = scmp.eq.s32.totalorder %s14, 0
      %p55 = por %p53, %p54
      %p56 = scmp.ne.s32.totalorder %s48, %s50
      %p57 = scmp.eq.s32.totalorder %s19, 1
      %p58 = por %p56, %p57
      %p59 = scmp.ne.s32.totalorder %s50, %s51
      %p60 = scmp.eq.s32.totalorder %s19, 0
      %p61 = por %p59, %p60
      %p62 = scmp.ne.s32.totalorder %s50, %s51
      %p63 = scmp.eq.s32.totalorder %s20, 1
      %p64 = por %p62, %p63
      %p66 = scmp.ne.s32.totalorder %s51, %s65
      %p67 = scmp.eq.s32.totalorder %s20, 0
      %p68 = por %p66, %p67
      %s70 = sadd.s32 %s69, 1
      %p73 = scmp.eq.s32.totalorder %s14, 1
      %p74 = scmp.ne.s32.totalorder %s69, %s71
      %p75 = scmp.eq.s32.totalorder %s14, 0
      %p76 = por %p74, %p75
      %p77 = scmp.ne.s32.totalorder %s69, %s71
      %p78 = scmp.eq.s32.totalorder %s19, 1
      %p79 = por %p77, %p78
      %p80 = scmp.ne.s32.totalorder %s71, %s72
      %p81 = scmp.eq.s32.totalorder %s19, 0
      %p82 = por %p80, %p81
      %p83 = scmp.ne.s32.totalorder %s71, %s72
      %p84 = scmp.eq.s32.totalorder %s20, 1
      %p85 = por %p83, %p84
      %p87 = scmp.ne.s32.totalorder %s72, %s86
      %p88 = scmp.eq.s32.totalorder %s20, 0
      %p89 = por %p87, %p88
      %s91 = sadd.s32 %s90, 1
      %p94 = scmp.eq.s32.totalorder %s14, 1
      %p95 = scmp.ne.s32.totalorder %s90, %s92
      %p96 = scmp.eq.s32.totalorder %s14, 0
      %p97 = por %p95, %p96
      %p98 = scmp.ne.s32.totalorder %s90, %s92
      %p99 = scmp.eq.s32.totalorder %s19, 1
      %p100 = por %p98, %p99
      %p101 = scmp.ne.s32.totalorder %s92, %s93
      %p102 = scmp.eq.s32.totalorder %s19, 0
      %p103 = por %p101, %p102
      %p104 = scmp.ne.s32.totalorder %s92, %s93
      %p105 = scmp.eq.s32.totalorder %s20, 1
      %p106 = por %p104, %p105
      %p108 = scmp.ne.s32.totalorder %s93, %s107
      %p109 = scmp.eq.s32.totalorder %s20, 0
      %p110 = por %p108, %p109
      %s112 = sadd.s32 %s111, 1
      %p115 = scmp.eq.s32.totalorder %s14, 1
      %p116 = scmp.ne.s32.totalorder %s111, %s113
      %p117 = scmp.eq.s32.totalorder %s14, 0
      %p118 = por %p116, %p117
      %p119 = scmp.ne.s32.totalorder %s111, %s113
      %p120 = scmp.eq.s32.totalorder %s19, 1
      %p121 = por %p119, %p120
      %p122 = scmp.ne.s32.totalorder %s113, %s114
      %p123 = scmp.eq.s32.totalorder %s19, 0
      %p124 = por %p122, %p123
      %p125 = scmp.ne.s32.totalorder %s113, %s114
      %p126 = scmp.eq.s32.totalorder %s20, 1
      %p127 = por %p125, %p126
      %p129 = scmp.ne.s32.totalorder %s114, %s128
      %p130 = scmp.eq.s32.totalorder %s20, 0
      %p131 = por %p129, %p130
      %s132 = ssub.s32 %s14, %s21
      %p133 = scmp.eq.s32.totalorder %s132, 0
      %s135 = sadd.s32 %s134, 1
      %s136 = scalar_select %p133, %s134, %s135
      %p139 = pneg %p133
      %p140 = scmp.eq.s32.totalorder %s14, 1
      %p141 = por %p139, %p140
      %p142 = scmp.ne.s32.totalorder %s134, %s137
      %p143 = scmp.eq.s32.totalorder %s14, 0
      %p144 = por %p142, %p143
      %p145 = scmp.ne.s32.totalorder %s134, %s137
      %p146 = scmp.eq.s32.totalorder %s19, 1
      %p147 = por %p145, %p146
      %p148 = scmp.ne.s32.totalorder %s137, %s138
      %p149 = scmp.eq.s32.totalorder %s19, 0
      %p150 = por %p148, %p149
      %p151 = scmp.ne.s32.totalorder %s137, %s138
      %p152 = scmp.eq.s32.totalorder %s20, 1
      %p153 = por %p151, %p152
      %p155 = scmp.ne.s32.totalorder %s138, %s154
      %p156 = scmp.eq.s32.totalorder %s20, 0
      %p157 = por %p155, %p156
      %p158 = scmp.le.s32.totalorder 1, %s14
      %p159 = scmp.lt.s32.totalorder %s14, 3
      %p160 = pnand %p158, %p159
      %p161 = pneg %p160
      // Predicated region
      $region9: #{tpu_custom_call.1} parent=5 // pred_check
        _
      $region10: #{tpu_custom_call.1} parent=5 // pred_check_branch
        %163 = sbr.rel (%p160) target = $region12
      $region11: #{tpu_custom_call.1} parent=5 // pred_region
        %s164 = ssub.s32 %s14, 1
        // Predicated region
        $region13: #{tpu_custom_call.1} parent=11 // pred_check
          %p165 = pneg %p61
        $region14: #{tpu_custom_call.1} parent=11 // pred_check_branch
          %167 = sbr.rel (%p165) target = $region16
        $region15: #{tpu_custom_call.1} parent=11 // pred_region
          _
        $region16: #{tpu_custom_call.1} parent=11 // pred_fallthru
          _
        // Predicated region
        $region17: #{tpu_custom_call.1} parent=11 // pred_check
          %p168 = pneg %p82
        $region18: #{tpu_custom_call.1} parent=11 // pred_check_branch
          %170 = sbr.rel (%p168) target = $region20
        $region19: #{tpu_custom_call.1} parent=11 // pred_region
          _
        $region20: #{tpu_custom_call.1} parent=11 // pred_fallthru
          _
        // Predicated region
        $region21: #{tpu_custom_call.1} parent=11 // pred_check
          %p171 = pneg %p103
        $region22: #{tpu_custom_call.1} parent=11 // pred_check_branch
          %173 = sbr.rel (%p171) target = $region24
        $region23: #{tpu_custom_call.1} parent=11 // pred_region
          _
        $region24: #{tpu_custom_call.1} parent=11 // pred_fallthru
          _
        // Predicated region
        $region25: #{tpu_custom_call.1} parent=11 // pred_check
          %p174 = pneg %p124
        $region26: #{tpu_custom_call.1} parent=11 // pred_check_branch
          %176 = sbr.rel (%p174) target = $region28
        $region27: #{tpu_custom_call.1} parent=11 // pred_region
          _
        $region28: #{tpu_custom_call.1} parent=11 // pred_fallthru
          _
      $region12: #{tpu_custom_call.1} parent=5 // pred_fallthru
        _
      %p177 = scmp.lt.s32.totalorder %s14, 2
      // Predicated region
      $region29: #{tpu_custom_call.1} parent=5 // pred_check
        %p178 = pneg %p177
      $region30: #{tpu_custom_call.1} parent=5 // pred_check_branch
        %180 = sbr.rel (%p178) target = $region32
      $region31: #{tpu_custom_call.1} parent=5 // pred_region
        // Predicated region
        $region33: #{tpu_custom_call.1} parent=31 // pred_check
          %p181 = pneg %p34
        $region34: #{tpu_custom_call.1} parent=31 // pred_check_branch
          %183 = sbr.rel (%p181) target = $region36
        $region35: #{tpu_custom_call.1} parent=31 // pred_region
          %p184 = scmp.lt.s32.totalorder %s14, 1
          %s185 = scalar_select %p184, %s14, 1
          %s186 = smul.addr %s185, 46
          %s187 = smul.addr %s186, 4
          %s188 = scalar_lea.vmem %s0, %s187
        $region36: #{tpu_custom_call.1} parent=31 // pred_fallthru
          _
      $region32: #{tpu_custom_call.1} parent=5 // pred_fallthru
        _
      %p189 = scmp.le.s32.totalorder 1, %s14
      %p190 = scmp.lt.s32.totalorder %s14, 3
      %p191 = pnand %p189, %p190
      %p192 = pneg %p191
      // Predicated region
      $region37: #{tpu_custom_call.1} parent=5 // pred_check
        _
      $region38: #{tpu_custom_call.1} parent=5 // pred_check_branch
        %194 = sbr.rel (%p191) target = $region40
      $region39: #{tpu_custom_call.1} parent=5 // pred_region
        %s195 = ssub.s32 %s14, 1
        %p196 = scmp.lt.s32.totalorder %s19, 1
        %s197 = scalar_select %p196, %s19, 1
        %s198 = smul.addr %s197, 46
        %s199 = smul.addr %s198, 4
        %s200 = scalar_lea.vmem %s0, %s199
        %p201 = pneg %p40
        %p202 = pneg %p37
        %p203 = pneg %p61
        %p204 = pneg %p58
        %p205 = pneg %p82
        %p206 = pneg %p79
        %p207 = pneg %p103
        %p208 = pneg %p100
        %p209 = pneg %p124
        %p210 = pneg %p121
        %p211 = pneg %p150
        %p212 = pneg %p147
        %s213 = sand.u32 %s137, 1
        %s214 = scalar_lea.sflag [#allocation3], %s213
        %s215 = sand.u32 %s137, 1
        %s216 = smul.addr %s215, 328
        %s217 = scalar_lea.vmem [#allocation2], %s216
        %p218 = scmp.lt.s32.totalorder %s19, 1
        %s219 = scalar_select %p218, %s19, 1
        %s220 = smul.addr %s219, 46
        %s221 = smul.addr %s220, 4
        %s222 = scalar_lea.vmem %s0, %s221
        %v224 = vld [vmem:[%s222] sm:$0xf]
        %v225 = vld [vmem:[%s222 + $0x4] sm:$0xf]
        %v226 = vld [vmem:[%s222 + $0x8] sm:$0xf]
        %v227 = vld [vmem:[%s222 + $0xc] sm:$0xf]
        %v228 = vld [vmem:[%s222 + $0x10] sm:$0xf]
        %v229 = vld [vmem:[%s222 + $0x14] sm:$0xf]
        %v230 = vld [vmem:[%s222 + $0x18] sm:$0xf]
        %v231 = vld [vmem:[%s222 + $0x1c] sm:$0xf]
        %v232 = vld [vmem:[%s222 + $0x20] sm:$0xf]
        %v233 = vld [vmem:[%s222 + $0x24] sm:$0xf]
        %v234 = vld [vmem:[%s222 + $0x28] sm:$0xf]
        %v235 = vld [vmem:[%s222 + $0x2c] sm:$0xf]
        %v236 = vld [vmem:[%s222 + $0x30] sm:$0xf]
        %v237 = vld [vmem:[%s222 + $0x34] sm:$0xf]
        %v238 = vld [vmem:[%s222 + $0x38] sm:$0xf]
        %v239 = vld [vmem:[%s222 + $0x3c] sm:$0xf]
        %v240 = vld [vmem:[%s222 + $0x40] sm:$0xf]
        %v241 = vld [vmem:[%s222 + $0x44] sm:$0xf]
        %v242 = vld [vmem:[%s222 + $0x48] sm:$0xf]
        %v243 = vld [vmem:[%s222 + $0x4c] sm:$0xf]
        %v244 = vld [vmem:[%s222 + $0x50] sm:$0xf]
        %v245 = vld [vmem:[%s222 + $0x54] sm:$0xf]
        %v246 = vld [vmem:[%s222 + $0x58] sm:$0xf]
        %v247 = vld [vmem:[%s222 + $0x5c] sm:$0xf]
        %v248 = vld [vmem:[%s222 + $0x60] sm:$0xf]
        %v249 = vld [vmem:[%s222 + $0x64] sm:$0xf]
        %v250 = vld [vmem:[%s222 + $0x68] sm:$0xf]
        %v251 = vld [vmem:[%s222 + $0x6c] sm:$0xf]
        %v252 = vld [vmem:[%s222 + $0x70] sm:$0xf]
        %v253 = vld [vmem:[%s222 + $0x74] sm:$0xf]
        %v254 = vld [vmem:[%s222 + $0x78] sm:$0xf]
        %v255 = vld [vmem:[%s222 + $0x7c] sm:$0xf]
        %v256 = vld [vmem:[%s222 + $0x80] sm:$0xf]
        %v257 = vld [vmem:[%s222 + $0x84] sm:$0xf]
        %v258 = vld [vmem:[%s222 + $0x88] sm:$0xf]
        %v259 = vld [vmem:[%s222 + $0x8c] sm:$0xf]
        %v260 = vld [vmem:[%s222 + $0x90] sm:$0xf]
        %v261 = vld [vmem:[%s222 + $0x94] sm:$0xf]
        %v262 = vld [vmem:[%s222 + $0x98] sm:$0xf]
        %v263 = vld [vmem:[%s222 + $0x9c] sm:$0xf]
        %v264 = vld [vmem:[%s222 + $0xa0] sm:$0xf]
        %v265 = vld [vmem:[%s1] sm:$0x3]
        %v266 = vld [vmem:[%s222 + $0xa4] sm:$0x1]
        %s267 = scalar_lea.vmem %s1, 2
        %v268 = vld [vmem:[%s267] sm:$0x3]
        %v311 = vunpack.c.l.b16 %v224
        %v312 = vunpack.c.l.b16 %v225
        %v313 = vunpack.c.l.b16 %v226
        %v314 = vunpack.c.l.b16 %v227
        %v315 = vunpack.c.l.b16 %v228
        %v316 = vunpack.c.l.b16 %v229
        %v317 = vunpack.c.l.b16 %v230
        %v318 = vunpack.c.l.b16 %v231
        %v319 = vunpack.c.l.b16 %v232
        %v320 = vunpack.c.l.b16 %v233
        %v321 = vunpack.c.l.b16 %v234
        %v322 = vunpack.c.l.b16 %v235
        %v323 = vunpack.c.l.b16 %v236
        %v324 = vunpack.c.l.b16 %v237
        %v325 = vunpack.c.l.b16 %v238
        %v326 = vunpack.c.l.b16 %v239
        %v327 = vunpack.c.l.b16 %v240
        %v328 = vunpack.c.l.b16 %v241
        %v329 = vunpack.c.l.b16 %v242
        %v330 = vunpack.c.l.b16 %v243
        %v331 = vunpack.c.l.b16 %v244
        %v332 = vunpack.c.l.b16 %v245
        %v333 = vunpack.c.l.b16 %v246
        %v334 = vunpack.c.l.b16 %v247
        %v335 = vunpack.c.l.b16 %v248
        %v336 = vunpack.c.l.b16 %v249
        %v337 = vunpack.c.l.b16 %v250
        %v338 = vunpack.c.l.b16 %v251
        %v339 = vunpack.c.l.b16 %v252
        %v340 = vunpack.c.l.b16 %v253
        %v341 = vunpack.c.l.b16 %v254
        %v342 = vunpack.c.l.b16 %v255
        %v343 = vunpack.c.l.b16 %v256
        %v344 = vunpack.c.l.b16 %v257
        %v345 = vunpack.c.l.b16 %v258
        %v346 = vunpack.c.l.b16 %v259
        %v347 = vunpack.c.l.b16 %v260
        %v348 = vunpack.c.l.b16 %v261
        %v349 = vunpack.c.l.b16 %v262
        %v350 = vunpack.c.l.b16 %v263
        %v351 = vunpack.c.l.b16 %v264
        %v352 = vunpack.c.l.b16 %v266
        %v353 = vpack.c.b16 %v312, %v311
        %v354 = vpack.c.b16 %v314, %v313
        %v355 = vpack.c.b16 %v316, %v315
        %v356 = vpack.c.b16 %v318, %v317
        %v357 = vpack.c.b16 %v320, %v319
        %v358 = vpack.c.b16 %v322, %v321
        %v359 = vpack.c.b16 %v324, %v323
        %v360 = vpack.c.b16 %v326, %v325
        %v361 = vpack.c.b16 %v328, %v327
        %v362 = vpack.c.b16 %v330, %v329
        %v363 = vpack.c.b16 %v332, %v331
        %v364 = vpack.c.b16 %v334, %v333
        %v365 = vpack.c.b16 %v336, %v335
        %v366 = vpack.c.b16 %v338, %v337
        %v367 = vpack.c.b16 %v340, %v339
        %v368 = vpack.c.b16 %v342, %v341
        %v369 = vpack.c.b16 %v344, %v343
        %v370 = vpack.c.b16 %v346, %v345
        %v371 = vpack.c.b16 %v348, %v347
        %v372 = vpack.c.b16 %v350, %v349
        %v373 = vpack.c.b16 %v352, %v351
        %vm374 = vsmask.f32 7424
        %v376 = vshrl.u32 %v353, 16
        %v378 = vshll.u32 %v353, 16
        %v380 = vrot.slane %v378, 1
        %v381 = vor.u32 %v376, %v380
        %v383 = vshll.u32 %v354, 16
        %v385 = vrot.slane %v383, 1
        %v386 = vsel %vm374, %v381, %v385
        %v387 = vshrl.u32 %v354, 16
        %v389 = vor.u32 %v387, %v385
        %v391 = vshll.u32 %v355, 16
        %v393 = vrot.slane %v391, 1
        %v394 = vsel %vm374, %v389, %v393
        %v395 = vshrl.u32 %v355, 16
        %v397 = vor.u32 %v395, %v393
        %v399 = vshll.u32 %v356, 16
        %v401 = vrot.slane %v399, 1
        %v402 = vsel %vm374, %v397, %v401
        %v403 = vshrl.u32 %v356, 16
        %v405 = vor.u32 %v403, %v401
        %v407 = vshll.u32 %v357, 16
        %v409 = vrot.slane %v407, 1
        %v410 = vsel %vm374, %v405, %v409
        %v411 = vshrl.u32 %v357, 16
        %v413 = vor.u32 %v411, %v409
        %v415 = vshll.u32 %v358, 16
        %v417 = vrot.slane %v415, 1
        %v418 = vsel %vm374, %v413, %v417
        %v419 = vshrl.u32 %v358, 16
        %v421 = vor.u32 %v419, %v417
        %v423 = vshll.u32 %v359, 16
        %v425 = vrot.slane %v423, 1
        %v426 = vsel %vm374, %v421, %v425
        %v427 = vshrl.u32 %v359, 16
        %v429 = vor.u32 %v427, %v425
        %v431 = vshll.u32 %v360, 16
        %v433 = vrot.slane %v431, 1
        %v434 = vsel %vm374, %v429, %v433
        %v435 = vshrl.u32 %v360, 16
        %v437 = vor.u32 %v435, %v433
        %v439 = vshll.u32 %v361, 16
        %v441 = vrot.slane %v439, 1
        %v442 = vsel %vm374, %v437, %v441
        %v443 = vshrl.u32 %v361, 16
        %v445 = vor.u32 %v443, %v441
        %v447 = vshll.u32 %v362, 16
        %v449 = vrot.slane %v447, 1
        %v450 = vsel %vm374, %v445, %v449
        %v451 = vshrl.u32 %v362, 16
        %v453 = vor.u32 %v451, %v449
        %v455 = vshll.u32 %v363, 16
        %v457 = vrot.slane %v455, 1
        %v458 = vsel %vm374, %v453, %v457
        %v459 = vshrl.u32 %v363, 16
        %v461 = vor.u32 %v459, %v457
        %v463 = vshll.u32 %v364, 16
        %v465 = vrot.slane %v463, 1
        %v466 = vsel %vm374, %v461, %v465
        %v467 = vshrl.u32 %v364, 16
        %v469 = vor.u32 %v467, %v465
        %v471 = vshll.u32 %v365, 16
        %v473 = vrot.slane %v471, 1
        %v474 = vsel %vm374, %v469, %v473
        %v475 = vshrl.u32 %v365, 16
        %v477 = vor.u32 %v475, %v473
        %v479 = vshll.u32 %v366, 16
        %v481 = vrot.slane %v479, 1
        %v482 = vsel %vm374, %v477, %v481
        %v483 = vshrl.u32 %v366, 16
        %v485 = vor.u32 %v483, %v481
        %v487 = vshll.u32 %v367, 16
        %v489 = vrot.slane %v487, 1
        %v490 = vsel %vm374, %v485, %v489
        %v491 = vshrl.u32 %v367, 16
        %v493 = vor.u32 %v491, %v489
        %v495 = vshll.u32 %v368, 16
        %v497 = vrot.slane %v495, 1
        %v498 = vsel %vm374, %v493, %v497
        %v499 = vshrl.u32 %v368, 16
        %v501 = vor.u32 %v499, %v497
        %v503 = vshll.u32 %v369, 16
        %v505 = vrot.slane %v503, 1
        %v506 = vsel %vm374, %v501, %v505
        %v507 = vshrl.u32 %v369, 16
        %v509 = vor.u32 %v507, %v505
        %v511 = vshll.u32 %v370, 16
        %v513 = vrot.slane %v511, 1
        %v514 = vsel %vm374, %v509, %v513
        %v515 = vshrl.u32 %v370, 16
        %v517 = vor.u32 %v515, %v513
        %v519 = vshll.u32 %v371, 16
        %v521 = vrot.slane %v519, 1
        %v522 = vsel %vm374, %v517, %v521
        %v523 = vshrl.u32 %v371, 16
        %v525 = vor.u32 %v523, %v521
        %v527 = vshll.u32 %v372, 16
        %v529 = vrot.slane %v527, 1
        %v530 = vsel %vm374, %v525, %v529
        %v531 = vshrl.u32 %v372, 16
        %v533 = vor.u32 %v531, %v529
        %v535 = vshll.u32 %v373, 16
        %v537 = vrot.slane %v535, 1
        %v538 = vsel %vm374, %v533, %v537
        %v539 = vshrl.u32 %v373, 16
        %v541 = vor.u32 %v539, %v537
        %vm542 = vcmask 31744
        %v544 = vsel %vm542, %v386, 0
        %v547 = vsel %vm542, %v394, 0
        %v550 = vsel %vm542, %v402, 0
        %v553 = vsel %vm542, %v410, 0
        %v556 = vsel %vm542, %v418, 0
        %v559 = vsel %vm542, %v426, 0
        %v562 = vsel %vm542, %v434, 0
        %v565 = vsel %vm542, %v442, 0
        %v568 = vsel %vm542, %v450, 0
        %v571 = vsel %vm542, %v458, 0
        %v574 = vsel %vm542, %v466, 0
        %v577 = vsel %vm542, %v474, 0
        %v580 = vsel %vm542, %v482, 0
        %v583 = vsel %vm542, %v490, 0
        %v586 = vsel %vm542, %v498, 0
        %v589 = vsel %vm542, %v506, 0
        %v592 = vsel %vm542, %v514, 0
        %v595 = vsel %vm542, %v522, 0
        %v598 = vsel %vm542, %v530, 0
        %v601 = vsel %vm542, %v538, 0
        %v604 = vsel %vm542, %v541, 0
        %vm606 = vcmask 1041408
        %v608 = vsel %vm606, %v268, 0
        %610 = vmatprep.subr.bf16.mxu0 0
        %611 = vmatpush1.bf16.msra.mxu0 %v608
        %612 = vmatprep.subr.bf16.mxu0 0
        %613 = vmatpush1.bf16.msra.mxu0 0
        %614 = vmatprep.subr.bf16.mxu0 0
        %615 = vmatpush1.bf16.msra.mxu0 0
        %616 = vmatprep.subr.bf16.mxu0 0
        %617 = vmatpush1.bf16.msra.mxu0 0
        %618 = vmatprep.subr.bf16.mxu0 0
        %619 = vmatpush1.bf16.msra.mxu0 0
        %620 = vmatprep.subr.bf16.mxu0 0
        %621 = vmatpush1.bf16.msra.mxu0 0
        %622 = vmatprep.subr.bf16.mxu0 0
        %623 = vmatpush1.bf16.msra.mxu0 0
        %624 = vmatprep.subr.bf16.mxu0 0
        %625 = vmatpush1.bf16.msra.mxu0 0
        %626 = vmatprep.subr.bf16.mxu0 0
        %627 = vmatpush1.bf16.msra.mxu0 0
        %628 = vmatprep.subr.bf16.mxu0 0
        %629 = vmatpush1.bf16.msra.mxu0 0
        %630 = vmatprep.subr.bf16.mxu0 0
        %631 = vmatpush1.bf16.msra.mxu0 0
        %632 = vmatprep.subr.bf16.mxu0 0
        %633 = vmatpush1.bf16.msra.mxu0 0
        %634 = vmatprep.subr.bf16.mxu0 0
        %635 = vmatpush1.bf16.msra.mxu0 0
        %636 = vmatprep.subr.bf16.mxu0 0
        %637 = vmatpush1.bf16.msra.mxu0 0
        %638 = vmatprep.subr.bf16.mxu0 0
        %639 = vmatpush1.bf16.msra.mxu0 0
        %640 = vmatprep.subr.bf16.mxu0 0
        %641 = vmatpush1.bf16.msra.mxu0 0
        %642 = vmatprep.mubr.bf16.mxu0 0
        %643 = vmatmul.mubr.bf16.gmra.mrb[0].mxu0 %v544
        %v644 = vpop.f32.mrb[0].mxu0
        %v645 = vadd.f32 0.0, %v644
        %v646 = vpop.f32.mrb[0].mxu0
        %v647 = vpop.f32.mrb[0].mxu0
        %v648 = vadd.f32 0.0, %v647
        %v649 = vpop.f32.mrb[0].mxu0
        %650 = vmatprep.mubr.bf16.mxu0 0
        %651 = vmatmul.mubr.bf16.gmra.mrb[0].mxu0 %v547
        %v652 = vpop.f32.mrb[0].mxu0
        %v653 = vadd.f32 0.0, %v652
        %v654 = vpop.f32.mrb[0].mxu0
        %v655 = vpop.f32.mrb[0].mxu0
        %v656 = vadd.f32 0.0, %v655
        %v657 = vpop.f32.mrb[0].mxu0
        %658 = vmatprep.mubr.bf16.mxu0 0
        %659 = vmatmul.mubr.bf16.gmra.mrb[0].mxu0 %v550
        %v660 = vpop.f32.mrb[0].mxu0
        %v661 = vadd.f32 0.0, %v660
        %v662 = vpop.f32.mrb[0].mxu0
        %v663 = vpop.f32.mrb[0].mxu0
        %v664 = vadd.f32 0.0, %v663
        %v665 = vpop.f32.mrb[0].mxu0
        %666 = vmatprep.mubr.bf16.mxu0 0
        %667 = vmatmul.mubr.bf16.gmra.mrb[0].mxu0 %v553
        %v668 = vpop.f32.mrb[0].mxu0
        %v669 = vadd.f32 0.0, %v668
        %v670 = vpop.f32.mrb[0].mxu0
        %v671 = vpop.f32.mrb[0].mxu0
        %v672 = vadd.f32 0.0, %v671
        %v673 = vpop.f32.mrb[0].mxu0
        %674 = vmatprep.mubr.bf16.mxu0 0
        %675 = vmatmul.mubr.bf16.gmra.mrb[0].mxu0 %v556
        %v676 = vpop.f32.mrb[0].mxu0
        %v677 = vadd.f32 0.0, %v676
        %v678 = vpop.f32.mrb[0].mxu0
        %v679 = vpop.f32.mrb[0].mxu0
        %v680 = vadd.f32 0.0, %v679
        %v681 = vpop.f32.mrb[0].mxu0
        %682 = vmatprep.mubr.bf16.mxu0 0
        %683 = vmatmul.mubr.bf16.gmra.mrb[0].mxu0 %v559
        %v684 = vpop.f32.mrb[0].mxu0
        %v685 = vadd.f32 0.0, %v684
        %v686 = vpop.f32.mrb[0].mxu0
        %v687 = vpop.f32.mrb[0].mxu0
        %v688 = vadd.f32 0.0, %v687
        %v689 = vpop.f32.mrb[0].mxu0
        %690 = vmatprep.mubr.bf16.mxu0 0
        %691 = vmatmul.mubr.bf16.gmra.mrb[0].mxu0 %v562
        %v692 = vpop.f32.mrb[0].mxu0
        %v693 = vadd.f32 0.0, %v692
        %v694 = vpop.f32.mrb[0].mxu0
        %v695 = vpop.f32.mrb[0].mxu0
        %v696 = vadd.f32 0.0, %v695
        %v697 = vpop.f32.mrb[0].mxu0
        %698 = vmatprep.mubr.bf16.mxu0 0
        %699 = vmatmul.mubr.bf16.gmra.mrb[0].mxu0 %v565
        %v700 = vpop.f32.mrb[0].mxu0
        %v701 = vadd.f32 0.0, %v700
        %v702 = vpop.f32.mrb[0].mxu0
        %v703 = vpop.f32.mrb[0].mxu0
        %v704 = vadd.f32 0.0, %v703
        %v705 = vpop.f32.mrb[0].mxu0
        %706 = vmatprep.mubr.bf16.mxu0 0
        %707 = vmatmul.mubr.bf16.gmra.mrb[0].mxu0 %v568
        %v708 = vpop.f32.mrb[0].mxu0
        %v709 = vadd.f32 0.0, %v708
        %v710 = vpop.f32.mrb[0].mxu0
        %v711 = vpop.f32.mrb[0].mxu0
        %v712 = vadd.f32 0.0, %v711
        %v713 = vpop.f32.mrb[0].mxu0
        %714 = vmatprep.mubr.bf16.mxu0 0
        %715 = vmatmul.mubr.bf16.gmra.mrb[0].mxu0 %v571
        %v716 = vpop.f32.mrb[0].mxu0
        %v717 = vadd.f32 0.0, %v716
        %v718 = vpop.f32.mrb[0].mxu0
        %v719 = vpop.f32.mrb[0].mxu0
        %v720 = vadd.f32 0.0, %v719
        %v721 = vpop.f32.mrb[0].mxu0
        %722 = vmatprep.mubr.bf16.mxu0 0
        %723 = vmatmul.mubr.bf16.gmra.mrb[0].mxu0 %v574
        %v724 = vpop.f32.mrb[0].mxu0
        %v725 = vadd.f32 0.0, %v724
        %v726 = vpop.f32.mrb[0].mxu0
        %v727 = vpop.f32.mrb[0].mxu0
        %v728 = vadd.f32 0.0, %v727
        %v729 = vpop.f32.mrb[0].mxu0
        %730 = vmatprep.mubr.bf16.mxu0 0
        %731 = vmatmul.mubr.bf16.gmra.mrb[0].mxu0 %v577
        %v732 = vpop.f32.mrb[0].mxu0
        %v733 = vadd.f32 0.0, %v732
        %v734 = vpop.f32.mrb[0].mxu0
        %v735 = vpop.f32.mrb[0].mxu0
        %v736 = vadd.f32 0.0, %v735
        %v737 = vpop.f32.mrb[0].mxu0
        %738 = vmatprep.mubr.bf16.mxu0 0
        %739 = vmatmul.mubr.bf16.gmra.mrb[0].mxu0 %v580
        %v740 = vpop.f32.mrb[0].mxu0
        %v741 = vadd.f32 0.0, %v740
        %v742 = vpop.f32.mrb[0].mxu0
        %v743 = vpop.f32.mrb[0].mxu0
        %v744 = vadd.f32 0.0, %v743
        %v745 = vpop.f32.mrb[0].mxu0
        %746 = vmatprep.mubr.bf16.mxu0 0
        %747 = vmatmul.mubr.bf16.gmra.mrb[0].mxu0 %v583
        %v748 = vpop.f32.mrb[0].mxu0
        %v749 = vadd.f32 0.0, %v748
        %v750 = vpop.f32.mrb[0].mxu0
        %v751 = vpop.f32.mrb[0].mxu0
        %v752 = vadd.f32 0.0, %v751
        %v753 = vpop.f32.mrb[0].mxu0
        %754 = vmatprep.mubr.bf16.mxu0 0
        %755 = vmatmul.mubr.bf16.gmra.mrb[0].mxu0 %v586
        %v756 = vpop.f32.mrb[0].mxu0
        %v757 = vadd.f32 0.0, %v756
        %v758 = vpop.f32.mrb[0].mxu0
        %v759 = vpop.f32.mrb[0].mxu0
        %v760 = vadd.f32 0.0, %v759
        %v761 = vpop.f32.mrb[0].mxu0
        %762 = vmatprep.mubr.bf16.mxu0 0
        %763 = vmatmul.mubr.bf16.gmra.mrb[0].mxu0 %v589
        %v764 = vpop.f32.mrb[0].mxu0
        %v765 = vadd.f32 0.0, %v764
        %v766 = vpop.f32.mrb[0].mxu0
        %v767 = vpop.f32.mrb[0].mxu0
        %v768 = vadd.f32 0.0, %v767
        %v769 = vpop.f32.mrb[0].mxu0
        %770 = vmatprep.mubr.bf16.mxu0 0
        %771 = vmatmul.mubr.bf16.gmra.mrb[0].mxu0 %v592
        %v772 = vpop.f32.mrb[0].mxu0
        %v773 = vadd.f32 0.0, %v772
        %v774 = vpop.f32.mrb[0].mxu0
        %v775 = vpop.f32.mrb[0].mxu0
        %v776 = vadd.f32 0.0, %v775
        %v777 = vpop.f32.mrb[0].mxu0
        %778 = vmatprep.mubr.bf16.mxu0 0
        %779 = vmatmul.mubr.bf16.gmra.mrb[0].mxu0 %v595
        %v780 = vpop.f32.mrb[0].mxu0
        %v781 = vadd.f32 0.0, %v780
        %v782 = vpop.f32.mrb[0].mxu0
        %v783 = vpop.f32.mrb[0].mxu0
        %v784 = vadd.f32 0.0, %v783
        %v785 = vpop.f32.mrb[0].mxu0
        %786 = vmatprep.mubr.bf16.mxu0 0
        %787 = vmatmul.mubr.bf16.gmra.mrb[0].mxu0 %v598
        %v788 = vpop.f32.mrb[0].mxu0
        %v789 = vadd.f32 0.0, %v788
        %v790 = vpop.f32.mrb[0].mxu0
        %v791 = vpop.f32.mrb[0].mxu0
        %v792 = vadd.f32 0.0, %v791
        %v793 = vpop.f32.mrb[0].mxu0
        %794 = vmatprep.mubr.bf16.mxu0 0
        %795 = vmatmul.mubr.bf16.gmra.mrb[0].mxu0 %v601
        %v796 = vpop.f32.mrb[0].mxu0
        %v797 = vadd.f32 0.0, %v796
        %v798 = vpop.f32.mrb[0].mxu0
        %v799 = vpop.f32.mrb[0].mxu0
        %v800 = vadd.f32 0.0, %v799
        %v801 = vpop.f32.mrb[0].mxu0
        %802 = vmatprep.mubr.bf16.mxu0 0
        %803 = vmatmul.mubr.bf16.gmra.mrb[0].mxu0 %v604
        %v804 = vpop.f32.mrb[0].mxu0
        %v805 = vadd.f32 0.0, %v804
        %v806 = vpop.f32.mrb[0].mxu0
        %v807 = vpop.f32.mrb[0].mxu0
        %v808 = vpop.f32.mrb[0].mxu0
        %809 = vdwg.mxu0
        %v810 = vpack.c.b16 %v351, %v351
        %v811 = vsel %vm542, %v353, 0
        %v813 = vsel %vm542, %v354, 0
        %v815 = vsel %vm542, %v355, 0
        %v817 = vsel %vm542, %v356, 0
        %v819 = vsel %vm542, %v357, 0
        %v821 = vsel %vm542, %v358, 0
        %v823 = vsel %vm542, %v359, 0
        %v825 = vsel %vm542, %v360, 0
        %v827 = vsel %vm542, %v361, 0
        %v829 = vsel %vm542, %v362, 0
        %v831 = vsel %vm542, %v363, 0
        %v833 = vsel %vm542, %v364, 0
        %v835 = vsel %vm542, %v365, 0
        %v837 = vsel %vm542, %v366, 0
        %v839 = vsel %vm542, %v367, 0
        %v841 = vsel %vm542, %v368, 0
        %v843 = vsel %vm542, %v369, 0
        %v845 = vsel %vm542, %v370, 0
        %v847 = vsel %vm542, %v371, 0
        %v849 = vsel %vm542, %v372, 0
        %v852 = vsel %vm542, %v810, 0
        %v855 = vsel %vm606, %v265, 0
        %857 = vmatprep.subr.bf16.mxu0 0
        %858 = vmatpush1.bf16.msra.mxu0 %v855
        %859 = vmatprep.subr.bf16.mxu0 0
        %860 = vmatpush1.bf16.msra.mxu0 0
        %861 = vmatprep.subr.bf16.mxu0 0
        %862 = vmatpush1.bf16.msra.mxu0 0
        %863 = vmatprep.subr.bf16.mxu0 0
        %864 = vmatpush1.bf16.msra.mxu0 0
        %865 = vmatprep.subr.bf16.mxu0 0
        %866 = vmatpush1.bf16.msra.mxu0 0
        %867 = vmatprep.subr.bf16.mxu0 0
        %868 = vmatpush1.bf16.msra.mxu0 0
        %869 = vmatprep.subr.bf16.mxu0 0
        %870 = vmatpush1.bf16.msra.mxu0 0
        %871 = vmatprep.subr.bf16.mxu0 0
        %872 = vmatpush1.bf16.msra.mxu0 0
        %873 = vmatprep.subr.bf16.mxu0 0
        %874 = vmatpush1.bf16.msra.mxu0 0
        %875 = vmatprep.subr.bf16.mxu0 0
        %876 = vmatpush1.bf16.msra.mxu0 0
        %877 = vmatprep.subr.bf16.mxu0 0
        %878 = vmatpush1.bf16.msra.mxu0 0
        %879 = vmatprep.subr.bf16.mxu0 0
        %880 = vmatpush1.bf16.msra.mxu0 0
        %881 = vmatprep.subr.bf16.mxu0 0
        %882 = vmatpush1.bf16.msra.mxu0 0
        %883 = vmatprep.subr.bf16.mxu0 0
        %884 = vmatpush1.bf16.msra.mxu0 0
        %885 = vmatprep.subr.bf16.mxu0 0
        %886 = vmatpush1.bf16.msra.mxu0 0
        %887 = vmatprep.subr.bf16.mxu0 0
        %888 = vmatpush1.bf16.msra.mxu0 0
        %889 = vmatprep.mubr.bf16.mxu0 0
        %890 = vmatmul.mubr.bf16.gmra.mrb[0].mxu0 %v811
        %v891 = vpop.f32.mrb[0].mxu0
        %v892 = vadd.f32 %v645, %v891
        %v893 = vpop.f32.mrb[0].mxu0
        %v894 = vpop.f32.mrb[0].mxu0
        %v895 = vadd.f32 %v648, %v894
        %v896 = vpop.f32.mrb[0].mxu0
        %897 = vmatprep.mubr.bf16.mxu0 0
        %898 = vmatmul.mubr.bf16.gmra.mrb[0].mxu0 %v813
        %v899 = vpop.f32.mrb[0].mxu0
        %v900 = vadd.f32 %v653, %v899
        %v901 = vpop.f32.mrb[0].mxu0
        %v902 = vpop.f32.mrb[0].mxu0
        %v903 = vadd.f32 %v656, %v902
        %v904 = vpop.f32.mrb[0].mxu0
        %905 = vmatprep.mubr.bf16.mxu0 0
        %906 = vmatmul.mubr.bf16.gmra.mrb[0].mxu0 %v815
        %v907 = vpop.f32.mrb[0].mxu0
        %v908 = vadd.f32 %v661, %v907
        %v909 = vpop.f32.mrb[0].mxu0
        %v910 = vpop.f32.mrb[0].mxu0
        %v911 = vadd.f32 %v664, %v910
        %v912 = vpop.f32.mrb[0].mxu0
        %913 = vmatprep.mubr.bf16.mxu0 0
        %914 = vmatmul.mubr.bf16.gmra.mrb[0].mxu0 %v817
        %v915 = vpop.f32.mrb[0].mxu0
        %v916 = vadd.f32 %v669, %v915
        %v917 = vpop.f32.mrb[0].mxu0
        %v918 = vpop.f32.mrb[0].mxu0
        %v919 = vadd.f32 %v672, %v918
        %v920 = vpop.f32.mrb[0].mxu0
        %921 = vmatprep.mubr.bf16.mxu0 0
        %922 = vmatmul.mubr.bf16.gmra.mrb[0].mxu0 %v819
        %v923 = vpop.f32.mrb[0].mxu0
        %v924 = vadd.f32 %v677, %v923
        %v925 = vpop.f32.mrb[0].mxu0
        %v926 = vpop.f32.mrb[0].mxu0
        %v927 = vadd.f32 %v680, %v926
        %v928 = vpop.f32.mrb[0].mxu0
        %929 = vmatprep.mubr.bf16.mxu0 0
        %930 = vmatmul.mubr.bf16.gmra.mrb[0].mxu0 %v821
        %v931 = vpop.f32.mrb[0].mxu0
        %v932 = vadd.f32 %v685, %v931
        %v933 = vpop.f32.mrb[0].mxu0
        %v934 = vpop.f32.mrb[0].mxu0
        %v935 = vadd.f32 %v688, %v934
        %v936 = vpop.f32.mrb[0].mxu0
        %937 = vmatprep.mubr.bf16.mxu0 0
        %938 = vmatmul.mubr.bf16.gmra.mrb[0].mxu0 %v823
        %v939 = vpop.f32.mrb[0].mxu0
        %v940 = vadd.f32 %v693, %v939
        %v941 = vpop.f32.mrb[0].mxu0
        %v942 = vpop.f32.mrb[0].mxu0
        %v943 = vadd.f32 %v696, %v942
        %v944 = vpop.f32.mrb[0].mxu0
        %945 = vmatprep.mubr.bf16.mxu0 0
        %946 = vmatmul.mubr.bf16.gmra.mrb[0].mxu0 %v825
        %v947 = vpop.f32.mrb[0].mxu0
        %v948 = vadd.f32 %v701, %v947
        %v949 = vpop.f32.mrb[0].mxu0
        %v950 = vpop.f32.mrb[0].mxu0
        %v951 = vadd.f32 %v704, %v950
        %v952 = vpop.f32.mrb[0].mxu0
        %953 = vmatprep.mubr.bf16.mxu0 0
        %954 = vmatmul.mubr.bf16.gmra.mrb[0].mxu0 %v827
        %v955 = vpop.f32.mrb[0].mxu0
        %v956 = vadd.f32 %v709, %v955
        %v957 = vpop.f32.mrb[0].mxu0
        %v958 = vpop.f32.mrb[0].mxu0
        %v959 = vadd.f32 %v712, %v958
        %v960 = vpop.f32.mrb[0].mxu0
        %961 = vmatprep.mubr.bf16.mxu0 0
        %962 = vmatmul.mubr.bf16.gmra.mrb[0].mxu0 %v829
        %v963 = vpop.f32.mrb[0].mxu0
        %v964 = vadd.f32 %v717, %v963
        %v965 = vpop.f32.mrb[0].mxu0
        %v966 = vpop.f32.mrb[0].mxu0
        %v967 = vadd.f32 %v720, %v966
        %v968 = vpop.f32.mrb[0].mxu0
        %969 = vmatprep.mubr.bf16.mxu0 0
        %970 = vmatmul.mubr.bf16.gmra.mrb[0].mxu0 %v831
        %v971 = vpop.f32.mrb[0].mxu0
        %v972 = vadd.f32 %v725, %v971
        %v973 = vpop.f32.mrb[0].mxu0
        %v974 = vpop.f32.mrb[0].mxu0
        %v975 = vadd.f32 %v728, %v974
        %v976 = vpop.f32.mrb[0].mxu0
        %977 = vmatprep.mubr.bf16.mxu0 0
        %978 = vmatmul.mubr.bf16.gmra.mrb[0].mxu0 %v833
        %v979 = vpop.f32.mrb[0].mxu0
        %v980 = vadd.f32 %v733, %v979
        %v981 = vpop.f32.mrb[0].mxu0
        %v982 = vpop.f32.mrb[0].mxu0
        %v983 = vadd.f32 %v736, %v982
        %v984 = vpop.f32.mrb[0].mxu0
        %985 = vmatprep.mubr.bf16.mxu0 0
        %986 = vmatmul.mubr.bf16.gmra.mrb[0].mxu0 %v835
        %v987 = vpop.f32.mrb[0].mxu0
        %v988 = vadd.f32 %v741, %v987
        %v989 = vpop.f32.mrb[0].mxu0
        %v990 = vpop.f32.mrb[0].mxu0
        %v991 = vadd.f32 %v744, %v990
        %v992 = vpop.f32.mrb[0].mxu0
        %993 = vmatprep.mubr.bf16.mxu0 0
        %994 = vmatmul.mubr.bf16.gmra.mrb[0].mxu0 %v837
        %v995 = vpop.f32.mrb[0].mxu0
        %v996 = vadd.f32 %v749, %v995
        %v997 = vpop.f32.mrb[0].mxu0
        %v998 = vpop.f32.mrb[0].mxu0
        %v999 = vadd.f32 %v752, %v998
        %v1000 = vpop.f32.mrb[0].mxu0
        %1001 = vmatprep.mubr.bf16.mxu0 0
        %1002 = vmatmul.mubr.bf16.gmra.mrb[0].mxu0 %v839
        %v1003 = vpop.f32.mrb[0].mxu0
        %v1004 = vadd.f32 %v757, %v1003
        %v1005 = vpop.f32.mrb[0].mxu0
        %v1006 = vpop.f32.mrb[0].mxu0
        %v1007 = vadd.f32 %v760, %v1006
        %v1008 = vpop.f32.mrb[0].mxu0
        %1009 = vmatprep.mubr.bf16.mxu0 0
        %1010 = vmatmul.mubr.bf16.gmra.mrb[0].mxu0 %v841
        %v1011 = vpop.f32.mrb[0].mxu0
        %v1012 = vadd.f32 %v765, %v1011
        %v1013 = vpop.f32.mrb[0].mxu0
        %v1014 = vpop.f32.mrb[0].mxu0
        %v1015 = vadd.f32 %v768, %v1014
        %v1016 = vpop.f32.mrb[0].mxu0
        %1017 = vmatprep.mubr.bf16.mxu0 0
        %1018 = vmatmul.mubr.bf16.gmra.mrb[0].mxu0 %v843
        %v1019 = vpop.f32.mrb[0].mxu0
        %v1020 = vadd.f32 %v773, %v1019
        %v1021 = vpop.f32.mrb[0].mxu0
        %v1022 = vpop.f32.mrb[0].mxu0
        %v1023 = vadd.f32 %v776, %v1022
        %v1024 = vpop.f32.mrb[0].mxu0
        %1025 = vmatprep.mubr.bf16.mxu0 0
        %1026 = vmatmul.mubr.bf16.gmra.mrb[0].mxu0 %v845
        %v1027 = vpop.f32.mrb[0].mxu0
        %v1028 = vadd.f32 %v781, %v1027
        %v1029 = vpop.f32.mrb[0].mxu0
        %v1030 = vpop.f32.mrb[0].mxu0
        %v1031 = vadd.f32 %v784, %v1030
        %v1032 = vpop.f32.mrb[0].mxu0
        %1033 = vmatprep.mubr.bf16.mxu0 0
        %1034 = vmatmul.mubr.bf16.gmra.mrb[0].mxu0 %v847
        %v1035 = vpop.f32.mrb[0].mxu0
        %v1036 = vadd.f32 %v789, %v1035
        %v1037 = vpop.f32.mrb[0].mxu0
        %v1038 = vpop.f32.mrb[0].mxu0
        %v1039 = vadd.f32 %v792, %v1038
        %v1040 = vpop.f32.mrb[0].mxu0
        %1041 = vmatprep.mubr.bf16.mxu0 0
        %1042 = vmatmul.mubr.bf16.gmra.mrb[0].mxu0 %v849
        %v1043 = vpop.f32.mrb[0].mxu0
        %v1044 = vadd.f32 %v797, %v1043
        %v1045 = vpop.f32.mrb[0].mxu0
        %v1046 = vpop.f32.mrb[0].mxu0
        %v1047 = vadd.f32 %v800, %v1046
        %v1048 = vpop.f32.mrb[0].mxu0
        %1049 = vmatprep.mubr.bf16.mxu0 0
        %1050 = vmatmul.mubr.bf16.gmra.mrb[0].mxu0 %v852
        %v1051 = vpop.f32.mrb[0].mxu0
        %v1052 = vadd.f32 %v805, %v1051
        %v1053 = vpop.f32.mrb[0].mxu0
        %v1054 = vpop.f32.mrb[0].mxu0
        %v1055 = vpop.f32.mrb[0].mxu0
        %1056 = vdwg.mxu0
        %v1057 = vld [vmem:[%s222] sm:$0xe]
        %s1058 = scalar_lea.vmem %s1, 4
        %v1059 = vld [vmem:[%s1058] sm:$0x3]
        %v1061 = vunpack.c.l.b16 %v1057
        %v1062 = vpack.c.b16 %v312, %v1061
        %vm1063 = vcmask 1046528
        %v1064 = vrot.slane %v1062, 1
        %v1065 = vrot.slane %v354, 1
        %v1066 = vsel %vm1063, %v1064, %v1065
        %v1067 = vrot.slane %v355, 1
        %v1068 = vsel %vm1063, %v1065, %v1067
        %v1069 = vrot.slane %v356, 1
        %v1070 = vsel %vm1063, %v1067, %v1069
        %v1071 = vrot.slane %v357, 1
        %v1072 = vsel %vm1063, %v1069, %v1071
        %v1073 = vrot.slane %v358, 1
        %v1074 = vsel %vm1063, %v1071, %v1073
        %v1075 = vrot.slane %v359, 1
        %v1076 = vsel %vm1063, %v1073, %v1075
        %v1077 = vrot.slane %v360, 1
        %v1078 = vsel %vm1063, %v1075, %v1077
        %v1079 = vrot.slane %v361, 1
        %v1080 = vsel %vm1063, %v1077, %v1079
        %v1081 = vrot.slane %v362, 1
        %v1082 = vsel %vm1063, %v1079, %v1081
        %v1083 = vrot.slane %v363, 1
        %v1084 = vsel %vm1063, %v1081, %v1083
        %v1085 = vrot.slane %v364, 1
        %v1086 = vsel %vm1063, %v1083, %v1085
        %v1087 = vrot.slane %v365, 1
        %v1088 = vsel %vm1063, %v1085, %v1087
        %v1089 = vrot.slane %v366, 1
        %v1090 = vsel %vm1063, %v1087, %v1089
        %v1091 = vrot.slane %v367, 1
        %v1092 = vsel %vm1063, %v1089, %v1091
        %v1093 = vrot.slane %v368, 1
        %v1094 = vsel %vm1063, %v1091, %v1093
        %v1095 = vrot.slane %v369, 1
        %v1096 = vsel %vm1063, %v1093, %v1095
        %v1097 = vrot.slane %v370, 1
        %v1098 = vsel %vm1063, %v1095, %v1097
        %v1099 = vrot.slane %v371, 1
        %v1100 = vsel %vm1063, %v1097, %v1099
        %v1101 = vrot.slane %v372, 1
        %v1102 = vsel %vm1063, %v1099, %v1101
        %v1103 = vrot.slane %v373, 1
        %v1104 = vsel %vm1063, %v1101, %v1103
        %v1106 = vsel %vm542, %v1066, 0
        %v1109 = vsel %vm542, %v1068, 0
        %v1112 = vsel %vm542, %v1070, 0
        %v1115 = vsel %vm542, %v1072, 0
        %v1118 = vsel %vm542, %v1074, 0
        %v1121 = vsel %vm542, %v1076, 0
        %v1124 = vsel %vm542, %v1078, 0
        %v1127 = vsel %vm542, %v1080, 0
        %v1130 = vsel %vm542, %v1082, 0
        %v1133 = vsel %vm542, %v1084, 0
        %v1136 = vsel %vm542, %v1086, 0
        %v1139 = vsel %vm542, %v1088, 0
        %v1142 = vsel %vm542, %v1090, 0
        %v1145 = vsel %vm542, %v1092, 0
        %v1148 = vsel %vm542, %v1094, 0
        %v1151 = vsel %vm542, %v1096, 0
        %v1154 = vsel %vm542, %v1098, 0
        %v1157 = vsel %vm542, %v1100, 0
        %v1160 = vsel %vm542, %v1102, 0
        %v1163 = vsel %vm542, %v1104, 0
        %v1166 = vsel %vm542, %v1103, 0
        %v1169 = vsel %vm606, %v1059, 0
        %1171 = vmatprep.subr.bf16.mxu0 0
        %1172 = vmatpush1.bf16.msra.mxu0 %v1169
        %1173 = vmatprep.subr.bf16.mxu0 0
        %1174 = vmatpush1.bf16.msra.mxu0 0
        %1175 = vmatprep.subr.bf16.mxu0 0
        %1176 = vmatpush1.bf16.msra.mxu0 0
        %1177 = vmatprep.subr.bf16.mxu0 0
        %1178 = vmatpush1.bf16.msra.mxu0 0
        %1179 = vmatprep.subr.bf16.mxu0 0
        %1180 = vmatpush1.bf16.msra.mxu0 0
        %1181 = vmatprep.subr.bf16.mxu0 0
        %1182 = vmatpush1.bf16.msra.mxu0 0
        %1183 = vmatprep.subr.bf16.mxu0 0
        %1184 = vmatpush1.bf16.msra.mxu0 0
        %1185 = vmatprep.subr.bf16.mxu0 0
        %1186 = vmatpush1.bf16.msra.mxu0 0
        %1187 = vmatprep.subr.bf16.mxu0 0
        %1188 = vmatpush1.bf16.msra.mxu0 0
        %1189 = vmatprep.subr.bf16.mxu0 0
        %1190 = vmatpush1.bf16.msra.mxu0 0
        %1191 = vmatprep.subr.bf16.mxu0 0
        %1192 = vmatpush1.bf16.msra.mxu0 0
        %1193 = vmatprep.subr.bf16.mxu0 0
        %1194 = vmatpush1.bf16.msra.mxu0 0
        %1195 = vmatprep.subr.bf16.mxu0 0
        %1196 = vmatpush1.bf16.msra.mxu0 0
        %1197 = vmatprep.subr.bf16.mxu0 0
        %1198 = vmatpush1.bf16.msra.mxu0 0
        %1199 = vmatprep.subr.bf16.mxu0 0
        %1200 = vmatpush1.bf16.msra.mxu0 0
        %1201 = vmatprep.subr.bf16.mxu0 0
        %1202 = vmatpush1.bf16.msra.mxu0 0
        %1203 = vmatprep.mubr.bf16.mxu0 0
        %1204 = vmatmul.mubr.bf16.gmra.mrb[0].mxu0 %v1106
        %v1205 = vpop.f32.mrb[0].mxu0
        %v1206 = vadd.f32 0.0, %v1205
        %v1207 = vpop.f32.mrb[0].mxu0
        %v1208 = vpop.f32.mrb[0].mxu0
        %v1209 = vadd.f32 0.0, %v1208
        %v1210 = vpop.f32.mrb[0].mxu0
        %1211 = vmatprep.mubr.bf16.mxu0 0
        %1212 = vmatmul.mubr.bf16.gmra.mrb[0].mxu0 %v1109
        %v1213 = vpop.f32.mrb[0].mxu0
        %v1214 = vadd.f32 0.0, %v1213
        %v1215 = vpop.f32.mrb[0].mxu0
        %v1216 = vpop.f32.mrb[0].mxu0
        %v1217 = vadd.f32 0.0, %v1216
        %v1218 = vpop.f32.mrb[0].mxu0
        %1219 = vmatprep.mubr.bf16.mxu0 0
        %1220 = vmatmul.mubr.bf16.gmra.mrb[0].mxu0 %v1112
        %v1221 = vpop.f32.mrb[0].mxu0
        %v1222 = vadd.f32 0.0, %v1221
        %v1223 = vpop.f32.mrb[0].mxu0
        %v1224 = vpop.f32.mrb[0].mxu0
        %v1225 = vadd.f32 0.0, %v1224
        %v1226 = vpop.f32.mrb[0].mxu0
        %1227 = vmatprep.mubr.bf16.mxu0 0
        %1228 = vmatmul.mubr.bf16.gmra.mrb[0].mxu0 %v1115
        %v1229 = vpop.f32.mrb[0].mxu0
        %v1230 = vadd.f32 0.0, %v1229
        %v1231 = vpop.f32.mrb[0].mxu0
        %v1232 = vpop.f32.mrb[0].mxu0
        %v1233 = vadd.f32 0.0, %v1232
        %v1234 = vpop.f32.mrb[0].mxu0
        %1235 = vmatprep.mubr.bf16.mxu0 0
        %1236 = vmatmul.mubr.bf16.gmra.mrb[0].mxu0 %v1118
        %v1237 = vpop.f32.mrb[0].mxu0
        %v1238 = vadd.f32 0.0, %v1237
        %v1239 = vpop.f32.mrb[0].mxu0
        %v1240 = vpop.f32.mrb[0].mxu0
        %v1241 = vadd.f32 0.0, %v1240
        %v1242 = vpop.f32.mrb[0].mxu0
        %1243 = vmatprep.mubr.bf16.mxu0 0
        %1244 = vmatmul.mubr.bf16.gmra.mrb[0].mxu0 %v1121
        %v1245 = vpop.f32.mrb[0].mxu0
        %v1246 = vadd.f32 0.0, %v1245
        %v1247 = vpop.f32.mrb[0].mxu0
        %v1248 = vpop.f32.mrb[0].mxu0
        %v1249 = vadd.f32 0.0, %v1248
        %v1250 = vpop.f32.mrb[0].mxu0
        %1251 = vmatprep.mubr.bf16.mxu0 0
        %1252 = vmatmul.mubr.bf16.gmra.mrb[0].mxu0 %v1124
        %v1253 = vpop.f32.mrb[0].mxu0
        %v1254 = vadd.f32 0.0, %v1253
        %v1255 = vpop.f32.mrb[0].mxu0
        %v1256 = vpop.f32.mrb[0].mxu0
        %v1257 = vadd.f32 0.0, %v1256
        %v1258 = vpop.f32.mrb[0].mxu0
        %1259 = vmatprep.mubr.bf16.mxu0 0
        %1260 = vmatmul.mubr.bf16.gmra.mrb[0].mxu0 %v1127
        %v1261 = vpop.f32.mrb[0].mxu0
        %v1262 = vadd.f32 0.0, %v1261
        %v1263 = vpop.f32.mrb[0].mxu0
        %v1264 = vpop.f32.mrb[0].mxu0
        %v1265 = vadd.f32 0.0, %v1264
        %v1266 = vpop.f32.mrb[0].mxu0
        %1267 = vmatprep.mubr.bf16.mxu0 0
        %1268 = vmatmul.mubr.bf16.gmra.mrb[0].mxu0 %v1130
        %v1269 = vpop.f32.mrb[0].mxu0
        %v1270 = vadd.f32 0.0, %v1269
        %v1271 = vpop.f32.mrb[0].mxu0
        %v1272 = vpop.f32.mrb[0].mxu0
        %v1273 = vadd.f32 0.0, %v1272
        %v1274 = vpop.f32.mrb[0].mxu0
        %1275 = vmatprep.mubr.bf16.mxu0 0
        %1276 = vmatmul.mubr.bf16.gmra.mrb[0].mxu0 %v1133
        %v1277 = vpop.f32.mrb[0].mxu0
        %v1278 = vadd.f32 0.0, %v1277
        %v1279 = vpop.f32.mrb[0].mxu0
        %v1280 = vpop.f32.mrb[0].mxu0
        %v1281 = vadd.f32 0.0, %v1280
        %v1282 = vpop.f32.mrb[0].mxu0
        %1283 = vmatprep.mubr.bf16.mxu0 0
        %1284 = vmatmul.mubr.bf16.gmra.mrb[0].mxu0 %v1136
        %v1285 = vpop.f32.mrb[0].mxu0
        %v1286 = vadd.f32 0.0, %v1285
        %v1287 = vpop.f32.mrb[0].mxu0
        %v1288 = vpop.f32.mrb[0].mxu0
        %v1289 = vadd.f32 0.0, %v1288
        %v1290 = vpop.f32.mrb[0].mxu0
        %1291 = vmatprep.mubr.bf16.mxu0 0
        %1292 = vmatmul.mubr.bf16.gmra.mrb[0].mxu0 %v1139
        %v1293 = vpop.f32.mrb[0].mxu0
        %v1294 = vadd.f32 0.0, %v1293
        %v1295 = vpop.f32.mrb[0].mxu0
        %v1296 = vpop.f32.mrb[0].mxu0
        %v1297 = vadd.f32 0.0, %v1296
        %v1298 = vpop.f32.mrb[0].mxu0
        %1299 = vmatprep.mubr.bf16.mxu0 0
        %1300 = vmatmul.mubr.bf16.gmra.mrb[0].mxu0 %v1142
        %v1301 = vpop.f32.mrb[0].mxu0
        %v1302 = vadd.f32 0.0, %v1301
        %v1303 = vpop.f32.mrb[0].mxu0
        %v1304 = vpop.f32.mrb[0].mxu0
        %v1305 = vadd.f32 0.0, %v1304
        %v1306 = vpop.f32.mrb[0].mxu0
        %1307 = vmatprep.mubr.bf16.mxu0 0
        %1308 = vmatmul.mubr.bf16.gmra.mrb[0].mxu0 %v1145
        %v1309 = vpop.f32.mrb[0].mxu0
        %v1310 = vadd.f32 0.0, %v1309
        %v1311 = vpop.f32.mrb[0].mxu0
        %v1312 = vpop.f32.mrb[0].mxu0
        %v1313 = vadd.f32 0.0, %v1312
        %v1314 = vpop.f32.mrb[0].mxu0
        %1315 = vmatprep.mubr.bf16.mxu0 0
        %1316 = vmatmul.mubr.bf16.gmra.mrb[0].mxu0 %v1148
        %v1317 = vpop.f32.mrb[0].mxu0
        %v1318 = vadd.f32 0.0, %v1317
        %v1319 = vpop.f32.mrb[0].mxu0
        %v1320 = vpop.f32.mrb[0].mxu0
        %v1321 = vadd.f32 0.0, %v1320
        %v1322 = vpop.f32.mrb[0].mxu0
        %1323 = vmatprep.mubr.bf16.mxu0 0
        %1324 = vmatmul.mubr.bf16.gmra.mrb[0].mxu0 %v1151
        %v1325 = vpop.f32.mrb[0].mxu0
        %v1326 = vadd.f32 0.0, %v1325
        %v1327 = vpop.f32.mrb[0].mxu0
        %v1328 = vpop.f32.mrb[0].mxu0
        %v1329 = vadd.f32 0.0, %v1328
        %v1330 = vpop.f32.mrb[0].mxu0
        %1331 = vmatprep.mubr.bf16.mxu0 0
        %1332 = vmatmul.mubr.bf16.gmra.mrb[0].mxu0 %v1154
        %v1333 = vpop.f32.mrb[0].mxu0
        %v1334 = vadd.f32 0.0, %v1333
        %v1335 = vpop.f32.mrb[0].mxu0
        %v1336 = vpop.f32.mrb[0].mxu0
        %v1337 = vadd.f32 0.0, %v1336
        %v1338 = vpop.f32.mrb[0].mxu0
        %1339 = vmatprep.mubr.bf16.mxu0 0
        %1340 = vmatmul.mubr.bf16.gmra.mrb[0].mxu0 %v1157
        %v1341 = vpop.f32.mrb[0].mxu0
        %v1342 = vadd.f32 0.0, %v1341
        %v1343 = vpop.f32.mrb[0].mxu0
        %v1344 = vpop.f32.mrb[0].mxu0
        %v1345 = vadd.f32 0.0, %v1344
        %v1346 = vpop.f32.mrb[0].mxu0
        %1347 = vmatprep.mubr.bf16.mxu0 0
        %1348 = vmatmul.mubr.bf16.gmra.mrb[0].mxu0 %v1160
        %v1349 = vpop.f32.mrb[0].mxu0
        %v1350 = vadd.f32 0.0, %v1349
        %v1351 = vpop.f32.mrb[0].mxu0
        %v1352 = vpop.f32.mrb[0].mxu0
        %v1353 = vadd.f32 0.0, %v1352
        %v1354 = vpop.f32.mrb[0].mxu0
        %1355 = vmatprep.mubr.bf16.mxu0 0
        %1356 = vmatmul.mubr.bf16.gmra.mrb[0].mxu0 %v1163
        %v1357 = vpop.f32.mrb[0].mxu0
        %v1358 = vadd.f32 0.0, %v1357
        %v1359 = vpop.f32.mrb[0].mxu0
        %v1360 = vpop.f32.mrb[0].mxu0
        %v1361 = vadd.f32 0.0, %v1360
        %v1362 = vpop.f32.mrb[0].mxu0
        %1363 = vmatprep.mubr.bf16.mxu0 0
        %1364 = vmatmul.mubr.bf16.gmra.mrb[0].mxu0 %v1166
        %v1365 = vpop.f32.mrb[0].mxu0
        %v1366 = vadd.f32 0.0, %v1365
        %v1367 = vpop.f32.mrb[0].mxu0
        %v1368 = vpop.f32.mrb[0].mxu0
        %v1369 = vpop.f32.mrb[0].mxu0
        %1370 = vdwg.mxu0
        %v1371 = vadd.f32 %v892, %v1206
        %v1372 = vadd.f32 %v895, %v1209
        %v1373 = vadd.f32 %v900, %v1214
        %v1374 = vadd.f32 %v903, %v1217
        %v1375 = vadd.f32 %v908, %v1222
        %v1376 = vadd.f32 %v911, %v1225
        %v1377 = vadd.f32 %v916, %v1230
        %v1378 = vadd.f32 %v919, %v1233
        %v1379 = vadd.f32 %v924, %v1238
        %v1380 = vadd.f32 %v927, %v1241
        %v1381 = vadd.f32 %v932, %v1246
        %v1382 = vadd.f32 %v935, %v1249
        %v1383 = vadd.f32 %v940, %v1254
        %v1384 = vadd.f32 %v943, %v1257
        %v1385 = vadd.f32 %v948, %v1262
        %v1386 = vadd.f32 %v951, %v1265
        %v1387 = vadd.f32 %v956, %v1270
        %v1388 = vadd.f32 %v959, %v1273
        %v1389 = vadd.f32 %v964, %v1278
        %v1390 = vadd.f32 %v967, %v1281
        %v1391 = vadd.f32 %v972, %v1286
        %v1392 = vadd.f32 %v975, %v1289
        %v1393 = vadd.f32 %v980, %v1294
        %v1394 = vadd.f32 %v983, %v1297
        %v1395 = vadd.f32 %v988, %v1302
        %v1396 = vadd.f32 %v991, %v1305
        %v1397 = vadd.f32 %v996, %v1310
        %v1398 = vadd.f32 %v999, %v1313
        %v1399 = vadd.f32 %v1004, %v1318
        %v1400 = vadd.f32 %v1007, %v1321
        %v1401 = vadd.f32 %v1012, %v1326
        %v1402 = vadd.f32 %v1015, %v1329
        %v1403 = vadd.f32 %v1020, %v1334
        %v1404 = vadd.f32 %v1023, %v1337
        %v1405 = vadd.f32 %v1028, %v1342
        %v1406 = vadd.f32 %v1031, %v1345
        %v1407 = vadd.f32 %v1036, %v1350
        %v1408 = vadd.f32 %v1039, %v1353
        %v1409 = vadd.f32 %v1044, %v1358
        %v1410 = vadd.f32 %v1047, %v1361
        %v1411 = vadd.f32 %v1052, %v1366
        %v1412 = vld [vmem:[%s222 + $0x8] sm:$0xe]
        %v1413 = vld [vmem:[%s222 + $0xc] sm:$0xf]
        %v1414 = vld [vmem:[%s222 + $0x10] sm:$0xf]
        %v1415 = vld [vmem:[%s222 + $0x14] sm:$0xf]
        %v1416 = vld [vmem:[%s222 + $0x18] sm:$0xf]
        %v1417 = vld [vmem:[%s222 + $0x1c] sm:$0xf]
        %v1418 = vld [vmem:[%s222 + $0x20] sm:$0xf]
        %v1419 = vld [vmem:[%s222 + $0x24] sm:$0xf]
        %v1420 = vld [vmem:[%s222 + $0x28] sm:$0xf]
        %v1421 = vld [vmem:[%s222 + $0x2c] sm:$0xf]
        %v1422 = vld [vmem:[%s222 + $0x30] sm:$0xf]
        %v1423 = vld [vmem:[%s222 + $0x34] sm:$0xf]
        %v1424 = vld [vmem:[%s222 + $0x38] sm:$0xf]
        %v1425 = vld [vmem:[%s222 + $0x3c] sm:$0xf]
        %v1426 = vld [vmem:[%s222 + $0x40] sm:$0xf]
        %v1427 = vld [vmem:[%s222 + $0x44] sm:$0xf]
        %v1428 = vld [vmem:[%s222 + $0x48] sm:$0xf]
        %v1429 = vld [vmem:[%s222 + $0x4c] sm:$0xf]
        %v1430 = vld [vmem:[%s222 + $0x50] sm:$0xf]
        %v1431 = vld [vmem:[%s222 + $0x54] sm:$0xf]
        %v1432 = vld [vmem:[%s222 + $0x58] sm:$0xf]
        %v1433 = vld [vmem:[%s222 + $0x5c] sm:$0xf]
        %v1434 = vld [vmem:[%s222 + $0x60] sm:$0xf]
        %v1435 = vld [vmem:[%s222 + $0x64] sm:$0xf]
        %v1436 = vld [vmem:[%s222 + $0x68] sm:$0xf]
        %v1437 = vld [vmem:[%s222 + $0x6c] sm:$0xf]
        %v1438 = vld [vmem:[%s222 + $0x70] sm:$0xf]
        %v1439 = vld [vmem:[%s222 + $0x74] sm:$0xf]
        %v1440 = vld [vmem:[%s222 + $0x78] sm:$0xf]
        %v1441 = vld [vmem:[%s222 + $0x7c] sm:$0xf]
        %v1442 = vld [vmem:[%s222 + $0x80] sm:$0xf]
        %v1443 = vld [vmem:[%s222 + $0x84] sm:$0xf]
        %v1444 = vld [vmem:[%s222 + $0x88] sm:$0xf]
        %v1445 = vld [vmem:[%s222 + $0x8c] sm:$0xf]
        %v1446 = vld [vmem:[%s222 + $0x90] sm:$0xf]
        %v1447 = vld [vmem:[%s222 + $0x94] sm:$0xf]
        %v1448 = vld [vmem:[%s222 + $0x98] sm:$0xf]
        %v1449 = vld [vmem:[%s222 + $0x9c] sm:$0xf]
        %v1450 = vld [vmem:[%s222 + $0xa0] sm:$0xf]
        %v1451 = vld [vmem:[%s222 + $0xa4] sm:$0xf]
        %v1452 = vld [vmem:[%s222 + $0xa8] sm:$0xf]
        %v1453 = vld [vmem:[%s222 + $0xac] sm:$0x1]
        %s1454 = scalar_lea.vmem %s1, 6
        %v1455 = vld [vmem:[%s1454] sm:$0x3]
        %v1498 = vunpack.c.l.b16 %v1412
        %v1499 = vunpack.c.l.b16 %v1413
        %v1500 = vunpack.c.l.b16 %v1414
        %v1501 = vunpack.c.l.b16 %v1415
        %v1502 = vunpack.c.l.b16 %v1416
        %v1503 = vunpack.c.l.b16 %v1417
        %v1504 = vunpack.c.l.b16 %v1418
        %v1505 = vunpack.c.l.b16 %v1419
        %v1506 = vunpack.c.l.b16 %v1420
        %v1507 = vunpack.c.l.b16 %v1421
        %v1508 = vunpack.c.l.b16 %v1422
        %v1509 = vunpack.c.l.b16 %v1423
        %v1510 = vunpack.c.l.b16 %v1424
        %v1511 = vunpack.c.l.b16 %v1425
        %v1512 = vunpack.c.l.b16 %v1426
        %v1513 = vunpack.c.l.b16 %v1427
        %v1514 = vunpack.c.l.b16 %v1428
        %v1515 = vunpack.c.l.b16 %v1429
        %v1516 = vunpack.c.l.b16 %v1430
        %v1517 = vunpack.c.l.b16 %v1431
        %v1518 = vunpack.c.l.b16 %v1432
        %v1519 = vunpack.c.l.b16 %v1433
        %v1520 = vunpack.c.l.b16 %v1434
        %v1521 = vunpack.c.l.b16 %v1435
        %v1522 = vunpack.c.l.b16 %v1436
        %v1523 = vunpack.c.l.b16 %v1437
        %v1524 = vunpack.c.l.b16 %v1438
        %v1525 = vunpack.c.l.b16 %v1439
        %v1526 = vunpack.c.l.b16 %v1440
        %v1527 = vunpack.c.l.b16 %v1441
        %v1528 = vunpack.c.l.b16 %v1442
        %v1529 = vunpack.c.l.b16 %v1443
        %v1530 = vunpack.c.l.b16 %v1444
        %v1531 = vunpack.c.l.b16 %v1445
        %v1532 = vunpack.c.l.b16 %v1446
        %v1533 = vunpack.c.l.b16 %v1447
        %v1534 = vunpack.c.l.b16 %v1448
        %v1535 = vunpack.c.l.b16 %v1449
        %v1536 = vunpack.c.l.b16 %v1450
        %v1537 = vunpack.c.l.b16 %v1451
        %v1538 = vunpack.c.l.b16 %v1452
        %v1539 = vunpack.c.l.b16 %v1453
        %v1540 = vpack.c.b16 %v1499, %v1498
        %v1541 = vpack.c.b16 %v1501, %v1500
        %v1542 = vpack.c.b16 %v1503, %v1502
        %v1543 = vpack.c.b16 %v1505, %v1504
        %v1544 = vpack.c.b16 %v1507, %v1506
        %v1545 = vpack.c.b16 %v1509, %v1508
        %v1546 = vpack.c.b16 %v1511, %v1510
        %v1547 = vpack.c.b16 %v1513, %v1512
        %v1548 = vpack.c.b16 %v1515, %v1514
        %v1549 = vpack.c.b16 %v1517, %v1516
        %v1550 = vpack.c.b16 %v1519, %v1518
        %v1551 = vpack.c.b16 %v1521, %v1520
        %v1552 = vpack.c.b16 %v1523, %v1522
        %v1553 = vpack.c.b16 %v1525, %v1524
        %v1554 = vpack.c.b16 %v1527, %v1526
        %v1555 = vpack.c.b16 %v1529, %v1528
        %v1556 = vpack.c.b16 %v1531, %v1530
        %v1557 = vpack.c.b16 %v1533, %v1532
        %v1558 = vpack.c.b16 %v1535, %v1534
        %v1559 = vpack.c.b16 %v1537, %v1536
        %v1560 = vpack.c.b16 %v1539, %v1538
        %v1561 = vrot.slane %v1540, 1
        %v1562 = vrot.slane %v1541, 1
        %v1563 = vsel %vm1063, %v1561, %v1562
        %v1564 = vrot.slane %v1542, 1
        %v1565 = vsel %vm1063, %v1562, %v1564
        %v1566 = vrot.slane %v1543, 1
        %v1567 = vsel %vm1063, %v1564, %v1566
        %v1568 = vrot.slane %v1544, 1
        %v1569 = vsel %vm1063, %v1566, %v1568
        %v1570 = vrot.slane %v1545, 1
        %v1571 = vsel %vm1063, %v1568, %v1570
        %v1572 = vrot.slane %v1546, 1
        %v1573 = vsel %vm1063, %v1570, %v1572
        %v1574 = vrot.slane %v1547, 1
        %v1575 = vsel %vm1063, %v1572, %v1574
        %v1576 = vrot.slane %v1548, 1
        %v1577 = vsel %vm1063, %v1574, %v1576
        %v1578 = vrot.slane %v1549, 1
        %v1579 = vsel %vm1063, %v1576, %v1578
        %v1580 = vrot.slane %v1550, 1
        %v1581 = vsel %vm1063, %v1578, %v1580
        %v1582 = vrot.slane %v1551, 1
        %v1583 = vsel %vm1063, %v1580, %v1582
        %v1584 = vrot.slane %v1552, 1
        %v1585 = vsel %vm1063, %v1582, %v1584
        %v1586 = vrot.slane %v1553, 1
        %v1587 = vsel %vm1063, %v1584, %v1586
        %v1588 = vrot.slane %v1554, 1
        %v1589 = vsel %vm1063, %v1586, %v1588
        %v1590 = vrot.slane %v1555, 1
        %v1591 = vsel %vm1063, %v1588, %v1590
        %v1592 = vrot.slane %v1556, 1
        %v1593 = vsel %vm1063, %v1590, %v1592
        %v1594 = vrot.slane %v1557, 1
        %v1595 = vsel %vm1063, %v1592, %v1594
        %v1596 = vrot.slane %v1558, 1
        %v1597 = vsel %vm1063, %v1594, %v1596
        %v1598 = vrot.slane %v1559, 1
        %v1599 = vsel %vm1063, %v1596, %v1598
        %v1600 = vrot.slane %v1560, 1
        %v1601 = vsel %vm1063, %v1598, %v1600
        %v1603 = vsel %vm542, %v1563, 0
        %v1606 = vsel %vm542, %v1565, 0
        %v1609 = vsel %vm542, %v1567, 0
        %v1612 = vsel %vm542, %v1569, 0
        %v1615 = vsel %vm542, %v1571, 0
        %v1618 = vsel %vm542, %v1573, 0
        %v1621 = vsel %vm542, %v1575, 0
        %v1624 = vsel %vm542, %v1577, 0
        %v1627 = vsel %vm542, %v1579, 0
        %v1630 = vsel %vm542, %v1581, 0
        %v1633 = vsel %vm542, %v1583, 0
        %v1636 = vsel %vm542, %v1585, 0
        %v1639 = vsel %vm542, %v1587, 0
        %v1642 = vsel %vm542, %v1589, 0
        %v1645 = vsel %vm542, %v1591, 0
        %v1648 = vsel %vm542, %v1593, 0
        %v1651 = vsel %vm542, %v1595, 0
        %v1654 = vsel %vm542, %v1597, 0
        %v1657 = vsel %vm542, %v1599, 0
        %v1660 = vsel %vm542, %v1601, 0
        %v1663 = vsel %vm542, %v1600, 0
        %v1666 = vsel %vm606, %v1455, 0
        %1668 = vmatprep.subr.bf16.mxu0 0
        %1669 = vmatpush1.bf16.msra.mxu0 %v1666
        %1670 = vmatprep.subr.bf16.mxu0 0
        %1671 = vmatpush1.bf16.msra.mxu0 0
        %1672 = vmatprep.subr.bf16.mxu0 0
        %1673 = vmatpush1.bf16.msra.mxu0 0
        %1674 = vmatprep.subr.bf16.mxu0 0
        %1675 = vmatpush1.bf16.msra.mxu0 0
        %1676 = vmatprep.subr.bf16.mxu0 0
        %1677 = vmatpush1.bf16.msra.mxu0 0
        %1678 = vmatprep.subr.bf16.mxu0 0
        %1679 = vmatpush1.bf16.msra.mxu0 0
        %1680 = vmatprep.subr.bf16.mxu0 0
        %1681 = vmatpush1.bf16.msra.mxu0 0
        %1682 = vmatprep.subr.bf16.mxu0 0
        %1683 = vmatpush1.bf16.msra.mxu0 0
        %1684 = vmatprep.subr.bf16.mxu0 0
        %1685 = vmatpush1.bf16.msra.mxu0 0
        %1686 = vmatprep.subr.bf16.mxu0 0
        %1687 = vmatpush1.bf16.msra.mxu0 0
        %1688 = vmatprep.subr.bf16.mxu0 0
        %1689 = vmatpush1.bf16.msra.mxu0 0
        %1690 = vmatprep.subr.bf16.mxu0 0
        %1691 = vmatpush1.bf16.msra.mxu0 0
        %1692 = vmatprep.subr.bf16.mxu0 0
        %1693 = vmatpush1.bf16.msra.mxu0 0
        %1694 = vmatprep.subr.bf16.mxu0 0
        %1695 = vmatpush1.bf16.msra.mxu0 0
        %1696 = vmatprep.subr.bf16.mxu0 0
        %1697 = vmatpush1.bf16.msra.mxu0 0
        %1698 = vmatprep.subr.bf16.mxu0 0
        %1699 = vmatpush1.bf16.msra.mxu0 0
        %1700 = vmatprep.mubr.bf16.mxu0 0
        %1701 = vmatmul.mubr.bf16.gmra.mrb[0].mxu0 %v1603
        %v1702 = vpop.f32.mrb[0].mxu0
        %v1703 = vadd.f32 0.0, %v1702
        %v1704 = vpop.f32.mrb[0].mxu0
        %v1705 = vpop.f32.mrb[0].mxu0
        %v1706 = vadd.f32 0.0, %v1705
        %v1707 = vpop.f32.mrb[0].mxu0
        %1708 = vmatprep.mubr.bf16.mxu0 0
        %1709 = vmatmul.mubr.bf16.gmra.mrb[0].mxu0 %v1606
        %v1710 = vpop.f32.mrb[0].mxu0
        %v1711 = vadd.f32 0.0, %v1710
        %v1712 = vpop.f32.mrb[0].mxu0
        %v1713 = vpop.f32.mrb[0].mxu0
        %v1714 = vadd.f32 0.0, %v1713
        %v1715 = vpop.f32.mrb[0].mxu0
        %1716 = vmatprep.mubr.bf16.mxu0 0
        %1717 = vmatmul.mubr.bf16.gmra.mrb[0].mxu0 %v1609
        %v1718 = vpop.f32.mrb[0].mxu0
        %v1719 = vadd.f32 0.0, %v1718
        %v1720 = vpop.f32.mrb[0].mxu0
        %v1721 = vpop.f32.mrb[0].mxu0
        %v1722 = vadd.f32 0.0, %v1721
        %v1723 = vpop.f32.mrb[0].mxu0
        %1724 = vmatprep.mubr.bf16.mxu0 0
        %1725 = vmatmul.mubr.bf16.gmra.mrb[0].mxu0 %v1612
        %v1726 = vpop.f32.mrb[0].mxu0
        %v1727 = vadd.f32 0.0, %v1726
        %v1728 = vpop.f32.mrb[0].mxu0
        %v1729 = vpop.f32.mrb[0].mxu0
        %v1730 = vadd.f32 0.0, %v1729
        %v1731 = vpop.f32.mrb[0].mxu0
        %1732 = vmatprep.mubr.bf16.mxu0 0
        %1733 = vmatmul.mubr.bf16.gmra.mrb[0].mxu0 %v1615
        %v1734 = vpop.f32.mrb[0].mxu0
        %v1735 = vadd.f32 0.0, %v1734
        %v1736 = vpop.f32.mrb[0].mxu0
        %v1737 = vpop.f32.mrb[0].mxu0
        %v1738 = vadd.f32 0.0, %v1737
        %v1739 = vpop.f32.mrb[0].mxu0
        %1740 = vmatprep.mubr.bf16.mxu0 0
        %1741 = vmatmul.mubr.bf16.gmra.mrb[0].mxu0 %v1618
        %v1742 = vpop.f32.mrb[0].mxu0
        %v1743 = vadd.f32 0.0, %v1742
        %v1744 = vpop.f32.mrb[0].mxu0
        %v1745 = vpop.f32.mrb[0].mxu0
        %v1746 = vadd.f32 0.0, %v1745
        %v1747 = vpop.f32.mrb[0].mxu0
        %1748 = vmatprep.mubr.bf16.mxu0 0
        %1749 = vmatmul.mubr.bf16.gmra.mrb[0].mxu0 %v1621
        %v1750 = vpop.f32.mrb[0].mxu0
        %v1751 = vadd.f32 0.0, %v1750
        %v1752 = vpop.f32.mrb[0].mxu0
        %v1753 = vpop.f32.mrb[0].mxu0
        %v1754 = vadd.f32 0.0, %v1753
        %v1755 = vpop.f32.mrb[0].mxu0
        %1756 = vmatprep.mubr.bf16.mxu0 0
        %1757 = vmatmul.mubr.bf16.gmra.mrb[0].mxu0 %v1624
        %v1758 = vpop.f32.mrb[0].mxu0
        %v1759 = vadd.f32 0.0, %v1758
        %v1760 = vpop.f32.mrb[0].mxu0
        %v1761 = vpop.f32.mrb[0].mxu0
        %v1762 = vadd.f32 0.0, %v1761
        %v1763 = vpop.f32.mrb[0].mxu0
        %1764 = vmatprep.mubr.bf16.mxu0 0
        %1765 = vmatmul.mubr.bf16.gmra.mrb[0].mxu0 %v1627
        %v1766 = vpop.f32.mrb[0].mxu0
        %v1767 = vadd.f32 0.0, %v1766
        %v1768 = vpop.f32.mrb[0].mxu0
        %v1769 = vpop.f32.mrb[0].mxu0
        %v1770 = vadd.f32 0.0, %v1769
        %v1771 = vpop.f32.mrb[0].mxu0
        %1772 = vmatprep.mubr.bf16.mxu0 0
        %1773 = vmatmul.mubr.bf16.gmra.mrb[0].mxu0 %v1630
        %v1774 = vpop.f32.mrb[0].mxu0
        %v1775 = vadd.f32 0.0, %v1774
        %v1776 = vpop.f32.mrb[0].mxu0
        %v1777 = vpop.f32.mrb[0].mxu0
        %v1778 = vadd.f32 0.0, %v1777
        %v1779 = vpop.f32.mrb[0].mxu0
        %1780 = vmatprep.mubr.bf16.mxu0 0
        %1781 = vmatmul.mubr.bf16.gmra.mrb[0].mxu0 %v1633
        %v1782 = vpop.f32.mrb[0].mxu0
        %v1783 = vadd.f32 0.0, %v1782
        %v1784 = vpop.f32.mrb[0].mxu0
        %v1785 = vpop.f32.mrb[0].mxu0
        %v1786 = vadd.f32 0.0, %v1785
        %v1787 = vpop.f32.mrb[0].mxu0
        %1788 = vmatprep.mubr.bf16.mxu0 0
        %1789 = vmatmul.mubr.bf16.gmra.mrb[0].mxu0 %v1636
        %v1790 = vpop.f32.mrb[0].mxu0
        %v1791 = vadd.f32 0.0, %v1790
        %v1792 = vpop.f32.mrb[0].mxu0
        %v1793 = vpop.f32.mrb[0].mxu0
        %v1794 = vadd.f32 0.0, %v1793
        %v1795 = vpop.f32.mrb[0].mxu0
        %1796 = vmatprep.mubr.bf16.mxu0 0
        %1797 = vmatmul.mubr.bf16.gmra.mrb[0].mxu0 %v1639
        %v1798 = vpop.f32.mrb[0].mxu0
        %v1799 = vadd.f32 0.0, %v1798
        %v1800 = vpop.f32.mrb[0].mxu0
        %v1801 = vpop.f32.mrb[0].mxu0
        %v1802 = vadd.f32 0.0, %v1801
        %v1803 = vpop.f32.mrb[0].mxu0
        %1804 = vmatprep.mubr.bf16.mxu0 0
        %1805 = vmatmul.mubr.bf16.gmra.mrb[0].mxu0 %v1642
        %v1806 = vpop.f32.mrb[0].mxu0
        %v1807 = vadd.f32 0.0, %v1806
        %v1808 = vpop.f32.mrb[0].mxu0
        %v1809 = vpop.f32.mrb[0].mxu0
        %v1810 = vadd.f32 0.0, %v1809
        %v1811 = vpop.f32.mrb[0].mxu0
        %1812 = vmatprep.mubr.bf16.mxu0 0
        %1813 = vmatmul.mubr.bf16.gmra.mrb[0].mxu0 %v1645
        %v1814 = vpop.f32.mrb[0].mxu0
        %v1815 = vadd.f32 0.0, %v1814
        %v1816 = vpop.f32.mrb[0].mxu0
        %v1817 = vpop.f32.mrb[0].mxu0
        %v1818 = vadd.f32 0.0, %v1817
        %v1819 = vpop.f32.mrb[0].mxu0
        %1820 = vmatprep.mubr.bf16.mxu0 0
        %1821 = vmatmul.mubr.bf16.gmra.mrb[0].mxu0 %v1648
        %v1822 = vpop.f32.mrb[0].mxu0
        %v1823 = vadd.f32 0.0, %v1822
        %v1824 = vpop.f32.mrb[0].mxu0
        %v1825 = vpop.f32.mrb[0].mxu0
        %v1826 = vadd.f32 0.0, %v1825
        %v1827 = vpop.f32.mrb[0].mxu0
        %1828 = vmatprep.mubr.bf16.mxu0 0
        %1829 = vmatmul.mubr.bf16.gmra.mrb[0].mxu0 %v1651
        %v1830 = vpop.f32.mrb[0].mxu0
        %v1831 = vadd.f32 0.0, %v1830
        %v1832 = vpop.f32.mrb[0].mxu0
        %v1833 = vpop.f32.mrb[0].mxu0
        %v1834 = vadd.f32 0.0, %v1833
        %v1835 = vpop.f32.mrb[0].mxu0
        %1836 = vmatprep.mubr.bf16.mxu0 0
        %1837 = vmatmul.mubr.bf16.gmra.mrb[0].mxu0 %v1654
        %v1838 = vpop.f32.mrb[0].mxu0
        %v1839 = vadd.f32 0.0, %v1838
        %v1840 = vpop.f32.mrb[0].mxu0
        %v1841 = vpop.f32.mrb[0].mxu0
        %v1842 = vadd.f32 0.0, %v1841
        %v1843 = vpop.f32.mrb[0].mxu0
        %1844 = vmatprep.mubr.bf16.mxu0 0
        %1845 = vmatmul.mubr.bf16.gmra.mrb[0].mxu0 %v1657
        %v1846 = vpop.f32.mrb[0].mxu0
        %v1847 = vadd.f32 0.0, %v1846
        %v1848 = vpop.f32.mrb[0].mxu0
        %v1849 = vpop.f32.mrb[0].mxu0
        %v1850 = vadd.f32 0.0, %v1849
        %v1851 = vpop.f32.mrb[0].mxu0
        %1852 = vmatprep.mubr.bf16.mxu0 0
        %1853 = vmatmul.mubr.bf16.gmra.mrb[0].mxu0 %v1660
        %v1854 = vpop.f32.mrb[0].mxu0
        %v1855 = vadd.f32 0.0, %v1854
        %v1856 = vpop.f32.mrb[0].mxu0
        %v1857 = vpop.f32.mrb[0].mxu0
        %v1858 = vadd.f32 0.0, %v1857
        %v1859 = vpop.f32.mrb[0].mxu0
        %1860 = vmatprep.mubr.bf16.mxu0 0
        %1861 = vmatmul.mubr.bf16.gmra.mrb[0].mxu0 %v1663
        %v1862 = vpop.f32.mrb[0].mxu0
        %v1863 = vadd.f32 0.0, %v1862
        %v1864 = vpop.f32.mrb[0].mxu0
        %v1865 = vpop.f32.mrb[0].mxu0
        %v1866 = vpop.f32.mrb[0].mxu0
        %1867 = vdwg.mxu0
        %v1868 = vadd.f32 %v1371, %v1703
        %v1869 = vadd.f32 %v1372, %v1706
        %v1870 = vadd.f32 %v1373, %v1711
        %v1871 = vadd.f32 %v1374, %v1714
        %v1872 = vadd.f32 %v1375, %v1719
        %v1873 = vadd.f32 %v1376, %v1722
        %v1874 = vadd.f32 %v1377, %v1727
        %v1875 = vadd.f32 %v1378, %v1730
        %v1876 = vadd.f32 %v1379, %v1735
        %v1877 = vadd.f32 %v1380, %v1738
        %v1878 = vadd.f32 %v1381, %v1743
        %v1879 = vadd.f32 %v1382, %v1746
        %v1880 = vadd.f32 %v1383, %v1751
        %v1881 = vadd.f32 %v1384, %v1754
        %v1882 = vadd.f32 %v1385, %v1759
        %v1883 = vadd.f32 %v1386, %v1762
        %v1884 = vadd.f32 %v1387, %v1767
        %v1885 = vadd.f32 %v1388, %v1770
        %v1886 = vadd.f32 %v1389, %v1775
        %v1887 = vadd.f32 %v1390, %v1778
        %v1888 = vadd.f32 %v1391, %v1783
        %v1889 = vadd.f32 %v1392, %v1786
        %v1890 = vadd.f32 %v1393, %v1791
        %v1891 = vadd.f32 %v1394, %v1794
        %v1892 = vadd.f32 %v1395, %v1799
        %v1893 = vadd.f32 %v1396, %v1802
        %v1894 = vadd.f32 %v1397, %v1807
        %v1895 = vadd.f32 %v1398, %v1810
        %v1896 = vadd.f32 %v1399, %v1815
        %v1897 = vadd.f32 %v1400, %v1818
        %v1898 = vadd.f32 %v1401, %v1823
        %v1899 = vadd.f32 %v1402, %v1826
        %v1900 = vadd.f32 %v1403, %v1831
        %v1901 = vadd.f32 %v1404, %v1834
        %v1902 = vadd.f32 %v1405, %v1839
        %v1903 = vadd.f32 %v1406, %v1842
        %v1904 = vadd.f32 %v1407, %v1847
        %v1905 = vadd.f32 %v1408, %v1850
        %v1906 = vadd.f32 %v1409, %v1855
        %v1907 = vadd.f32 %v1410, %v1858
        %v1908 = vadd.f32 %v1411, %v1863
        %v1909 = vld [vmem:[%s222 + $0xac] sm:$0x3]
        %s1910 = scalar_lea.vmem %s1, 8
        %v1911 = vld [vmem:[%s1910] sm:$0x3]
        %v1913 = vunpack.c.l.b16 %v1909
        %v1914 = vpack.c.b16 %v1913, %v1538
        %vm1915 = vsmask.f32 6400
        %v1917 = vshrl.u32 %v1540, 16
        %v1919 = vrot.slane %v1917, 1
        %v1920 = vshll.u32 %v1540, 16
        %v1922 = vrot.slane %v1920, 2
        %v1923 = vor.u32 %v1919, %v1922
        %v1925 = vshrl.u32 %v1541, 16
        %v1927 = vrot.slane %v1925, 1
        %v1928 = vshll.u32 %v1541, 16
        %v1930 = vrot.slane %v1928, 2
        %v1931 = vor.u32 %v1927, %v1930
        %v1932 = vsel %vm1915, %v1923, %v1931
        %v1934 = vshrl.u32 %v1542, 16
        %v1936 = vrot.slane %v1934, 1
        %v1937 = vshll.u32 %v1542, 16
        %v1939 = vrot.slane %v1937, 2
        %v1940 = vor.u32 %v1936, %v1939
        %v1941 = vsel %vm1915, %v1931, %v1940
        %v1943 = vshrl.u32 %v1543, 16
        %v1945 = vrot.slane %v1943, 1
        %v1946 = vshll.u32 %v1543, 16
        %v1948 = vrot.slane %v1946, 2
        %v1949 = vor.u32 %v1945, %v1948
        %v1950 = vsel %vm1915, %v1940, %v1949
        %v1952 = vshrl.u32 %v1544, 16
        %v1954 = vrot.slane %v1952, 1
        %v1955 = vshll.u32 %v1544, 16
        %v1957 = vrot.slane %v1955, 2
        %v1958 = vor.u32 %v1954, %v1957
        %v1959 = vsel %vm1915, %v1949, %v1958
        %v1961 = vshrl.u32 %v1545, 16
        %v1963 = vrot.slane %v1961, 1
        %v1964 = vshll.u32 %v1545, 16
        %v1966 = vrot.slane %v1964, 2
        %v1967 = vor.u32 %v1963, %v1966
        %v1968 = vsel %vm1915, %v1958, %v1967
        %v1970 = vshrl.u32 %v1546, 16
        %v1972 = vrot.slane %v1970, 1
        %v1973 = vshll.u32 %v1546, 16
        %v1975 = vrot.slane %v1973, 2
        %v1976 = vor.u32 %v1972, %v1975
        %v1977 = vsel %vm1915, %v1967, %v1976
        %v1979 = vshrl.u32 %v1547, 16
        %v1981 = vrot.slane %v1979, 1
        %v1982 = vshll.u32 %v1547, 16
        %v1984 = vrot.slane %v1982, 2
        %v1985 = vor.u32 %v1981, %v1984
        %v1986 = vsel %vm1915, %v1976, %v1985
        %v1988 = vshrl.u32 %v1548, 16
        %v1990 = vrot.slane %v1988, 1
        %v1991 = vshll.u32 %v1548, 16
        %v1993 = vrot.slane %v1991, 2
        %v1994 = vor.u32 %v1990, %v1993
        %v1995 = vsel %vm1915, %v1985, %v1994
        %v1997 = vshrl.u32 %v1549, 16
        %v1999 = vrot.slane %v1997, 1
        %v2000 = vshll.u32 %v1549, 16
        %v2002 = vrot.slane %v2000, 2
        %v2003 = vor.u32 %v1999, %v2002
        %v2004 = vsel %vm1915, %v1994, %v2003
        %v2006 = vshrl.u32 %v1550, 16
        %v2008 = vrot.slane %v2006, 1
        %v2009 = vshll.u32 %v1550, 16
        %v2011 = vrot.slane %v2009, 2
        %v2012 = vor.u32 %v2008, %v2011
        %v2013 = vsel %vm1915, %v2003, %v2012
        %v2015 = vshrl.u32 %v1551, 16
        %v2017 = vrot.slane %v2015, 1
        %v2018 = vshll.u32 %v1551, 16
        %v2020 = vrot.slane %v2018, 2
        %v2021 = vor.u32 %v2017, %v2020
        %v2022 = vsel %vm1915, %v2012, %v2021
        %v2024 = vshrl.u32 %v1552, 16
        %v2026 = vrot.slane %v2024, 1
        %v2027 = vshll.u32 %v1552, 16
        %v2029 = vrot.slane %v2027, 2
        %v2030 = vor.u32 %v2026, %v2029
        %v2031 = vsel %vm1915, %v2021, %v2030
        %v2033 = vshrl.u32 %v1553, 16
        %v2035 = vrot.slane %v2033, 1
        %v2036 = vshll.u32 %v1553, 16
        %v2038 = vrot.slane %v2036, 2
        %v2039 = vor.u32 %v2035, %v2038
        %v2040 = vsel %vm1915, %v2030, %v2039
        %v2042 = vshrl.u32 %v1554, 16
        %v2044 = vrot.slane %v2042, 1
        %v2045 = vshll.u32 %v1554, 16
        %v2047 = vrot.slane %v2045, 2
        %v2048 = vor.u32 %v2044, %v2047
        %v2049 = vsel %vm1915, %v2039, %v2048
        %v2051 = vshrl.u32 %v1555, 16
        %v2053 = vrot.slane %v2051, 1
        %v2054 = vshll.u32 %v1555, 16
        %v2056 = vrot.slane %v2054, 2
        %v2057 = vor.u32 %v2053, %v2056
        %v2058 = vsel %vm1915, %v2048, %v2057
        %v2060 = vshrl.u32 %v1556, 16
        %v2062 = vrot.slane %v2060, 1
        %v2063 = vshll.u32 %v1556, 16
        %v2065 = vrot.slane %v2063, 2
        %v2066 = vor.u32 %v2062, %v2065
        %v2067 = vsel %vm1915, %v2057, %v2066
        %v2069 = vshrl.u32 %v1557, 16
        %v2071 = vrot.slane %v2069, 1
        %v2072 = vshll.u32 %v1557, 16
        %v2074 = vrot.slane %v2072, 2
        %v2075 = vor.u32 %v2071, %v2074
        %v2076 = vsel %vm1915, %v2066, %v2075
        %v2078 = vshrl.u32 %v1558, 16
        %v2080 = vrot.slane %v2078, 1
        %v2081 = vshll.u32 %v1558, 16
        %v2083 = vrot.slane %v2081, 2
        %v2084 = vor.u32 %v2080, %v2083
        %v2085 = vsel %vm1915, %v2075, %v2084
        %v2087 = vshrl.u32 %v1559, 16
        %v2089 = vrot.slane %v2087, 1
        %v2090 = vshll.u32 %v1559, 16
        %v2092 = vrot.slane %v2090, 2
        %v2093 = vor.u32 %v2089, %v2092
        %v2094 = vsel %vm1915, %v2084, %v2093
        %v2096 = vshrl.u32 %v1914, 16
        %v2098 = vrot.slane %v2096, 1
        %v2099 = vshll.u32 %v1914, 16
        %v2101 = vrot.slane %v2099, 2
        %v2102 = vor.u32 %v2098, %v2101
        %v2103 = vsel %vm1915, %v2093, %v2102
        %v2105 = vsel %vm542, %v1932, 0
        %v2108 = vsel %vm542, %v1941, 0
        %v2111 = vsel %vm542, %v1950, 0
        %v2114 = vsel %vm542, %v1959, 0
        %v2117 = vsel %vm542, %v1968, 0
        %v2120 = vsel %vm542, %v1977, 0
        %v2123 = vsel %vm542, %v1986, 0
        %v2126 = vsel %vm542, %v1995, 0
        %v2129 = vsel %vm542, %v2004, 0
        %v2132 = vsel %vm542, %v2013, 0
        %v2135 = vsel %vm542, %v2022, 0
        %v2138 = vsel %vm542, %v2031, 0
        %v2141 = vsel %vm542, %v2040, 0
        %v2144 = vsel %vm542, %v2049, 0
        %v2147 = vsel %vm542, %v2058, 0
        %v2150 = vsel %vm542, %v2067, 0
        %v2153 = vsel %vm542, %v2076, 0
        %v2156 = vsel %vm542, %v2085, 0
        %v2159 = vsel %vm542, %v2094, 0
        %v2162 = vsel %vm542, %v2103, 0
        %v2165 = vsel %vm542, %v2102, 0
        %v2168 = vsel %vm606, %v1911, 0
        %2170 = vmatprep.subr.bf16.mxu0 0
        %2171 = vmatpush1.bf16.msra.mxu0 %v2168
        %2172 = vmatprep.subr.bf16.mxu0 0
        %2173 = vmatpush1.bf16.msra.mxu0 0
        %2174 = vmatprep.subr.bf16.mxu0 0
        %2175 = vmatpush1.bf16.msra.mxu0 0
        %2176 = vmatprep.subr.bf16.mxu0 0
        %2177 = vmatpush1.bf16.msra.mxu0 0
        %2178 = vmatprep.subr.bf16.mxu0 0
        %2179 = vmatpush1.bf16.msra.mxu0 0
        %2180 = vmatprep.subr.bf16.mxu0 0
        %2181 = vmatpush1.bf16.msra.mxu0 0
        %2182 = vmatprep.subr.bf16.mxu0 0
        %2183 = vmatpush1.bf16.msra.mxu0 0
        %2184 = vmatprep.subr.bf16.mxu0 0
        %2185 = vmatpush1.bf16.msra.mxu0 0
        %2186 = vmatprep.subr.bf16.mxu0 0
        %2187 = vmatpush1.bf16.msra.mxu0 0
        %2188 = vmatprep.subr.bf16.mxu0 0
        %2189 = vmatpush1.bf16.msra.mxu0 0
        %2190 = vmatprep.subr.bf16.mxu0 0
        %2191 = vmatpush1.bf16.msra.mxu0 0
        %2192 = vmatprep.subr.bf16.mxu0 0
        %2193 = vmatpush1.bf16.msra.mxu0 0
        %2194 = vmatprep.subr.bf16.mxu0 0
        %2195 = vmatpush1.bf16.msra.mxu0 0
        %2196 = vmatprep.subr.bf16.mxu0 0
        %2197 = vmatpush1.bf16.msra.mxu0 0
        %2198 = vmatprep.subr.bf16.mxu0 0
        %2199 = vmatpush1.bf16.msra.mxu0 0
        %2200 = vmatprep.subr.bf16.mxu0 0
        %2201 = vmatpush1.bf16.msra.mxu0 0
        %2202 = vmatprep.mubr.bf16.mxu0 0
        %2203 = vmatmul.mubr.bf16.gmra.mrb[0].mxu0 %v2105
        %v2204 = vpop.f32.mrb[0].mxu0
        %v2205 = vadd.f32 0.0, %v2204
        %v2206 = vpop.f32.mrb[0].mxu0
        %v2207 = vpop.f32.mrb[0].mxu0
        %v2208 = vadd.f32 0.0, %v2207
        %v2209 = vpop.f32.mrb[0].mxu0
        %2210 = vmatprep.mubr.bf16.mxu0 0
        %2211 = vmatmul.mubr.bf16.gmra.mrb[0].mxu0 %v2108
        %v2212 = vpop.f32.mrb[0].mxu0
        %v2213 = vadd.f32 0.0, %v2212
        %v2214 = vpop.f32.mrb[0].mxu0
        %v2215 = vpop.f32.mrb[0].mxu0
        %v2216 = vadd.f32 0.0, %v2215
        %v2217 = vpop.f32.mrb[0].mxu0
        %2218 = vmatprep.mubr.bf16.mxu0 0
        %2219 = vmatmul.mubr.bf16.gmra.mrb[0].mxu0 %v2111
        %v2220 = vpop.f32.mrb[0].mxu0
        %v2221 = vadd.f32 0.0, %v2220
        %v2222 = vpop.f32.mrb[0].mxu0
        %v2223 = vpop.f32.mrb[0].mxu0
        %v2224 = vadd.f32 0.0, %v2223
        %v2225 = vpop.f32.mrb[0].mxu0
        %2226 = vmatprep.mubr.bf16.mxu0 0
        %2227 = vmatmul.mubr.bf16.gmra.mrb[0].mxu0 %v2114
        %v2228 = vpop.f32.mrb[0].mxu0
        %v2229 = vadd.f32 0.0, %v2228
        %v2230 = vpop.f32.mrb[0].mxu0
        %v2231 = vpop.f32.mrb[0].mxu0
        %v2232 = vadd.f32 0.0, %v2231
        %v2233 = vpop.f32.mrb[0].mxu0
        %2234 = vmatprep.mubr.bf16.mxu0 0
        %2235 = vmatmul.mubr.bf16.gmra.mrb[0].mxu0 %v2117
        %v2236 = vpop.f32.mrb[0].mxu0
        %v2237 = vadd.f32 0.0, %v2236
        %v2238 = vpop.f32.mrb[0].mxu0
        %v2239 = vpop.f32.mrb[0].mxu0
        %v2240 = vadd.f32 0.0, %v2239
        %v2241 = vpop.f32.mrb[0].mxu0
        %2242 = vmatprep.mubr.bf16.mxu0 0
        %2243 = vmatmul.mubr.bf16.gmra.mrb[0].mxu0 %v2120
        %v2244 = vpop.f32.mrb[0].mxu0
        %v2245 = vadd.f32 0.0, %v2244
        %v2246 = vpop.f32.mrb[0].mxu0
        %v2247 = vpop.f32.mrb[0].mxu0
        %v2248 = vadd.f32 0.0, %v2247
        %v2249 = vpop.f32.mrb[0].mxu0
        %2250 = vmatprep.mubr.bf16.mxu0 0
        %2251 = vmatmul.mubr.bf16.gmra.mrb[0].mxu0 %v2123
        %v2252 = vpop.f32.mrb[0].mxu0
        %v2253 = vadd.f32 0.0, %v2252
        %v2254 = vpop.f32.mrb[0].mxu0
        %v2255 = vpop.f32.mrb[0].mxu0
        %v2256 = vadd.f32 0.0, %v2255
        %v2257 = vpop.f32.mrb[0].mxu0
        %2258 = vmatprep.mubr.bf16.mxu0 0
        %2259 = vmatmul.mubr.bf16.gmra.mrb[0].mxu0 %v2126
        %v2260 = vpop.f32.mrb[0].mxu0
        %v2261 = vadd.f32 0.0, %v2260
        %v2262 = vpop.f32.mrb[0].mxu0
        %v2263 = vpop.f32.mrb[0].mxu0
        %v2264 = vadd.f32 0.0, %v2263
        %v2265 = vpop.f32.mrb[0].mxu0
        %2266 = vmatprep.mubr.bf16.mxu0 0
        %2267 = vmatmul.mubr.bf16.gmra.mrb[0].mxu0 %v2129
        %v2268 = vpop.f32.mrb[0].mxu0
        %v2269 = vadd.f32 0.0, %v2268
        %v2270 = vpop.f32.mrb[0].mxu0
        %v2271 = vpop.f32.mrb[0].mxu0
        %v2272 = vadd.f32 0.0, %v2271
        %v2273 = vpop.f32.mrb[0].mxu0
        %2274 = vmatprep.mubr.bf16.mxu0 0
        %2275 = vmatmul.mubr.bf16.gmra.mrb[0].mxu0 %v2132
        %v2276 = vpop.f32.mrb[0].mxu0
        %v2277 = vadd.f32 0.0, %v2276
        %v2278 = vpop.f32.mrb[0].mxu0
        %v2279 = vpop.f32.mrb[0].mxu0
        %v2280 = vadd.f32 0.0, %v2279
        %v2281 = vpop.f32.mrb[0].mxu0
        %2282 = vmatprep.mubr.bf16.mxu0 0
        %2283 = vmatmul.mubr.bf16.gmra.mrb[0].mxu0 %v2135
        %v2284 = vpop.f32.mrb[0].mxu0
        %v2285 = vadd.f32 0.0, %v2284
        %v2286 = vpop.f32.mrb[0].mxu0
        %v2287 = vpop.f32.mrb[0].mxu0
        %v2288 = vadd.f32 0.0, %v2287
        %v2289 = vpop.f32.mrb[0].mxu0
        %2290 = vmatprep.mubr.bf16.mxu0 0
        %2291 = vmatmul.mubr.bf16.gmra.mrb[0].mxu0 %v2138
        %v2292 = vpop.f32.mrb[0].mxu0
        %v2293 = vadd.f32 0.0, %v2292
        %v2294 = vpop.f32.mrb[0].mxu0
        %v2295 = vpop.f32.mrb[0].mxu0
        %v2296 = vadd.f32 0.0, %v2295
        %v2297 = vpop.f32.mrb[0].mxu0
        %2298 = vmatprep.mubr.bf16.mxu0 0
        %2299 = vmatmul.mubr.bf16.gmra.mrb[0].mxu0 %v2141
        %v2300 = vpop.f32.mrb[0].mxu0
        %v2301 = vadd.f32 0.0, %v2300
        %v2302 = vpop.f32.mrb[0].mxu0
        %v2303 = vpop.f32.mrb[0].mxu0
        %v2304 = vadd.f32 0.0, %v2303
        %v2305 = vpop.f32.mrb[0].mxu0
        %2306 = vmatprep.mubr.bf16.mxu0 0
        %2307 = vmatmul.mubr.bf16.gmra.mrb[0].mxu0 %v2144
        %v2308 = vpop.f32.mrb[0].mxu0
        %v2309 = vadd.f32 0.0, %v2308
        %v2310 = vpop.f32.mrb[0].mxu0
        %v2311 = vpop.f32.mrb[0].mxu0
        %v2312 = vadd.f32 0.0, %v2311
        %v2313 = vpop.f32.mrb[0].mxu0
        %2314 = vmatprep.mubr.bf16.mxu0 0
        %2315 = vmatmul.mubr.bf16.gmra.mrb[0].mxu0 %v2147
        %v2316 = vpop.f32.mrb[0].mxu0
        %v2317 = vadd.f32 0.0, %v2316
        %v2318 = vpop.f32.mrb[0].mxu0
        %v2319 = vpop.f32.mrb[0].mxu0
        %v2320 = vadd.f32 0.0, %v2319
        %v2321 = vpop.f32.mrb[0].mxu0
        %2322 = vmatprep.mubr.bf16.mxu0 0
        %2323 = vmatmul.mubr.bf16.gmra.mrb[0].mxu0 %v2150
        %v2324 = vpop.f32.mrb[0].mxu0
        %v2325 = vadd.f32 0.0, %v2324
        %v2326 = vpop.f32.mrb[0].mxu0
        %v2327 = vpop.f32.mrb[0].mxu0
        %v2328 = vadd.f32 0.0, %v2327
        %v2329 = vpop.f32.mrb[0].mxu0
        %2330 = vmatprep.mubr.bf16.mxu0 0
        %2331 = vmatmul.mubr.bf16.gmra.mrb[0].mxu0 %v2153
        %v2332 = vpop.f32.mrb[0].mxu0
        %v2333 = vadd.f32 0.0, %v2332
        %v2334 = vpop.f32.mrb[0].mxu0
        %v2335 = vpop.f32.mrb[0].mxu0
        %v2336 = vadd.f32 0.0, %v2335
        %v2337 = vpop.f32.mrb[0].mxu0
        %2338 = vmatprep.mubr.bf16.mxu0 0
        %2339 = vmatmul.mubr.bf16.gmra.mrb[0].mxu0 %v2156
        %v2340 = vpop.f32.mrb[0].mxu0
        %v2341 = vadd.f32 0.0, %v2340
        %v2342 = vpop.f32.mrb[0].mxu0
        %v2343 = vpop.f32.mrb[0].mxu0
        %v2344 = vadd.f32 0.0, %v2343
        %v2345 = vpop.f32.mrb[0].mxu0
        %2346 = vmatprep.mubr.bf16.mxu0 0
        %2347 = vmatmul.mubr.bf16.gmra.mrb[0].mxu0 %v2159
        %v2348 = vpop.f32.mrb[0].mxu0
        %v2349 = vadd.f32 0.0, %v2348
        %v2350 = vpop.f32.mrb[0].mxu0
        %v2351 = vpop.f32.mrb[0].mxu0
        %v2352 = vadd.f32 0.0, %v2351
        %v2353 = vpop.f32.mrb[0].mxu0
        %2354 = vmatprep.mubr.bf16.mxu0 0
        %2355 = vmatmul.mubr.bf16.gmra.mrb[0].mxu0 %v2162
        %v2356 = vpop.f32.mrb[0].mxu0
        %v2357 = vadd.f32 0.0, %v2356
        %v2358 = vpop.f32.mrb[0].mxu0
        %v2359 = vpop.f32.mrb[0].mxu0
        %v2360 = vadd.f32 0.0, %v2359
        %v2361 = vpop.f32.mrb[0].mxu0
        %2362 = vmatprep.mubr.bf16.mxu0 0
        %2363 = vmatmul.mubr.bf16.gmra.mrb[0].mxu0 %v2165
        %v2364 = vpop.f32.mrb[0].mxu0
        %v2365 = vadd.f32 0.0, %v2364
        %v2366 = vpop.f32.mrb[0].mxu0
        %v2367 = vpop.f32.mrb[0].mxu0
        %v2368 = vpop.f32.mrb[0].mxu0
        %2369 = vdwg.mxu0
        %v2370 = vadd.f32 %v1868, %v2205
        %v2371 = vadd.f32 %v1869, %v2208
        %v2372 = vadd.f32 %v1870, %v2213
        %v2373 = vadd.f32 %v1871, %v2216
        %v2374 = vadd.f32 %v1872, %v2221
        %v2375 = vadd.f32 %v1873, %v2224
        %v2376 = vadd.f32 %v1874, %v2229
        %v2377 = vadd.f32 %v1875, %v2232
        %v2378 = vadd.f32 %v1876, %v2237
        %v2379 = vadd.f32 %v1877, %v2240
        %v2380 = vadd.f32 %v1878, %v2245
        %v2381 = vadd.f32 %v1879, %v2248
        %v2382 = vadd.f32 %v1880, %v2253
        %v2383 = vadd.f32 %v1881, %v2256
        %v2384 = vadd.f32 %v1882, %v2261
        %v2385 = vadd.f32 %v1883, %v2264
        %v2386 = vadd.f32 %v1884, %v2269
        %v2387 = vadd.f32 %v1885, %v2272
        %v2388 = vadd.f32 %v1886, %v2277
        %v2389 = vadd.f32 %v1887, %v2280
        %v2390 = vadd.f32 %v1888, %v2285
        %v2391 = vadd.f32 %v1889, %v2288
        %v2392 = vadd.f32 %v1890, %v2293
        %v2393 = vadd.f32 %v1891, %v2296
        %v2394 = vadd.f32 %v1892, %v2301
        %v2395 = vadd.f32 %v1893, %v2304
        %v2396 = vadd.f32 %v1894, %v2309
        %v2397 = vadd.f32 %v1895, %v2312
        %v2398 = vadd.f32 %v1896, %v2317
        %v2399 = vadd.f32 %v1897, %v2320
        %v2400 = vadd.f32 %v1898, %v2325
        %v2401 = vadd.f32 %v1899, %v2328
        %v2402 = vadd.f32 %v1900, %v2333
        %v2403 = vadd.f32 %v1901, %v2336
        %v2404 = vadd.f32 %v1902, %v2341
        %v2405 = vadd.f32 %v1903, %v2344
        %v2406 = vadd.f32 %v1904, %v2349
        %v2407 = vadd.f32 %v1905, %v2352
        %v2408 = vadd.f32 %v1906, %v2357
        %v2409 = vadd.f32 %v1907, %v2360
        %v2410 = vadd.f32 %v1908, %v2365
        %v2411 = vld [vmem:[%s222 + $0x8] sm:$0xc]
        %s2412 = scalar_lea.vmem %s1, 10
        %v2413 = vld [vmem:[%s2412] sm:$0x3]
        %v2415 = vunpack.c.l.b16 %v2411
        %v2416 = vpack.c.b16 %v1499, %v2415
        %vm2417 = vcmask 1045504
        %v2418 = vrot.slane %v2416, 2
        %v2419 = vrot.slane %v1541, 2
        %v2420 = vsel %vm2417, %v2418, %v2419
        %v2421 = vrot.slane %v1542, 2
        %v2422 = vsel %vm2417, %v2419, %v2421
        %v2423 = vrot.slane %v1543, 2
        %v2424 = vsel %vm2417, %v2421, %v2423
        %v2425 = vrot.slane %v1544, 2
        %v2426 = vsel %vm2417, %v2423, %v2425
        %v2427 = vrot.slane %v1545, 2
        %v2428 = vsel %vm2417, %v2425, %v2427
        %v2429 = vrot.slane %v1546, 2
        %v2430 = vsel %vm2417, %v2427, %v2429
        %v2431 = vrot.slane %v1547, 2
        %v2432 = vsel %vm2417, %v2429, %v2431
        %v2433 = vrot.slane %v1548, 2
        %v2434 = vsel %vm2417, %v2431, %v2433
        %v2435 = vrot.slane %v1549, 2
        %v2436 = vsel %vm2417, %v2433, %v2435
        %v2437 = vrot.slane %v1550, 2
        %v2438 = vsel %vm2417, %v2435, %v2437
        %v2439 = vrot.slane %v1551, 2
        %v2440 = vsel %vm2417, %v2437, %v2439
        %v2441 = vrot.slane %v1552, 2
        %v2442 = vsel %vm2417, %v2439, %v2441
        %v2443 = vrot.slane %v1553, 2
        %v2444 = vsel %vm2417, %v2441, %v2443
        %v2445 = vrot.slane %v1554, 2
        %v2446 = vsel %vm2417, %v2443, %v2445
        %v2447 = vrot.slane %v1555, 2
        %v2448 = vsel %vm2417, %v2445, %v2447
        %v2449 = vrot.slane %v1556, 2
        %v2450 = vsel %vm2417, %v2447, %v2449
        %v2451 = vrot.slane %v1557, 2
        %v2452 = vsel %vm2417, %v2449, %v2451
        %v2453 = vrot.slane %v1558, 2
        %v2454 = vsel %vm2417, %v2451, %v2453
        %v2455 = vrot.slane %v1559, 2
        %v2456 = vsel %vm2417, %v2453, %v2455
        %v2457 = vrot.slane %v1914, 2
        %v2458 = vsel %vm2417, %v2455, %v2457
        %v2460 = vsel %vm542, %v2420, 0
        %v2463 = vsel %vm542, %v2422, 0
        %v2466 = vsel %vm542, %v2424, 0
        %v2469 = vsel %vm542, %v2426, 0
        %v2472 = vsel %vm542, %v2428, 0
        %v2475 = vsel %vm542, %v2430, 0
        %v2478 = vsel %vm542, %v2432, 0
        %v2481 = vsel %vm542, %v2434, 0
        %v2484 = vsel %vm542, %v2436, 0
        %v2487 = vsel %vm542, %v2438, 0
        %v2490 = vsel %vm542, %v2440, 0
        %v2493 = vsel %vm542, %v2442, 0
        %v2496 = vsel %vm542, %v2444, 0
        %v2499 = vsel %vm542, %v2446, 0
        %v2502 = vsel %vm542, %v2448, 0
        %v2505 = vsel %vm542, %v2450, 0
        %v2508 = vsel %vm542, %v2452, 0
        %v2511 = vsel %vm542, %v2454, 0
        %v2514 = vsel %vm542, %v2456, 0
        %v2517 = vsel %vm542, %v2458, 0
        %v2520 = vsel %vm542, %v2457, 0
        %v2523 = vsel %vm606, %v2413, 0
        %2525 = vmatprep.subr.bf16.mxu0 0
        %2526 = vmatpush1.bf16.msra.mxu0 %v2523
        %2527 = vmatprep.subr.bf16.mxu0 0
        %2528 = vmatpush1.bf16.msra.mxu0 0
        %2529 = vmatprep.subr.bf16.mxu0 0
        %2530 = vmatpush1.bf16.msra.mxu0 0
        %2531 = vmatprep.subr.bf16.mxu0 0
        %2532 = vmatpush1.bf16.msra.mxu0 0
        %2533 = vmatprep.subr.bf16.mxu0 0
        %2534 = vmatpush1.bf16.msra.mxu0 0
        %2535 = vmatprep.subr.bf16.mxu0 0
        %2536 = vmatpush1.bf16.msra.mxu0 0
        %2537 = vmatprep.subr.bf16.mxu0 0
        %2538 = vmatpush1.bf16.msra.mxu0 0
        %2539 = vmatprep.subr.bf16.mxu0 0
        %2540 = vmatpush1.bf16.msra.mxu0 0
        %2541 = vmatprep.subr.bf16.mxu0 0
        %2542 = vmatpush1.bf16.msra.mxu0 0
        %2543 = vmatprep.subr.bf16.mxu0 0
        %2544 = vmatpush1.bf16.msra.mxu0 0
        %2545 = vmatprep.subr.bf16.mxu0 0
        %2546 = vmatpush1.bf16.msra.mxu0 0
        %2547 = vmatprep.subr.bf16.mxu0 0
        %2548 = vmatpush1.bf16.msra.mxu0 0
        %2549 = vmatprep.subr.bf16.mxu0 0
        %2550 = vmatpush1.bf16.msra.mxu0 0
        %2551 = vmatprep.subr.bf16.mxu0 0
        %2552 = vmatpush1.bf16.msra.mxu0 0
        %2553 = vmatprep.subr.bf16.mxu0 0
        %2554 = vmatpush1.bf16.msra.mxu0 0
        %2555 = vmatprep.subr.bf16.mxu0 0
        %2556 = vmatpush1.bf16.msra.mxu0 0
        %2557 = vmatprep.mubr.bf16.mxu0 0
        %2558 = vmatmul.mubr.bf16.gmra.mrb[0].mxu0 %v2460
        %v2559 = vpop.f32.mrb[0].mxu0
        %v2560 = vadd.f32 0.0, %v2559
        %v2561 = vpop.f32.mrb[0].mxu0
        %v2562 = vpop.f32.mrb[0].mxu0
        %v2563 = vadd.f32 0.0, %v2562
        %v2564 = vpop.f32.mrb[0].mxu0
        %2565 = vmatprep.mubr.bf16.mxu0 0
        %2566 = vmatmul.mubr.bf16.gmra.mrb[0].mxu0 %v2463
        %v2567 = vpop.f32.mrb[0].mxu0
        %v2568 = vadd.f32 0.0, %v2567
        %v2569 = vpop.f32.mrb[0].mxu0
        %v2570 = vpop.f32.mrb[0].mxu0
        %v2571 = vadd.f32 0.0, %v2570
        %v2572 = vpop.f32.mrb[0].mxu0
        %2573 = vmatprep.mubr.bf16.mxu0 0
        %2574 = vmatmul.mubr.bf16.gmra.mrb[0].mxu0 %v2466
        %v2575 = vpop.f32.mrb[0].mxu0
        %v2576 = vadd.f32 0.0, %v2575
        %v2577 = vpop.f32.mrb[0].mxu0
        %v2578 = vpop.f32.mrb[0].mxu0
        %v2579 = vadd.f32 0.0, %v2578
        %v2580 = vpop.f32.mrb[0].mxu0
        %2581 = vmatprep.mubr.bf16.mxu0 0
        %2582 = vmatmul.mubr.bf16.gmra.mrb[0].mxu0 %v2469
        %v2583 = vpop.f32.mrb[0].mxu0
        %v2584 = vadd.f32 0.0, %v2583
        %v2585 = vpop.f32.mrb[0].mxu0
        %v2586 = vpop.f32.mrb[0].mxu0
        %v2587 = vadd.f32 0.0, %v2586
        %v2588 = vpop.f32.mrb[0].mxu0
        %2589 = vmatprep.mubr.bf16.mxu0 0
        %2590 = vmatmul.mubr.bf16.gmra.mrb[0].mxu0 %v2472
        %v2591 = vpop.f32.mrb[0].mxu0
        %v2592 = vadd.f32 0.0, %v2591
        %v2593 = vpop.f32.mrb[0].mxu0
        %v2594 = vpop.f32.mrb[0].mxu0
        %v2595 = vadd.f32 0.0, %v2594
        %v2596 = vpop.f32.mrb[0].mxu0
        %2597 = vmatprep.mubr.bf16.mxu0 0
        %2598 = vmatmul.mubr.bf16.gmra.mrb[0].mxu0 %v2475
        %v2599 = vpop.f32.mrb[0].mxu0
        %v2600 = vadd.f32 0.0, %v2599
        %v2601 = vpop.f32.mrb[0].mxu0
        %v2602 = vpop.f32.mrb[0].mxu0
        %v2603 = vadd.f32 0.0, %v2602
        %v2604 = vpop.f32.mrb[0].mxu0
        %2605 = vmatprep.mubr.bf16.mxu0 0
        %2606 = vmatmul.mubr.bf16.gmra.mrb[0].mxu0 %v2478
        %v2607 = vpop.f32.mrb[0].mxu0
        %v2608 = vadd.f32 0.0, %v2607
        %v2609 = vpop.f32.mrb[0].mxu0
        %v2610 = vpop.f32.mrb[0].mxu0
        %v2611 = vadd.f32 0.0, %v2610
        %v2612 = vpop.f32.mrb[0].mxu0
        %2613 = vmatprep.mubr.bf16.mxu0 0
        %2614 = vmatmul.mubr.bf16.gmra.mrb[0].mxu0 %v2481
        %v2615 = vpop.f32.mrb[0].mxu0
        %v2616 = vadd.f32 0.0, %v2615
        %v2617 = vpop.f32.mrb[0].mxu0
        %v2618 = vpop.f32.mrb[0].mxu0
        %v2619 = vadd.f32 0.0, %v2618
        %v2620 = vpop.f32.mrb[0].mxu0
        %2621 = vmatprep.mubr.bf16.mxu0 0
        %2622 = vmatmul.mubr.bf16.gmra.mrb[0].mxu0 %v2484
        %v2623 = vpop.f32.mrb[0].mxu0
        %v2624 = vadd.f32 0.0, %v2623
        %v2625 = vpop.f32.mrb[0].mxu0
        %v2626 = vpop.f32.mrb[0].mxu0
        %v2627 = vadd.f32 0.0, %v2626
        %v2628 = vpop.f32.mrb[0].mxu0
        %2629 = vmatprep.mubr.bf16.mxu0 0
        %2630 = vmatmul.mubr.bf16.gmra.mrb[0].mxu0 %v2487
        %v2631 = vpop.f32.mrb[0].mxu0
        %v2632 = vadd.f32 0.0, %v2631
        %v2633 = vpop.f32.mrb[0].mxu0
        %v2634 = vpop.f32.mrb[0].mxu0
        %v2635 = vadd.f32 0.0, %v2634
        %v2636 = vpop.f32.mrb[0].mxu0
        %2637 = vmatprep.mubr.bf16.mxu0 0
        %2638 = vmatmul.mubr.bf16.gmra.mrb[0].mxu0 %v2490
        %v2639 = vpop.f32.mrb[0].mxu0
        %v2640 = vadd.f32 0.0, %v2639
        %v2641 = vpop.f32.mrb[0].mxu0
        %v2642 = vpop.f32.mrb[0].mxu0
        %v2643 = vadd.f32 0.0, %v2642
        %v2644 = vpop.f32.mrb[0].mxu0
        %2645 = vmatprep.mubr.bf16.mxu0 0
        %2646 = vmatmul.mubr.bf16.gmra.mrb[0].mxu0 %v2493
        %v2647 = vpop.f32.mrb[0].mxu0
        %v2648 = vadd.f32 0.0, %v2647
        %v2649 = vpop.f32.mrb[0].mxu0
        %v2650 = vpop.f32.mrb[0].mxu0
        %v2651 = vadd.f32 0.0, %v2650
        %v2652 = vpop.f32.mrb[0].mxu0
        %2653 = vmatprep.mubr.bf16.mxu0 0
        %2654 = vmatmul.mubr.bf16.gmra.mrb[0].mxu0 %v2496
        %v2655 = vpop.f32.mrb[0].mxu0
        %v2656 = vadd.f32 0.0, %v2655
        %v2657 = vpop.f32.mrb[0].mxu0
        %v2658 = vpop.f32.mrb[0].mxu0
        %v2659 = vadd.f32 0.0, %v2658
        %v2660 = vpop.f32.mrb[0].mxu0
        %2661 = vmatprep.mubr.bf16.mxu0 0
        %2662 = vmatmul.mubr.bf16.gmra.mrb[0].mxu0 %v2499
        %v2663 = vpop.f32.mrb[0].mxu0
        %v2664 = vadd.f32 0.0, %v2663
        %v2665 = vpop.f32.mrb[0].mxu0
        %v2666 = vpop.f32.mrb[0].mxu0
        %v2667 = vadd.f32 0.0, %v2666
        %v2668 = vpop.f32.mrb[0].mxu0
        %2669 = vmatprep.mubr.bf16.mxu0 0
        %2670 = vmatmul.mubr.bf16.gmra.mrb[0].mxu0 %v2502
        %v2671 = vpop.f32.mrb[0].mxu0
        %v2672 = vadd.f32 0.0, %v2671
        %v2673 = vpop.f32.mrb[0].mxu0
        %v2674 = vpop.f32.mrb[0].mxu0
        %v2675 = vadd.f32 0.0, %v2674
        %v2676 = vpop.f32.mrb[0].mxu0
        %2677 = vmatprep.mubr.bf16.mxu0 0
        %2678 = vmatmul.mubr.bf16.gmra.mrb[0].mxu0 %v2505
        %v2679 = vpop.f32.mrb[0].mxu0
        %v2680 = vadd.f32 0.0, %v2679
        %v2681 = vpop.f32.mrb[0].mxu0
        %v2682 = vpop.f32.mrb[0].mxu0
        %v2683 = vadd.f32 0.0, %v2682
        %v2684 = vpop.f32.mrb[0].mxu0
        %2685 = vmatprep.mubr.bf16.mxu0 0
        %2686 = vmatmul.mubr.bf16.gmra.mrb[0].mxu0 %v2508
        %v2687 = vpop.f32.mrb[0].mxu0
        %v2688 = vadd.f32 0.0, %v2687
        %v2689 = vpop.f32.mrb[0].mxu0
        %v2690 = vpop.f32.mrb[0].mxu0
        %v2691 = vadd.f32 0.0, %v2690
        %v2692 = vpop.f32.mrb[0].mxu0
        %2693 = vmatprep.mubr.bf16.mxu0 0
        %2694 = vmatmul.mubr.bf16.gmra.mrb[0].mxu0 %v2511
        %v2695 = vpop.f32.mrb[0].mxu0
        %v2696 = vadd.f32 0.0, %v2695
        %v2697 = vpop.f32.mrb[0].mxu0
        %v2698 = vpop.f32.mrb[0].mxu0
        %v2699 = vadd.f32 0.0, %v2698
        %v2700 = vpop.f32.mrb[0].mxu0
        %2701 = vmatprep.mubr.bf16.mxu0 0
        %2702 = vmatmul.mubr.bf16.gmra.mrb[0].mxu0 %v2514
        %v2703 = vpop.f32.mrb[0].mxu0
        %v2704 = vadd.f32 0.0, %v2703
        %v2705 = vpop.f32.mrb[0].mxu0
        %v2706 = vpop.f32.mrb[0].mxu0
        %v2707 = vadd.f32 0.0, %v2706
        %v2708 = vpop.f32.mrb[0].mxu0
        %2709 = vmatprep.mubr.bf16.mxu0 0
        %2710 = vmatmul.mubr.bf16.gmra.mrb[0].mxu0 %v2517
        %v2711 = vpop.f32.mrb[0].mxu0
        %v2712 = vadd.f32 0.0, %v2711
        %v2713 = vpop.f32.mrb[0].mxu0
        %v2714 = vpop.f32.mrb[0].mxu0
        %v2715 = vadd.f32 0.0, %v2714
        %v2716 = vpop.f32.mrb[0].mxu0
        %2717 = vmatprep.mubr.bf16.mxu0 0
        %2718 = vmatmul.mubr.bf16.gmra.mrb[0].mxu0 %v2520
        %v2719 = vpop.f32.mrb[0].mxu0
        %v2720 = vadd.f32 0.0, %v2719
        %v2721 = vpop.f32.mrb[0].mxu0
        %v2722 = vpop.f32.mrb[0].mxu0
        %v2723 = vpop.f32.mrb[0].mxu0
        %2724 = vdwg.mxu0
        %v2725 = vadd.f32 %v2370, %v2560
        %v2726 = vadd.f32 %v2371, %v2563
        %v2727 = vadd.f32 %v2372, %v2568
        %v2728 = vadd.f32 %v2373, %v2571
        %v2729 = vadd.f32 %v2374, %v2576
        %v2730 = vadd.f32 %v2375, %v2579
        %v2731 = vadd.f32 %v2376, %v2584
        %v2732 = vadd.f32 %v2377, %v2587
        %v2733 = vadd.f32 %v2378, %v2592
        %v2734 = vadd.f32 %v2379, %v2595
        %v2735 = vadd.f32 %v2380, %v2600
        %v2736 = vadd.f32 %v2381, %v2603
        %v2737 = vadd.f32 %v2382, %v2608
        %v2738 = vadd.f32 %v2383, %v2611
        %v2739 = vadd.f32 %v2384, %v2616
        %v2740 = vadd.f32 %v2385, %v2619
        %v2741 = vadd.f32 %v2386, %v2624
        %v2742 = vadd.f32 %v2387, %v2627
        %v2743 = vadd.f32 %v2388, %v2632
        %v2744 = vadd.f32 %v2389, %v2635
        %v2745 = vadd.f32 %v2390, %v2640
        %v2746 = vadd.f32 %v2391, %v2643
        %v2747 = vadd.f32 %v2392, %v2648
        %v2748 = vadd.f32 %v2393, %v2651
        %v2749 = vadd.f32 %v2394, %v2656
        %v2750 = vadd.f32 %v2395, %v2659
        %v2751 = vadd.f32 %v2396, %v2664
        %v2752 = vadd.f32 %v2397, %v2667
        %v2753 = vadd.f32 %v2398, %v2672
        %v2754 = vadd.f32 %v2399, %v2675
        %v2755 = vadd.f32 %v2400, %v2680
        %v2756 = vadd.f32 %v2401, %v2683
        %v2757 = vadd.f32 %v2402, %v2688
        %v2758 = vadd.f32 %v2403, %v2691
        %v2759 = vadd.f32 %v2404, %v2696
        %v2760 = vadd.f32 %v2405, %v2699
        %v2761 = vadd.f32 %v2406, %v2704
        %v2762 = vadd.f32 %v2407, %v2707
        %v2763 = vadd.f32 %v2408, %v2712
        %v2764 = vadd.f32 %v2409, %v2715
        %v2765 = vadd.f32 %v2410, %v2720
        %v2766 = vld [vmem:[%s222 + $0x10] sm:$0xc]
        %v2767 = vld [vmem:[%s222 + $0x14] sm:$0xf]
        %v2768 = vld [vmem:[%s222 + $0x18] sm:$0xf]
        %v2769 = vld [vmem:[%s222 + $0x1c] sm:$0xf]
        %v2770 = vld [vmem:[%s222 + $0x20] sm:$0xf]
        %v2771 = vld [vmem:[%s222 + $0x24] sm:$0xf]
        %v2772 = vld [vmem:[%s222 + $0x28] sm:$0xf]
        %v2773 = vld [vmem:[%s222 + $0x2c] sm:$0xf]
        %v2774 = vld [vmem:[%s222 + $0x30] sm:$0xf]
        %v2775 = vld [vmem:[%s222 + $0x34] sm:$0xf]
        %v2776 = vld [vmem:[%s222 + $0x38] sm:$0xf]
        %v2777 = vld [vmem:[%s222 + $0x3c] sm:$0xf]
        %v2778 = vld [vmem:[%s222 + $0x40] sm:$0xf]
        %v2779 = vld [vmem:[%s222 + $0x44] sm:$0xf]
        %v2780 = vld [vmem:[%s222 + $0x48] sm:$0xf]
        %v2781 = vld [vmem:[%s222 + $0x4c] sm:$0xf]
        %v2782 = vld [vmem:[%s222 + $0x50] sm:$0xf]
        %v2783 = vld [vmem:[%s222 + $0x54] sm:$0xf]
        %v2784 = vld [vmem:[%s222 + $0x58] sm:$0xf]
        %v2785 = vld [vmem:[%s222 + $0x5c] sm:$0xf]
        %v2786 = vld [vmem:[%s222 + $0x60] sm:$0xf]
        %v2787 = vld [vmem:[%s222 + $0x64] sm:$0xf]
        %v2788 = vld [vmem:[%s222 + $0x68] sm:$0xf]
        %v2789 = vld [vmem:[%s222 + $0x6c] sm:$0xf]
        %v2790 = vld [vmem:[%s222 + $0x70] sm:$0xf]
        %v2791 = vld [vmem:[%s222 + $0x74] sm:$0xf]
        %v2792 = vld [vmem:[%s222 + $0x78] sm:$0xf]
        %v2793 = vld [vmem:[%s222 + $0x7c] sm:$0xf]
        %v2794 = vld [vmem:[%s222 + $0x80] sm:$0xf]
        %v2795 = vld [vmem:[%s222 + $0x84] sm:$0xf]
        %v2796 = vld [vmem:[%s222 + $0x88] sm:$0xf]
        %v2797 = vld [vmem:[%s222 + $0x8c] sm:$0xf]
        %v2798 = vld [vmem:[%s222 + $0x90] sm:$0xf]
        %v2799 = vld [vmem:[%s222 + $0x94] sm:$0xf]
        %v2800 = vld [vmem:[%s222 + $0x98] sm:$0xf]
        %v2801 = vld [vmem:[%s222 + $0x9c] sm:$0xf]
        %v2802 = vld [vmem:[%s222 + $0xa0] sm:$0xf]
        %v2803 = vld [vmem:[%s222 + $0xa4] sm:$0xf]
        %v2804 = vld [vmem:[%s222 + $0xa8] sm:$0xf]
        %v2805 = vld [vmem:[%s222 + $0xac] sm:$0xf]
        %v2806 = vld [vmem:[%s222 + $0xb0] sm:$0xf]
        %v2807 = vld [vmem:[%s222 + $0xb4] sm:$0x3]
        %s2808 = scalar_lea.vmem %s1, 12
        %v2809 = vld [vmem:[%s2808] sm:$0x3]
        %v2852 = vunpack.c.l.b16 %v2766
        %v2853 = vunpack.c.l.b16 %v2767
        %v2854 = vunpack.c.l.b16 %v2768
        %v2855 = vunpack.c.l.b16 %v2769
        %v2856 = vunpack.c.l.b16 %v2770
        %v2857 = vunpack.c.l.b16 %v2771
        %v2858 = vunpack.c.l.b16 %v2772
        %v2859 = vunpack.c.l.b16 %v2773
        %v2860 = vunpack.c.l.b16 %v2774
        %v2861 = vunpack.c.l.b16 %v2775
        %v2862 = vunpack.c.l.b16 %v2776
        %v2863 = vunpack.c.l.b16 %v2777
        %v2864 = vunpack.c.l.b16 %v2778
        %v2865 = vunpack.c.l.b16 %v2779
        %v2866 = vunpack.c.l.b16 %v2780
        %v2867 = vunpack.c.l.b16 %v2781
        %v2868 = vunpack.c.l.b16 %v2782
        %v2869 = vunpack.c.l.b16 %v2783
        %v2870 = vunpack.c.l.b16 %v2784
        %v2871 = vunpack.c.l.b16 %v2785
        %v2872 = vunpack.c.l.b16 %v2786
        %v2873 = vunpack.c.l.b16 %v2787
        %v2874 = vunpack.c.l.b16 %v2788
        %v2875 = vunpack.c.l.b16 %v2789
        %v2876 = vunpack.c.l.b16 %v2790
        %v2877 = vunpack.c.l.b16 %v2791
        %v2878 = vunpack.c.l.b16 %v2792
        %v2879 = vunpack.c.l.b16 %v2793
        %v2880 = vunpack.c.l.b16 %v2794
        %v2881 = vunpack.c.l.b16 %v2795
        %v2882 = vunpack.c.l.b16 %v2796
        %v2883 = vunpack.c.l.b16 %v2797
        %v2884 = vunpack.c.l.b16 %v2798
        %v2885 = vunpack.c.l.b16 %v2799
        %v2886 = vunpack.c.l.b16 %v2800
        %v2887 = vunpack.c.l.b16 %v2801
        %v2888 = vunpack.c.l.b16 %v2802
        %v2889 = vunpack.c.l.b16 %v2803
        %v2890 = vunpack.c.l.b16 %v2804
        %v2891 = vunpack.c.l.b16 %v2805
        %v2892 = vunpack.c.l.b16 %v2806
        %v2893 = vunpack.c.l.b16 %v2807
        %v2894 = vpack.c.b16 %v2853, %v2852
        %v2895 = vpack.c.b16 %v2855, %v2854
        %v2896 = vpack.c.b16 %v2857, %v2856
        %v2897 = vpack.c.b16 %v2859, %v2858
        %v2898 = vpack.c.b16 %v2861, %v2860
        %v2899 = vpack.c.b16 %v2863, %v2862
        %v2900 = vpack.c.b16 %v2865, %v2864
        %v2901 = vpack.c.b16 %v2867, %v2866
        %v2902 = vpack.c.b16 %v2869, %v2868
        %v2903 = vpack.c.b16 %v2871, %v2870
        %v2904 = vpack.c.b16 %v2873, %v2872
        %v2905 = vpack.c.b16 %v2875, %v2874
        %v2906 = vpack.c.b16 %v2877, %v2876
        %v2907 = vpack.c.b16 %v2879, %v2878
        %v2908 = vpack.c.b16 %v2881, %v2880
        %v2909 = vpack.c.b16 %v2883, %v2882
        %v2910 = vpack.c.b16 %v2885, %v2884
        %v2911 = vpack.c.b16 %v2887, %v2886
        %v2912 = vpack.c.b16 %v2889, %v2888
        %v2913 = vpack.c.b16 %v2891, %v2890
        %v2914 = vpack.c.b16 %v2893, %v2892
        %v2915 = vrot.slane %v2894, 2
        %v2916 = vrot.slane %v2895, 2
        %v2917 = vsel %vm2417, %v2915, %v2916
        %v2918 = vrot.slane %v2896, 2
        %v2919 = vsel %vm2417, %v2916, %v2918
        %v2920 = vrot.slane %v2897, 2
        %v2921 = vsel %vm2417, %v2918, %v2920
        %v2922 = vrot.slane %v2898, 2
        %v2923 = vsel %vm2417, %v2920, %v2922
        %v2924 = vrot.slane %v2899, 2
        %v2925 = vsel %vm2417, %v2922, %v2924
        %v2926 = vrot.slane %v2900, 2
        %v2927 = vsel %vm2417, %v2924, %v2926
        %v2928 = vrot.slane %v2901, 2
        %v2929 = vsel %vm2417, %v2926, %v2928
        %v2930 = vrot.slane %v2902, 2
        %v2931 = vsel %vm2417, %v2928, %v2930
        %v2932 = vrot.slane %v2903, 2
        %v2933 = vsel %vm2417, %v2930, %v2932
        %v2934 = vrot.slane %v2904, 2
        %v2935 = vsel %vm2417, %v2932, %v2934
        %v2936 = vrot.slane %v2905, 2
        %v2937 = vsel %vm2417, %v2934, %v2936
        %v2938 = vrot.slane %v2906, 2
        %v2939 = vsel %vm2417, %v2936, %v2938
        %v2940 = vrot.slane %v2907, 2
        %v2941 = vsel %vm2417, %v2938, %v2940
        %v2942 = vrot.slane %v2908, 2
        %v2943 = vsel %vm2417, %v2940, %v2942
        %v2944 = vrot.slane %v2909, 2
        %v2945 = vsel %vm2417, %v2942, %v2944
        %v2946 = vrot.slane %v2910, 2
        %v2947 = vsel %vm2417, %v2944, %v2946
        %v2948 = vrot.slane %v2911, 2
        %v2949 = vsel %vm2417, %v2946, %v2948
        %v2950 = vrot.slane %v2912, 2
        %v2951 = vsel %vm2417, %v2948, %v2950
        %v2952 = vrot.slane %v2913, 2
        %v2953 = vsel %vm2417, %v2950, %v2952
        %v2954 = vrot.slane %v2914, 2
        %v2955 = vsel %vm2417, %v2952, %v2954
        %v2957 = vsel %vm542, %v2917, 0
        %v2960 = vsel %vm542, %v2919, 0
        %v2963 = vsel %vm542, %v2921, 0
        %v2966 = vsel %vm542, %v2923, 0
        %v2969 = vsel %vm542, %v2925, 0
        %v2972 = vsel %vm542, %v2927, 0
        %v2975 = vsel %vm542, %v2929, 0
        %v2978 = vsel %vm542, %v2931, 0
        %v2981 = vsel %vm542, %v2933, 0
        %v2984 = vsel %vm542, %v2935, 0
        %v2987 = vsel %vm542, %v2937, 0
        %v2990 = vsel %vm542, %v2939, 0
        %v2993 = vsel %vm542, %v2941, 0
        %v2996 = vsel %vm542, %v2943, 0
        %v2999 = vsel %vm542, %v2945, 0
        %v3002 = vsel %vm542, %v2947, 0
        %v3005 = vsel %vm542, %v2949, 0
        %v3008 = vsel %vm542, %v2951, 0
        %v3011 = vsel %vm542, %v2953, 0
        %v3014 = vsel %vm542, %v2955, 0
        %v3017 = vsel %vm542, %v2954, 0
        %v3020 = vsel %vm606, %v2809, 0
        %3022 = vmatprep.subr.bf16.mxu0 0
        %3023 = vmatpush1.bf16.msra.mxu0 %v3020
        %3024 = vmatprep.subr.bf16.mxu0 0
        %3025 = vmatpush1.bf16.msra.mxu0 0
        %3026 = vmatprep.subr.bf16.mxu0 0
        %3027 = vmatpush1.bf16.msra.mxu0 0
        %3028 = vmatprep.subr.bf16.mxu0 0
        %3029 = vmatpush1.bf16.msra.mxu0 0
        %3030 = vmatprep.subr.bf16.mxu0 0
        %3031 = vmatpush1.bf16.msra.mxu0 0
        %3032 = vmatprep.subr.bf16.mxu0 0
        %3033 = vmatpush1.bf16.msra.mxu0 0
        %3034 = vmatprep.subr.bf16.mxu0 0
        %3035 = vmatpush1.bf16.msra.mxu0 0
        %3036 = vmatprep.subr.bf16.mxu0 0
        %3037 = vmatpush1.bf16.msra.mxu0 0
        %3038 = vmatprep.subr.bf16.mxu0 0
        %3039 = vmatpush1.bf16.msra.mxu0 0
        %3040 = vmatprep.subr.bf16.mxu0 0
        %3041 = vmatpush1.bf16.msra.mxu0 0
        %3042 = vmatprep.subr.bf16.mxu0 0
        %3043 = vmatpush1.bf16.msra.mxu0 0
        %3044 = vmatprep.subr.bf16.mxu0 0
        %3045 = vmatpush1.bf16.msra.mxu0 0
        %3046 = vmatprep.subr.bf16.mxu0 0
        %3047 = vmatpush1.bf16.msra.mxu0 0
        %3048 = vmatprep.subr.bf16.mxu0 0
        %3049 = vmatpush1.bf16.msra.mxu0 0
        %3050 = vmatprep.subr.bf16.mxu0 0
        %3051 = vmatpush1.bf16.msra.mxu0 0
        %3052 = vmatprep.subr.bf16.mxu0 0
        %3053 = vmatpush1.bf16.msra.mxu0 0
        %3054 = vmatprep.mubr.bf16.mxu0 0
        %3055 = vmatmul.mubr.bf16.gmra.mrb[0].mxu0 %v2957
        %v3056 = vpop.f32.mrb[0].mxu0
        %v3057 = vadd.f32 0.0, %v3056
        %v3058 = vpop.f32.mrb[0].mxu0
        %v3059 = vpop.f32.mrb[0].mxu0
        %v3060 = vadd.f32 0.0, %v3059
        %v3061 = vpop.f32.mrb[0].mxu0
        %3062 = vmatprep.mubr.bf16.mxu0 0
        %3063 = vmatmul.mubr.bf16.gmra.mrb[0].mxu0 %v2960
        %v3064 = vpop.f32.mrb[0].mxu0
        %v3065 = vadd.f32 0.0, %v3064
        %v3066 = vpop.f32.mrb[0].mxu0
        %v3067 = vpop.f32.mrb[0].mxu0
        %v3068 = vadd.f32 0.0, %v3067
        %v3069 = vpop.f32.mrb[0].mxu0
        %3070 = vmatprep.mubr.bf16.mxu0 0
        %3071 = vmatmul.mubr.bf16.gmra.mrb[0].mxu0 %v2963
        %v3072 = vpop.f32.mrb[0].mxu0
        %v3073 = vadd.f32 0.0, %v3072
        %v3074 = vpop.f32.mrb[0].mxu0
        %v3075 = vpop.f32.mrb[0].mxu0
        %v3076 = vadd.f32 0.0, %v3075
        %v3077 = vpop.f32.mrb[0].mxu0
        %3078 = vmatprep.mubr.bf16.mxu0 0
        %3079 = vmatmul.mubr.bf16.gmra.mrb[0].mxu0 %v2966
        %v3080 = vpop.f32.mrb[0].mxu0
        %v3081 = vadd.f32 0.0, %v3080
        %v3082 = vpop.f32.mrb[0].mxu0
        %v3083 = vpop.f32.mrb[0].mxu0
        %v3084 = vadd.f32 0.0, %v3083
        %v3085 = vpop.f32.mrb[0].mxu0
        %3086 = vmatprep.mubr.bf16.mxu0 0
        %3087 = vmatmul.mubr.bf16.gmra.mrb[0].mxu0 %v2969
        %v3088 = vpop.f32.mrb[0].mxu0
        %v3089 = vadd.f32 0.0, %v3088
        %v3090 = vpop.f32.mrb[0].mxu0
        %v3091 = vpop.f32.mrb[0].mxu0
        %v3092 = vadd.f32 0.0, %v3091
        %v3093 = vpop.f32.mrb[0].mxu0
        %3094 = vmatprep.mubr.bf16.mxu0 0
        %3095 = vmatmul.mubr.bf16.gmra.mrb[0].mxu0 %v2972
        %v3096 = vpop.f32.mrb[0].mxu0
        %v3097 = vadd.f32 0.0, %v3096
        %v3098 = vpop.f32.mrb[0].mxu0
        %v3099 = vpop.f32.mrb[0].mxu0
        %v3100 = vadd.f32 0.0, %v3099
        %v3101 = vpop.f32.mrb[0].mxu0
        %3102 = vmatprep.mubr.bf16.mxu0 0
        %3103 = vmatmul.mubr.bf16.gmra.mrb[0].mxu0 %v2975
        %v3104 = vpop.f32.mrb[0].mxu0
        %v3105 = vadd.f32 0.0, %v3104
        %v3106 = vpop.f32.mrb[0].mxu0
        %v3107 = vpop.f32.mrb[0].mxu0
        %v3108 = vadd.f32 0.0, %v3107
        %v3109 = vpop.f32.mrb[0].mxu0
        %3110 = vmatprep.mubr.bf16.mxu0 0
        %3111 = vmatmul.mubr.bf16.gmra.mrb[0].mxu0 %v2978
        %v3112 = vpop.f32.mrb[0].mxu0
        %v3113 = vadd.f32 0.0, %v3112
        %v3114 = vpop.f32.mrb[0].mxu0
        %v3115 = vpop.f32.mrb[0].mxu0
        %v3116 = vadd.f32 0.0, %v3115
        %v3117 = vpop.f32.mrb[0].mxu0
        %3118 = vmatprep.mubr.bf16.mxu0 0
        %3119 = vmatmul.mubr.bf16.gmra.mrb[0].mxu0 %v2981
        %v3120 = vpop.f32.mrb[0].mxu0
        %v3121 = vadd.f32 0.0, %v3120
        %v3122 = vpop.f32.mrb[0].mxu0
        %v3123 = vpop.f32.mrb[0].mxu0
        %v3124 = vadd.f32 0.0, %v3123
        %v3125 = vpop.f32.mrb[0].mxu0
        %3126 = vmatprep.mubr.bf16.mxu0 0
        %3127 = vmatmul.mubr.bf16.gmra.mrb[0].mxu0 %v2984
        %v3128 = vpop.f32.mrb[0].mxu0
        %v3129 = vadd.f32 0.0, %v3128
        %v3130 = vpop.f32.mrb[0].mxu0
        %v3131 = vpop.f32.mrb[0].mxu0
        %v3132 = vadd.f32 0.0, %v3131
        %v3133 = vpop.f32.mrb[0].mxu0
        %3134 = vmatprep.mubr.bf16.mxu0 0
        %3135 = vmatmul.mubr.bf16.gmra.mrb[0].mxu0 %v2987
        %v3136 = vpop.f32.mrb[0].mxu0
        %v3137 = vadd.f32 0.0, %v3136
        %v3138 = vpop.f32.mrb[0].mxu0
        %v3139 = vpop.f32.mrb[0].mxu0
        %v3140 = vadd.f32 0.0, %v3139
        %v3141 = vpop.f32.mrb[0].mxu0
        %3142 = vmatprep.mubr.bf16.mxu0 0
        %3143 = vmatmul.mubr.bf16.gmra.mrb[0].mxu0 %v2990
        %v3144 = vpop.f32.mrb[0].mxu0
        %v3145 = vadd.f32 0.0, %v3144
        %v3146 = vpop.f32.mrb[0].mxu0
        %v3147 = vpop.f32.mrb[0].mxu0
        %v3148 = vadd.f32 0.0, %v3147
        %v3149 = vpop.f32.mrb[0].mxu0
        %3150 = vmatprep.mubr.bf16.mxu0 0
        %3151 = vmatmul.mubr.bf16.gmra.mrb[0].mxu0 %v2993
        %v3152 = vpop.f32.mrb[0].mxu0
        %v3153 = vadd.f32 0.0, %v3152
        %v3154 = vpop.f32.mrb[0].mxu0
        %v3155 = vpop.f32.mrb[0].mxu0
        %v3156 = vadd.f32 0.0, %v3155
        %v3157 = vpop.f32.mrb[0].mxu0
        %3158 = vmatprep.mubr.bf16.mxu0 0
        %3159 = vmatmul.mubr.bf16.gmra.mrb[0].mxu0 %v2996
        %v3160 = vpop.f32.mrb[0].mxu0
        %v3161 = vadd.f32 0.0, %v3160
        %v3162 = vpop.f32.mrb[0].mxu0
        %v3163 = vpop.f32.mrb[0].mxu0
        %v3164 = vadd.f32 0.0, %v3163
        %v3165 = vpop.f32.mrb[0].mxu0
        %3166 = vmatprep.mubr.bf16.mxu0 0
        %3167 = vmatmul.mubr.bf16.gmra.mrb[0].mxu0 %v2999
        %v3168 = vpop.f32.mrb[0].mxu0
        %v3169 = vadd.f32 0.0, %v3168
        %v3170 = vpop.f32.mrb[0].mxu0
        %v3171 = vpop.f32.mrb[0].mxu0
        %v3172 = vadd.f32 0.0, %v3171
        %v3173 = vpop.f32.mrb[0].mxu0
        %3174 = vmatprep.mubr.bf16.mxu0 0
        %3175 = vmatmul.mubr.bf16.gmra.mrb[0].mxu0 %v3002
        %v3176 = vpop.f32.mrb[0].mxu0
        %v3177 = vadd.f32 0.0, %v3176
        %v3178 = vpop.f32.mrb[0].mxu0
        %v3179 = vpop.f32.mrb[0].mxu0
        %v3180 = vadd.f32 0.0, %v3179
        %v3181 = vpop.f32.mrb[0].mxu0
        %3182 = vmatprep.mubr.bf16.mxu0 0
        %3183 = vmatmul.mubr.bf16.gmra.mrb[0].mxu0 %v3005
        %v3184 = vpop.f32.mrb[0].mxu0
        %v3185 = vadd.f32 0.0, %v3184
        %v3186 = vpop.f32.mrb[0].mxu0
        %v3187 = vpop.f32.mrb[0].mxu0
        %v3188 = vadd.f32 0.0, %v3187
        %v3189 = vpop.f32.mrb[0].mxu0
        %3190 = vmatprep.mubr.bf16.mxu0 0
        %3191 = vmatmul.mubr.bf16.gmra.mrb[0].mxu0 %v3008
        %v3192 = vpop.f32.mrb[0].mxu0
        %v3193 = vadd.f32 0.0, %v3192
        %v3194 = vpop.f32.mrb[0].mxu0
        %v3195 = vpop.f32.mrb[0].mxu0
        %v3196 = vadd.f32 0.0, %v3195
        %v3197 = vpop.f32.mrb[0].mxu0
        %3198 = vmatprep.mubr.bf16.mxu0 0
        %3199 = vmatmul.mubr.bf16.gmra.mrb[0].mxu0 %v3011
        %v3200 = vpop.f32.mrb[0].mxu0
        %v3201 = vadd.f32 0.0, %v3200
        %v3202 = vpop.f32.mrb[0].mxu0
        %v3203 = vpop.f32.mrb[0].mxu0
        %v3204 = vadd.f32 0.0, %v3203
        %v3205 = vpop.f32.mrb[0].mxu0
        %3206 = vmatprep.mubr.bf16.mxu0 0
        %3207 = vmatmul.mubr.bf16.gmra.mrb[0].mxu0 %v3014
        %v3208 = vpop.f32.mrb[0].mxu0
        %v3209 = vadd.f32 0.0, %v3208
        %v3210 = vpop.f32.mrb[0].mxu0
        %v3211 = vpop.f32.mrb[0].mxu0
        %v3212 = vadd.f32 0.0, %v3211
        %v3213 = vpop.f32.mrb[0].mxu0
        %3214 = vmatprep.mubr.bf16.mxu0 0
        %3215 = vmatmul.mubr.bf16.gmra.mrb[0].mxu0 %v3017
        %v3216 = vpop.f32.mrb[0].mxu0
        %v3217 = vadd.f32 0.0, %v3216
        %v3218 = vpop.f32.mrb[0].mxu0
        %v3219 = vpop.f32.mrb[0].mxu0
        %v3220 = vpop.f32.mrb[0].mxu0
        %3221 = vdwg.mxu0
        %v3222 = vadd.f32 %v2725, %v3057
        %v3223 = vadd.f32 %v2726, %v3060
        %v3224 = vadd.f32 %v2727, %v3065
        %v3225 = vadd.f32 %v2728, %v3068
        %v3226 = vadd.f32 %v2729, %v3073
        %v3227 = vadd.f32 %v2730, %v3076
        %v3228 = vadd.f32 %v2731, %v3081
        %v3229 = vadd.f32 %v2732, %v3084
        %v3230 = vadd.f32 %v2733, %v3089
        %v3231 = vadd.f32 %v2734, %v3092
        %v3232 = vadd.f32 %v2735, %v3097
        %v3233 = vadd.f32 %v2736, %v3100
        %v3234 = vadd.f32 %v2737, %v3105
        %v3235 = vadd.f32 %v2738, %v3108
        %v3236 = vadd.f32 %v2739, %v3113
        %v3237 = vadd.f32 %v2740, %v3116
        %v3238 = vadd.f32 %v2741, %v3121
        %v3239 = vadd.f32 %v2742, %v3124
        %v3240 = vadd.f32 %v2743, %v3129
        %v3241 = vadd.f32 %v2744, %v3132
        %v3242 = vadd.f32 %v2745, %v3137
        %v3243 = vadd.f32 %v2746, %v3140
        %v3244 = vadd.f32 %v2747, %v3145
        %v3245 = vadd.f32 %v2748, %v3148
        %v3246 = vadd.f32 %v2749, %v3153
        %v3247 = vadd.f32 %v2750, %v3156
        %v3248 = vadd.f32 %v2751, %v3161
        %v3249 = vadd.f32 %v2752, %v3164
        %v3250 = vadd.f32 %v2753, %v3169
        %v3251 = vadd.f32 %v2754, %v3172
        %v3252 = vadd.f32 %v2755, %v3177
        %v3253 = vadd.f32 %v2756, %v3180
        %v3254 = vadd.f32 %v2757, %v3185
        %v3255 = vadd.f32 %v2758, %v3188
        %v3256 = vadd.f32 %v2759, %v3193
        %v3257 = vadd.f32 %v2760, %v3196
        %v3258 = vadd.f32 %v2761, %v3201
        %v3259 = vadd.f32 %v2762, %v3204
        %v3260 = vadd.f32 %v2763, %v3209
        %v3261 = vadd.f32 %v2764, %v3212
        %v3262 = vadd.f32 %v2765, %v3217
        %v3263 = vld [vmem:[%s222 + $0xb4] sm:$0x7]
        %s3264 = scalar_lea.vmem %s1, 14
        %v3265 = vld [vmem:[%s3264] sm:$0x3]
        %v3267 = vunpack.c.l.b16 %v3263
        %v3268 = vpack.c.b16 %v3267, %v2892
        %vm3269 = vsmask.f32 5376
        %v3271 = vshrl.u32 %v2894, 16
        %v3273 = vrot.slane %v3271, 2
        %v3274 = vshll.u32 %v2894, 16
        %v3276 = vrot.slane %v3274, 3
        %v3277 = vor.u32 %v3273, %v3276
        %v3279 = vshrl.u32 %v2895, 16
        %v3281 = vrot.slane %v3279, 2
        %v3282 = vshll.u32 %v2895, 16
        %v3284 = vrot.slane %v3282, 3
        %v3285 = vor.u32 %v3281, %v3284
        %v3286 = vsel %vm3269, %v3277, %v3285
        %v3288 = vshrl.u32 %v2896, 16
        %v3290 = vrot.slane %v3288, 2
        %v3291 = vshll.u32 %v2896, 16
        %v3293 = vrot.slane %v3291, 3
        %v3294 = vor.u32 %v3290, %v3293
        %v3295 = vsel %vm3269, %v3285, %v3294
        %v3297 = vshrl.u32 %v2897, 16
        %v3299 = vrot.slane %v3297, 2
        %v3300 = vshll.u32 %v2897, 16
        %v3302 = vrot.slane %v3300, 3
        %v3303 = vor.u32 %v3299, %v3302
        %v3304 = vsel %vm3269, %v3294, %v3303
        %v3306 = vshrl.u32 %v2898, 16
        %v3308 = vrot.slane %v3306, 2
        %v3309 = vshll.u32 %v2898, 16
        %v3311 = vrot.slane %v3309, 3
        %v3312 = vor.u32 %v3308, %v3311
        %v3313 = vsel %vm3269, %v3303, %v3312
        %v3315 = vshrl.u32 %v2899, 16
        %v3317 = vrot.slane %v3315, 2
        %v3318 = vshll.u32 %v2899, 16
        %v3320 = vrot.slane %v3318, 3
        %v3321 = vor.u32 %v3317, %v3320
        %v3322 = vsel %vm3269, %v3312, %v3321
        %v3324 = vshrl.u32 %v2900, 16
        %v3326 = vrot.slane %v3324, 2
        %v3327 = vshll.u32 %v2900, 16
        %v3329 = vrot.slane %v3327, 3
        %v3330 = vor.u32 %v3326, %v3329
        %v3331 = vsel %vm3269, %v3321, %v3330
        %v3333 = vshrl.u32 %v2901, 16
        %v3335 = vrot.slane %v3333, 2
        %v3336 = vshll.u32 %v2901, 16
        %v3338 = vrot.slane %v3336, 3
        %v3339 = vor.u32 %v3335, %v3338
        %v3340 = vsel %vm3269, %v3330, %v3339
        %v3342 = vshrl.u32 %v2902, 16
        %v3344 = vrot.slane %v3342, 2
        %v3345 = vshll.u32 %v2902, 16
        %v3347 = vrot.slane %v3345, 3
        %v3348 = vor.u32 %v3344, %v3347
        %v3349 = vsel %vm3269, %v3339, %v3348
        %v3351 = vshrl.u32 %v2903, 16
        %v3353 = vrot.slane %v3351, 2
        %v3354 = vshll.u32 %v2903, 16
        %v3356 = vrot.slane %v3354, 3
        %v3357 = vor.u32 %v3353, %v3356
        %v3358 = vsel %vm3269, %v3348, %v3357
        %v3360 = vshrl.u32 %v2904, 16
        %v3362 = vrot.slane %v3360, 2
        %v3363 = vshll.u32 %v2904, 16
        %v3365 = vrot.slane %v3363, 3
        %v3366 = vor.u32 %v3362, %v3365
        %v3367 = vsel %vm3269, %v3357, %v3366
        %v3369 = vshrl.u32 %v2905, 16
        %v3371 = vrot.slane %v3369, 2
        %v3372 = vshll.u32 %v2905, 16
        %v3374 = vrot.slane %v3372, 3
        %v3375 = vor.u32 %v3371, %v3374
        %v3376 = vsel %vm3269, %v3366, %v3375
        %v3378 = vshrl.u32 %v2906, 16
        %v3380 = vrot.slane %v3378, 2
        %v3381 = vshll.u32 %v2906, 16
        %v3383 = vrot.slane %v3381, 3
        %v3384 = vor.u32 %v3380, %v3383
        %v3385 = vsel %vm3269, %v3375, %v3384
        %v3387 = vshrl.u32 %v2907, 16
        %v3389 = vrot.slane %v3387, 2
        %v3390 = vshll.u32 %v2907, 16
        %v3392 = vrot.slane %v3390, 3
        %v3393 = vor.u32 %v3389, %v3392
        %v3394 = vsel %vm3269, %v3384, %v3393
        %v3396 = vshrl.u32 %v2908, 16
        %v3398 = vrot.slane %v3396, 2
        %v3399 = vshll.u32 %v2908, 16
        %v3401 = vrot.slane %v3399, 3
        %v3402 = vor.u32 %v3398, %v3401
        %v3403 = vsel %vm3269, %v3393, %v3402
        %v3405 = vshrl.u32 %v2909, 16
        %v3407 = vrot.slane %v3405, 2
        %v3408 = vshll.u32 %v2909, 16
        %v3410 = vrot.slane %v3408, 3
        %v3411 = vor.u32 %v3407, %v3410
        %v3412 = vsel %vm3269, %v3402, %v3411
        %v3414 = vshrl.u32 %v2910, 16
        %v3416 = vrot.slane %v3414, 2
        %v3417 = vshll.u32 %v2910, 16
        %v3419 = vrot.slane %v3417, 3
        %v3420 = vor.u32 %v3416, %v3419
        %v3421 = vsel %vm3269, %v3411, %v3420
        %v3423 = vshrl.u32 %v2911, 16
        %v3425 = vrot.slane %v3423, 2
        %v3426 = vshll.u32 %v2911, 16
        %v3428 = vrot.slane %v3426, 3
        %v3429 = vor.u32 %v3425, %v3428
        %v3430 = vsel %vm3269, %v3420, %v3429
        %v3432 = vshrl.u32 %v2912, 16
        %v3434 = vrot.slane %v3432, 2
        %v3435 = vshll.u32 %v2912, 16
        %v3437 = vrot.slane %v3435, 3
        %v3438 = vor.u32 %v3434, %v3437
        %v3439 = vsel %vm3269, %v3429, %v3438
        %v3441 = vshrl.u32 %v2913, 16
        %v3443 = vrot.slane %v3441, 2
        %v3444 = vshll.u32 %v2913, 16
        %v3446 = vrot.slane %v3444, 3
        %v3447 = vor.u32 %v3443, %v3446
        %v3448 = vsel %vm3269, %v3438, %v3447
        %v3450 = vshrl.u32 %v3268, 16
        %v3452 = vrot.slane %v3450, 2
        %v3453 = vshll.u32 %v3268, 16
        %v3455 = vrot.slane %v3453, 3
        %v3456 = vor.u32 %v3452, %v3455
        %v3457 = vsel %vm3269, %v3447, %v3456
        %v3459 = vsel %vm542, %v3286, 0
        %v3462 = vsel %vm542, %v3295, 0
        %v3465 = vsel %vm542, %v3304, 0
        %v3468 = vsel %vm542, %v3313, 0
        %v3471 = vsel %vm542, %v3322, 0
        %v3474 = vsel %vm542, %v3331, 0
        %v3477 = vsel %vm542, %v3340, 0
        %v3480 = vsel %vm542, %v3349, 0
        %v3483 = vsel %vm542, %v3358, 0
        %v3486 = vsel %vm542, %v3367, 0
        %v3489 = vsel %vm542, %v3376, 0
        %v3492 = vsel %vm542, %v3385, 0
        %v3495 = vsel %vm542, %v3394, 0
        %v3498 = vsel %vm542, %v3403, 0
        %v3501 = vsel %vm542, %v3412, 0
        %v3504 = vsel %vm542, %v3421, 0
        %v3507 = vsel %vm542, %v3430, 0
        %v3510 = vsel %vm542, %v3439, 0
        %v3513 = vsel %vm542, %v3448, 0
        %v3516 = vsel %vm542, %v3457, 0
        %v3519 = vsel %vm542, %v3456, 0
        %v3522 = vsel %vm606, %v3265, 0
        %3524 = vmatprep.subr.bf16.mxu0 0
        %3525 = vmatpush1.bf16.msra.mxu0 %v3522
        %3526 = vmatprep.subr.bf16.mxu0 0
        %3527 = vmatpush1.bf16.msra.mxu0 0
        %3528 = vmatprep.subr.bf16.mxu0 0
        %3529 = vmatpush1.bf16.msra.mxu0 0
        %3530 = vmatprep.subr.bf16.mxu0 0
        %3531 = vmatpush1.bf16.msra.mxu0 0
        %3532 = vmatprep.subr.bf16.mxu0 0
        %3533 = vmatpush1.bf16.msra.mxu0 0
        %3534 = vmatprep.subr.bf16.mxu0 0
        %3535 = vmatpush1.bf16.msra.mxu0 0
        %3536 = vmatprep.subr.bf16.mxu0 0
        %3537 = vmatpush1.bf16.msra.mxu0 0
        %3538 = vmatprep.subr.bf16.mxu0 0
        %3539 = vmatpush1.bf16.msra.mxu0 0
        %3540 = vmatprep.subr.bf16.mxu0 0
        %3541 = vmatpush1.bf16.msra.mxu0 0
        %3542 = vmatprep.subr.bf16.mxu0 0
        %3543 = vmatpush1.bf16.msra.mxu0 0
        %3544 = vmatprep.subr.bf16.mxu0 0
        %3545 = vmatpush1.bf16.msra.mxu0 0
        %3546 = vmatprep.subr.bf16.mxu0 0
        %3547 = vmatpush1.bf16.msra.mxu0 0
        %3548 = vmatprep.subr.bf16.mxu0 0
        %3549 = vmatpush1.bf16.msra.mxu0 0
        %3550 = vmatprep.subr.bf16.mxu0 0
        %3551 = vmatpush1.bf16.msra.mxu0 0
        %3552 = vmatprep.subr.bf16.mxu0 0
        %3553 = vmatpush1.bf16.msra.mxu0 0
        %3554 = vmatprep.subr.bf16.mxu0 0
        %3555 = vmatpush1.bf16.msra.mxu0 0
        %3556 = vmatprep.mubr.bf16.mxu0 0
        %3557 = vmatmul.mubr.bf16.gmra.mrb[0].mxu0 %v3459
        %v3558 = vpop.f32.mrb[0].mxu0
        %v3559 = vadd.f32 0.0, %v3558
        %v3560 = vpop.f32.mrb[0].mxu0
        %v3561 = vpop.f32.mrb[0].mxu0
        %v3562 = vadd.f32 0.0, %v3561
        %v3563 = vpop.f32.mrb[0].mxu0
        %3564 = vmatprep.mubr.bf16.mxu0 0
        %3565 = vmatmul.mubr.bf16.gmra.mrb[0].mxu0 %v3462
        %v3566 = vpop.f32.mrb[0].mxu0
        %v3567 = vadd.f32 0.0, %v3566
        %v3568 = vpop.f32.mrb[0].mxu0
        %v3569 = vpop.f32.mrb[0].mxu0
        %v3570 = vadd.f32 0.0, %v3569
        %v3571 = vpop.f32.mrb[0].mxu0
        %3572 = vmatprep.mubr.bf16.mxu0 0
        %3573 = vmatmul.mubr.bf16.gmra.mrb[0].mxu0 %v3465
        %v3574 = vpop.f32.mrb[0].mxu0
        %v3575 = vadd.f32 0.0, %v3574
        %v3576 = vpop.f32.mrb[0].mxu0
        %v3577 = vpop.f32.mrb[0].mxu0
        %v3578 = vadd.f32 0.0, %v3577
        %v3579 = vpop.f32.mrb[0].mxu0
        %3580 = vmatprep.mubr.bf16.mxu0 0
        %3581 = vmatmul.mubr.bf16.gmra.mrb[0].mxu0 %v3468
        %v3582 = vpop.f32.mrb[0].mxu0
        %v3583 = vadd.f32 0.0, %v3582
        %v3584 = vpop.f32.mrb[0].mxu0
        %v3585 = vpop.f32.mrb[0].mxu0
        %v3586 = vadd.f32 0.0, %v3585
        %v3587 = vpop.f32.mrb[0].mxu0
        %3588 = vmatprep.mubr.bf16.mxu0 0
        %3589 = vmatmul.mubr.bf16.gmra.mrb[0].mxu0 %v3471
        %v3590 = vpop.f32.mrb[0].mxu0
        %v3591 = vadd.f32 0.0, %v3590
        %v3592 = vpop.f32.mrb[0].mxu0
        %v3593 = vpop.f32.mrb[0].mxu0
        %v3594 = vadd.f32 0.0, %v3593
        %v3595 = vpop.f32.mrb[0].mxu0
        %3596 = vmatprep.mubr.bf16.mxu0 0
        %3597 = vmatmul.mubr.bf16.gmra.mrb[0].mxu0 %v3474
        %v3598 = vpop.f32.mrb[0].mxu0
        %v3599 = vadd.f32 0.0, %v3598
        %v3600 = vpop.f32.mrb[0].mxu0
        %v3601 = vpop.f32.mrb[0].mxu0
        %v3602 = vadd.f32 0.0, %v3601
        %v3603 = vpop.f32.mrb[0].mxu0
        %3604 = vmatprep.mubr.bf16.mxu0 0
        %3605 = vmatmul.mubr.bf16.gmra.mrb[0].mxu0 %v3477
        %v3606 = vpop.f32.mrb[0].mxu0
        %v3607 = vadd.f32 0.0, %v3606
        %v3608 = vpop.f32.mrb[0].mxu0
        %v3609 = vpop.f32.mrb[0].mxu0
        %v3610 = vadd.f32 0.0, %v3609
        %v3611 = vpop.f32.mrb[0].mxu0
        %3612 = vmatprep.mubr.bf16.mxu0 0
        %3613 = vmatmul.mubr.bf16.gmra.mrb[0].mxu0 %v3480
        %v3614 = vpop.f32.mrb[0].mxu0
        %v3615 = vadd.f32 0.0, %v3614
        %v3616 = vpop.f32.mrb[0].mxu0
        %v3617 = vpop.f32.mrb[0].mxu0
        %v3618 = vadd.f32 0.0, %v3617
        %v3619 = vpop.f32.mrb[0].mxu0
        %3620 = vmatprep.mubr.bf16.mxu0 0
        %3621 = vmatmul.mubr.bf16.gmra.mrb[0].mxu0 %v3483
        %v3622 = vpop.f32.mrb[0].mxu0
        %v3623 = vadd.f32 0.0, %v3622
        %v3624 = vpop.f32.mrb[0].mxu0
        %v3625 = vpop.f32.mrb[0].mxu0
        %v3626 = vadd.f32 0.0, %v3625
        %v3627 = vpop.f32.mrb[0].mxu0
        %3628 = vmatprep.mubr.bf16.mxu0 0
        %3629 = vmatmul.mubr.bf16.gmra.mrb[0].mxu0 %v3486
        %v3630 = vpop.f32.mrb[0].mxu0
        %v3631 = vadd.f32 0.0, %v3630
        %v3632 = vpop.f32.mrb[0].mxu0
        %v3633 = vpop.f32.mrb[0].mxu0
        %v3634 = vadd.f32 0.0, %v3633
        %v3635 = vpop.f32.mrb[0].mxu0
        %3636 = vmatprep.mubr.bf16.mxu0 0
        %3637 = vmatmul.mubr.bf16.gmra.mrb[0].mxu0 %v3489
        %v3638 = vpop.f32.mrb[0].mxu0
        %v3639 = vadd.f32 0.0, %v3638
        %v3640 = vpop.f32.mrb[0].mxu0
        %v3641 = vpop.f32.mrb[0].mxu0
        %v3642 = vadd.f32 0.0, %v3641
        %v3643 = vpop.f32.mrb[0].mxu0
        %3644 = vmatprep.mubr.bf16.mxu0 0
        %3645 = vmatmul.mubr.bf16.gmra.mrb[0].mxu0 %v3492
        %v3646 = vpop.f32.mrb[0].mxu0
        %v3647 = vadd.f32 0.0, %v3646
        %v3648 = vpop.f32.mrb[0].mxu0
        %v3649 = vpop.f32.mrb[0].mxu0
        %v3650 = vadd.f32 0.0, %v3649
        %v3651 = vpop.f32.mrb[0].mxu0
        %3652 = vmatprep.mubr.bf16.mxu0 0
        %3653 = vmatmul.mubr.bf16.gmra.mrb[0].mxu0 %v3495
        %v3654 = vpop.f32.mrb[0].mxu0
        %v3655 = vadd.f32 0.0, %v3654
        %v3656 = vpop.f32.mrb[0].mxu0
        %v3657 = vpop.f32.mrb[0].mxu0
        %v3658 = vadd.f32 0.0, %v3657
        %v3659 = vpop.f32.mrb[0].mxu0
        %3660 = vmatprep.mubr.bf16.mxu0 0
        %3661 = vmatmul.mubr.bf16.gmra.mrb[0].mxu0 %v3498
        %v3662 = vpop.f32.mrb[0].mxu0
        %v3663 = vadd.f32 0.0, %v3662
        %v3664 = vpop.f32.mrb[0].mxu0
        %v3665 = vpop.f32.mrb[0].mxu0
        %v3666 = vadd.f32 0.0, %v3665
        %v3667 = vpop.f32.mrb[0].mxu0
        %3668 = vmatprep.mubr.bf16.mxu0 0
        %3669 = vmatmul.mubr.bf16.gmra.mrb[0].mxu0 %v3501
        %v3670 = vpop.f32.mrb[0].mxu0
        %v3671 = vadd.f32 0.0, %v3670
        %v3672 = vpop.f32.mrb[0].mxu0
        %v3673 = vpop.f32.mrb[0].mxu0
        %v3674 = vadd.f32 0.0, %v3673
        %v3675 = vpop.f32.mrb[0].mxu0
        %3676 = vmatprep.mubr.bf16.mxu0 0
        %3677 = vmatmul.mubr.bf16.gmra.mrb[0].mxu0 %v3504
        %v3678 = vpop.f32.mrb[0].mxu0
        %v3679 = vadd.f32 0.0, %v3678
        %v3680 = vpop.f32.mrb[0].mxu0
        %v3681 = vpop.f32.mrb[0].mxu0
        %v3682 = vadd.f32 0.0, %v3681
        %v3683 = vpop.f32.mrb[0].mxu0
        %3684 = vmatprep.mubr.bf16.mxu0 0
        %3685 = vmatmul.mubr.bf16.gmra.mrb[0].mxu0 %v3507
        %v3686 = vpop.f32.mrb[0].mxu0
        %v3687 = vadd.f32 0.0, %v3686
        %v3688 = vpop.f32.mrb[0].mxu0
        %v3689 = vpop.f32.mrb[0].mxu0
        %v3690 = vadd.f32 0.0, %v3689
        %v3691 = vpop.f32.mrb[0].mxu0
        %3692 = vmatprep.mubr.bf16.mxu0 0
        %3693 = vmatmul.mubr.bf16.gmra.mrb[0].mxu0 %v3510
        %v3694 = vpop.f32.mrb[0].mxu0
        %v3695 = vadd.f32 0.0, %v3694
        %v3696 = vpop.f32.mrb[0].mxu0
        %v3697 = vpop.f32.mrb[0].mxu0
        %v3698 = vadd.f32 0.0, %v3697
        %v3699 = vpop.f32.mrb[0].mxu0
        %3700 = vmatprep.mubr.bf16.mxu0 0
        %3701 = vmatmul.mubr.bf16.gmra.mrb[0].mxu0 %v3513
        %v3702 = vpop.f32.mrb[0].mxu0
        %v3703 = vadd.f32 0.0, %v3702
        %v3704 = vpop.f32.mrb[0].mxu0
        %v3705 = vpop.f32.mrb[0].mxu0
        %v3706 = vadd.f32 0.0, %v3705
        %v3707 = vpop.f32.mrb[0].mxu0
        %3708 = vmatprep.mubr.bf16.mxu0 0
        %3709 = vmatmul.mubr.bf16.gmra.mrb[0].mxu0 %v3516
        %v3710 = vpop.f32.mrb[0].mxu0
        %v3711 = vadd.f32 0.0, %v3710
        %v3712 = vpop.f32.mrb[0].mxu0
        %v3713 = vpop.f32.mrb[0].mxu0
        %v3714 = vadd.f32 0.0, %v3713
        %v3715 = vpop.f32.mrb[0].mxu0
        %3716 = vmatprep.mubr.bf16.mxu0 0
        %3717 = vmatmul.mubr.bf16.gmra.mrb[0].mxu0 %v3519
        %v3718 = vpop.f32.mrb[0].mxu0
        %v3719 = vadd.f32 0.0, %v3718
        %v3720 = vpop.f32.mrb[0].mxu0
        %v3721 = vpop.f32.mrb[0].mxu0
        %v3722 = vpop.f32.mrb[0].mxu0
        %3723 = vdwg.mxu0
        %v3724 = vadd.f32 %v3222, %v3559
        %v3725 = vadd.f32 %v3223, %v3562
        %v3726 = vadd.f32 %v3224, %v3567
        %v3727 = vadd.f32 %v3225, %v3570
        %v3728 = vadd.f32 %v3226, %v3575
        %v3729 = vadd.f32 %v3227, %v3578
        %v3730 = vadd.f32 %v3228, %v3583
        %v3731 = vadd.f32 %v3229, %v3586
        %v3732 = vadd.f32 %v3230, %v3591
        %v3733 = vadd.f32 %v3231, %v3594
        %v3734 = vadd.f32 %v3232, %v3599
        %v3735 = vadd.f32 %v3233, %v3602
        %v3736 = vadd.f32 %v3234, %v3607
        %v3737 = vadd.f32 %v3235, %v3610
        %v3738 = vadd.f32 %v3236, %v3615
        %v3739 = vadd.f32 %v3237, %v3618
        %v3740 = vadd.f32 %v3238, %v3623
        %v3741 = vadd.f32 %v3239, %v3626
        %v3742 = vadd.f32 %v3240, %v3631
        %v3743 = vadd.f32 %v3241, %v3634
        %v3744 = vadd.f32 %v3242, %v3639
        %v3745 = vadd.f32 %v3243, %v3642
        %v3746 = vadd.f32 %v3244, %v3647
        %v3747 = vadd.f32 %v3245, %v3650
        %v3748 = vadd.f32 %v3246, %v3655
        %v3749 = vadd.f32 %v3247, %v3658
        %v3750 = vadd.f32 %v3248, %v3663
        %v3751 = vadd.f32 %v3249, %v3666
        %v3752 = vadd.f32 %v3250, %v3671
        %v3753 = vadd.f32 %v3251, %v3674
        %v3754 = vadd.f32 %v3252, %v3679
        %v3755 = vadd.f32 %v3253, %v3682
        %v3756 = vadd.f32 %v3254, %v3687
        %v3757 = vadd.f32 %v3255, %v3690
        %v3758 = vadd.f32 %v3256, %v3695
        %v3759 = vadd.f32 %v3257, %v3698
        %v3760 = vadd.f32 %v3258, %v3703
        %v3761 = vadd.f32 %v3259, %v3706
        %v3762 = vadd.f32 %v3260, %v3711
        %v3763 = vadd.f32 %v3261, %v3714
        %v3764 = vadd.f32 %v3262, %v3719
        %v3765 = vld [vmem:[%s222 + $0x10] sm:$0x8]
        %s3766 = scalar_lea.vmem %s1, 16
        %v3767 = vld [vmem:[%s3766] sm:$0x3]
        %v3769 = vunpack.c.l.b16 %v3765
        %v3770 = vpack.c.b16 %v2853, %v3769
        %vm3771 = vcmask 1044480
        %v3772 = vrot.slane %v3770, 3
        %v3773 = vrot.slane %v2895, 3
        %v3774 = vsel %vm3771, %v3772, %v3773
        %v3775 = vrot.slane %v2896, 3
        %v3776 = vsel %vm3771, %v3773, %v3775
        %v3777 = vrot.slane %v2897, 3
        %v3778 = vsel %vm3771, %v3775, %v3777
        %v3779 = vrot.slane %v2898, 3
        %v3780 = vsel %vm3771, %v3777, %v3779
        %v3781 = vrot.slane %v2899, 3
        %v3782 = vsel %vm3771, %v3779, %v3781
        %v3783 = vrot.slane %v2900, 3
        %v3784 = vsel %vm3771, %v3781, %v3783
        %v3785 = vrot.slane %v2901, 3
        %v3786 = vsel %vm3771, %v3783, %v3785
        %v3787 = vrot.slane %v2902, 3
        %v3788 = vsel %vm3771, %v3785, %v3787
        %v3789 = vrot.slane %v2903, 3
        %v3790 = vsel %vm3771, %v3787, %v3789
        %v3791 = vrot.slane %v2904, 3
        %v3792 = vsel %vm3771, %v3789, %v3791
        %v3793 = vrot.slane %v2905, 3
        %v3794 = vsel %vm3771, %v3791, %v3793
        %v3795 = vrot.slane %v2906, 3
        %v3796 = vsel %vm3771, %v3793, %v3795
        %v3797 = vrot.slane %v2907, 3
        %v3798 = vsel %vm3771, %v3795, %v3797
        %v3799 = vrot.slane %v2908, 3
        %v3800 = vsel %vm3771, %v3797, %v3799
        %v3801 = vrot.slane %v2909, 3
        %v3802 = vsel %vm3771, %v3799, %v3801
        %v3803 = vrot.slane %v2910, 3
        %v3804 = vsel %vm3771, %v3801, %v3803
        %v3805 = vrot.slane %v2911, 3
        %v3806 = vsel %vm3771, %v3803, %v3805
        %v3807 = vrot.slane %v2912, 3
        %v3808 = vsel %vm3771, %v3805, %v3807
        %v3809 = vrot.slane %v2913, 3
        %v3810 = vsel %vm3771, %v3807, %v3809
        %v3811 = vrot.slane %v3268, 3
        %v3812 = vsel %vm3771, %v3809, %v3811
        %v3814 = vsel %vm542, %v3774, 0
        %v3817 = vsel %vm542, %v3776, 0
        %v3820 = vsel %vm542, %v3778, 0
        %v3823 = vsel %vm542, %v3780, 0
        %v3826 = vsel %vm542, %v3782, 0
        %v3829 = vsel %vm542, %v3784, 0
        %v3832 = vsel %vm542, %v3786, 0
        %v3835 = vsel %vm542, %v3788, 0
        %v3838 = vsel %vm542, %v3790, 0
        %v3841 = vsel %vm542, %v3792, 0
        %v3844 = vsel %vm542, %v3794, 0
        %v3847 = vsel %vm542, %v3796, 0
        %v3850 = vsel %vm542, %v3798, 0
        %v3853 = vsel %vm542, %v3800, 0
        %v3856 = vsel %vm542, %v3802, 0
        %v3859 = vsel %vm542, %v3804, 0
        %v3862 = vsel %vm542, %v3806, 0
        %v3865 = vsel %vm542, %v3808, 0
        %v3868 = vsel %vm542, %v3810, 0
        %v3871 = vsel %vm542, %v3812, 0
        %v3874 = vsel %vm542, %v3811, 0
        %v3877 = vsel %vm606, %v3767, 0
        %3879 = vmatprep.subr.bf16.mxu0 0
        %3880 = vmatpush1.bf16.msra.mxu0 %v3877
        %3881 = vmatprep.subr.bf16.mxu0 0
        %3882 = vmatpush1.bf16.msra.mxu0 0
        %3883 = vmatprep.subr.bf16.mxu0 0
        %3884 = vmatpush1.bf16.msra.mxu0 0
        %3885 = vmatprep.subr.bf16.mxu0 0
        %3886 = vmatpush1.bf16.msra.mxu0 0
        %3887 = vmatprep.subr.bf16.mxu0 0
        %3888 = vmatpush1.bf16.msra.mxu0 0
        %3889 = vmatprep.subr.bf16.mxu0 0
        %3890 = vmatpush1.bf16.msra.mxu0 0
        %3891 = vmatprep.subr.bf16.mxu0 0
        %3892 = vmatpush1.bf16.msra.mxu0 0
        %3893 = vmatprep.subr.bf16.mxu0 0
        %3894 = vmatpush1.bf16.msra.mxu0 0
        %3895 = vmatprep.subr.bf16.mxu0 0
        %3896 = vmatpush1.bf16.msra.mxu0 0
        %3897 = vmatprep.subr.bf16.mxu0 0
        %3898 = vmatpush1.bf16.msra.mxu0 0
        %3899 = vmatprep.subr.bf16.mxu0 0
        %3900 = vmatpush1.bf16.msra.mxu0 0
        %3901 = vmatprep.subr.bf16.mxu0 0
        %3902 = vmatpush1.bf16.msra.mxu0 0
        %3903 = vmatprep.subr.bf16.mxu0 0
        %3904 = vmatpush1.bf16.msra.mxu0 0
        %3905 = vmatprep.subr.bf16.mxu0 0
        %3906 = vmatpush1.bf16.msra.mxu0 0
        %3907 = vmatprep.subr.bf16.mxu0 0
        %3908 = vmatpush1.bf16.msra.mxu0 0
        %3909 = vmatprep.subr.bf16.mxu0 0
        %3910 = vmatpush1.bf16.msra.mxu0 0
        %3911 = vmatprep.mubr.bf16.mxu0 0
        %3912 = vmatmul.mubr.bf16.gmra.mrb[0].mxu0 %v3814
        %v3913 = vpop.f32.mrb[0].mxu0
        %v3914 = vadd.f32 0.0, %v3913
        %v3915 = vpop.f32.mrb[0].mxu0
        %v3916 = vpop.f32.mrb[0].mxu0
        %v3917 = vadd.f32 0.0, %v3916
        %v3918 = vpop.f32.mrb[0].mxu0
        %3919 = vmatprep.mubr.bf16.mxu0 0
        %3920 = vmatmul.mubr.bf16.gmra.mrb[0].mxu0 %v3817
        %v3921 = vpop.f32.mrb[0].mxu0
        %v3922 = vadd.f32 0.0, %v3921
        %v3923 = vpop.f32.mrb[0].mxu0
        %v3924 = vpop.f32.mrb[0].mxu0
        %v3925 = vadd.f32 0.0, %v3924
        %v3926 = vpop.f32.mrb[0].mxu0
        %3927 = vmatprep.mubr.bf16.mxu0 0
        %3928 = vmatmul.mubr.bf16.gmra.mrb[0].mxu0 %v3820
        %v3929 = vpop.f32.mrb[0].mxu0
        %v3930 = vadd.f32 0.0, %v3929
        %v3931 = vpop.f32.mrb[0].mxu0
        %v3932 = vpop.f32.mrb[0].mxu0
        %v3933 = vadd.f32 0.0, %v3932
        %v3934 = vpop.f32.mrb[0].mxu0
        %3935 = vmatprep.mubr.bf16.mxu0 0
        %3936 = vmatmul.mubr.bf16.gmra.mrb[0].mxu0 %v3823
        %v3937 = vpop.f32.mrb[0].mxu0
        %v3938 = vadd.f32 0.0, %v3937
        %v3939 = vpop.f32.mrb[0].mxu0
        %v3940 = vpop.f32.mrb[0].mxu0
        %v3941 = vadd.f32 0.0, %v3940
        %v3942 = vpop.f32.mrb[0].mxu0
        %3943 = vmatprep.mubr.bf16.mxu0 0
        %3944 = vmatmul.mubr.bf16.gmra.mrb[0].mxu0 %v3826
        %v3945 = vpop.f32.mrb[0].mxu0
        %v3946 = vadd.f32 0.0, %v3945
        %v3947 = vpop.f32.mrb[0].mxu0
        %v3948 = vpop.f32.mrb[0].mxu0
        %v3949 = vadd.f32 0.0, %v3948
        %v3950 = vpop.f32.mrb[0].mxu0
        %3951 = vmatprep.mubr.bf16.mxu0 0
        %3952 = vmatmul.mubr.bf16.gmra.mrb[0].mxu0 %v3829
        %v3953 = vpop.f32.mrb[0].mxu0
        %v3954 = vadd.f32 0.0, %v3953
        %v3955 = vpop.f32.mrb[0].mxu0
        %v3956 = vpop.f32.mrb[0].mxu0
        %v3957 = vadd.f32 0.0, %v3956
        %v3958 = vpop.f32.mrb[0].mxu0
        %3959 = vmatprep.mubr.bf16.mxu0 0
        %3960 = vmatmul.mubr.bf16.gmra.mrb[0].mxu0 %v3832
        %v3961 = vpop.f32.mrb[0].mxu0
        %v3962 = vadd.f32 0.0, %v3961
        %v3963 = vpop.f32.mrb[0].mxu0
        %v3964 = vpop.f32.mrb[0].mxu0
        %v3965 = vadd.f32 0.0, %v3964
        %v3966 = vpop.f32.mrb[0].mxu0
        %3967 = vmatprep.mubr.bf16.mxu0 0
        %3968 = vmatmul.mubr.bf16.gmra.mrb[0].mxu0 %v3835
        %v3969 = vpop.f32.mrb[0].mxu0
        %v3970 = vadd.f32 0.0, %v3969
        %v3971 = vpop.f32.mrb[0].mxu0
        %v3972 = vpop.f32.mrb[0].mxu0
        %v3973 = vadd.f32 0.0, %v3972
        %v3974 = vpop.f32.mrb[0].mxu0
        %3975 = vmatprep.mubr.bf16.mxu0 0
        %3976 = vmatmul.mubr.bf16.gmra.mrb[0].mxu0 %v3838
        %v3977 = vpop.f32.mrb[0].mxu0
        %v3978 = vadd.f32 0.0, %v3977
        %v3979 = vpop.f32.mrb[0].mxu0
        %v3980 = vpop.f32.mrb[0].mxu0
        %v3981 = vadd.f32 0.0, %v3980
        %v3982 = vpop.f32.mrb[0].mxu0
        %3983 = vmatprep.mubr.bf16.mxu0 0
        %3984 = vmatmul.mubr.bf16.gmra.mrb[0].mxu0 %v3841
        %v3985 = vpop.f32.mrb[0].mxu0
        %v3986 = vadd.f32 0.0, %v3985
        %v3987 = vpop.f32.mrb[0].mxu0
        %v3988 = vpop.f32.mrb[0].mxu0
        %v3989 = vadd.f32 0.0, %v3988
        %v3990 = vpop.f32.mrb[0].mxu0
        %3991 = vmatprep.mubr.bf16.mxu0 0
        %3992 = vmatmul.mubr.bf16.gmra.mrb[0].mxu0 %v3844
        %v3993 = vpop.f32.mrb[0].mxu0
        %v3994 = vadd.f32 0.0, %v3993
        %v3995 = vpop.f32.mrb[0].mxu0
        %v3996 = vpop.f32.mrb[0].mxu0
        %v3997 = vadd.f32 0.0, %v3996
        %v3998 = vpop.f32.mrb[0].mxu0
        %3999 = vmatprep.mubr.bf16.mxu0 0
        %4000 = vmatmul.mubr.bf16.gmra.mrb[0].mxu0 %v3847
        %v4001 = vpop.f32.mrb[0].mxu0
        %v4002 = vadd.f32 0.0, %v4001
        %v4003 = vpop.f32.mrb[0].mxu0
        %v4004 = vpop.f32.mrb[0].mxu0
        %v4005 = vadd.f32 0.0, %v4004
        %v4006 = vpop.f32.mrb[0].mxu0
        %4007 = vmatprep.mubr.bf16.mxu0 0
        %4008 = vmatmul.mubr.bf16.gmra.mrb[0].mxu0 %v3850
        %v4009 = vpop.f32.mrb[0].mxu0
        %v4010 = vadd.f32 0.0, %v4009
        %v4011 = vpop.f32.mrb[0].mxu0
        %v4012 = vpop.f32.mrb[0].mxu0
        %v4013 = vadd.f32 0.0, %v4012
        %v4014 = vpop.f32.mrb[0].mxu0
        %4015 = vmatprep.mubr.bf16.mxu0 0
        %4016 = vmatmul.mubr.bf16.gmra.mrb[0].mxu0 %v3853
        %v4017 = vpop.f32.mrb[0].mxu0
        %v4018 = vadd.f32 0.0, %v4017
        %v4019 = vpop.f32.mrb[0].mxu0
        %v4020 = vpop.f32.mrb[0].mxu0
        %v4021 = vadd.f32 0.0, %v4020
        %v4022 = vpop.f32.mrb[0].mxu0
        %4023 = vmatprep.mubr.bf16.mxu0 0
        %4024 = vmatmul.mubr.bf16.gmra.mrb[0].mxu0 %v3856
        %v4025 = vpop.f32.mrb[0].mxu0
        %v4026 = vadd.f32 0.0, %v4025
        %v4027 = vpop.f32.mrb[0].mxu0
        %v4028 = vpop.f32.mrb[0].mxu0
        %v4029 = vadd.f32 0.0, %v4028
        %v4030 = vpop.f32.mrb[0].mxu0
        %4031 = vmatprep.mubr.bf16.mxu0 0
        %4032 = vmatmul.mubr.bf16.gmra.mrb[0].mxu0 %v3859
        %v4033 = vpop.f32.mrb[0].mxu0
        %v4034 = vadd.f32 0.0, %v4033
        %v4035 = vpop.f32.mrb[0].mxu0
        %v4036 = vpop.f32.mrb[0].mxu0
        %v4037 = vadd.f32 0.0, %v4036
        %v4038 = vpop.f32.mrb[0].mxu0
        %4039 = vmatprep.mubr.bf16.mxu0 0
        %4040 = vmatmul.mubr.bf16.gmra.mrb[0].mxu0 %v3862
        %v4041 = vpop.f32.mrb[0].mxu0
        %v4042 = vadd.f32 0.0, %v4041
        %v4043 = vpop.f32.mrb[0].mxu0
        %v4044 = vpop.f32.mrb[0].mxu0
        %v4045 = vadd.f32 0.0, %v4044
        %v4046 = vpop.f32.mrb[0].mxu0
        %4047 = vmatprep.mubr.bf16.mxu0 0
        %4048 = vmatmul.mubr.bf16.gmra.mrb[0].mxu0 %v3865
        %v4049 = vpop.f32.mrb[0].mxu0
        %v4050 = vadd.f32 0.0, %v4049
        %v4051 = vpop.f32.mrb[0].mxu0
        %v4052 = vpop.f32.mrb[0].mxu0
        %v4053 = vadd.f32 0.0, %v4052
        %v4054 = vpop.f32.mrb[0].mxu0
        %4055 = vmatprep.mubr.bf16.mxu0 0
        %4056 = vmatmul.mubr.bf16.gmra.mrb[0].mxu0 %v3868
        %v4057 = vpop.f32.mrb[0].mxu0
        %v4058 = vadd.f32 0.0, %v4057
        %v4059 = vpop.f32.mrb[0].mxu0
        %v4060 = vpop.f32.mrb[0].mxu0
        %v4061 = vadd.f32 0.0, %v4060
        %v4062 = vpop.f32.mrb[0].mxu0
        %4063 = vmatprep.mubr.bf16.mxu0 0
        %4064 = vmatmul.mubr.bf16.gmra.mrb[0].mxu0 %v3871
        %v4065 = vpop.f32.mrb[0].mxu0
        %v4066 = vadd.f32 0.0, %v4065
        %v4067 = vpop.f32.mrb[0].mxu0
        %v4068 = vpop.f32.mrb[0].mxu0
        %v4069 = vadd.f32 0.0, %v4068
        %v4070 = vpop.f32.mrb[0].mxu0
        %4071 = vmatprep.mubr.bf16.mxu0 0
        %4072 = vmatmul.mubr.bf16.gmra.mrb[0].mxu0 %v3874
        %v4073 = vpop.f32.mrb[0].mxu0
        %v4074 = vadd.f32 0.0, %v4073
        %v4075 = vpop.f32.mrb[0].mxu0
        %v4076 = vpop.f32.mrb[0].mxu0
        %v4077 = vpop.f32.mrb[0].mxu0
        %4078 = vdwg.mxu0
        %v4079 = vadd.f32 %v3724, %v3914
        %v4080 = vadd.f32 %v3725, %v3917
        %v4081 = vadd.f32 %v3726, %v3922
        %v4082 = vadd.f32 %v3727, %v3925
        %v4083 = vadd.f32 %v3728, %v3930
        %v4084 = vadd.f32 %v3729, %v3933
        %v4085 = vadd.f32 %v3730, %v3938
        %v4086 = vadd.f32 %v3731, %v3941
        %v4087 = vadd.f32 %v3732, %v3946
        %v4088 = vadd.f32 %v3733, %v3949
        %v4089 = vadd.f32 %v3734, %v3954
        %v4090 = vadd.f32 %v3735, %v3957
        %v4091 = vadd.f32 %v3736, %v3962
        %v4092 = vadd.f32 %v3737, %v3965
        %v4093 = vadd.f32 %v3738, %v3970
        %v4094 = vadd.f32 %v3739, %v3973
        %v4095 = vadd.f32 %v3740, %v3978
        %v4096 = vadd.f32 %v3741, %v3981
        %v4097 = vadd.f32 %v3742, %v3986
        %v4098 = vadd.f32 %v3743, %v3989
        %v4099 = vadd.f32 %v3744, %v3994
        %v4100 = vadd.f32 %v3745, %v3997
        %v4101 = vadd.f32 %v3746, %v4002
        %v4102 = vadd.f32 %v3747, %v4005
        %v4103 = vadd.f32 %v3748, %v4010
        %v4104 = vadd.f32 %v3749, %v4013
        %v4105 = vadd.f32 %v3750, %v4018
        %v4106 = vadd.f32 %v3751, %v4021
        %v4107 = vadd.f32 %v3752, %v4026
        %v4108 = vadd.f32 %v3753, %v4029
        %v4109 = vadd.f32 %v3754, %v4034
        %v4110 = vadd.f32 %v3755, %v4037
        %v4111 = vadd.f32 %v3756, %v4042
        %v4112 = vadd.f32 %v3757, %v4045
        %v4113 = vadd.f32 %v3758, %v4050
        %v4114 = vadd.f32 %v3759, %v4053
        %v4115 = vadd.f32 %v3760, %v4058
        %v4116 = vadd.f32 %v3761, %v4061
        %v4117 = vadd.f32 %v3762, %v4066
        %v4118 = vadd.f32 %v3763, %v4069
        %v4119 = vadd.f32 %v3764, %v4074
        %v4120 = vld [vmem:[%s2] sm:$0x1]
        %v4122 = vlaneseq
        %v4123 = vshrl.u32 %v4122, 7
        %v4124 = vsub.s32 0, %v4123
        %v4125 = vrot.slane %v4120, %v4124
        %v4127 = vadd.f32 %v4079, %v4125
        %v4128 = vadd.f32 %v4080, %v4125
        %v4129 = vadd.f32 %v4081, %v4125
        %v4130 = vadd.f32 %v4082, %v4125
        %v4131 = vadd.f32 %v4083, %v4125
        %v4132 = vadd.f32 %v4084, %v4125
        %v4133 = vadd.f32 %v4085, %v4125
        %v4134 = vadd.f32 %v4086, %v4125
        %v4135 = vadd.f32 %v4087, %v4125
        %v4136 = vadd.f32 %v4088, %v4125
        %v4137 = vadd.f32 %v4089, %v4125
        %v4138 = vadd.f32 %v4090, %v4125
        %v4139 = vadd.f32 %v4091, %v4125
        %v4140 = vadd.f32 %v4092, %v4125
        %v4141 = vadd.f32 %v4093, %v4125
        %v4142 = vadd.f32 %v4094, %v4125
        %v4143 = vadd.f32 %v4095, %v4125
        %v4144 = vadd.f32 %v4096, %v4125
        %v4145 = vadd.f32 %v4097, %v4125
        %v4146 = vadd.f32 %v4098, %v4125
        %v4147 = vadd.f32 %v4099, %v4125
        %v4148 = vadd.f32 %v4100, %v4125
        %v4149 = vadd.f32 %v4101, %v4125
        %v4150 = vadd.f32 %v4102, %v4125
        %v4151 = vadd.f32 %v4103, %v4125
        %v4152 = vadd.f32 %v4104, %v4125
        %v4153 = vadd.f32 %v4105, %v4125
        %v4154 = vadd.f32 %v4106, %v4125
        %v4155 = vadd.f32 %v4107, %v4125
        %v4156 = vadd.f32 %v4108, %v4125
        %v4157 = vadd.f32 %v4109, %v4125
        %v4158 = vadd.f32 %v4110, %v4125
        %v4159 = vadd.f32 %v4111, %v4125
        %v4160 = vadd.f32 %v4112, %v4125
        %v4161 = vadd.f32 %v4113, %v4125
        %v4162 = vadd.f32 %v4114, %v4125
        %v4163 = vadd.f32 %v4115, %v4125
        %v4164 = vadd.f32 %v4116, %v4125
        %v4165 = vadd.f32 %v4117, %v4125
        %v4166 = vadd.f32 %v4118, %v4125
        %v4167 = vadd.f32 %v4119, %v4125
        %v4168 = vmax.f32 %v4127, 0.0
        %v4169 = vmax.f32 %v4128, 0.0
        %v4170 = vmax.f32 %v4129, 0.0
        %v4171 = vmax.f32 %v4130, 0.0
        %v4172 = vmax.f32 %v4131, 0.0
        %v4173 = vmax.f32 %v4132, 0.0
        %v4174 = vmax.f32 %v4133, 0.0
        %v4175 = vmax.f32 %v4134, 0.0
        %v4176 = vmax.f32 %v4135, 0.0
        %v4177 = vmax.f32 %v4136, 0.0
        %v4178 = vmax.f32 %v4137, 0.0
        %v4179 = vmax.f32 %v4138, 0.0
        %v4180 = vmax.f32 %v4139, 0.0
        %v4181 = vmax.f32 %v4140, 0.0
        %v4182 = vmax.f32 %v4141, 0.0
        %v4183 = vmax.f32 %v4142, 0.0
        %v4184 = vmax.f32 %v4143, 0.0
        %v4185 = vmax.f32 %v4144, 0.0
        %v4186 = vmax.f32 %v4145, 0.0
        %v4187 = vmax.f32 %v4146, 0.0
        %v4188 = vmax.f32 %v4147, 0.0
        %v4189 = vmax.f32 %v4148, 0.0
        %v4190 = vmax.f32 %v4149, 0.0
        %v4191 = vmax.f32 %v4150, 0.0
        %v4192 = vmax.f32 %v4151, 0.0
        %v4193 = vmax.f32 %v4152, 0.0
        %v4194 = vmax.f32 %v4153, 0.0
        %v4195 = vmax.f32 %v4154, 0.0
        %v4196 = vmax.f32 %v4155, 0.0
        %v4197 = vmax.f32 %v4156, 0.0
        %v4198 = vmax.f32 %v4157, 0.0
        %v4199 = vmax.f32 %v4158, 0.0
        %v4200 = vmax.f32 %v4159, 0.0
        %v4201 = vmax.f32 %v4160, 0.0
        %v4202 = vmax.f32 %v4161, 0.0
        %v4203 = vmax.f32 %v4162, 0.0
        %v4204 = vmax.f32 %v4163, 0.0
        %v4205 = vmax.f32 %v4164, 0.0
        %v4206 = vmax.f32 %v4165, 0.0
        %v4207 = vmax.f32 %v4166, 0.0
        %v4208 = vmax.f32 %v4167, 0.0
        %v4209 = vpack.c.bf16 %v4169, %v4168
        %v4210 = vpack.c.bf16 %v4171, %v4170
        %v4211 = vpack.c.bf16 %v4173, %v4172
        %v4212 = vpack.c.bf16 %v4175, %v4174
        %v4213 = vpack.c.bf16 %v4177, %v4176
        %v4214 = vpack.c.bf16 %v4179, %v4178
        %v4215 = vpack.c.bf16 %v4181, %v4180
        %v4216 = vpack.c.bf16 %v4183, %v4182
        %v4217 = vpack.c.bf16 %v4185, %v4184
        %v4218 = vpack.c.bf16 %v4187, %v4186
        %v4219 = vpack.c.bf16 %v4189, %v4188
        %v4220 = vpack.c.bf16 %v4191, %v4190
        %v4221 = vpack.c.bf16 %v4193, %v4192
        %v4222 = vpack.c.bf16 %v4195, %v4194
        %v4223 = vpack.c.bf16 %v4197, %v4196
        %v4224 = vpack.c.bf16 %v4199, %v4198
        %v4225 = vpack.c.bf16 %v4201, %v4200
        %v4226 = vpack.c.bf16 %v4203, %v4202
        %v4227 = vpack.c.bf16 %v4205, %v4204
        %v4228 = vpack.c.bf16 %v4207, %v4206
        %v4229 = vpack.c.bf16 %v4208, %v4208
        %v4230 = vld [vmem:[%s3] sm:$0xf]
        %v4231 = vld [vmem:[%s3 + $0x4] sm:$0xf]
        %v4232 = vld [vmem:[%s3 + $0x8] sm:$0xf]
        %v4233 = vld [vmem:[%s3 + $0xc] sm:$0xf]
        %v4234 = vld [vmem:[%s4] sm:$0x1]
        %v4236 = vlaneseq
        %v4237 = vshrl.u32 %v4236, 7
        %v4238 = vsub.s32 0, %v4237
        %v4239 = vrot.slane %v4234, %v4238
        %v4245 = vunpack.c.l.b16 %v4230
        %v4246 = vunpack.c.l.b16 %v4231
        %v4247 = vunpack.c.l.b16 %v4232
        %v4248 = vunpack.c.l.b16 %v4233
        %v4249 = vpack.c.b16 %v4246, %v4245
        %v4250 = vpack.c.b16 %v4248, %v4247
        %vm4253 = vcmask 261120
        %v4255 = vsel %vm4253, %v4209, 0
        %v4258 = vsel %vm4253, %v4210, 0
        %v4261 = vsel %vm4253, %v4211, 0
        %v4264 = vsel %vm4253, %v4212, 0
        %v4267 = vsel %vm4253, %v4213, 0
        %v4270 = vsel %vm4253, %v4214, 0
        %v4273 = vsel %vm4253, %v4215, 0
        %v4276 = vsel %vm4253, %v4216, 0
        %v4279 = vsel %vm4253, %v4217, 0
        %v4282 = vsel %vm4253, %v4218, 0
        %v4285 = vsel %vm4253, %v4219, 0
        %v4288 = vsel %vm4253, %v4220, 0
        %v4291 = vsel %vm4253, %v4221, 0
        %v4294 = vsel %vm4253, %v4222, 0
        %v4297 = vsel %vm4253, %v4223, 0
        %v4300 = vsel %vm4253, %v4224, 0
        %v4303 = vsel %vm4253, %v4225, 0
        %v4306 = vsel %vm4253, %v4226, 0
        %v4309 = vsel %vm4253, %v4227, 0
        %v4312 = vsel %vm4253, %v4228, 0
        %v4315 = vsel %vm4253, %v4229, 0
        %4317 = vmatprep.subr.bf16.mxu0 0
        %4318 = vmatpush1.bf16.msra.mxu0 %v4249
        %4319 = vmatprep.subr.bf16.mxu0 0
        %4320 = vmatpush1.bf16.msra.mxu0 %v4250
        %4321 = vmatprep.subr.bf16.mxu0 0
        %4322 = vmatpush1.bf16.msra.mxu0 0
        %4323 = vmatprep.subr.bf16.mxu0 0
        %4324 = vmatpush1.bf16.msra.mxu0 0
        %4325 = vmatprep.subr.bf16.mxu0 0
        %4326 = vmatpush1.bf16.msra.mxu0 0
        %4327 = vmatprep.subr.bf16.mxu0 0
        %4328 = vmatpush1.bf16.msra.mxu0 0
        %4329 = vmatprep.subr.bf16.mxu0 0
        %4330 = vmatpush1.bf16.msra.mxu0 0
        %4331 = vmatprep.subr.bf16.mxu0 0
        %4332 = vmatpush1.bf16.msra.mxu0 0
        %4333 = vmatprep.subr.bf16.mxu0 0
        %4334 = vmatpush1.bf16.msra.mxu0 0
        %4335 = vmatprep.subr.bf16.mxu0 0
        %4336 = vmatpush1.bf16.msra.mxu0 0
        %4337 = vmatprep.subr.bf16.mxu0 0
        %4338 = vmatpush1.bf16.msra.mxu0 0
        %4339 = vmatprep.subr.bf16.mxu0 0
        %4340 = vmatpush1.bf16.msra.mxu0 0
        %4341 = vmatprep.subr.bf16.mxu0 0
        %4342 = vmatpush1.bf16.msra.mxu0 0
        %4343 = vmatprep.subr.bf16.mxu0 0
        %4344 = vmatpush1.bf16.msra.mxu0 0
        %4345 = vmatprep.subr.bf16.mxu0 0
        %4346 = vmatpush1.bf16.msra.mxu0 0
        %4347 = vmatprep.subr.bf16.mxu0 0
        %4348 = vmatpush1.bf16.msra.mxu0 0
        %4349 = vmatprep.mubr.bf16.mxu0 0
        %4350 = vmatmul.mubr.bf16.gmra.mrb[0].mxu0 %v4255
        %v4351 = vpop.f32.mrb[0].mxu0
        %v4352 = vadd.f32 %v4239, %v4351
        %v4353 = vpop.f32.mrb[0].mxu0
        %v4354 = vpop.f32.mrb[0].mxu0
        %v4355 = vadd.f32 %v4239, %v4354
        %v4356 = vpop.f32.mrb[0].mxu0
        %4357 = vmatprep.mubr.bf16.mxu0 0
        %4358 = vmatmul.mubr.bf16.gmra.mrb[0].mxu0 %v4258
        %v4359 = vpop.f32.mrb[0].mxu0
        %v4360 = vadd.f32 %v4239, %v4359
        %v4361 = vpop.f32.mrb[0].mxu0
        %v4362 = vpop.f32.mrb[0].mxu0
        %v4363 = vadd.f32 %v4239, %v4362
        %v4364 = vpop.f32.mrb[0].mxu0
        %4365 = vmatprep.mubr.bf16.mxu0 0
        %4366 = vmatmul.mubr.bf16.gmra.mrb[0].mxu0 %v4261
        %v4367 = vpop.f32.mrb[0].mxu0
        %v4368 = vadd.f32 %v4239, %v4367
        %v4369 = vpop.f32.mrb[0].mxu0
        %v4370 = vpop.f32.mrb[0].mxu0
        %v4371 = vadd.f32 %v4239, %v4370
        %v4372 = vpop.f32.mrb[0].mxu0
        %4373 = vmatprep.mubr.bf16.mxu0 0
        %4374 = vmatmul.mubr.bf16.gmra.mrb[0].mxu0 %v4264
        %v4375 = vpop.f32.mrb[0].mxu0
        %v4376 = vadd.f32 %v4239, %v4375
        %v4377 = vpop.f32.mrb[0].mxu0
        %v4378 = vpop.f32.mrb[0].mxu0
        %v4379 = vadd.f32 %v4239, %v4378
        %v4380 = vpop.f32.mrb[0].mxu0
        %4381 = vmatprep.mubr.bf16.mxu0 0
        %4382 = vmatmul.mubr.bf16.gmra.mrb[0].mxu0 %v4267
        %v4383 = vpop.f32.mrb[0].mxu0
        %v4384 = vadd.f32 %v4239, %v4383
        %v4385 = vpop.f32.mrb[0].mxu0
        %v4386 = vpop.f32.mrb[0].mxu0
        %v4387 = vadd.f32 %v4239, %v4386
        %v4388 = vpop.f32.mrb[0].mxu0
        %4389 = vmatprep.mubr.bf16.mxu0 0
        %4390 = vmatmul.mubr.bf16.gmra.mrb[0].mxu0 %v4270
        %v4391 = vpop.f32.mrb[0].mxu0
        %v4392 = vadd.f32 %v4239, %v4391
        %v4393 = vpop.f32.mrb[0].mxu0
        %v4394 = vpop.f32.mrb[0].mxu0
        %v4395 = vadd.f32 %v4239, %v4394
        %v4396 = vpop.f32.mrb[0].mxu0
        %4397 = vmatprep.mubr.bf16.mxu0 0
        %4398 = vmatmul.mubr.bf16.gmra.mrb[0].mxu0 %v4273
        %v4399 = vpop.f32.mrb[0].mxu0
        %v4400 = vadd.f32 %v4239, %v4399
        %v4401 = vpop.f32.mrb[0].mxu0
        %v4402 = vpop.f32.mrb[0].mxu0
        %v4403 = vadd.f32 %v4239, %v4402
        %v4404 = vpop.f32.mrb[0].mxu0
        %4405 = vmatprep.mubr.bf16.mxu0 0
        %4406 = vmatmul.mubr.bf16.gmra.mrb[0].mxu0 %v4276
        %v4407 = vpop.f32.mrb[0].mxu0
        %v4408 = vadd.f32 %v4239, %v4407
        %v4409 = vpop.f32.mrb[0].mxu0
        %v4410 = vpop.f32.mrb[0].mxu0
        %v4411 = vadd.f32 %v4239, %v4410
        %v4412 = vpop.f32.mrb[0].mxu0
        %4413 = vmatprep.mubr.bf16.mxu0 0
        %4414 = vmatmul.mubr.bf16.gmra.mrb[0].mxu0 %v4279
        %v4415 = vpop.f32.mrb[0].mxu0
        %v4416 = vadd.f32 %v4239, %v4415
        %v4417 = vpop.f32.mrb[0].mxu0
        %v4418 = vpop.f32.mrb[0].mxu0
        %v4419 = vadd.f32 %v4239, %v4418
        %v4420 = vpop.f32.mrb[0].mxu0
        %4421 = vmatprep.mubr.bf16.mxu0 0
        %4422 = vmatmul.mubr.bf16.gmra.mrb[0].mxu0 %v4282
        %v4423 = vpop.f32.mrb[0].mxu0
        %v4424 = vadd.f32 %v4239, %v4423
        %v4425 = vpop.f32.mrb[0].mxu0
        %v4426 = vpop.f32.mrb[0].mxu0
        %v4427 = vadd.f32 %v4239, %v4426
        %v4428 = vpop.f32.mrb[0].mxu0
        %4429 = vmatprep.mubr.bf16.mxu0 0
        %4430 = vmatmul.mubr.bf16.gmra.mrb[0].mxu0 %v4285
        %v4431 = vpop.f32.mrb[0].mxu0
        %v4432 = vadd.f32 %v4239, %v4431
        %v4433 = vpop.f32.mrb[0].mxu0
        %v4434 = vpop.f32.mrb[0].mxu0
        %v4435 = vadd.f32 %v4239, %v4434
        %v4436 = vpop.f32.mrb[0].mxu0
        %4437 = vmatprep.mubr.bf16.mxu0 0
        %4438 = vmatmul.mubr.bf16.gmra.mrb[0].mxu0 %v4288
        %v4439 = vpop.f32.mrb[0].mxu0
        %v4440 = vadd.f32 %v4239, %v4439
        %v4441 = vpop.f32.mrb[0].mxu0
        %v4442 = vpop.f32.mrb[0].mxu0
        %v4443 = vadd.f32 %v4239, %v4442
        %v4444 = vpop.f32.mrb[0].mxu0
        %4445 = vmatprep.mubr.bf16.mxu0 0
        %4446 = vmatmul.mubr.bf16.gmra.mrb[0].mxu0 %v4291
        %v4447 = vpop.f32.mrb[0].mxu0
        %v4448 = vadd.f32 %v4239, %v4447
        %v4449 = vpop.f32.mrb[0].mxu0
        %v4450 = vpop.f32.mrb[0].mxu0
        %v4451 = vadd.f32 %v4239, %v4450
        %v4452 = vpop.f32.mrb[0].mxu0
        %4453 = vmatprep.mubr.bf16.mxu0 0
        %4454 = vmatmul.mubr.bf16.gmra.mrb[0].mxu0 %v4294
        %v4455 = vpop.f32.mrb[0].mxu0
        %v4456 = vadd.f32 %v4239, %v4455
        %v4457 = vpop.f32.mrb[0].mxu0
        %v4458 = vpop.f32.mrb[0].mxu0
        %v4459 = vadd.f32 %v4239, %v4458
        %v4460 = vpop.f32.mrb[0].mxu0
        %4461 = vmatprep.mubr.bf16.mxu0 0
        %4462 = vmatmul.mubr.bf16.gmra.mrb[0].mxu0 %v4297
        %v4463 = vpop.f32.mrb[0].mxu0
        %v4464 = vadd.f32 %v4239, %v4463
        %v4465 = vpop.f32.mrb[0].mxu0
        %v4466 = vpop.f32.mrb[0].mxu0
        %v4467 = vadd.f32 %v4239, %v4466
        %v4468 = vpop.f32.mrb[0].mxu0
        %4469 = vmatprep.mubr.bf16.mxu0 0
        %4470 = vmatmul.mubr.bf16.gmra.mrb[0].mxu0 %v4300
        %v4471 = vpop.f32.mrb[0].mxu0
        %v4472 = vadd.f32 %v4239, %v4471
        %v4473 = vpop.f32.mrb[0].mxu0
        %v4474 = vpop.f32.mrb[0].mxu0
        %v4475 = vadd.f32 %v4239, %v4474
        %v4476 = vpop.f32.mrb[0].mxu0
        %4477 = vmatprep.mubr.bf16.mxu0 0
        %4478 = vmatmul.mubr.bf16.gmra.mrb[0].mxu0 %v4303
        %v4479 = vpop.f32.mrb[0].mxu0
        %v4480 = vadd.f32 %v4239, %v4479
        %v4481 = vpop.f32.mrb[0].mxu0
        %v4482 = vpop.f32.mrb[0].mxu0
        %v4483 = vadd.f32 %v4239, %v4482
        %v4484 = vpop.f32.mrb[0].mxu0
        %4485 = vmatprep.mubr.bf16.mxu0 0
        %4486 = vmatmul.mubr.bf16.gmra.mrb[0].mxu0 %v4306
        %v4487 = vpop.f32.mrb[0].mxu0
        %v4488 = vadd.f32 %v4239, %v4487
        %v4489 = vpop.f32.mrb[0].mxu0
        %v4490 = vpop.f32.mrb[0].mxu0
        %v4491 = vadd.f32 %v4239, %v4490
        %v4492 = vpop.f32.mrb[0].mxu0
        %4493 = vmatprep.mubr.bf16.mxu0 0
        %4494 = vmatmul.mubr.bf16.gmra.mrb[0].mxu0 %v4309
        %v4495 = vpop.f32.mrb[0].mxu0
        %v4496 = vadd.f32 %v4239, %v4495
        %v4497 = vpop.f32.mrb[0].mxu0
        %v4498 = vpop.f32.mrb[0].mxu0
        %v4499 = vadd.f32 %v4239, %v4498
        %v4500 = vpop.f32.mrb[0].mxu0
        %4501 = vmatprep.mubr.bf16.mxu0 0
        %4502 = vmatmul.mubr.bf16.gmra.mrb[0].mxu0 %v4312
        %v4503 = vpop.f32.mrb[0].mxu0
        %v4504 = vadd.f32 %v4239, %v4503
        %v4505 = vpop.f32.mrb[0].mxu0
        %v4506 = vpop.f32.mrb[0].mxu0
        %v4507 = vadd.f32 %v4239, %v4506
        %v4508 = vpop.f32.mrb[0].mxu0
        %4509 = vmatprep.mubr.bf16.mxu0 0
        %4510 = vmatmul.mubr.bf16.gmra.mrb[0].mxu0 %v4315
        %v4511 = vpop.f32.mrb[0].mxu0
        %v4512 = vadd.f32 %v4239, %v4511
        %v4513 = vpop.f32.mrb[0].mxu0
        %v4514 = vpop.f32.mrb[0].mxu0
        %v4515 = vpop.f32.mrb[0].mxu0
        %4516 = vdwg.mxu0
        %vm4517 = vcmp.lt.f32.partialorder %v4352, 0.0
        %vm4518 = vcmp.lt.f32.partialorder %v4355, 0.0
        %vm4519 = vcmp.lt.f32.partialorder %v4360, 0.0
        %vm4520 = vcmp.lt.f32.partialorder %v4363, 0.0
        %vm4521 = vcmp.lt.f32.partialorder %v4368, 0.0
        %vm4522 = vcmp.lt.f32.partialorder %v4371, 0.0
        %vm4523 = vcmp.lt.f32.partialorder %v4376, 0.0
        %vm4524 = vcmp.lt.f32.partialorder %v4379, 0.0
        %vm4525 = vcmp.lt.f32.partialorder %v4384, 0.0
        %vm4526 = vcmp.lt.f32.partialorder %v4387, 0.0
        %vm4527 = vcmp.lt.f32.partialorder %v4392, 0.0
        %vm4528 = vcmp.lt.f32.partialorder %v4395, 0.0
        %vm4529 = vcmp.lt.f32.partialorder %v4400, 0.0
        %vm4530 = vcmp.lt.f32.partialorder %v4403, 0.0
        %vm4531 = vcmp.lt.f32.partialorder %v4408, 0.0
        %vm4532 = vcmp.lt.f32.partialorder %v4411, 0.0
        %vm4533 = vcmp.lt.f32.partialorder %v4416, 0.0
        %vm4534 = vcmp.lt.f32.partialorder %v4419, 0.0
        %vm4535 = vcmp.lt.f32.partialorder %v4424, 0.0
        %vm4536 = vcmp.lt.f32.partialorder %v4427, 0.0
        %vm4537 = vcmp.lt.f32.partialorder %v4432, 0.0
        %vm4538 = vcmp.lt.f32.partialorder %v4435, 0.0
        %vm4539 = vcmp.lt.f32.partialorder %v4440, 0.0
        %vm4540 = vcmp.lt.f32.partialorder %v4443, 0.0
        %vm4541 = vcmp.lt.f32.partialorder %v4448, 0.0
        %vm4542 = vcmp.lt.f32.partialorder %v4451, 0.0
        %vm4543 = vcmp.lt.f32.partialorder %v4456, 0.0
        %vm4544 = vcmp.lt.f32.partialorder %v4459, 0.0
        %vm4545 = vcmp.lt.f32.partialorder %v4464, 0.0
        %vm4546 = vcmp.lt.f32.partialorder %v4467, 0.0
        %vm4547 = vcmp.lt.f32.partialorder %v4472, 0.0
        %vm4548 = vcmp.lt.f32.partialorder %v4475, 0.0
        %vm4549 = vcmp.lt.f32.partialorder %v4480, 0.0
        %vm4550 = vcmp.lt.f32.partialorder %v4483, 0.0
        %vm4551 = vcmp.lt.f32.partialorder %v4488, 0.0
        %vm4552 = vcmp.lt.f32.partialorder %v4491, 0.0
        %vm4553 = vcmp.lt.f32.partialorder %v4496, 0.0
        %vm4554 = vcmp.lt.f32.partialorder %v4499, 0.0
        %vm4555 = vcmp.lt.f32.partialorder %v4504, 0.0
        %vm4556 = vcmp.lt.f32.partialorder %v4507, 0.0
        %vm4557 = vcmp.lt.f32.partialorder %v4512, 0.0
        %v4558 = vsub.f32 0.0, %v4352
        %v4559 = vsub.f32 0.0, %v4355
        %v4560 = vsub.f32 0.0, %v4360
        %v4561 = vsub.f32 0.0, %v4363
        %v4562 = vsub.f32 0.0, %v4368
        %v4563 = vsub.f32 0.0, %v4371
        %v4564 = vsub.f32 0.0, %v4376
        %v4565 = vsub.f32 0.0, %v4379
        %v4566 = vsub.f32 0.0, %v4384
        %v4567 = vsub.f32 0.0, %v4387
        %v4568 = vsub.f32 0.0, %v4392
        %v4569 = vsub.f32 0.0, %v4395
        %v4570 = vsub.f32 0.0, %v4400
        %v4571 = vsub.f32 0.0, %v4403
        %v4572 = vsub.f32 0.0, %v4408
        %v4573 = vsub.f32 0.0, %v4411
        %v4574 = vsub.f32 0.0, %v4416
        %v4575 = vsub.f32 0.0, %v4419
        %v4576 = vsub.f32 0.0, %v4424
        %v4577 = vsub.f32 0.0, %v4427
        %v4578 = vsub.f32 0.0, %v4432
        %v4579 = vsub.f32 0.0, %v4435
        %v4580 = vsub.f32 0.0, %v4440
        %v4581 = vsub.f32 0.0, %v4443
        %v4582 = vsub.f32 0.0, %v4448
        %v4583 = vsub.f32 0.0, %v4451
        %v4584 = vsub.f32 0.0, %v4456
        %v4585 = vsub.f32 0.0, %v4459
        %v4586 = vsub.f32 0.0, %v4464
        %v4587 = vsub.f32 0.0, %v4467
        %v4588 = vsub.f32 0.0, %v4472
        %v4589 = vsub.f32 0.0, %v4475
        %v4590 = vsub.f32 0.0, %v4480
        %v4591 = vsub.f32 0.0, %v4483
        %v4592 = vsub.f32 0.0, %v4488
        %v4593 = vsub.f32 0.0, %v4491
        %v4594 = vsub.f32 0.0, %v4496
        %v4595 = vsub.f32 0.0, %v4499
        %v4596 = vsub.f32 0.0, %v4504
        %v4597 = vsub.f32 0.0, %v4507
        %v4598 = vsub.f32 0.0, %v4512
        %v4599 = vsel %vm4517, %v4352, %v4558
        %v4600 = vsel %vm4518, %v4355, %v4559
        %v4601 = vsel %vm4519, %v4360, %v4560
        %v4602 = vsel %vm4520, %v4363, %v4561
        %v4603 = vsel %vm4521, %v4368, %v4562
        %v4604 = vsel %vm4522, %v4371, %v4563
        %v4605 = vsel %vm4523, %v4376, %v4564
        %v4606 = vsel %vm4524, %v4379, %v4565
        %v4607 = vsel %vm4525, %v4384, %v4566
        %v4608 = vsel %vm4526, %v4387, %v4567
        %v4609 = vsel %vm4527, %v4392, %v4568
        %v4610 = vsel %vm4528, %v4395, %v4569
        %v4611 = vsel %vm4529, %v4400, %v4570
        %v4612 = vsel %vm4530, %v4403, %v4571
        %v4613 = vsel %vm4531, %v4408, %v4572
        %v4614 = vsel %vm4532, %v4411, %v4573
        %v4615 = vsel %vm4533, %v4416, %v4574
        %v4616 = vsel %vm4534, %v4419, %v4575
        %v4617 = vsel %vm4535, %v4424, %v4576
        %v4618 = vsel %vm4536, %v4427, %v4577
        %v4619 = vsel %vm4537, %v4432, %v4578
        %v4620 = vsel %vm4538, %v4435, %v4579
        %v4621 = vsel %vm4539, %v4440, %v4580
        %v4622 = vsel %vm4540, %v4443, %v4581
        %v4623 = vsel %vm4541, %v4448, %v4582
        %v4624 = vsel %vm4542, %v4451, %v4583
        %v4625 = vsel %vm4543, %v4456, %v4584
        %v4626 = vsel %vm4544, %v4459, %v4585
        %v4627 = vsel %vm4545, %v4464, %v4586
        %v4628 = vsel %vm4546, %v4467, %v4587
        %v4629 = vsel %vm4547, %v4472, %v4588
        %v4630 = vsel %vm4548, %v4475, %v4589
        %v4631 = vsel %vm4549, %v4480, %v4590
        %v4632 = vsel %vm4550, %v4483, %v4591
        %v4633 = vsel %vm4551, %v4488, %v4592
        %v4634 = vsel %vm4552, %v4491, %v4593
        %v4635 = vsel %vm4553, %v4496, %v4594
        %v4636 = vsel %vm4554, %v4499, %v4595
        %v4637 = vsel %vm4555, %v4504, %v4596
        %v4638 = vsel %vm4556, %v4507, %v4597
        %v4639 = vsel %vm4557, %v4512, %v4598
        %v4640 = vmul.f32 %v4599, 1.442695
        %v4641 = vpow.pop %v4640
        %v4642 = vmul.f32 %v4600, 1.442695
        %v4643 = vpow.pop %v4642
        %v4644 = vmul.f32 %v4601, 1.442695
        %v4645 = vpow.pop %v4644
        %v4646 = vmul.f32 %v4602, 1.442695
        %v4647 = vpow.pop %v4646
        %v4648 = vmul.f32 %v4603, 1.442695
        %v4649 = vpow.pop %v4648
        %v4650 = vmul.f32 %v4604, 1.442695
        %v4651 = vpow.pop %v4650
        %v4652 = vmul.f32 %v4605, 1.442695
        %v4653 = vpow.pop %v4652
        %v4654 = vmul.f32 %v4606, 1.442695
        %v4655 = vpow.pop %v4654
        %v4656 = vmul.f32 %v4607, 1.442695
        %v4657 = vpow.pop %v4656
        %v4658 = vmul.f32 %v4608, 1.442695
        %v4659 = vpow.pop %v4658
        %v4660 = vmul.f32 %v4609, 1.442695
        %v4661 = vpow.pop %v4660
        %v4662 = vmul.f32 %v4610, 1.442695
        %v4663 = vpow.pop %v4662
        %v4664 = vmul.f32 %v4611, 1.442695
        %v4665 = vpow.pop %v4664
        %v4666 = vmul.f32 %v4612, 1.442695
        %v4667 = vpow.pop %v4666
        %v4668 = vmul.f32 %v4613, 1.442695
        %v4669 = vpow.pop %v4668
        %v4670 = vmul.f32 %v4614, 1.442695
        %v4671 = vpow.pop %v4670
        %v4672 = vmul.f32 %v4615, 1.442695
        %v4673 = vpow.pop %v4672
        %v4674 = vmul.f32 %v4616, 1.442695
        %v4675 = vpow.pop %v4674
        %v4676 = vmul.f32 %v4617, 1.442695
        %v4677 = vpow.pop %v4676
        %v4678 = vmul.f32 %v4618, 1.442695
        %v4679 = vpow.pop %v4678
        %v4680 = vmul.f32 %v4619, 1.442695
        %v4681 = vpow.pop %v4680
        %v4682 = vmul.f32 %v4620, 1.442695
        %v4683 = vpow.pop %v4682
        %v4684 = vmul.f32 %v4621, 1.442695
        %v4685 = vpow.pop %v4684
        %v4686 = vmul.f32 %v4622, 1.442695
        %v4687 = vpow.pop %v4686
        %v4688 = vmul.f32 %v4623, 1.442695
        %v4689 = vpow.pop %v4688
        %v4690 = vmul.f32 %v4624, 1.442695
        %v4691 = vpow.pop %v4690
        %v4692 = vmul.f32 %v4625, 1.442695
        %v4693 = vpow.pop %v4692
        %v4694 = vmul.f32 %v4626, 1.442695
        %v4695 = vpow.pop %v4694
        %v4696 = vmul.f32 %v4627, 1.442695
        %v4697 = vpow.pop %v4696
        %v4698 = vmul.f32 %v4628, 1.442695
        %v4699 = vpow.pop %v4698
        %v4700 = vmul.f32 %v4629, 1.442695
        %v4701 = vpow.pop %v4700
        %v4702 = vmul.f32 %v4630, 1.442695
        %v4703 = vpow.pop %v4702
        %v4704 = vmul.f32 %v4631, 1.442695
        %v4705 = vpow.pop %v4704
        %v4706 = vmul.f32 %v4632, 1.442695
        %v4707 = vpow.pop %v4706
        %v4708 = vmul.f32 %v4633, 1.442695
        %v4709 = vpow.pop %v4708
        %v4710 = vmul.f32 %v4634, 1.442695
        %v4711 = vpow.pop %v4710
        %v4712 = vmul.f32 %v4635, 1.442695
        %v4713 = vpow.pop %v4712
        %v4714 = vmul.f32 %v4636, 1.442695
        %v4715 = vpow.pop %v4714
        %v4716 = vmul.f32 %v4637, 1.442695
        %v4717 = vpow.pop %v4716
        %v4718 = vmul.f32 %v4638, 1.442695
        %v4719 = vpow.pop %v4718
        %v4720 = vmul.f32 %v4639, 1.442695
        %v4721 = vpow.pop %v4720
        %v4722 = vadd.f32 %v4641, 1.0
        %v4723 = vadd.f32 %v4643, 1.0
        %v4724 = vadd.f32 %v4645, 1.0
        %v4725 = vadd.f32 %v4647, 1.0
        %v4726 = vadd.f32 %v4649, 1.0
        %v4727 = vadd.f32 %v4651, 1.0
        %v4728 = vadd.f32 %v4653, 1.0
        %v4729 = vadd.f32 %v4655, 1.0
        %v4730 = vadd.f32 %v4657, 1.0
        %v4731 = vadd.f32 %v4659, 1.0
        %v4732 = vadd.f32 %v4661, 1.0
        %v4733 = vadd.f32 %v4663, 1.0
        %v4734 = vadd.f32 %v4665, 1.0
        %v4735 = vadd.f32 %v4667, 1.0
        %v4736 = vadd.f32 %v4669, 1.0
        %v4737 = vadd.f32 %v4671, 1.0
        %v4738 = vadd.f32 %v4673, 1.0
        %v4739 = vadd.f32 %v4675, 1.0
        %v4740 = vadd.f32 %v4677, 1.0
        %v4741 = vadd.f32 %v4679, 1.0
        %v4742 = vadd.f32 %v4681, 1.0
        %v4743 = vadd.f32 %v4683, 1.0
        %v4744 = vadd.f32 %v4685, 1.0
        %v4745 = vadd.f32 %v4687, 1.0
        %v4746 = vadd.f32 %v4689, 1.0
        %v4747 = vadd.f32 %v4691, 1.0
        %v4748 = vadd.f32 %v4693, 1.0
        %v4749 = vadd.f32 %v4695, 1.0
        %v4750 = vadd.f32 %v4697, 1.0
        %v4751 = vadd.f32 %v4699, 1.0
        %v4752 = vadd.f32 %v4701, 1.0
        %v4753 = vadd.f32 %v4703, 1.0
        %v4754 = vadd.f32 %v4705, 1.0
        %v4755 = vadd.f32 %v4707, 1.0
        %v4756 = vadd.f32 %v4709, 1.0
        %v4757 = vadd.f32 %v4711, 1.0
        %v4758 = vadd.f32 %v4713, 1.0
        %v4759 = vadd.f32 %v4715, 1.0
        %v4760 = vadd.f32 %v4717, 1.0
        %v4761 = vadd.f32 %v4719, 1.0
        %v4762 = vadd.f32 %v4721, 1.0
        %v4763 = vrcp.pop %v4722
        %v4764 = vmul.f32 1.0, %v4763
        %v4765 = vrcp.pop %v4723
        %v4766 = vmul.f32 1.0, %v4765
        %v4767 = vrcp.pop %v4724
        %v4768 = vmul.f32 1.0, %v4767
        %v4769 = vrcp.pop %v4725
        %v4770 = vmul.f32 1.0, %v4769
        %v4771 = vrcp.pop %v4726
        %v4772 = vmul.f32 1.0, %v4771
        %v4773 = vrcp.pop %v4727
        %v4774 = vmul.f32 1.0, %v4773
        %v4775 = vrcp.pop %v4728
        %v4776 = vmul.f32 1.0, %v4775
        %v4777 = vrcp.pop %v4729
        %v4778 = vmul.f32 1.0, %v4777
        %v4779 = vrcp.pop %v4730
        %v4780 = vmul.f32 1.0, %v4779
        %v4781 = vrcp.pop %v4731
        %v4782 = vmul.f32 1.0, %v4781
        %v4783 = vrcp.pop %v4732
        %v4784 = vmul.f32 1.0, %v4783
        %v4785 = vrcp.pop %v4733
        %v4786 = vmul.f32 1.0, %v4785
        %v4787 = vrcp.pop %v4734
        %v4788 = vmul.f32 1.0, %v4787
        %v4789 = vrcp.pop %v4735
        %v4790 = vmul.f32 1.0, %v4789
        %v4791 = vrcp.pop %v4736
        %v4792 = vmul.f32 1.0, %v4791
        %v4793 = vrcp.pop %v4737
        %v4794 = vmul.f32 1.0, %v4793
        %v4795 = vrcp.pop %v4738
        %v4796 = vmul.f32 1.0, %v4795
        %v4797 = vrcp.pop %v4739
        %v4798 = vmul.f32 1.0, %v4797
        %v4799 = vrcp.pop %v4740
        %v4800 = vmul.f32 1.0, %v4799
        %v4801 = vrcp.pop %v4741
        %v4802 = vmul.f32 1.0, %v4801
        %v4803 = vrcp.pop %v4742
        %v4804 = vmul.f32 1.0, %v4803
        %v4805 = vrcp.pop %v4743
        %v4806 = vmul.f32 1.0, %v4805
        %v4807 = vrcp.pop %v4744
        %v4808 = vmul.f32 1.0, %v4807
        %v4809 = vrcp.pop %v4745
        %v4810 = vmul.f32 1.0, %v4809
        %v4811 = vrcp.pop %v4746
        %v4812 = vmul.f32 1.0, %v4811
        %v4813 = vrcp.pop %v4747
        %v4814 = vmul.f32 1.0, %v4813
        %v4815 = vrcp.pop %v4748
        %v4816 = vmul.f32 1.0, %v4815
        %v4817 = vrcp.pop %v4749
        %v4818 = vmul.f32 1.0, %v4817
        %v4819 = vrcp.pop %v4750
        %v4820 = vmul.f32 1.0, %v4819
        %v4821 = vrcp.pop %v4751
        %v4822 = vmul.f32 1.0, %v4821
        %v4823 = vrcp.pop %v4752
        %v4824 = vmul.f32 1.0, %v4823
        %v4825 = vrcp.pop %v4753
        %v4826 = vmul.f32 1.0, %v4825
        %v4827 = vrcp.pop %v4754
        %v4828 = vmul.f32 1.0, %v4827
        %v4829 = vrcp.pop %v4755
        %v4830 = vmul.f32 1.0, %v4829
        %v4831 = vrcp.pop %v4756
        %v4832 = vmul.f32 1.0, %v4831
        %v4833 = vrcp.pop %v4757
        %v4834 = vmul.f32 1.0, %v4833
        %v4835 = vrcp.pop %v4758
        %v4836 = vmul.f32 1.0, %v4835
        %v4837 = vrcp.pop %v4759
        %v4838 = vmul.f32 1.0, %v4837
        %v4839 = vrcp.pop %v4760
        %v4840 = vmul.f32 1.0, %v4839
        %v4841 = vrcp.pop %v4761
        %v4842 = vmul.f32 1.0, %v4841
        %v4843 = vrcp.pop %v4762
        %v4844 = vmul.f32 1.0, %v4843
        %v4845 = vmul.f32 %v4641, %v4764
        %v4846 = vmul.f32 %v4643, %v4766
        %v4847 = vmul.f32 %v4645, %v4768
        %v4848 = vmul.f32 %v4647, %v4770
        %v4849 = vmul.f32 %v4649, %v4772
        %v4850 = vmul.f32 %v4651, %v4774
        %v4851 = vmul.f32 %v4653, %v4776
        %v4852 = vmul.f32 %v4655, %v4778
        %v4853 = vmul.f32 %v4657, %v4780
        %v4854 = vmul.f32 %v4659, %v4782
        %v4855 = vmul.f32 %v4661, %v4784
        %v4856 = vmul.f32 %v4663, %v4786
        %v4857 = vmul.f32 %v4665, %v4788
        %v4858 = vmul.f32 %v4667, %v4790
        %v4859 = vmul.f32 %v4669, %v4792
        %v4860 = vmul.f32 %v4671, %v4794
        %v4861 = vmul.f32 %v4673, %v4796
        %v4862 = vmul.f32 %v4675, %v4798
        %v4863 = vmul.f32 %v4677, %v4800
        %v4864 = vmul.f32 %v4679, %v4802
        %v4865 = vmul.f32 %v4681, %v4804
        %v4866 = vmul.f32 %v4683, %v4806
        %v4867 = vmul.f32 %v4685, %v4808
        %v4868 = vmul.f32 %v4687, %v4810
        %v4869 = vmul.f32 %v4689, %v4812
        %v4870 = vmul.f32 %v4691, %v4814
        %v4871 = vmul.f32 %v4693, %v4816
        %v4872 = vmul.f32 %v4695, %v4818
        %v4873 = vmul.f32 %v4697, %v4820
        %v4874 = vmul.f32 %v4699, %v4822
        %v4875 = vmul.f32 %v4701, %v4824
        %v4876 = vmul.f32 %v4703, %v4826
        %v4877 = vmul.f32 %v4705, %v4828
        %v4878 = vmul.f32 %v4707, %v4830
        %v4879 = vmul.f32 %v4709, %v4832
        %v4880 = vmul.f32 %v4711, %v4834
        %v4881 = vmul.f32 %v4713, %v4836
        %v4882 = vmul.f32 %v4715, %v4838
        %v4883 = vmul.f32 %v4717, %v4840
        %v4884 = vmul.f32 %v4719, %v4842
        %v4885 = vmul.f32 %v4721, %v4844
        %v4886 = vsel %vm4517, %v4845, %v4764
        %v4887 = vsel %vm4518, %v4846, %v4766
        %v4888 = vsel %vm4519, %v4847, %v4768
        %v4889 = vsel %vm4520, %v4848, %v4770
        %v4890 = vsel %vm4521, %v4849, %v4772
        %v4891 = vsel %vm4522, %v4850, %v4774
        %v4892 = vsel %vm4523, %v4851, %v4776
        %v4893 = vsel %vm4524, %v4852, %v4778
        %v4894 = vsel %vm4525, %v4853, %v4780
        %v4895 = vsel %vm4526, %v4854, %v4782
        %v4896 = vsel %vm4527, %v4855, %v4784
        %v4897 = vsel %vm4528, %v4856, %v4786
        %v4898 = vsel %vm4529, %v4857, %v4788
        %v4899 = vsel %vm4530, %v4858, %v4790
        %v4900 = vsel %vm4531, %v4859, %v4792
        %v4901 = vsel %vm4532, %v4860, %v4794
        %v4902 = vsel %vm4533, %v4861, %v4796
        %v4903 = vsel %vm4534, %v4862, %v4798
        %v4904 = vsel %vm4535, %v4863, %v4800
        %v4905 = vsel %vm4536, %v4864, %v4802
        %v4906 = vsel %vm4537, %v4865, %v4804
        %v4907 = vsel %vm4538, %v4866, %v4806
        %v4908 = vsel %vm4539, %v4867, %v4808
        %v4909 = vsel %vm4540, %v4868, %v4810
        %v4910 = vsel %vm4541, %v4869, %v4812
        %v4911 = vsel %vm4542, %v4870, %v4814
        %v4912 = vsel %vm4543, %v4871, %v4816
        %v4913 = vsel %vm4544, %v4872, %v4818
        %v4914 = vsel %vm4545, %v4873, %v4820
        %v4915 = vsel %vm4546, %v4874, %v4822
        %v4916 = vsel %vm4547, %v4875, %v4824
        %v4917 = vsel %vm4548, %v4876, %v4826
        %v4918 = vsel %vm4549, %v4877, %v4828
        %v4919 = vsel %vm4550, %v4878, %v4830
        %v4920 = vsel %vm4551, %v4879, %v4832
        %v4921 = vsel %vm4552, %v4880, %v4834
        %v4922 = vsel %vm4553, %v4881, %v4836
        %v4923 = vsel %vm4554, %v4882, %v4838
        %v4924 = vsel %vm4555, %v4883, %v4840
        %v4925 = vsel %vm4556, %v4884, %v4842
        %v4926 = vsel %vm4557, %v4885, %v4844
        %v4927 = vlaneseq
        %v4928 = vand.u32 %v4927, 127
        %vm4929 = vcmp.ge.s32.totalorder %v4928, 54
        %vm4930 = vcmp.lt.s32.totalorder %v4928, 63
        %vm4931 = vmand %vm4929, %vm4930
        %v4932 = vsel %vm4931, %v4886, %v4352
        %v4933 = vsel %vm4931, %v4887, %v4355
        %v4934 = vsel %vm4931, %v4888, %v4360
        %v4935 = vsel %vm4931, %v4889, %v4363
        %v4936 = vsel %vm4931, %v4890, %v4368
        %v4937 = vsel %vm4931, %v4891, %v4371
        %v4938 = vsel %vm4931, %v4892, %v4376
        %v4939 = vsel %vm4931, %v4893, %v4379
        %v4940 = vsel %vm4931, %v4894, %v4384
        %v4941 = vsel %vm4931, %v4895, %v4387
        %v4942 = vsel %vm4931, %v4896, %v4392
        %v4943 = vsel %vm4931, %v4897, %v4395
        %v4944 = vsel %vm4931, %v4898, %v4400
        %v4945 = vsel %vm4931, %v4899, %v4403
        %v4946 = vsel %vm4931, %v4900, %v4408
        %v4947 = vsel %vm4931, %v4901, %v4411
        %v4948 = vsel %vm4931, %v4902, %v4416
        %v4949 = vsel %vm4931, %v4903, %v4419
        %v4950 = vsel %vm4931, %v4904, %v4424
        %v4951 = vsel %vm4931, %v4905, %v4427
        %v4952 = vsel %vm4931, %v4906, %v4432
        %v4953 = vsel %vm4931, %v4907, %v4435
        %v4954 = vsel %vm4931, %v4908, %v4440
        %v4955 = vsel %vm4931, %v4909, %v4443
        %v4956 = vsel %vm4931, %v4910, %v4448
        %v4957 = vsel %vm4931, %v4911, %v4451
        %v4958 = vsel %vm4931, %v4912, %v4456
        %v4959 = vsel %vm4931, %v4913, %v4459
        %v4960 = vsel %vm4931, %v4914, %v4464
        %v4961 = vsel %vm4931, %v4915, %v4467
        %v4962 = vsel %vm4931, %v4916, %v4472
        %v4963 = vsel %vm4931, %v4917, %v4475
        %v4964 = vsel %vm4931, %v4918, %v4480
        %v4965 = vsel %vm4931, %v4919, %v4483
        %v4966 = vsel %vm4931, %v4920, %v4488
        %v4967 = vsel %vm4931, %v4921, %v4491
        %v4968 = vsel %vm4931, %v4922, %v4496
        %v4969 = vsel %vm4931, %v4923, %v4499
        %v4970 = vsel %vm4931, %v4924, %v4504
        %v4971 = vsel %vm4931, %v4925, %v4507
        %v4972 = vsel %vm4931, %v4926, %v4512
        %4973 = vst [vmem:[%s217] sm:$0xff] %v4932
        %4974 = vst [vmem:[%s217 + $0x8] sm:$0xff] %v4933
        %4975 = vst [vmem:[%s217 + $0x10] sm:$0xff] %v4934
        %4976 = vst [vmem:[%s217 + $0x18] sm:$0xff] %v4935
        %4977 = vst [vmem:[%s217 + $0x20] sm:$0xff] %v4936
        %4978 = vst [vmem:[%s217 + $0x28] sm:$0xff] %v4937
        %4979 = vst [vmem:[%s217 + $0x30] sm:$0xff] %v4938
        %4980 = vst [vmem:[%s217 + $0x38] sm:$0xff] %v4939
        %4981 = vst [vmem:[%s217 + $0x40] sm:$0xff] %v4940
        %4982 = vst [vmem:[%s217 + $0x48] sm:$0xff] %v4941
        %4983 = vst [vmem:[%s217 + $0x50] sm:$0xff] %v4942
        %4984 = vst [vmem:[%s217 + $0x58] sm:$0xff] %v4943
        %4985 = vst [vmem:[%s217 + $0x60] sm:$0xff] %v4944
        %4986 = vst [vmem:[%s217 + $0x68] sm:$0xff] %v4945
        %4987 = vst [vmem:[%s217 + $0x70] sm:$0xff] %v4946
        %4988 = vst [vmem:[%s217 + $0x78] sm:$0xff] %v4947
        %4989 = vst [vmem:[%s217 + $0x80] sm:$0xff] %v4948
        %4990 = vst [vmem:[%s217 + $0x88] sm:$0xff] %v4949
        %4991 = vst [vmem:[%s217 + $0x90] sm:$0xff] %v4950
        %4992 = vst [vmem:[%s217 + $0x98] sm:$0xff] %v4951
        %4993 = vst [vmem:[%s217 + $0xa0] sm:$0xff] %v4952
        %4994 = vst [vmem:[%s217 + $0xa8] sm:$0xff] %v4953
        %4995 = vst [vmem:[%s217 + $0xb0] sm:$0xff] %v4954
        %4996 = vst [vmem:[%s217 + $0xb8] sm:$0xff] %v4955
        %4997 = vst [vmem:[%s217 + $0xc0] sm:$0xff] %v4956
        %4998 = vst [vmem:[%s217 + $0xc8] sm:$0xff] %v4957
        %4999 = vst [vmem:[%s217 + $0xd0] sm:$0xff] %v4958
        %5000 = vst [vmem:[%s217 + $0xd8] sm:$0xff] %v4959
        %5001 = vst [vmem:[%s217 + $0xe0] sm:$0xff] %v4960
        %5002 = vst [vmem:[%s217 + $0xe8] sm:$0xff] %v4961
        %5003 = vst [vmem:[%s217 + $0xf0] sm:$0xff] %v4962
        %5004 = vst [vmem:[%s217 + $0xf8] sm:$0xff] %v4963
        %5005 = vst [vmem:[%s217 + $0x100] sm:$0xff] %v4964
        %5006 = vst [vmem:[%s217 + $0x108] sm:$0xff] %v4965
        %5007 = vst [vmem:[%s217 + $0x110] sm:$0xff] %v4966
        %5008 = vst [vmem:[%s217 + $0x118] sm:$0xff] %v4967
        %5009 = vst [vmem:[%s217 + $0x120] sm:$0xff] %v4968
        %5010 = vst [vmem:[%s217 + $0x128] sm:$0xff] %v4969
        %5011 = vst [vmem:[%s217 + $0x130] sm:$0xff] %v4970
        %5012 = vst [vmem:[%s217 + $0x138] sm:$0xff] %v4971
        %5013 = vst [vmem:[%s217 + $0x140] sm:$0xff] %v4972
        %s5014 = sand.u32 %s137, 1
        %s5015 = scalar_lea.sflag [#allocation3], %s5014
        %s5016 = sand.u32 %s137, 1
        %s5017 = smul.addr %s5016, 328
        %s5018 = scalar_lea.vmem [#allocation2], %s5017
        // Predicated region
        $region41: #{tpu_custom_call.1} parent=39 // pred_check
          %p5019 = pneg %p147
        $region42: #{tpu_custom_call.1} parent=39 // pred_check_branch
          %5021 = sbr.rel (%p5019) target = $region44
        $region43: #{tpu_custom_call.1} parent=39 // pred_region
          %s5023 = ssub.s32 5248, 5248
          %5024 = vsyncadd %s5015, %s5023
          %s5025 = smul.addr %s19, 41
          %s5026 = smul.addr %s5025, 128
          %s5027 = scalar_lea.hbm %s5, %s5026
          %s5028 = sshll.u32 %s5018, 4
          %s5029 = int_to_ptr.vmem [resolvable:$true] %s5028
          %5034 = dma.vmem_to_hbm [thread:$0]  %s5029, 5248, %s5027, %s5015, 128, 128, 8
        $region44: #{tpu_custom_call.1} parent=39 // pred_fallthru
          _
      $region40: #{tpu_custom_call.1} parent=5 // pred_fallthru
        _
      %p5035 = scmp.le.s32.totalorder 2, %s14
      // Predicated region
      $region45: #{tpu_custom_call.1} parent=5 // pred_check
        %p5036 = pneg %p5035
      $region46: #{tpu_custom_call.1} parent=5 // pred_check_branch
        %5038 = sbr.rel (%p5036) target = $region48
      $region47: #{tpu_custom_call.1} parent=5 // pred_region
        %s5039 = ssub.s32 %s14, 2
        // Predicated region
        $region49: #{tpu_custom_call.1} parent=47 // pred_check
          %p5040 = pneg %p153
        $region50: #{tpu_custom_call.1} parent=47 // pred_check_branch
          %5042 = sbr.rel (%p5040) target = $region52
        $region51: #{tpu_custom_call.1} parent=47 // pred_region
          %s5043 = sand.u32 %s138, 1
          %s5044 = scalar_lea.sflag [#allocation3], %s5043
          %s5045 = sand.u32 %s138, 1
          %s5046 = smul.addr %s5045, 328
          %s5047 = scalar_lea.vmem [#allocation2], %s5046
          %5048 = dma.done %s5044, 5248
        $region52: #{tpu_custom_call.1} parent=47 // pred_fallthru
          _
      $region48: #{tpu_custom_call.1} parent=5 // pred_fallthru
        _
    $region6: #{tpu_custom_call.1} parent=1 // loop_footer
      %s18 = sadd.s32 1, %s14
    $region7: #{tpu_custom_call.1} parent=1 // loop_footer_branch
      %13 = sbr.rel target = $region3
    $region8: #{tpu_custom_call.1} parent=1 // loop_exit
      _
    %5049 = vsyncpa [#allocation3], 1
    %s5050 = scalar_lea.sflag [#allocation3], 1
    %5051 = vsyncpa %s5050, 1

</llo_original>
